<compile_context>
chip_gen: v5e
topology: v5e:2x2
jax: 0.10.0
libtpu: 0.0.40
codegen_flags: <defaults>
</compile_context>

<pallas_src>
import math

import jax
import jax.numpy as jnp
from jax import lax
from jax.experimental import pallas as pl
from jax.experimental.pallas import tpu as pltpu

H = W = 16
NPIX = H * W          # 256 storage pixels per image (valid region shrinks per conv)
PAD = 40              # >= max band extent (2 + 2*16 = 34); multiple of 8 sublanes


# ----------------------------------------------------------------------------
# Fused Pallas kernel
# ----------------------------------------------------------------------------

def _conv3x3(src_ref, w_ref, b_ref, n):
    """3x3 VALID conv on the flattened storage grid as ONE im2col matmul.

    src_ref : [n + PAD, Cin]  (rows >= n are finite; shifted bands stay in bounds)
    w_ref   : [9*Cin, Cout]   row block t = ky*3 + kx (same order as HWIO reshape)
    returns : [n, Cout] value (only the valid corner rows of each image are meaningful)
    """
    pieces = [None] * 9
    for kx in range(3):
        # One band per kx: only kx = 1, 2 are sublane-misaligned reads (2 per conv,
        # down from 6); the ky taps below are aligned value slices of the band.
        band = src_ref[pl.ds(kx, n + 2 * W), :]                  # [n + 32, Cin]
        for ky in range(3):
            pieces[ky * 3 + kx] = band[ky * W: ky * W + n, :]    # aligned (0/16/32)
    slab = jnp.concatenate(pieces, axis=1)                       # [n, 9*Cin] im2col slab
    return jnp.dot(slab, w_ref[...], preferred_element_type=jnp.float32) + b_ref[...]


def _fused_kernel(x_ref,
                  w1_ref, b1_ref, w2_ref, b2_ref, w3_ref, b3_ref,
                  wkqv_ref, bkqv_ref, wo_ref, bo_ref, wf_ref, bf_ref,
                  o_ref, a1_ref, a2_ref):
    batch = o_ref.shape[0]
    n = batch * NPIX                      # rows of the (un-padded) storage grid

    # conv1: 3 -> 16  (input ref is already zero-padded by the wrapper: no staging copy)
    a1_ref[pl.ds(0, n), :] = _conv3x3(x_ref, w1_ref, b1_ref, n)
    a1_ref[pl.ds(n, PAD), :] = jnp.zeros((PAD, a1_ref.shape[1]), jnp.float32)

    # conv2: 16 -> 32
    a2_ref[pl.ds(0, n), :] = _conv3x3(a1_ref, w2_ref, b2_ref, n)
    a2_ref[pl.ds(n, PAD), :] = jnp.zeros((PAD, a2_ref.shape[1]), jnp.float32)

    # conv3: 32 -> 48  (kept as a value; no further shifted reads needed)
    h3 = _conv3x3(a2_ref, w3_ref, b3_ref, n)                     # [n, 48]

    # Global average pool over the valid 10x10 corner of each image, mask built
    # in-kernel (bitwise ops on an iota), reduced per image -> O(B) work, no pool input.
    row = lax.broadcasted_iota(jnp.int32, (n, 1), 0)
    local = jnp.bitwise_and(row, NPIX - 1)                       # row % 256
    yy = jnp.right_shift(local, 4)                               # local // 16
    xx = jnp.bitwise_and(local, W - 1)                           # local % 16
    valid = (yy < 10) & (xx < 10)
    pooled = jnp.where(valid, h3, 0.0) * (1.0 / 100.0)           # [n, 48]
    x = jnp.concatenate(
        [jnp.sum(pooled[b * NPIX:(b + 1) * NPIX, :], axis=0, keepdims=True)
         for b in range(batch)], axis=0)                         # [batch, 48]

    inv_sqrt8 = 1.0 / math.sqrt(8.0)
    for i in range(4):                                           # 4 stacked ULTIMUS blocks
        kqv = jnp.dot(x, wkqv_ref[i], preferred_element_type=jnp.float32) + bkqv_ref[i]
        k = kqv[:, 0:8]
        q = kqv[:, 8:16]
        v = kqv[:, 16:24]
        # q^T @ k : contract over the batch dim -> [8, 8] (torch.transpose(q, 0, 1) @ k)
        m = lax.dot_general(q, k, dimension_numbers=(((0,), (0,)), ((), ())),
                            preferred_element_type=jnp.float32)
        m = m - jnp.max(m, axis=1, keepdims=True)                # softmax(dim=1)
        e = jnp.exp(m)
        am = (e / jnp.sum(e, axis=1, keepdims=True)) * inv_sqrt8  # scale AFTER softmax (spec)
        z = jnp.dot(v, am, preferred_element_type=jnp.float32)                     # [B, 8]
        x = jnp.dot(z, wo_ref[i], preferred_element_type=jnp.float32) + bo_ref[i]  # [B, 48]

    o_ref[...] = jnp.dot(x, wf_ref[...], preferred_element_type=jnp.float32) + bf_ref[...]


# ----------------------------------------------------------------------------
# Wrapper
# ----------------------------------------------------------------------------

def _full_spec(shape):
    nd = len(shape)
    return pl.BlockSpec(shape, lambda *_: (0,) * nd)


def transformer_forward(x_nchw, p):
    batch = x_nchw.shape[0]
    n = batch * NPIX
    # NCHW -> NHWC -> [B*H*W, 3], plus PAD zero rows so conv1 bands stay in bounds.
    # This (~7 KB) is the only pre-kernel glue.
    x2 = jnp.transpose(x_nchw, (0, 2, 3, 1)).reshape(n, 3)
    x_pad = jnp.pad(x2, ((0, PAD), (0, 0)))

    args = (x_pad, p["w1"], p["b1"], p["w2"], p["b2"], p["w3"], p["b3"],
            p["wkqv"], p["bkqv"], p["wo"], p["bo"], p["wf"], p["bf"])

    conv_flops = 2 * n * (27 * 16 + 144 * 32 + 288 * 48)
    head_flops = (2 * n * 48
                  + 4 * 2 * batch * (48 * 24 + 8 * 8 + 8 * 8 + 8 * 48)
                  + 2 * batch * 48 * 10)
    bytes_accessed = 4 * (sum(int(a.size) for a in args) + batch * 10)

    return pl.pallas_call(
        _fused_kernel,
        out_shape=jax.ShapeDtypeStruct((batch, 10), jnp.float32),
        grid=(1,),
        in_specs=[_full_spec(a.shape) for a in args],
        out_specs=_full_spec((batch, 10)),
        scratch_shapes=[pltpu.VMEM((n + PAD, 16), jnp.float32),
                        pltpu.VMEM((n + PAD, 32), jnp.float32)],
        compiler_params=pltpu.CompilerParams(dimension_semantics=("arbitrary",)),
        cost_estimate=pl.CostEstimate(flops=conv_flops + head_flops,
                                      transcendentals=4 * 64,
                                      bytes_accessed=bytes_accessed),
    )(*args)


# ----------------------------------------------------------------------------
# Pure-JAX reference (no Pallas) for the numerical sanity check
# ----------------------------------------------------------------------------

def reference_forward(x_nchw, p):
    x = jnp.transpose(x_nchw, (0, 2, 3, 1))
    for wn, bn, cin in (("w1", "b1", 3), ("w2", "b2", 16), ("w3", "b3", 32)):
        w = p[wn].reshape(3, 3, cin, -1)                          # [ky, kx, cin, cout] = HWIO
        x = lax.conv_general_dilated(
            x, w, window_strides=(1, 1), padding="VALID",
            dimension_numbers=("NHWC", "HWIO", "NHWC")) + p[bn].reshape(1, 1, 1, -1)
    x = jnp.mean(x, axis=(1, 2))                                  # [B, 48]
    for i in range(4):
        kqv = x @ p["wkqv"][i] + p["bkqv"][i]
        k, q, v = kqv[:, :8], kqv[:, 8:16], kqv[:, 16:24]
        m = q.T @ k
        m = m - m.max(axis=1, keepdims=True)
        e = jnp.exp(m)
        am = (e / e.sum(axis=1, keepdims=True)) / math.sqrt(8.0)
        z = v @ am
        x = z @ p["wo"][i] + p["bo"][i]
    return x @ p["wf"] + p["bf"]


# ----------------------------------------------------------------------------
# Parameter init (PyTorch-style uniform(-1/sqrt(fan_in), 1/sqrt(fan_in)))
# ----------------------------------------------------------------------------

def init_params(key):
    def uni(k, shape, fan_in):
        bound = 1.0 / math.sqrt(fan_in)
        return jax.random.uniform(k, shape, jnp.float32, -bound, bound)

    ks = iter(jax.random.split(key, 16))
    p = {}
    # conv weights flattened for the fused im2col dot: [9*Cin, Cout], row block t = ky*3+kx.
    p["w1"] = uni(next(ks), (27, 16), 27);      p["b1"] = uni(next(ks), (1, 16), 27)
    p["w2"] = uni(next(ks), (144, 32), 144);    p["b2"] = uni(next(ks), (1, 32), 144)
    p["w3"] = uni(next(ks), (288, 48), 288);    p["b3"] = uni(next(ks), (1, 48), 288)
    # 4 ULTIMUS blocks; K|Q|V fused along the output dim: Linear(48,8)x3 -> [4, 48, 24]
    p["wkqv"] = uni(next(ks), (4, 48, 24), 48); p["bkqv"] = uni(next(ks), (4, 1, 24), 48)
    p["wo"] = uni(next(ks), (4, 8, 48), 8);     p["bo"] = uni(next(ks), (4, 1, 48), 8)
    # classifier Linear(48, 10), stored transposed as [in, out]
    p["wf"] = uni(next(ks), (48, 10), 48);      p["bf"] = uni(next(ks), (1, 10), 48)
    return p


if __name__ == "__main__":
    key = jax.random.PRNGKey(0)
    pkey, xkey = jax.random.split(key)
    params = init_params(pkey)

    # NCHW input matching the PyTorch module: [B=2, C=3, H=16, W=16]
    x = jax.random.normal(xkey, (2, 3, 16, 16), dtype=jnp.float32)

    out = jax.block_until_ready(jax.jit(transformer_forward)(x, params))
    assert out.shape == (2, 10), out.shape

    ref = jax.block_until_ready(reference_forward(x, params))
    assert jnp.allclose(out, ref, rtol=1e-3, atol=1e-3), (out, ref)

    print("KERNEL_OK")
</pallas_src>

<mosaic_0001>
module attributes {stable_mosaic.version = 11 : i64} {
  func.func @_fused_kernel(%arg0: i32, %arg1: memref<552x3xf32, #tpu.memory_space<vmem>>, %arg2: memref<27x16xf32, #tpu.memory_space<vmem>>, %arg3: memref<1x16xf32, #tpu.memory_space<vmem>>, %arg4: memref<144x32xf32, #tpu.memory_space<vmem>>, %arg5: memref<1x32xf32, #tpu.memory_space<vmem>>, %arg6: memref<288x48xf32, #tpu.memory_space<vmem>>, %arg7: memref<1x48xf32, #tpu.memory_space<vmem>>, %arg8: memref<4x48x24xf32, #tpu.memory_space<vmem>>, %arg9: memref<4x1x24xf32, #tpu.memory_space<vmem>>, %arg10: memref<4x8x48xf32, #tpu.memory_space<vmem>>, %arg11: memref<4x1x48xf32, #tpu.memory_space<vmem>>, %arg12: memref<48x10xf32, #tpu.memory_space<vmem>>, %arg13: memref<1x10xf32, #tpu.memory_space<vmem>>, %arg14: memref<2x10xf32, #tpu.memory_space<vmem>>, %arg15: memref<552x16xf32, #tpu.memory_space<vmem>>, %arg16: memref<552x32xf32, #tpu.memory_space<vmem>>) attributes {dimension_semantics = [#tpu.dimension_semantics<arbitrary>], iteration_bounds = array<i64: 1>, scalar_prefetch = 0 : i64, scratch_operands = 2 : i64, tpu.core_type = #tpu.core_type<tc>, window_params = [{pipeline_mode = #tpu.pipeline_mode<synchronous>, transform_indices = @transform_0, window_bounds = array<i64: 552, 3>}, {pipeline_mode = #tpu.pipeline_mode<synchronous>, transform_indices = @transform_1, window_bounds = array<i64: 27, 16>}, {pipeline_mode = #tpu.pipeline_mode<synchronous>, transform_indices = @transform_2, window_bounds = array<i64: 1, 16>}, {pipeline_mode = #tpu.pipeline_mode<synchronous>, transform_indices = @transform_3, window_bounds = array<i64: 144, 32>}, {pipeline_mode = #tpu.pipeline_mode<synchronous>, transform_indices = @transform_4, window_bounds = array<i64: 1, 32>}, {pipeline_mode = #tpu.pipeline_mode<synchronous>, transform_indices = @transform_5, window_bounds = array<i64: 288, 48>}, {pipeline_mode = #tpu.pipeline_mode<synchronous>, transform_indices = @transform_6, window_bounds = array<i64: 1, 48>}, {pipeline_mode = #tpu.pipeline_mode<synchronous>, transform_indices = @transform_7, window_bounds = array<i64: 4, 48, 24>}, {pipeline_mode = #tpu.pipeline_mode<synchronous>, transform_indices = @transform_8, window_bounds = array<i64: 4, 1, 24>}, {pipeline_mode = #tpu.pipeline_mode<synchronous>, transform_indices = @transform_9, window_bounds = array<i64: 4, 8, 48>}, {pipeline_mode = #tpu.pipeline_mode<synchronous>, transform_indices = @transform_10, window_bounds = array<i64: 4, 1, 48>}, {pipeline_mode = #tpu.pipeline_mode<synchronous>, transform_indices = @transform_11, window_bounds = array<i64: 48, 10>}, {pipeline_mode = #tpu.pipeline_mode<synchronous>, transform_indices = @transform_12, window_bounds = array<i64: 1, 10>}, {pipeline_mode = #tpu.pipeline_mode<synchronous>, transform_indices = @transform_13, window_bounds = array<i64: 2, 10>}]} {
    %c0 = arith.constant 0 : index
    %c0_0 = arith.constant 0 : index
    %0 = vector.load %arg1[%c0, %c0_0] : memref<552x3xf32, #tpu.memory_space<vmem>>, vector<544x3xf32>
    %1 = vector.extract_strided_slice %0 {offsets = [0, 0], sizes = [512, 3], strides = [1, 1]} : vector<544x3xf32> to vector<512x3xf32>
    %2 = vector.extract_strided_slice %0 {offsets = [16, 0], sizes = [512, 3], strides = [1, 1]} : vector<544x3xf32> to vector<512x3xf32>
    %3 = vector.extract_strided_slice %0 {offsets = [32, 0], sizes = [512, 3], strides = [1, 1]} : vector<544x3xf32> to vector<512x3xf32>
    %c1 = arith.constant 1 : index
    %c0_1 = arith.constant 0 : index
    %4 = vector.load %arg1[%c1, %c0_1] : memref<552x3xf32, #tpu.memory_space<vmem>>, vector<544x3xf32>
    %5 = vector.extract_strided_slice %4 {offsets = [0, 0], sizes = [512, 3], strides = [1, 1]} : vector<544x3xf32> to vector<512x3xf32>
    %6 = vector.extract_strided_slice %4 {offsets = [16, 0], sizes = [512, 3], strides = [1, 1]} : vector<544x3xf32> to vector<512x3xf32>
    %7 = vector.extract_strided_slice %4 {offsets = [32, 0], sizes = [512, 3], strides = [1, 1]} : vector<544x3xf32> to vector<512x3xf32>
    %c2 = arith.constant 2 : index
    %c0_2 = arith.constant 0 : index
    %8 = vector.load %arg1[%c2, %c0_2] : memref<552x3xf32, #tpu.memory_space<vmem>>, vector<544x3xf32>
    %9 = vector.extract_strided_slice %8 {offsets = [0, 0], sizes = [512, 3], strides = [1, 1]} : vector<544x3xf32> to vector<512x3xf32>
    %10 = vector.extract_strided_slice %8 {offsets = [16, 0], sizes = [512, 3], strides = [1, 1]} : vector<544x3xf32> to vector<512x3xf32>
    %11 = vector.extract_strided_slice %8 {offsets = [32, 0], sizes = [512, 3], strides = [1, 1]} : vector<544x3xf32> to vector<512x3xf32>
    %12 = tpu.concatenate %1, %5, %9, %2, %6, %10, %3, %7, %11 in 1 : vector<512x3xf32>, vector<512x3xf32>, vector<512x3xf32>, vector<512x3xf32>, vector<512x3xf32>, vector<512x3xf32>, vector<512x3xf32>, vector<512x3xf32>, vector<512x3xf32> -> vector<512x27xf32>
    %c0_3 = arith.constant 0 : index
    %c0_4 = arith.constant 0 : index
    %13 = vector.load %arg2[%c0_3, %c0_4] : memref<27x16xf32, #tpu.memory_space<vmem>>, vector<27x16xf32>
    %cst = arith.constant dense<0.000000e+00> : vector<512x16xf32>
    %14 = tpu.matmul %12, %13, %cst {dimension_numbers = #tpu.dot_dimension_numbers<[1], [0], [0], [1], [0, 0, 1, 1], [], []>} : vector<512x27xf32>, vector<27x16xf32>, vector<512x16xf32> -> vector<512x16xf32>
    %c0_5 = arith.constant 0 : index
    %c0_6 = arith.constant 0 : index
    %15 = vector.load %arg3[%c0_5, %c0_6] : memref<1x16xf32, #tpu.memory_space<vmem>>, vector<1x16xf32>
    %16 = vector.broadcast %15 : vector<1x16xf32> to vector<512x16xf32>
    %17 = arith.addf %14, %16 : vector<512x16xf32>
    %c0_7 = arith.constant 0 : index
    %c0_8 = arith.constant 0 : index
    %18 = vector.load %arg15[%c0_7, %c0_8] : memref<552x16xf32, #tpu.memory_space<vmem>>, vector<512x16xf32>
    tpu.vector_store %arg15[%c0_7, %c0_8], %17 {strides = array<i32>} : memref<552x16xf32, #tpu.memory_space<vmem>>, vector<512x16xf32>,
    %cst_9 = arith.constant 0.000000e+00 : f32
    %19 = vector.broadcast %cst_9 : f32 to vector<40x16xf32>
    %c512 = arith.constant 512 : index
    %c0_10 = arith.constant 0 : index
    %20 = vector.load %arg15[%c512, %c0_10] : memref<552x16xf32, #tpu.memory_space<vmem>>, vector<40x16xf32>
    tpu.vector_store %arg15[%c512, %c0_10], %19 {strides = array<i32>} : memref<552x16xf32, #tpu.memory_space<vmem>>, vector<40x16xf32>,
    %c0_11 = arith.constant 0 : index
    %c0_12 = arith.constant 0 : index
    %21 = vector.load %arg15[%c0_11, %c0_12] : memref<552x16xf32, #tpu.memory_space<vmem>>, vector<544x16xf32>
    %22 = vector.extract_strided_slice %21 {offsets = [0, 0], sizes = [512, 16], strides = [1, 1]} : vector<544x16xf32> to vector<512x16xf32>
    %23 = vector.extract_strided_slice %21 {offsets = [16, 0], sizes = [512, 16], strides = [1, 1]} : vector<544x16xf32> to vector<512x16xf32>
    %24 = vector.extract_strided_slice %21 {offsets = [32, 0], sizes = [512, 16], strides = [1, 1]} : vector<544x16xf32> to vector<512x16xf32>
    %c1_13 = arith.constant 1 : index
    %c0_14 = arith.constant 0 : index
    %25 = vector.load %arg15[%c1_13, %c0_14] : memref<552x16xf32, #tpu.memory_space<vmem>>, vector<544x16xf32>
    %26 = vector.extract_strided_slice %25 {offsets = [0, 0], sizes = [512, 16], strides = [1, 1]} : vector<544x16xf32> to vector<512x16xf32>
    %27 = vector.extract_strided_slice %25 {offsets = [16, 0], sizes = [512, 16], strides = [1, 1]} : vector<544x16xf32> to vector<512x16xf32>
    %28 = vector.extract_strided_slice %25 {offsets = [32, 0], sizes = [512, 16], strides = [1, 1]} : vector<544x16xf32> to vector<512x16xf32>
    %c2_15 = arith.constant 2 : index
    %c0_16 = arith.constant 0 : index
    %29 = vector.load %arg15[%c2_15, %c0_16] : memref<552x16xf32, #tpu.memory_space<vmem>>, vector<544x16xf32>
    %30 = vector.extract_strided_slice %29 {offsets = [0, 0], sizes = [512, 16], strides = [1, 1]} : vector<544x16xf32> to vector<512x16xf32>
    %31 = vector.extract_strided_slice %29 {offsets = [16, 0], sizes = [512, 16], strides = [1, 1]} : vector<544x16xf32> to vector<512x16xf32>
    %32 = vector.extract_strided_slice %29 {offsets = [32, 0], sizes = [512, 16], strides = [1, 1]} : vector<544x16xf32> to vector<512x16xf32>
    %33 = tpu.concatenate %22, %26, %30, %23, %27, %31, %24, %28, %32 in 1 : vector<512x16xf32>, vector<512x16xf32>, vector<512x16xf32>, vector<512x16xf32>, vector<512x16xf32>, vector<512x16xf32>, vector<512x16xf32>, vector<512x16xf32>, vector<512x16xf32> -> vector<512x144xf32>
    %c0_17 = arith.constant 0 : index
    %c0_18 = arith.constant 0 : index
    %34 = vector.load %arg4[%c0_17, %c0_18] : memref<144x32xf32, #tpu.memory_space<vmem>>, vector<144x32xf32>
    %cst_19 = arith.constant dense<0.000000e+00> : vector<512x32xf32>
    %35 = tpu.matmul %33, %34, %cst_19 {dimension_numbers = #tpu.dot_dimension_numbers<[1], [0], [0], [1], [0, 0, 1, 1], [], []>} : vector<512x144xf32>, vector<144x32xf32>, vector<512x32xf32> -> vector<512x32xf32>
    %c0_20 = arith.constant 0 : index
    %c0_21 = arith.constant 0 : index
    %36 = vector.load %arg5[%c0_20, %c0_21] : memref<1x32xf32, #tpu.memory_space<vmem>>, vector<1x32xf32>
    %37 = vector.broadcast %36 : vector<1x32xf32> to vector<512x32xf32>
    %38 = arith.addf %35, %37 : vector<512x32xf32>
    %c0_22 = arith.constant 0 : index
    %c0_23 = arith.constant 0 : index
    %39 = vector.load %arg16[%c0_22, %c0_23] : memref<552x32xf32, #tpu.memory_space<vmem>>, vector<512x32xf32>
    tpu.vector_store %arg16[%c0_22, %c0_23], %38 {strides = array<i32>} : memref<552x32xf32, #tpu.memory_space<vmem>>, vector<512x32xf32>,
    %cst_24 = arith.constant 0.000000e+00 : f32
    %40 = vector.broadcast %cst_24 : f32 to vector<40x32xf32>
    %c512_25 = arith.constant 512 : index
    %c0_26 = arith.constant 0 : index
    %41 = vector.load %arg16[%c512_25, %c0_26] : memref<552x32xf32, #tpu.memory_space<vmem>>, vector<40x32xf32>
    tpu.vector_store %arg16[%c512_25, %c0_26], %40 {strides = array<i32>} : memref<552x32xf32, #tpu.memory_space<vmem>>, vector<40x32xf32>,
    %c0_27 = arith.constant 0 : index
    %c0_28 = arith.constant 0 : index
    %42 = vector.load %arg16[%c0_27, %c0_28] : memref<552x32xf32, #tpu.memory_space<vmem>>, vector<544x32xf32>
    %43 = vector.extract_strided_slice %42 {offsets = [0, 0], sizes = [512, 32], strides = [1, 1]} : vector<544x32xf32> to vector<512x32xf32>
    %44 = vector.extract_strided_slice %42 {offsets = [16, 0], sizes = [512, 32], strides = [1, 1]} : vector<544x32xf32> to vector<512x32xf32>
    %45 = vector.extract_strided_slice %42 {offsets = [32, 0], sizes = [512, 32], strides = [1, 1]} : vector<544x32xf32> to vector<512x32xf32>
    %c1_29 = arith.constant 1 : index
    %c0_30 = arith.constant 0 : index
    %46 = vector.load %arg16[%c1_29, %c0_30] : memref<552x32xf32, #tpu.memory_space<vmem>>, vector<544x32xf32>
    %47 = vector.extract_strided_slice %46 {offsets = [0, 0], sizes = [512, 32], strides = [1, 1]} : vector<544x32xf32> to vector<512x32xf32>
    %48 = vector.extract_strided_slice %46 {offsets = [16, 0], sizes = [512, 32], strides = [1, 1]} : vector<544x32xf32> to vector<512x32xf32>
    %49 = vector.extract_strided_slice %46 {offsets = [32, 0], sizes = [512, 32], strides = [1, 1]} : vector<544x32xf32> to vector<512x32xf32>
    %c2_31 = arith.constant 2 : index
    %c0_32 = arith.constant 0 : index
    %50 = vector.load %arg16[%c2_31, %c0_32] : memref<552x32xf32, #tpu.memory_space<vmem>>, vector<544x32xf32>
    %51 = vector.extract_strided_slice %50 {offsets = [0, 0], sizes = [512, 32], strides = [1, 1]} : vector<544x32xf32> to vector<512x32xf32>
    %52 = vector.extract_strided_slice %50 {offsets = [16, 0], sizes = [512, 32], strides = [1, 1]} : vector<544x32xf32> to vector<512x32xf32>
    %53 = vector.extract_strided_slice %50 {offsets = [32, 0], sizes = [512, 32], strides = [1, 1]} : vector<544x32xf32> to vector<512x32xf32>
    %54 = tpu.concatenate %43, %47, %51, %44, %48, %52, %45, %49, %53 in 1 : vector<512x32xf32>, vector<512x32xf32>, vector<512x32xf32>, vector<512x32xf32>, vector<512x32xf32>, vector<512x32xf32>, vector<512x32xf32>, vector<512x32xf32>, vector<512x32xf32> -> vector<512x288xf32>
    %c0_33 = arith.constant 0 : index
    %c0_34 = arith.constant 0 : index
    %55 = vector.load %arg6[%c0_33, %c0_34] : memref<288x48xf32, #tpu.memory_space<vmem>>, vector<288x48xf32>
    %cst_35 = arith.constant dense<0.000000e+00> : vector<512x48xf32>
    %56 = tpu.matmul %54, %55, %cst_35 {dimension_numbers = #tpu.dot_dimension_numbers<[1], [0], [0], [1], [0, 0, 1, 1], [], []>} : vector<512x288xf32>, vector<288x48xf32>, vector<512x48xf32> -> vector<512x48xf32>
    %c0_36 = arith.constant 0 : index
    %c0_37 = arith.constant 0 : index
    %57 = vector.load %arg7[%c0_36, %c0_37] : memref<1x48xf32, #tpu.memory_space<vmem>>, vector<1x48xf32>
    %58 = vector.broadcast %57 : vector<1x48xf32> to vector<512x48xf32>
    %59 = arith.addf %56, %58 : vector<512x48xf32>
    %60 = tpu.iota {dimensions = array<i32: 0>} : vector<512x1xi32>
    %c255_i32 = arith.constant 255 : i32
    %61 = vector.broadcast %c255_i32 : i32 to vector<512x1xi32>
    %62 = arith.andi %60, %61 : vector<512x1xi32>
    %c4_i32 = arith.constant 4 : i32
    %63 = vector.broadcast %c4_i32 : i32 to vector<512x1xi32>
    %64 = arith.shrsi %62, %63 : vector<512x1xi32>
    %c15_i32 = arith.constant 15 : i32
    %65 = vector.broadcast %c15_i32 : i32 to vector<512x1xi32>
    %66 = arith.andi %62, %65 : vector<512x1xi32>
    %c10_i32 = arith.constant 10 : i32
    %67 = vector.broadcast %c10_i32 : i32 to vector<512x1xi32>
    %68 = arith.cmpi slt, %64, %67 : vector<512x1xi32>
    %c10_i32_38 = arith.constant 10 : i32
    %69 = vector.broadcast %c10_i32_38 : i32 to vector<512x1xi32>
    %70 = arith.cmpi slt, %66, %69 : vector<512x1xi32>
    %71 = arith.andi %68, %70 : vector<512x1xi1>
    %cst_39 = arith.constant 0.000000e+00 : f32
    %72 = vector.shape_cast %71 : vector<512x1xi1> to vector<512x1xi1>
    %73 = vector.broadcast %72 : vector<512x1xi1> to vector<512x48xi1>
    %74 = vector.broadcast %cst_39 : f32 to vector<512x48xf32>
    %75 = arith.select %73, %59, %74 : vector<512x48xi1>, vector<512x48xf32>
    %cst_40 = arith.constant 0.00999999977 : f32
    %76 = vector.broadcast %cst_40 : f32 to vector<512x48xf32>
    %77 = arith.mulf %75, %76 : vector<512x48xf32>
    %78 = vector.extract_strided_slice %77 {offsets = [0, 0], sizes = [256, 48], strides = [1, 1]} : vector<512x48xf32> to vector<256x48xf32>
    %cst_41 = arith.constant dense<0.000000e+00> : vector<48xf32>
    %79 = vector.multi_reduction <add>, %78, %cst_41 [0] : vector<256x48xf32> to vector<48xf32>
    %80 = vector.shape_cast %79 : vector<48xf32> to vector<1x48xf32>
    %81 = vector.extract_strided_slice %77 {offsets = [256, 0], sizes = [256, 48], strides = [1, 1]} : vector<512x48xf32> to vector<256x48xf32>
    %cst_42 = arith.constant dense<0.000000e+00> : vector<48xf32>
    %82 = vector.multi_reduction <add>, %81, %cst_42 [0] : vector<256x48xf32> to vector<48xf32>
    %83 = vector.shape_cast %82 : vector<48xf32> to vector<1x48xf32>
    %84 = tpu.concatenate %80, %83 in 0 : vector<1x48xf32>, vector<1x48xf32> -> vector<2x48xf32>
    %c0_43 = arith.constant 0 : index
    %c0_44 = arith.constant 0 : index
    %c0_45 = arith.constant 0 : index
    %85 = vector.load %arg8[%c0_43, %c0_44, %c0_45] : memref<4x48x24xf32, #tpu.memory_space<vmem>>, vector<1x48x24xf32>
    %86 = vector.shape_cast %85 : vector<1x48x24xf32> to vector<48x24xf32>
    %cst_46 = arith.constant dense<0.000000e+00> : vector<2x24xf32>
    %87 = tpu.matmul %84, %86, %cst_46 {dimension_numbers = #tpu.dot_dimension_numbers<[1], [0], [0], [1], [0, 0, 1, 1], [], []>} : vector<2x48xf32>, vector<48x24xf32>, vector<2x24xf32> -> vector<2x24xf32>
    %c0_47 = arith.constant 0 : index
    %c0_48 = arith.constant 0 : index
    %c0_49 = arith.constant 0 : index
    %88 = vector.load %arg9[%c0_47, %c0_48, %c0_49] : memref<4x1x24xf32, #tpu.memory_space<vmem>>, vector<1x1x24xf32>
    %89 = vector.shape_cast %88 : vector<1x1x24xf32> to vector<1x24xf32>
    %90 = vector.broadcast %89 : vector<1x24xf32> to vector<2x24xf32>
    %91 = arith.addf %87, %90 : vector<2x24xf32>
    %92 = vector.extract_strided_slice %91 {offsets = [0, 0], sizes = [2, 8], strides = [1, 1]} : vector<2x24xf32> to vector<2x8xf32>
    %93 = vector.extract_strided_slice %91 {offsets = [0, 8], sizes = [2, 8], strides = [1, 1]} : vector<2x24xf32> to vector<2x8xf32>
    %94 = vector.extract_strided_slice %91 {offsets = [0, 16], sizes = [2, 8], strides = [1, 1]} : vector<2x24xf32> to vector<2x8xf32>
    %cst_50 = arith.constant dense<0.000000e+00> : vector<8x8xf32>
    %95 = tpu.matmul %93, %92, %cst_50 {dimension_numbers = #tpu.dot_dimension_numbers<[0], [0], [1], [1], [0, 1, 1, 1], [], []>} : vector<2x8xf32>, vector<2x8xf32>, vector<8x8xf32> -> vector<8x8xf32>
    %cst_51 = arith.constant dense<0xFF800000> : vector<8xf32>
    %96 = vector.multi_reduction <maximumf>, %95, %cst_51 [1] : vector<8x8xf32> to vector<8xf32>
    %97 = vector.shape_cast %96 : vector<8xf32> to vector<8x1xf32>
    %98 = vector.broadcast %97 : vector<8x1xf32> to vector<8x8xf32>
    %99 = arith.subf %95, %98 : vector<8x8xf32>
    %100 = math.exp %99 : vector<8x8xf32>
    %cst_52 = arith.constant dense<0.000000e+00> : vector<8xf32>
    %101 = vector.multi_reduction <add>, %100, %cst_52 [1] : vector<8x8xf32> to vector<8xf32>
    %102 = vector.shape_cast %101 : vector<8xf32> to vector<8x1xf32>
    %103 = vector.broadcast %102 : vector<8x1xf32> to vector<8x8xf32>
    %104 = arith.divf %100, %103 : vector<8x8xf32>
    %cst_53 = arith.constant 0.353553385 : f32
    %105 = vector.broadcast %cst_53 : f32 to vector<8x8xf32>
    %106 = arith.mulf %104, %105 : vector<8x8xf32>
    %cst_54 = arith.constant dense<0.000000e+00> : vector<2x8xf32>
    %107 = tpu.matmul %94, %106, %cst_54 {dimension_numbers = #tpu.dot_dimension_numbers<[1], [0], [0], [1], [0, 0, 1, 1], [], []>} : vector<2x8xf32>, vector<8x8xf32>, vector<2x8xf32> -> vector<2x8xf32>
    %c0_55 = arith.constant 0 : index
    %c0_56 = arith.constant 0 : index
    %c0_57 = arith.constant 0 : index
    %108 = vector.load %arg10[%c0_55, %c0_56, %c0_57] : memref<4x8x48xf32, #tpu.memory_space<vmem>>, vector<1x8x48xf32>
    %109 = vector.shape_cast %108 : vector<1x8x48xf32> to vector<8x48xf32>
    %cst_58 = arith.constant dense<0.000000e+00> : vector<2x48xf32>
    %110 = tpu.matmul %107, %109, %cst_58 {dimension_numbers = #tpu.dot_dimension_numbers<[1], [0], [0], [1], [0, 0, 1, 1], [], []>} : vector<2x8xf32>, vector<8x48xf32>, vector<2x48xf32> -> vector<2x48xf32>
    %c0_59 = arith.constant 0 : index
    %c0_60 = arith.constant 0 : index
    %c0_61 = arith.constant 0 : index
    %111 = vector.load %arg11[%c0_59, %c0_60, %c0_61] : memref<4x1x48xf32, #tpu.memory_space<vmem>>, vector<1x1x48xf32>
    %112 = vector.shape_cast %111 : vector<1x1x48xf32> to vector<1x48xf32>
    %113 = vector.broadcast %112 : vector<1x48xf32> to vector<2x48xf32>
    %114 = arith.addf %110, %113 : vector<2x48xf32>
    %c1_62 = arith.constant 1 : index
    %c0_63 = arith.constant 0 : index
    %c0_64 = arith.constant 0 : index
    %115 = vector.load %arg8[%c1_62, %c0_63, %c0_64] : memref<4x48x24xf32, #tpu.memory_space<vmem>>, vector<1x48x24xf32>
    %116 = vector.shape_cast %115 : vector<1x48x24xf32> to vector<48x24xf32>
    %cst_65 = arith.constant dense<0.000000e+00> : vector<2x24xf32>
    %117 = tpu.matmul %114, %116, %cst_65 {dimension_numbers = #tpu.dot_dimension_numbers<[1], [0], [0], [1], [0, 0, 1, 1], [], []>} : vector<2x48xf32>, vector<48x24xf32>, vector<2x24xf32> -> vector<2x24xf32>
    %c1_66 = arith.constant 1 : index
    %c0_67 = arith.constant 0 : index
    %c0_68 = arith.constant 0 : index
    %118 = vector.load %arg9[%c1_66, %c0_67, %c0_68] : memref<4x1x24xf32, #tpu.memory_space<vmem>>, vector<1x1x24xf32>
    %119 = vector.shape_cast %118 : vector<1x1x24xf32> to vector<1x24xf32>
    %120 = vector.broadcast %119 : vector<1x24xf32> to vector<2x24xf32>
    %121 = arith.addf %117, %120 : vector<2x24xf32>
    %122 = vector.extract_strided_slice %121 {offsets = [0, 0], sizes = [2, 8], strides = [1, 1]} : vector<2x24xf32> to vector<2x8xf32>
    %123 = vector.extract_strided_slice %121 {offsets = [0, 8], sizes = [2, 8], strides = [1, 1]} : vector<2x24xf32> to vector<2x8xf32>
    %124 = vector.extract_strided_slice %121 {offsets = [0, 16], sizes = [2, 8], strides = [1, 1]} : vector<2x24xf32> to vector<2x8xf32>
    %cst_69 = arith.constant dense<0.000000e+00> : vector<8x8xf32>
    %125 = tpu.matmul %123, %122, %cst_69 {dimension_numbers = #tpu.dot_dimension_numbers<[0], [0], [1], [1], [0, 1, 1, 1], [], []>} : vector<2x8xf32>, vector<2x8xf32>, vector<8x8xf32> -> vector<8x8xf32>
    %cst_70 = arith.constant dense<0xFF800000> : vector<8xf32>
    %126 = vector.multi_reduction <maximumf>, %125, %cst_70 [1] : vector<8x8xf32> to vector<8xf32>
    %127 = vector.shape_cast %126 : vector<8xf32> to vector<8x1xf32>
    %128 = vector.broadcast %127 : vector<8x1xf32> to vector<8x8xf32>
    %129 = arith.subf %125, %128 : vector<8x8xf32>
    %130 = math.exp %129 : vector<8x8xf32>
    %cst_71 = arith.constant dense<0.000000e+00> : vector<8xf32>
    %131 = vector.multi_reduction <add>, %130, %cst_71 [1] : vector<8x8xf32> to vector<8xf32>
    %132 = vector.shape_cast %131 : vector<8xf32> to vector<8x1xf32>
    %133 = vector.broadcast %132 : vector<8x1xf32> to vector<8x8xf32>
    %134 = arith.divf %130, %133 : vector<8x8xf32>
    %cst_72 = arith.constant 0.353553385 : f32
    %135 = vector.broadcast %cst_72 : f32 to vector<8x8xf32>
    %136 = arith.mulf %134, %135 : vector<8x8xf32>
    %cst_73 = arith.constant dense<0.000000e+00> : vector<2x8xf32>
    %137 = tpu.matmul %124, %136, %cst_73 {dimension_numbers = #tpu.dot_dimension_numbers<[1], [0], [0], [1], [0, 0, 1, 1], [], []>} : vector<2x8xf32>, vector<8x8xf32>, vector<2x8xf32> -> vector<2x8xf32>
    %c1_74 = arith.constant 1 : index
    %c0_75 = arith.constant 0 : index
    %c0_76 = arith.constant 0 : index
    %138 = vector.load %arg10[%c1_74, %c0_75, %c0_76] : memref<4x8x48xf32, #tpu.memory_space<vmem>>, vector<1x8x48xf32>
    %139 = vector.shape_cast %138 : vector<1x8x48xf32> to vector<8x48xf32>
    %cst_77 = arith.constant dense<0.000000e+00> : vector<2x48xf32>
    %140 = tpu.matmul %137, %139, %cst_77 {dimension_numbers = #tpu.dot_dimension_numbers<[1], [0], [0], [1], [0, 0, 1, 1], [], []>} : vector<2x8xf32>, vector<8x48xf32>, vector<2x48xf32> -> vector<2x48xf32>
    %c1_78 = arith.constant 1 : index
    %c0_79 = arith.constant 0 : index
    %c0_80 = arith.constant 0 : index
    %141 = vector.load %arg11[%c1_78, %c0_79, %c0_80] : memref<4x1x48xf32, #tpu.memory_space<vmem>>, vector<1x1x48xf32>
    %142 = vector.shape_cast %141 : vector<1x1x48xf32> to vector<1x48xf32>
    %143 = vector.broadcast %142 : vector<1x48xf32> to vector<2x48xf32>
    %144 = arith.addf %140, %143 : vector<2x48xf32>
    %c2_81 = arith.constant 2 : index
    %c0_82 = arith.constant 0 : index
    %c0_83 = arith.constant 0 : index
    %145 = vector.load %arg8[%c2_81, %c0_82, %c0_83] : memref<4x48x24xf32, #tpu.memory_space<vmem>>, vector<1x48x24xf32>
    %146 = vector.shape_cast %145 : vector<1x48x24xf32> to vector<48x24xf32>
    %cst_84 = arith.constant dense<0.000000e+00> : vector<2x24xf32>
    %147 = tpu.matmul %144, %146, %cst_84 {dimension_numbers = #tpu.dot_dimension_numbers<[1], [0], [0], [1], [0, 0, 1, 1], [], []>} : vector<2x48xf32>, vector<48x24xf32>, vector<2x24xf32> -> vector<2x24xf32>
    %c2_85 = arith.constant 2 : index
    %c0_86 = arith.constant 0 : index
    %c0_87 = arith.constant 0 : index
    %148 = vector.load %arg9[%c2_85, %c0_86, %c0_87] : memref<4x1x24xf32, #tpu.memory_space<vmem>>, vector<1x1x24xf32>
    %149 = vector.shape_cast %148 : vector<1x1x24xf32> to vector<1x24xf32>
    %150 = vector.broadcast %149 : vector<1x24xf32> to vector<2x24xf32>
    %151 = arith.addf %147, %150 : vector<2x24xf32>
    %152 = vector.extract_strided_slice %151 {offsets = [0, 0], sizes = [2, 8], strides = [1, 1]} : vector<2x24xf32> to vector<2x8xf32>
    %153 = vector.extract_strided_slice %151 {offsets = [0, 8], sizes = [2, 8], strides = [1, 1]} : vector<2x24xf32> to vector<2x8xf32>
    %154 = vector.extract_strided_slice %151 {offsets = [0, 16], sizes = [2, 8], strides = [1, 1]} : vector<2x24xf32> to vector<2x8xf32>
    %cst_88 = arith.constant dense<0.000000e+00> : vector<8x8xf32>
    %155 = tpu.matmul %153, %152, %cst_88 {dimension_numbers = #tpu.dot_dimension_numbers<[0], [0], [1], [1], [0, 1, 1, 1], [], []>} : vector<2x8xf32>, vector<2x8xf32>, vector<8x8xf32> -> vector<8x8xf32>
    %cst_89 = arith.constant dense<0xFF800000> : vector<8xf32>
    %156 = vector.multi_reduction <maximumf>, %155, %cst_89 [1] : vector<8x8xf32> to vector<8xf32>
    %157 = vector.shape_cast %156 : vector<8xf32> to vector<8x1xf32>
    %158 = vector.broadcast %157 : vector<8x1xf32> to vector<8x8xf32>
    %159 = arith.subf %155, %158 : vector<8x8xf32>
    %160 = math.exp %159 : vector<8x8xf32>
    %cst_90 = arith.constant dense<0.000000e+00> : vector<8xf32>
    %161 = vector.multi_reduction <add>, %160, %cst_90 [1] : vector<8x8xf32> to vector<8xf32>
    %162 = vector.shape_cast %161 : vector<8xf32> to vector<8x1xf32>
    %163 = vector.broadcast %162 : vector<8x1xf32> to vector<8x8xf32>
    %164 = arith.divf %160, %163 : vector<8x8xf32>
    %cst_91 = arith.constant 0.353553385 : f32
    %165 = vector.broadcast %cst_91 : f32 to vector<8x8xf32>
    %166 = arith.mulf %164, %165 : vector<8x8xf32>
    %cst_92 = arith.constant dense<0.000000e+00> : vector<2x8xf32>
    %167 = tpu.matmul %154, %166, %cst_92 {dimension_numbers = #tpu.dot_dimension_numbers<[1], [0], [0], [1], [0, 0, 1, 1], [], []>} : vector<2x8xf32>, vector<8x8xf32>, vector<2x8xf32> -> vector<2x8xf32>
    %c2_93 = arith.constant 2 : index
    %c0_94 = arith.constant 0 : index
    %c0_95 = arith.constant 0 : index
    %168 = vector.load %arg10[%c2_93, %c0_94, %c0_95] : memref<4x8x48xf32, #tpu.memory_space<vmem>>, vector<1x8x48xf32>
    %169 = vector.shape_cast %168 : vector<1x8x48xf32> to vector<8x48xf32>
    %cst_96 = arith.constant dense<0.000000e+00> : vector<2x48xf32>
    %170 = tpu.matmul %167, %169, %cst_96 {dimension_numbers = #tpu.dot_dimension_numbers<[1], [0], [0], [1], [0, 0, 1, 1], [], []>} : vector<2x8xf32>, vector<8x48xf32>, vector<2x48xf32> -> vector<2x48xf32>
    %c2_97 = arith.constant 2 : index
    %c0_98 = arith.constant 0 : index
    %c0_99 = arith.constant 0 : index
    %171 = vector.load %arg11[%c2_97, %c0_98, %c0_99] : memref<4x1x48xf32, #tpu.memory_space<vmem>>, vector<1x1x48xf32>
    %172 = vector.shape_cast %171 : vector<1x1x48xf32> to vector<1x48xf32>
    %173 = vector.broadcast %172 : vector<1x48xf32> to vector<2x48xf32>
    %174 = arith.addf %170, %173 : vector<2x48xf32>
    %c3 = arith.constant 3 : index
    %c0_100 = arith.constant 0 : index
    %c0_101 = arith.constant 0 : index
    %175 = vector.load %arg8[%c3, %c0_100, %c0_101] : memref<4x48x24xf32, #tpu.memory_space<vmem>>, vector<1x48x24xf32>
    %176 = vector.shape_cast %175 : vector<1x48x24xf32> to vector<48x24xf32>
    %cst_102 = arith.constant dense<0.000000e+00> : vector<2x24xf32>
    %177 = tpu.matmul %174, %176, %cst_102 {dimension_numbers = #tpu.dot_dimension_numbers<[1], [0], [0], [1], [0, 0, 1, 1], [], []>} : vector<2x48xf32>, vector<48x24xf32>, vector<2x24xf32> -> vector<2x24xf32>
    %c3_103 = arith.constant 3 : index
    %c0_104 = arith.constant 0 : index
    %c0_105 = arith.constant 0 : index
    %178 = vector.load %arg9[%c3_103, %c0_104, %c0_105] : memref<4x1x24xf32, #tpu.memory_space<vmem>>, vector<1x1x24xf32>
    %179 = vector.shape_cast %178 : vector<1x1x24xf32> to vector<1x24xf32>
    %180 = vector.broadcast %179 : vector<1x24xf32> to vector<2x24xf32>
    %181 = arith.addf %177, %180 : vector<2x24xf32>
    %182 = vector.extract_strided_slice %181 {offsets = [0, 0], sizes = [2, 8], strides = [1, 1]} : vector<2x24xf32> to vector<2x8xf32>
    %183 = vector.extract_strided_slice %181 {offsets = [0, 8], sizes = [2, 8], strides = [1, 1]} : vector<2x24xf32> to vector<2x8xf32>
    %184 = vector.extract_strided_slice %181 {offsets = [0, 16], sizes = [2, 8], strides = [1, 1]} : vector<2x24xf32> to vector<2x8xf32>
    %cst_106 = arith.constant dense<0.000000e+00> : vector<8x8xf32>
    %185 = tpu.matmul %183, %182, %cst_106 {dimension_numbers = #tpu.dot_dimension_numbers<[0], [0], [1], [1], [0, 1, 1, 1], [], []>} : vector<2x8xf32>, vector<2x8xf32>, vector<8x8xf32> -> vector<8x8xf32>
    %cst_107 = arith.constant dense<0xFF800000> : vector<8xf32>
    %186 = vector.multi_reduction <maximumf>, %185, %cst_107 [1] : vector<8x8xf32> to vector<8xf32>
    %187 = vector.shape_cast %186 : vector<8xf32> to vector<8x1xf32>
    %188 = vector.broadcast %187 : vector<8x1xf32> to vector<8x8xf32>
    %189 = arith.subf %185, %188 : vector<8x8xf32>
    %190 = math.exp %189 : vector<8x8xf32>
    %cst_108 = arith.constant dense<0.000000e+00> : vector<8xf32>
    %191 = vector.multi_reduction <add>, %190, %cst_108 [1] : vector<8x8xf32> to vector<8xf32>
    %192 = vector.shape_cast %191 : vector<8xf32> to vector<8x1xf32>
    %193 = vector.broadcast %192 : vector<8x1xf32> to vector<8x8xf32>
    %194 = arith.divf %190, %193 : vector<8x8xf32>
    %cst_109 = arith.constant 0.353553385 : f32
    %195 = vector.broadcast %cst_109 : f32 to vector<8x8xf32>
    %196 = arith.mulf %194, %195 : vector<8x8xf32>
    %cst_110 = arith.constant dense<0.000000e+00> : vector<2x8xf32>
    %197 = tpu.matmul %184, %196, %cst_110 {dimension_numbers = #tpu.dot_dimension_numbers<[1], [0], [0], [1], [0, 0, 1, 1], [], []>} : vector<2x8xf32>, vector<8x8xf32>, vector<2x8xf32> -> vector<2x8xf32>
    %c3_111 = arith.constant 3 : index
    %c0_112 = arith.constant 0 : index
    %c0_113 = arith.constant 0 : index
    %198 = vector.load %arg10[%c3_111, %c0_112, %c0_113] : memref<4x8x48xf32, #tpu.memory_space<vmem>>, vector<1x8x48xf32>
    %199 = vector.shape_cast %198 : vector<1x8x48xf32> to vector<8x48xf32>
    %cst_114 = arith.constant dense<0.000000e+00> : vector<2x48xf32>
    %200 = tpu.matmul %197, %199, %cst_114 {dimension_numbers = #tpu.dot_dimension_numbers<[1], [0], [0], [1], [0, 0, 1, 1], [], []>} : vector<2x8xf32>, vector<8x48xf32>, vector<2x48xf32> -> vector<2x48xf32>
    %c3_115 = arith.constant 3 : index
    %c0_116 = arith.constant 0 : index
    %c0_117 = arith.constant 0 : index
    %201 = vector.load %arg11[%c3_115, %c0_116, %c0_117] : memref<4x1x48xf32, #tpu.memory_space<vmem>>, vector<1x1x48xf32>
    %202 = vector.shape_cast %201 : vector<1x1x48xf32> to vector<1x48xf32>
    %203 = vector.broadcast %202 : vector<1x48xf32> to vector<2x48xf32>
    %204 = arith.addf %200, %203 : vector<2x48xf32>
    %c0_118 = arith.constant 0 : index
    %c0_119 = arith.constant 0 : index
    %205 = vector.load %arg12[%c0_118, %c0_119] : memref<48x10xf32, #tpu.memory_space<vmem>>, vector<48x10xf32>
    %cst_120 = arith.constant dense<0.000000e+00> : vector<2x10xf32>
    %206 = tpu.matmul %204, %205, %cst_120 {dimension_numbers = #tpu.dot_dimension_numbers<[1], [0], [0], [1], [0, 0, 1, 1], [], []>} : vector<2x48xf32>, vector<48x10xf32>, vector<2x10xf32> -> vector<2x10xf32>
    %c0_121 = arith.constant 0 : index
    %c0_122 = arith.constant 0 : index
    %207 = vector.load %arg13[%c0_121, %c0_122] : memref<1x10xf32, #tpu.memory_space<vmem>>, vector<1x10xf32>
    %208 = vector.broadcast %207 : vector<1x10xf32> to vector<2x10xf32>
    %209 = arith.addf %206, %208 : vector<2x10xf32>
    %c0_123 = arith.constant 0 : index
    %c0_124 = arith.constant 0 : index
    %210 = vector.load %arg14[%c0_123, %c0_124] : memref<2x10xf32, #tpu.memory_space<vmem>>, vector<2x10xf32>
    tpu.vector_store %arg14[%c0_123, %c0_124], %209 {strides = array<i32>} : memref<2x10xf32, #tpu.memory_space<vmem>>, vector<2x10xf32>,
    return
  }
  func.func @transform_0(%arg0: i32) -> (i32, i32) {
    %c0_i32 = arith.constant 0 : i32
    %c0_i32_0 = arith.constant 0 : i32
    %c0_i32_1 = arith.constant 0 : i32
    return %c0_i32, %c0_i32_0 : i32, i32
  }
  func.func @transform_1(%arg0: i32) -> (i32, i32) {
    %c0_i32 = arith.constant 0 : i32
    %c0_i32_0 = arith.constant 0 : i32
    %c0_i32_1 = arith.constant 0 : i32
    return %c0_i32, %c0_i32_0 : i32, i32
  }
  func.func @transform_2(%arg0: i32) -> (i32, i32) {
    %c0_i32 = arith.constant 0 : i32
    %c0_i32_0 = arith.constant 0 : i32
    %c0_i32_1 = arith.constant 0 : i32
    return %c0_i32, %c0_i32_0 : i32, i32
  }
  func.func @transform_3(%arg0: i32) -> (i32, i32) {
    %c0_i32 = arith.constant 0 : i32
    %c0_i32_0 = arith.constant 0 : i32
    %c0_i32_1 = arith.constant 0 : i32
    return %c0_i32, %c0_i32_0 : i32, i32
  }
  func.func @transform_4(%arg0: i32) -> (i32, i32) {
    %c0_i32 = arith.constant 0 : i32
    %c0_i32_0 = arith.constant 0 : i32
    %c0_i32_1 = arith.constant 0 : i32
    return %c0_i32, %c0_i32_0 : i32, i32
  }
  func.func @transform_5(%arg0: i32) -> (i32, i32) {
    %c0_i32 = arith.constant 0 : i32
    %c0_i32_0 = arith.constant 0 : i32
    %c0_i32_1 = arith.constant 0 : i32
    return %c0_i32, %c0_i32_0 : i32, i32
  }
  func.func @transform_6(%arg0: i32) -> (i32, i32) {
    %c0_i32 = arith.constant 0 : i32
    %c0_i32_0 = arith.constant 0 : i32
    %c0_i32_1 = arith.constant 0 : i32
    return %c0_i32, %c0_i32_0 : i32, i32
  }
  func.func @transform_7(%arg0: i32) -> (i32, i32, i32) {
    %c0_i32 = arith.constant 0 : i32
    %c0_i32_0 = arith.constant 0 : i32
    %c0_i32_1 = arith.constant 0 : i32
    %c0_i32_2 = arith.constant 0 : i32
    return %c0_i32, %c0_i32_0, %c0_i32_1 : i32, i32, i32
  }
  func.func @transform_8(%arg0: i32) -> (i32, i32, i32) {
    %c0_i32 = arith.constant 0 : i32
    %c0_i32_0 = arith.constant 0 : i32
    %c0_i32_1 = arith.constant 0 : i32
    %c0_i32_2 = arith.constant 0 : i32
    return %c0_i32, %c0_i32_0, %c0_i32_1 : i32, i32, i32
  }
  func.func @transform_9(%arg0: i32) -> (i32, i32, i32) {
    %c0_i32 = arith.constant 0 : i32
    %c0_i32_0 = arith.constant 0 : i32
    %c0_i32_1 = arith.constant 0 : i32
    %c0_i32_2 = arith.constant 0 : i32
    return %c0_i32, %c0_i32_0, %c0_i32_1 : i32, i32, i32
  }
  func.func @transform_10(%arg0: i32) -> (i32, i32, i32) {
    %c0_i32 = arith.constant 0 : i32
    %c0_i32_0 = arith.constant 0 : i32
    %c0_i32_1 = arith.constant 0 : i32
    %c0_i32_2 = arith.constant 0 : i32
    return %c0_i32, %c0_i32_0, %c0_i32_1 : i32, i32, i32
  }
  func.func @transform_11(%arg0: i32) -> (i32, i32) {
    %c0_i32 = arith.constant 0 : i32
    %c0_i32_0 = arith.constant 0 : i32
    %c0_i32_1 = arith.constant 0 : i32
    return %c0_i32, %c0_i32_0 : i32, i32
  }
  func.func @transform_12(%arg0: i32) -> (i32, i32) {
    %c0_i32 = arith.constant 0 : i32
    %c0_i32_0 = arith.constant 0 : i32
    %c0_i32_1 = arith.constant 0 : i32
    return %c0_i32, %c0_i32_0 : i32, i32
  }
  func.func @transform_13(%arg0: i32) -> (i32, i32) {
    %c0_i32 = arith.constant 0 : i32
    %c0_i32_0 = arith.constant 0 : i32
    %c0_i32_1 = arith.constant 0 : i32
    return %c0_i32, %c0_i32_0 : i32, i32
  }
}

</mosaic_0001>

<llo_original>
// kernel: transformer_forward.1
$region0: #{transformer_forward.1}
  #allocation0 [shape = 'u32[]', space=smem, size = 0x4, offset = 0x4, fixed_abs, tag = 'smem constant byte address 0x4 - core index']
  #allocation1 [shape = 'u32[72,128]{1,0:T(1,128)}', space=vmem, size = 0x9000, scoped, tag = 'internal scratch']
  #allocation2 [shape = 'f32[552,16]{1,0:T(8,128)}', space=vmem, size = 0x45000, scoped, tag = 'scratch operand']
  #allocation3 [shape = 'f32[552,32]{1,0:T(8,128)}', space=vmem, size = 0x45000, scoped, tag = 'scratch operand']
  %s0 = inlined_call_operand.vmem [shape: f32[552,3], index: 0, kind: input, shape index: {}]
  %s1 = inlined_call_operand.vmem [shape: f32[27,16], index: 1, kind: input, shape index: {}]
  %s2 = inlined_call_operand.vmem [shape: f32[1,16], index: 2, kind: input, shape index: {}]
  %s3 = inlined_call_operand.vmem [shape: f32[144,32], index: 3, kind: input, shape index: {}]
  %s4 = inlined_call_operand.vmem [shape: f32[1,32], index: 4, kind: input, shape index: {}]
  %s5 = inlined_call_operand.vmem [shape: f32[288,48], index: 5, kind: input, shape index: {}]
  %s6 = inlined_call_operand.vmem [shape: f32[1,48], index: 6, kind: input, shape index: {}]
  %s7 = inlined_call_operand.vmem [shape: f32[4,48,24], index: 7, kind: input, shape index: {}]
  %s8 = inlined_call_operand.vmem [shape: f32[4,1,24], index: 8, kind: input, shape index: {}]
  %s9 = inlined_call_operand.vmem [shape: f32[4,8,48], index: 9, kind: input, shape index: {}]
  %s10 = inlined_call_operand.vmem [shape: f32[4,1,48], index: 10, kind: input, shape index: {}]
  %s11 = inlined_call_operand.vmem [shape: f32[48,10], index: 11, kind: input, shape index: {}]
  %s12 = inlined_call_operand.vmem [shape: f32[1,10], index: 12, kind: input, shape index: {}]
  %s13 = inlined_call_operand.hbm [shape: f32[2,10], index: 13, kind: output, shape index: {}]
  %s14 = sld [smem:[#allocation0]]
  $region62: #{transformer_forward.1} parent=0
    _
  %s16 = ssub.s32 1, %s14
  %s17 = scalar_select 0, %s16, %s14
  $region1: #{transformer_forward.1} parent=0
    #allocation4 [shape = 'u8[1024]{0}', space=vmem, size = 0x400, scoped, tag = 'output window, operand 0, single buffered']
    #allocation5 [shape = 's32[1]{0}', space=sflag, size = 0x4, scoped, tag = 'scoped memory for transformer_forward.1']
    %18 = vsyncpa [#allocation5], 0
    // Predicated region
    $region2: #{transformer_forward.1} parent=1 // pred_check
      _
    $region3: #{transformer_forward.1} parent=1 // pred_check_branch
      %20 = sbr.rel (0) target = $region5
    $region4: #{transformer_forward.1} parent=1 // pred_region
      _
    $region5: #{transformer_forward.1} parent=1 // pred_fallthru
      _
    // Predicated region
    $region6: #{transformer_forward.1} parent=1 // pred_check
      _
    $region7: #{transformer_forward.1} parent=1 // pred_check_branch
      %22 = sbr.rel (0) target = $region9
    $region8: #{transformer_forward.1} parent=1 // pred_region
      _
    $region9: #{transformer_forward.1} parent=1 // pred_fallthru
      _
    // Predicated region
    $region10: #{transformer_forward.1} parent=1 // pred_check
      _
    $region11: #{transformer_forward.1} parent=1 // pred_check_branch
      %24 = sbr.rel (0) target = $region13
    $region12: #{transformer_forward.1} parent=1 // pred_region
      _
    $region13: #{transformer_forward.1} parent=1 // pred_fallthru
      _
    // Predicated region
    $region14: #{transformer_forward.1} parent=1 // pred_check
      _
    $region15: #{transformer_forward.1} parent=1 // pred_check_branch
      %26 = sbr.rel (0) target = $region17
    $region16: #{transformer_forward.1} parent=1 // pred_region
      _
    $region17: #{transformer_forward.1} parent=1 // pred_fallthru
      _
    // Predicated region
    $region18: #{transformer_forward.1} parent=1 // pred_check
      _
    $region19: #{transformer_forward.1} parent=1 // pred_check_branch
      %28 = sbr.rel (0) target = $region21
    $region20: #{transformer_forward.1} parent=1 // pred_region
      _
    $region21: #{transformer_forward.1} parent=1 // pred_fallthru
      _
    // Predicated region
    $region22: #{transformer_forward.1} parent=1 // pred_check
      _
    $region23: #{transformer_forward.1} parent=1 // pred_check_branch
      %30 = sbr.rel (0) target = $region25
    $region24: #{transformer_forward.1} parent=1 // pred_region
      _
    $region25: #{transformer_forward.1} parent=1 // pred_fallthru
      _
    // Predicated region
    $region26: #{transformer_forward.1} parent=1 // pred_check
      _
    $region27: #{transformer_forward.1} parent=1 // pred_check_branch
      %32 = sbr.rel (0) target = $region29
    $region28: #{transformer_forward.1} parent=1 // pred_region
      _
    $region29: #{transformer_forward.1} parent=1 // pred_fallthru
      _
    // Predicated region
    $region30: #{transformer_forward.1} parent=1 // pred_check
      _
    $region31: #{transformer_forward.1} parent=1 // pred_check_branch
      %34 = sbr.rel (0) target = $region33
    $region32: #{transformer_forward.1} parent=1 // pred_region
      _
    $region33: #{transformer_forward.1} parent=1 // pred_fallthru
      _
    // Predicated region
    $region34: #{transformer_forward.1} parent=1 // pred_check
      _
    $region35: #{transformer_forward.1} parent=1 // pred_check_branch
      %36 = sbr.rel (0) target = $region37
    $region36: #{transformer_forward.1} parent=1 // pred_region
      _
    $region37: #{transformer_forward.1} parent=1 // pred_fallthru
      _
    // Predicated region
    $region38: #{transformer_forward.1} parent=1 // pred_check
      _
    $region39: #{transformer_forward.1} parent=1 // pred_check_branch
      %38 = sbr.rel (0) target = $region41
    $region40: #{transformer_forward.1} parent=1 // pred_region
      _
    $region41: #{transformer_forward.1} parent=1 // pred_fallthru
      _
    // Predicated region
    $region42: #{transformer_forward.1} parent=1 // pred_check
      _
    $region43: #{transformer_forward.1} parent=1 // pred_check_branch
      %40 = sbr.rel (0) target = $region45
    $region44: #{transformer_forward.1} parent=1 // pred_region
      _
    $region45: #{transformer_forward.1} parent=1 // pred_fallthru
      _
    // Predicated region
    $region46: #{transformer_forward.1} parent=1 // pred_check
      _
    $region47: #{transformer_forward.1} parent=1 // pred_check_branch
      %42 = sbr.rel (0) target = $region49
    $region48: #{transformer_forward.1} parent=1 // pred_region
      _
    $region49: #{transformer_forward.1} parent=1 // pred_fallthru
      _
    // Predicated region
    $region50: #{transformer_forward.1} parent=1 // pred_check
      _
    $region51: #{transformer_forward.1} parent=1 // pred_check_branch
      %44 = sbr.rel (0) target = $region53
    $region52: #{transformer_forward.1} parent=1 // pred_region
      _
    $region53: #{transformer_forward.1} parent=1 // pred_fallthru
      _
    %v45 = vld [vmem:[%s0] sm:$0xff]
    %v46 = vld [vmem:[%s0 + $0x8] sm:$0xff]
    %v47 = vld [vmem:[%s0 + $0x10] sm:$0xff]
    %v48 = vld [vmem:[%s0 + $0x18] sm:$0xff]
    %v49 = vld [vmem:[%s0 + $0x20] sm:$0xff]
    %v50 = vld [vmem:[%s0 + $0x28] sm:$0xff]
    %v51 = vld [vmem:[%s0 + $0x30] sm:$0xff]
    %v52 = vld [vmem:[%s0 + $0x38] sm:$0xff]
    %v53 = vld [vmem:[%s0 + $0x40] sm:$0xff]
    %v54 = vld [vmem:[%s0 + $0x48] sm:$0xff]
    %v55 = vld [vmem:[%s0 + $0x50] sm:$0xff]
    %v56 = vld [vmem:[%s0 + $0x58] sm:$0xff]
    %v57 = vld [vmem:[%s0 + $0x60] sm:$0xff]
    %v58 = vld [vmem:[%s0 + $0x68] sm:$0xff]
    %v59 = vld [vmem:[%s0 + $0x70] sm:$0xff]
    %v60 = vld [vmem:[%s0 + $0x78] sm:$0xff]
    %v61 = vld [vmem:[%s0 + $0x80] sm:$0xff]
    %v62 = vld [vmem:[%s0 + $0x88] sm:$0xff]
    %v63 = vld [vmem:[%s0 + $0x90] sm:$0xff]
    %v64 = vld [vmem:[%s0 + $0x98] sm:$0xff]
    %v65 = vld [vmem:[%s0 + $0xa0] sm:$0xff]
    %v66 = vld [vmem:[%s0 + $0xa8] sm:$0xff]
    %v67 = vld [vmem:[%s0 + $0xb0] sm:$0xff]
    %v68 = vld [vmem:[%s0 + $0xb8] sm:$0xff]
    %v69 = vld [vmem:[%s0 + $0xc0] sm:$0xff]
    %v70 = vld [vmem:[%s0 + $0xc8] sm:$0xff]
    %v71 = vld [vmem:[%s0 + $0xd0] sm:$0xff]
    %v72 = vld [vmem:[%s0 + $0xd8] sm:$0xff]
    %v73 = vld [vmem:[%s0 + $0xe0] sm:$0xff]
    %v74 = vld [vmem:[%s0 + $0xe8] sm:$0xff]
    %v75 = vld [vmem:[%s0 + $0xf0] sm:$0xff]
    %v76 = vld [vmem:[%s0 + $0xf8] sm:$0xff]
    %v77 = vld [vmem:[%s0 + $0x100] sm:$0xff]
    %v78 = vld [vmem:[%s0 + $0x108] sm:$0xff]
    %v79 = vld [vmem:[%s0 + $0x110] sm:$0xff]
    %v80 = vld [vmem:[%s0 + $0x118] sm:$0xff]
    %v81 = vld [vmem:[%s0 + $0x120] sm:$0xff]
    %v82 = vld [vmem:[%s0 + $0x128] sm:$0xff]
    %v83 = vld [vmem:[%s0 + $0x130] sm:$0xff]
    %v84 = vld [vmem:[%s0 + $0x138] sm:$0xff]
    %v85 = vld [vmem:[%s0 + $0x140] sm:$0xff]
    %v86 = vld [vmem:[%s0 + $0x148] sm:$0xff]
    %v87 = vld [vmem:[%s0 + $0x150] sm:$0xff]
    %v88 = vld [vmem:[%s0 + $0x158] sm:$0xff]
    %v89 = vld [vmem:[%s0 + $0x160] sm:$0xff]
    %v90 = vld [vmem:[%s0 + $0x168] sm:$0xff]
    %v91 = vld [vmem:[%s0 + $0x170] sm:$0xff]
    %v92 = vld [vmem:[%s0 + $0x178] sm:$0xff]
    %v93 = vld [vmem:[%s0 + $0x180] sm:$0xff]
    %v94 = vld [vmem:[%s0 + $0x188] sm:$0xff]
    %v95 = vld [vmem:[%s0 + $0x190] sm:$0xff]
    %v96 = vld [vmem:[%s0 + $0x198] sm:$0xff]
    %v97 = vld [vmem:[%s0 + $0x1a0] sm:$0xff]
    %v98 = vld [vmem:[%s0 + $0x1a8] sm:$0xff]
    %v99 = vld [vmem:[%s0 + $0x1b0] sm:$0xff]
    %v100 = vld [vmem:[%s0 + $0x1b8] sm:$0xff]
    %v101 = vld [vmem:[%s0 + $0x1c0] sm:$0xff]
    %v102 = vld [vmem:[%s0 + $0x1c8] sm:$0xff]
    %v103 = vld [vmem:[%s0 + $0x1d0] sm:$0xff]
    %v104 = vld [vmem:[%s0 + $0x1d8] sm:$0xff]
    %v105 = vld [vmem:[%s0 + $0x1e0] sm:$0xff]
    %v106 = vld [vmem:[%s0 + $0x1e8] sm:$0xff]
    %v107 = vld [vmem:[%s0 + $0x1f0] sm:$0xff]
    %v108 = vld [vmem:[%s0 + $0x1f8] sm:$0xff]
    %v109 = vld [vmem:[%s0 + $0x200] sm:$0xff]
    %v110 = vld [vmem:[%s0 + $0x208] sm:$0xff]
    %v111 = vld [vmem:[%s0 + $0x210] sm:$0xff]
    %v112 = vld [vmem:[%s0 + $0x218] sm:$0xff]
    %v113 = vld [vmem:[%s0 + $0x1] sm:$0xff]
    %v114 = vld [vmem:[%s0 + $0x9] sm:$0xff]
    %v115 = vld [vmem:[%s0 + $0x11] sm:$0xff]
    %v116 = vld [vmem:[%s0 + $0x19] sm:$0xff]
    %v117 = vld [vmem:[%s0 + $0x21] sm:$0xff]
    %v118 = vld [vmem:[%s0 + $0x29] sm:$0xff]
    %v119 = vld [vmem:[%s0 + $0x31] sm:$0xff]
    %v120 = vld [vmem:[%s0 + $0x39] sm:$0xff]
    %v121 = vld [vmem:[%s0 + $0x41] sm:$0xff]
    %v122 = vld [vmem:[%s0 + $0x49] sm:$0xff]
    %v123 = vld [vmem:[%s0 + $0x51] sm:$0xff]
    %v124 = vld [vmem:[%s0 + $0x59] sm:$0xff]
    %v125 = vld [vmem:[%s0 + $0x61] sm:$0xff]
    %v126 = vld [vmem:[%s0 + $0x69] sm:$0xff]
    %v127 = vld [vmem:[%s0 + $0x71] sm:$0xff]
    %v128 = vld [vmem:[%s0 + $0x79] sm:$0xff]
    %v129 = vld [vmem:[%s0 + $0x81] sm:$0xff]
    %v130 = vld [vmem:[%s0 + $0x89] sm:$0xff]
    %v131 = vld [vmem:[%s0 + $0x91] sm:$0xff]
    %v132 = vld [vmem:[%s0 + $0x99] sm:$0xff]
    %v133 = vld [vmem:[%s0 + $0xa1] sm:$0xff]
    %v134 = vld [vmem:[%s0 + $0xa9] sm:$0xff]
    %v135 = vld [vmem:[%s0 + $0xb1] sm:$0xff]
    %v136 = vld [vmem:[%s0 + $0xb9] sm:$0xff]
    %v137 = vld [vmem:[%s0 + $0xc1] sm:$0xff]
    %v138 = vld [vmem:[%s0 + $0xc9] sm:$0xff]
    %v139 = vld [vmem:[%s0 + $0xd1] sm:$0xff]
    %v140 = vld [vmem:[%s0 + $0xd9] sm:$0xff]
    %v141 = vld [vmem:[%s0 + $0xe1] sm:$0xff]
    %v142 = vld [vmem:[%s0 + $0xe9] sm:$0xff]
    %v143 = vld [vmem:[%s0 + $0xf1] sm:$0xff]
    %v144 = vld [vmem:[%s0 + $0xf9] sm:$0xff]
    %v145 = vld [vmem:[%s0 + $0x101] sm:$0xff]
    %v146 = vld [vmem:[%s0 + $0x109] sm:$0xff]
    %v147 = vld [vmem:[%s0 + $0x111] sm:$0xff]
    %v148 = vld [vmem:[%s0 + $0x119] sm:$0xff]
    %v149 = vld [vmem:[%s0 + $0x121] sm:$0xff]
    %v150 = vld [vmem:[%s0 + $0x129] sm:$0xff]
    %v151 = vld [vmem:[%s0 + $0x131] sm:$0xff]
    %v152 = vld [vmem:[%s0 + $0x139] sm:$0xff]
    %v153 = vld [vmem:[%s0 + $0x141] sm:$0xff]
    %v154 = vld [vmem:[%s0 + $0x149] sm:$0xff]
    %v155 = vld [vmem:[%s0 + $0x151] sm:$0xff]
    %v156 = vld [vmem:[%s0 + $0x159] sm:$0xff]
    %v157 = vld [vmem:[%s0 + $0x161] sm:$0xff]
    %v158 = vld [vmem:[%s0 + $0x169] sm:$0xff]
    %v159 = vld [vmem:[%s0 + $0x171] sm:$0xff]
    %v160 = vld [vmem:[%s0 + $0x179] sm:$0xff]
    %v161 = vld [vmem:[%s0 + $0x181] sm:$0xff]
    %v162 = vld [vmem:[%s0 + $0x189] sm:$0xff]
    %v163 = vld [vmem:[%s0 + $0x191] sm:$0xff]
    %v164 = vld [vmem:[%s0 + $0x199] sm:$0xff]
    %v165 = vld [vmem:[%s0 + $0x1a1] sm:$0xff]
    %v166 = vld [vmem:[%s0 + $0x1a9] sm:$0xff]
    %v167 = vld [vmem:[%s0 + $0x1b1] sm:$0xff]
    %v168 = vld [vmem:[%s0 + $0x1b9] sm:$0xff]
    %v169 = vld [vmem:[%s0 + $0x1c1] sm:$0xff]
    %v170 = vld [vmem:[%s0 + $0x1c9] sm:$0xff]
    %v171 = vld [vmem:[%s0 + $0x1d1] sm:$0xff]
    %v172 = vld [vmem:[%s0 + $0x1d9] sm:$0xff]
    %v173 = vld [vmem:[%s0 + $0x1e1] sm:$0xff]
    %v174 = vld [vmem:[%s0 + $0x1e9] sm:$0xff]
    %v175 = vld [vmem:[%s0 + $0x1f1] sm:$0xff]
    %v176 = vld [vmem:[%s0 + $0x1f9] sm:$0xff]
    %v177 = vld [vmem:[%s0 + $0x201] sm:$0xff]
    %v178 = vld [vmem:[%s0 + $0x209] sm:$0xff]
    %v179 = vld [vmem:[%s0 + $0x211] sm:$0xff]
    %v180 = vld [vmem:[%s0 + $0x219] sm:$0xff]
    %v181 = vld [vmem:[%s0 + $0x2] sm:$0xff]
    %v182 = vld [vmem:[%s0 + $0xa] sm:$0xff]
    %v183 = vld [vmem:[%s0 + $0x12] sm:$0xff]
    %v184 = vld [vmem:[%s0 + $0x1a] sm:$0xff]
    %v185 = vld [vmem:[%s0 + $0x22] sm:$0xff]
    %v186 = vld [vmem:[%s0 + $0x2a] sm:$0xff]
    %v187 = vld [vmem:[%s0 + $0x32] sm:$0xff]
    %v188 = vld [vmem:[%s0 + $0x3a] sm:$0xff]
    %v189 = vld [vmem:[%s0 + $0x42] sm:$0xff]
    %v190 = vld [vmem:[%s0 + $0x4a] sm:$0xff]
    %v191 = vld [vmem:[%s0 + $0x52] sm:$0xff]
    %v192 = vld [vmem:[%s0 + $0x5a] sm:$0xff]
    %v193 = vld [vmem:[%s0 + $0x62] sm:$0xff]
    %v194 = vld [vmem:[%s0 + $0x6a] sm:$0xff]
    %v195 = vld [vmem:[%s0 + $0x72] sm:$0xff]
    %v196 = vld [vmem:[%s0 + $0x7a] sm:$0xff]
    %v197 = vld [vmem:[%s0 + $0x82] sm:$0xff]
    %v198 = vld [vmem:[%s0 + $0x8a] sm:$0xff]
    %v199 = vld [vmem:[%s0 + $0x92] sm:$0xff]
    %v200 = vld [vmem:[%s0 + $0x9a] sm:$0xff]
    %v201 = vld [vmem:[%s0 + $0xa2] sm:$0xff]
    %v202 = vld [vmem:[%s0 + $0xaa] sm:$0xff]
    %v203 = vld [vmem:[%s0 + $0xb2] sm:$0xff]
    %v204 = vld [vmem:[%s0 + $0xba] sm:$0xff]
    %v205 = vld [vmem:[%s0 + $0xc2] sm:$0xff]
    %v206 = vld [vmem:[%s0 + $0xca] sm:$0xff]
    %v207 = vld [vmem:[%s0 + $0xd2] sm:$0xff]
    %v208 = vld [vmem:[%s0 + $0xda] sm:$0xff]
    %v209 = vld [vmem:[%s0 + $0xe2] sm:$0xff]
    %v210 = vld [vmem:[%s0 + $0xea] sm:$0xff]
    %v211 = vld [vmem:[%s0 + $0xf2] sm:$0xff]
    %v212 = vld [vmem:[%s0 + $0xfa] sm:$0xff]
    %v213 = vld [vmem:[%s0 + $0x102] sm:$0xff]
    %v214 = vld [vmem:[%s0 + $0x10a] sm:$0xff]
    %v215 = vld [vmem:[%s0 + $0x112] sm:$0xff]
    %v216 = vld [vmem:[%s0 + $0x11a] sm:$0xff]
    %v217 = vld [vmem:[%s0 + $0x122] sm:$0xff]
    %v218 = vld [vmem:[%s0 + $0x12a] sm:$0xff]
    %v219 = vld [vmem:[%s0 + $0x132] sm:$0xff]
    %v220 = vld [vmem:[%s0 + $0x13a] sm:$0xff]
    %v221 = vld [vmem:[%s0 + $0x142] sm:$0xff]
    %v222 = vld [vmem:[%s0 + $0x14a] sm:$0xff]
    %v223 = vld [vmem:[%s0 + $0x152] sm:$0xff]
    %v224 = vld [vmem:[%s0 + $0x15a] sm:$0xff]
    %v225 = vld [vmem:[%s0 + $0x162] sm:$0xff]
    %v226 = vld [vmem:[%s0 + $0x16a] sm:$0xff]
    %v227 = vld [vmem:[%s0 + $0x172] sm:$0xff]
    %v228 = vld [vmem:[%s0 + $0x17a] sm:$0xff]
    %v229 = vld [vmem:[%s0 + $0x182] sm:$0xff]
    %v230 = vld [vmem:[%s0 + $0x18a] sm:$0xff]
    %v231 = vld [vmem:[%s0 + $0x192] sm:$0xff]
    %v232 = vld [vmem:[%s0 + $0x19a] sm:$0xff]
    %v233 = vld [vmem:[%s0 + $0x1a2] sm:$0xff]
    %v234 = vld [vmem:[%s0 + $0x1aa] sm:$0xff]
    %v235 = vld [vmem:[%s0 + $0x1b2] sm:$0xff]
    %v236 = vld [vmem:[%s0 + $0x1ba] sm:$0xff]
    %v237 = vld [vmem:[%s0 + $0x1c2] sm:$0xff]
    %v238 = vld [vmem:[%s0 + $0x1ca] sm:$0xff]
    %v239 = vld [vmem:[%s0 + $0x1d2] sm:$0xff]
    %v240 = vld [vmem:[%s0 + $0x1da] sm:$0xff]
    %v241 = vld [vmem:[%s0 + $0x1e2] sm:$0xff]
    %v242 = vld [vmem:[%s0 + $0x1ea] sm:$0xff]
    %v243 = vld [vmem:[%s0 + $0x1f2] sm:$0xff]
    %v244 = vld [vmem:[%s0 + $0x1fa] sm:$0xff]
    %v245 = vld [vmem:[%s0 + $0x202] sm:$0xff]
    %v246 = vld [vmem:[%s0 + $0x20a] sm:$0xff]
    %v247 = vld [vmem:[%s0 + $0x212] sm:$0xff]
    %v248 = vld [vmem:[%s0 + $0x21a] sm:$0xff]
    %313 = vrot.lane.b32.xlu0 %v113, 3
    %v314 = vpop.permute.xlu0 %313
    %315 = vrot.lane.b32.xlu0 %v114, 3
    %v316 = vpop.permute.xlu0 %315
    %317 = vrot.lane.b32.xlu0 %v115, 3
    %v318 = vpop.permute.xlu0 %317
    %319 = vrot.lane.b32.xlu0 %v116, 3
    %v320 = vpop.permute.xlu0 %319
    %321 = vrot.lane.b32.xlu0 %v117, 3
    %v322 = vpop.permute.xlu0 %321
    %323 = vrot.lane.b32.xlu0 %v118, 3
    %v324 = vpop.permute.xlu0 %323
    %325 = vrot.lane.b32.xlu0 %v119, 3
    %v326 = vpop.permute.xlu0 %325
    %327 = vrot.lane.b32.xlu0 %v120, 3
    %v328 = vpop.permute.xlu0 %327
    %329 = vrot.lane.b32.xlu0 %v121, 3
    %v330 = vpop.permute.xlu0 %329
    %331 = vrot.lane.b32.xlu0 %v122, 3
    %v332 = vpop.permute.xlu0 %331
    %333 = vrot.lane.b32.xlu0 %v123, 3
    %v334 = vpop.permute.xlu0 %333
    %335 = vrot.lane.b32.xlu0 %v124, 3
    %v336 = vpop.permute.xlu0 %335
    %337 = vrot.lane.b32.xlu0 %v125, 3
    %v338 = vpop.permute.xlu0 %337
    %339 = vrot.lane.b32.xlu0 %v126, 3
    %v340 = vpop.permute.xlu0 %339
    %341 = vrot.lane.b32.xlu0 %v127, 3
    %v342 = vpop.permute.xlu0 %341
    %343 = vrot.lane.b32.xlu0 %v128, 3
    %v344 = vpop.permute.xlu0 %343
    %345 = vrot.lane.b32.xlu0 %v129, 3
    %v346 = vpop.permute.xlu0 %345
    %347 = vrot.lane.b32.xlu0 %v130, 3
    %v348 = vpop.permute.xlu0 %347
    %349 = vrot.lane.b32.xlu0 %v131, 3
    %v350 = vpop.permute.xlu0 %349
    %351 = vrot.lane.b32.xlu0 %v132, 3
    %v352 = vpop.permute.xlu0 %351
    %353 = vrot.lane.b32.xlu0 %v133, 3
    %v354 = vpop.permute.xlu0 %353
    %355 = vrot.lane.b32.xlu0 %v134, 3
    %v356 = vpop.permute.xlu0 %355
    %357 = vrot.lane.b32.xlu0 %v135, 3
    %v358 = vpop.permute.xlu0 %357
    %359 = vrot.lane.b32.xlu0 %v136, 3
    %v360 = vpop.permute.xlu0 %359
    %361 = vrot.lane.b32.xlu0 %v137, 3
    %v362 = vpop.permute.xlu0 %361
    %363 = vrot.lane.b32.xlu0 %v138, 3
    %v364 = vpop.permute.xlu0 %363
    %365 = vrot.lane.b32.xlu0 %v139, 3
    %v366 = vpop.permute.xlu0 %365
    %367 = vrot.lane.b32.xlu0 %v140, 3
    %v368 = vpop.permute.xlu0 %367
    %369 = vrot.lane.b32.xlu0 %v141, 3
    %v370 = vpop.permute.xlu0 %369
    %371 = vrot.lane.b32.xlu0 %v142, 3
    %v372 = vpop.permute.xlu0 %371
    %373 = vrot.lane.b32.xlu0 %v143, 3
    %v374 = vpop.permute.xlu0 %373
    %375 = vrot.lane.b32.xlu0 %v144, 3
    %v376 = vpop.permute.xlu0 %375
    %377 = vrot.lane.b32.xlu0 %v145, 3
    %v378 = vpop.permute.xlu0 %377
    %379 = vrot.lane.b32.xlu0 %v146, 3
    %v380 = vpop.permute.xlu0 %379
    %381 = vrot.lane.b32.xlu0 %v147, 3
    %v382 = vpop.permute.xlu0 %381
    %383 = vrot.lane.b32.xlu0 %v148, 3
    %v384 = vpop.permute.xlu0 %383
    %385 = vrot.lane.b32.xlu0 %v149, 3
    %v386 = vpop.permute.xlu0 %385
    %387 = vrot.lane.b32.xlu0 %v150, 3
    %v388 = vpop.permute.xlu0 %387
    %389 = vrot.lane.b32.xlu0 %v151, 3
    %v390 = vpop.permute.xlu0 %389
    %391 = vrot.lane.b32.xlu0 %v152, 3
    %v392 = vpop.permute.xlu0 %391
    %393 = vrot.lane.b32.xlu0 %v153, 3
    %v394 = vpop.permute.xlu0 %393
    %395 = vrot.lane.b32.xlu0 %v154, 3
    %v396 = vpop.permute.xlu0 %395
    %397 = vrot.lane.b32.xlu0 %v155, 3
    %v398 = vpop.permute.xlu0 %397
    %399 = vrot.lane.b32.xlu0 %v156, 3
    %v400 = vpop.permute.xlu0 %399
    %401 = vrot.lane.b32.xlu0 %v157, 3
    %v402 = vpop.permute.xlu0 %401
    %403 = vrot.lane.b32.xlu0 %v158, 3
    %v404 = vpop.permute.xlu0 %403
    %405 = vrot.lane.b32.xlu0 %v159, 3
    %v406 = vpop.permute.xlu0 %405
    %407 = vrot.lane.b32.xlu0 %v160, 3
    %v408 = vpop.permute.xlu0 %407
    %409 = vrot.lane.b32.xlu0 %v161, 3
    %v410 = vpop.permute.xlu0 %409
    %411 = vrot.lane.b32.xlu0 %v162, 3
    %v412 = vpop.permute.xlu0 %411
    %413 = vrot.lane.b32.xlu0 %v163, 3
    %v414 = vpop.permute.xlu0 %413
    %415 = vrot.lane.b32.xlu0 %v164, 3
    %v416 = vpop.permute.xlu0 %415
    %417 = vrot.lane.b32.xlu0 %v165, 3
    %v418 = vpop.permute.xlu0 %417
    %419 = vrot.lane.b32.xlu0 %v166, 3
    %v420 = vpop.permute.xlu0 %419
    %421 = vrot.lane.b32.xlu0 %v167, 3
    %v422 = vpop.permute.xlu0 %421
    %423 = vrot.lane.b32.xlu0 %v168, 3
    %v424 = vpop.permute.xlu0 %423
    %425 = vrot.lane.b32.xlu0 %v169, 3
    %v426 = vpop.permute.xlu0 %425
    %427 = vrot.lane.b32.xlu0 %v170, 3
    %v428 = vpop.permute.xlu0 %427
    %429 = vrot.lane.b32.xlu0 %v171, 3
    %v430 = vpop.permute.xlu0 %429
    %431 = vrot.lane.b32.xlu0 %v172, 3
    %v432 = vpop.permute.xlu0 %431
    %433 = vrot.lane.b32.xlu0 %v173, 3
    %v434 = vpop.permute.xlu0 %433
    %435 = vrot.lane.b32.xlu0 %v174, 3
    %v436 = vpop.permute.xlu0 %435
    %437 = vrot.lane.b32.xlu0 %v175, 3
    %v438 = vpop.permute.xlu0 %437
    %439 = vrot.lane.b32.xlu0 %v176, 3
    %v440 = vpop.permute.xlu0 %439
    %569 = vrot.lane.b32.xlu0 %v181, 6
    %v570 = vpop.permute.xlu0 %569
    %571 = vrot.lane.b32.xlu0 %v182, 6
    %v572 = vpop.permute.xlu0 %571
    %573 = vrot.lane.b32.xlu0 %v183, 6
    %v574 = vpop.permute.xlu0 %573
    %575 = vrot.lane.b32.xlu0 %v184, 6
    %v576 = vpop.permute.xlu0 %575
    %577 = vrot.lane.b32.xlu0 %v185, 6
    %v578 = vpop.permute.xlu0 %577
    %579 = vrot.lane.b32.xlu0 %v186, 6
    %v580 = vpop.permute.xlu0 %579
    %581 = vrot.lane.b32.xlu0 %v187, 6
    %v582 = vpop.permute.xlu0 %581
    %583 = vrot.lane.b32.xlu0 %v188, 6
    %v584 = vpop.permute.xlu0 %583
    %585 = vrot.lane.b32.xlu0 %v189, 6
    %v586 = vpop.permute.xlu0 %585
    %587 = vrot.lane.b32.xlu0 %v190, 6
    %v588 = vpop.permute.xlu0 %587
    %589 = vrot.lane.b32.xlu0 %v191, 6
    %v590 = vpop.permute.xlu0 %589
    %591 = vrot.lane.b32.xlu0 %v192, 6
    %v592 = vpop.permute.xlu0 %591
    %593 = vrot.lane.b32.xlu0 %v193, 6
    %v594 = vpop.permute.xlu0 %593
    %595 = vrot.lane.b32.xlu0 %v194, 6
    %v596 = vpop.permute.xlu0 %595
    %597 = vrot.lane.b32.xlu0 %v195, 6
    %v598 = vpop.permute.xlu0 %597
    %599 = vrot.lane.b32.xlu0 %v196, 6
    %v600 = vpop.permute.xlu0 %599
    %601 = vrot.lane.b32.xlu0 %v197, 6
    %v602 = vpop.permute.xlu0 %601
    %603 = vrot.lane.b32.xlu0 %v198, 6
    %v604 = vpop.permute.xlu0 %603
    %605 = vrot.lane.b32.xlu0 %v199, 6
    %v606 = vpop.permute.xlu0 %605
    %607 = vrot.lane.b32.xlu0 %v200, 6
    %v608 = vpop.permute.xlu0 %607
    %609 = vrot.lane.b32.xlu0 %v201, 6
    %v610 = vpop.permute.xlu0 %609
    %611 = vrot.lane.b32.xlu0 %v202, 6
    %v612 = vpop.permute.xlu0 %611
    %613 = vrot.lane.b32.xlu0 %v203, 6
    %v614 = vpop.permute.xlu0 %613
    %615 = vrot.lane.b32.xlu0 %v204, 6
    %v616 = vpop.permute.xlu0 %615
    %617 = vrot.lane.b32.xlu0 %v205, 6
    %v618 = vpop.permute.xlu0 %617
    %619 = vrot.lane.b32.xlu0 %v206, 6
    %v620 = vpop.permute.xlu0 %619
    %621 = vrot.lane.b32.xlu0 %v207, 6
    %v622 = vpop.permute.xlu0 %621
    %623 = vrot.lane.b32.xlu0 %v208, 6
    %v624 = vpop.permute.xlu0 %623
    %625 = vrot.lane.b32.xlu0 %v209, 6
    %v626 = vpop.permute.xlu0 %625
    %627 = vrot.lane.b32.xlu0 %v210, 6
    %v628 = vpop.permute.xlu0 %627
    %629 = vrot.lane.b32.xlu0 %v211, 6
    %v630 = vpop.permute.xlu0 %629
    %631 = vrot.lane.b32.xlu0 %v212, 6
    %v632 = vpop.permute.xlu0 %631
    %633 = vrot.lane.b32.xlu0 %v213, 6
    %v634 = vpop.permute.xlu0 %633
    %635 = vrot.lane.b32.xlu0 %v214, 6
    %v636 = vpop.permute.xlu0 %635
    %637 = vrot.lane.b32.xlu0 %v215, 6
    %v638 = vpop.permute.xlu0 %637
    %639 = vrot.lane.b32.xlu0 %v216, 6
    %v640 = vpop.permute.xlu0 %639
    %641 = vrot.lane.b32.xlu0 %v217, 6
    %v642 = vpop.permute.xlu0 %641
    %643 = vrot.lane.b32.xlu0 %v218, 6
    %v644 = vpop.permute.xlu0 %643
    %645 = vrot.lane.b32.xlu0 %v219, 6
    %v646 = vpop.permute.xlu0 %645
    %647 = vrot.lane.b32.xlu0 %v220, 6
    %v648 = vpop.permute.xlu0 %647
    %649 = vrot.lane.b32.xlu0 %v221, 6
    %v650 = vpop.permute.xlu0 %649
    %651 = vrot.lane.b32.xlu0 %v222, 6
    %v652 = vpop.permute.xlu0 %651
    %653 = vrot.lane.b32.xlu0 %v223, 6
    %v654 = vpop.permute.xlu0 %653
    %655 = vrot.lane.b32.xlu0 %v224, 6
    %v656 = vpop.permute.xlu0 %655
    %657 = vrot.lane.b32.xlu0 %v225, 6
    %v658 = vpop.permute.xlu0 %657
    %659 = vrot.lane.b32.xlu0 %v226, 6
    %v660 = vpop.permute.xlu0 %659
    %661 = vrot.lane.b32.xlu0 %v227, 6
    %v662 = vpop.permute.xlu0 %661
    %663 = vrot.lane.b32.xlu0 %v228, 6
    %v664 = vpop.permute.xlu0 %663
    %665 = vrot.lane.b32.xlu0 %v229, 6
    %v666 = vpop.permute.xlu0 %665
    %667 = vrot.lane.b32.xlu0 %v230, 6
    %v668 = vpop.permute.xlu0 %667
    %669 = vrot.lane.b32.xlu0 %v231, 6
    %v670 = vpop.permute.xlu0 %669
    %671 = vrot.lane.b32.xlu0 %v232, 6
    %v672 = vpop.permute.xlu0 %671
    %673 = vrot.lane.b32.xlu0 %v233, 6
    %v674 = vpop.permute.xlu0 %673
    %675 = vrot.lane.b32.xlu0 %v234, 6
    %v676 = vpop.permute.xlu0 %675
    %677 = vrot.lane.b32.xlu0 %v235, 6
    %v678 = vpop.permute.xlu0 %677
    %679 = vrot.lane.b32.xlu0 %v236, 6
    %v680 = vpop.permute.xlu0 %679
    %681 = vrot.lane.b32.xlu0 %v237, 6
    %v682 = vpop.permute.xlu0 %681
    %683 = vrot.lane.b32.xlu0 %v238, 6
    %v684 = vpop.permute.xlu0 %683
    %685 = vrot.lane.b32.xlu0 %v239, 6
    %v686 = vpop.permute.xlu0 %685
    %687 = vrot.lane.b32.xlu0 %v240, 6
    %v688 = vpop.permute.xlu0 %687
    %689 = vrot.lane.b32.xlu0 %v241, 6
    %v690 = vpop.permute.xlu0 %689
    %691 = vrot.lane.b32.xlu0 %v242, 6
    %v692 = vpop.permute.xlu0 %691
    %693 = vrot.lane.b32.xlu0 %v243, 6
    %v694 = vpop.permute.xlu0 %693
    %695 = vrot.lane.b32.xlu0 %v244, 6
    %v696 = vpop.permute.xlu0 %695
    %825 = vrot.lane.b32.xlu0 %v47, 9
    %v826 = vpop.permute.xlu0 %825
    %827 = vrot.lane.b32.xlu0 %v48, 9
    %v828 = vpop.permute.xlu0 %827
    %829 = vrot.lane.b32.xlu0 %v49, 9
    %v830 = vpop.permute.xlu0 %829
    %831 = vrot.lane.b32.xlu0 %v50, 9
    %v832 = vpop.permute.xlu0 %831
    %833 = vrot.lane.b32.xlu0 %v51, 9
    %v834 = vpop.permute.xlu0 %833
    %835 = vrot.lane.b32.xlu0 %v52, 9
    %v836 = vpop.permute.xlu0 %835
    %837 = vrot.lane.b32.xlu0 %v53, 9
    %v838 = vpop.permute.xlu0 %837
    %839 = vrot.lane.b32.xlu0 %v54, 9
    %v840 = vpop.permute.xlu0 %839
    %841 = vrot.lane.b32.xlu0 %v55, 9
    %v842 = vpop.permute.xlu0 %841
    %843 = vrot.lane.b32.xlu0 %v56, 9
    %v844 = vpop.permute.xlu0 %843
    %845 = vrot.lane.b32.xlu0 %v57, 9
    %v846 = vpop.permute.xlu0 %845
    %847 = vrot.lane.b32.xlu0 %v58, 9
    %v848 = vpop.permute.xlu0 %847
    %849 = vrot.lane.b32.xlu0 %v59, 9
    %v850 = vpop.permute.xlu0 %849
    %851 = vrot.lane.b32.xlu0 %v60, 9
    %v852 = vpop.permute.xlu0 %851
    %853 = vrot.lane.b32.xlu0 %v61, 9
    %v854 = vpop.permute.xlu0 %853
    %855 = vrot.lane.b32.xlu0 %v62, 9
    %v856 = vpop.permute.xlu0 %855
    %857 = vrot.lane.b32.xlu0 %v63, 9
    %v858 = vpop.permute.xlu0 %857
    %859 = vrot.lane.b32.xlu0 %v64, 9
    %v860 = vpop.permute.xlu0 %859
    %861 = vrot.lane.b32.xlu0 %v65, 9
    %v862 = vpop.permute.xlu0 %861
    %863 = vrot.lane.b32.xlu0 %v66, 9
    %v864 = vpop.permute.xlu0 %863
    %865 = vrot.lane.b32.xlu0 %v67, 9
    %v866 = vpop.permute.xlu0 %865
    %867 = vrot.lane.b32.xlu0 %v68, 9
    %v868 = vpop.permute.xlu0 %867
    %869 = vrot.lane.b32.xlu0 %v69, 9
    %v870 = vpop.permute.xlu0 %869
    %871 = vrot.lane.b32.xlu0 %v70, 9
    %v872 = vpop.permute.xlu0 %871
    %873 = vrot.lane.b32.xlu0 %v71, 9
    %v874 = vpop.permute.xlu0 %873
    %875 = vrot.lane.b32.xlu0 %v72, 9
    %v876 = vpop.permute.xlu0 %875
    %877 = vrot.lane.b32.xlu0 %v73, 9
    %v878 = vpop.permute.xlu0 %877
    %879 = vrot.lane.b32.xlu0 %v74, 9
    %v880 = vpop.permute.xlu0 %879
    %881 = vrot.lane.b32.xlu0 %v75, 9
    %v882 = vpop.permute.xlu0 %881
    %883 = vrot.lane.b32.xlu0 %v76, 9
    %v884 = vpop.permute.xlu0 %883
    %885 = vrot.lane.b32.xlu0 %v77, 9
    %v886 = vpop.permute.xlu0 %885
    %887 = vrot.lane.b32.xlu0 %v78, 9
    %v888 = vpop.permute.xlu0 %887
    %889 = vrot.lane.b32.xlu0 %v79, 9
    %v890 = vpop.permute.xlu0 %889
    %891 = vrot.lane.b32.xlu0 %v80, 9
    %v892 = vpop.permute.xlu0 %891
    %893 = vrot.lane.b32.xlu0 %v81, 9
    %v894 = vpop.permute.xlu0 %893
    %895 = vrot.lane.b32.xlu0 %v82, 9
    %v896 = vpop.permute.xlu0 %895
    %897 = vrot.lane.b32.xlu0 %v83, 9
    %v898 = vpop.permute.xlu0 %897
    %899 = vrot.lane.b32.xlu0 %v84, 9
    %v900 = vpop.permute.xlu0 %899
    %901 = vrot.lane.b32.xlu0 %v85, 9
    %v902 = vpop.permute.xlu0 %901
    %903 = vrot.lane.b32.xlu0 %v86, 9
    %v904 = vpop.permute.xlu0 %903
    %905 = vrot.lane.b32.xlu0 %v87, 9
    %v906 = vpop.permute.xlu0 %905
    %907 = vrot.lane.b32.xlu0 %v88, 9
    %v908 = vpop.permute.xlu0 %907
    %909 = vrot.lane.b32.xlu0 %v89, 9
    %v910 = vpop.permute.xlu0 %909
    %911 = vrot.lane.b32.xlu0 %v90, 9
    %v912 = vpop.permute.xlu0 %911
    %913 = vrot.lane.b32.xlu0 %v91, 9
    %v914 = vpop.permute.xlu0 %913
    %915 = vrot.lane.b32.xlu0 %v92, 9
    %v916 = vpop.permute.xlu0 %915
    %917 = vrot.lane.b32.xlu0 %v93, 9
    %v918 = vpop.permute.xlu0 %917
    %919 = vrot.lane.b32.xlu0 %v94, 9
    %v920 = vpop.permute.xlu0 %919
    %921 = vrot.lane.b32.xlu0 %v95, 9
    %v922 = vpop.permute.xlu0 %921
    %923 = vrot.lane.b32.xlu0 %v96, 9
    %v924 = vpop.permute.xlu0 %923
    %925 = vrot.lane.b32.xlu0 %v97, 9
    %v926 = vpop.permute.xlu0 %925
    %927 = vrot.lane.b32.xlu0 %v98, 9
    %v928 = vpop.permute.xlu0 %927
    %929 = vrot.lane.b32.xlu0 %v99, 9
    %v930 = vpop.permute.xlu0 %929
    %931 = vrot.lane.b32.xlu0 %v100, 9
    %v932 = vpop.permute.xlu0 %931
    %933 = vrot.lane.b32.xlu0 %v101, 9
    %v934 = vpop.permute.xlu0 %933
    %935 = vrot.lane.b32.xlu0 %v102, 9
    %v936 = vpop.permute.xlu0 %935
    %937 = vrot.lane.b32.xlu0 %v103, 9
    %v938 = vpop.permute.xlu0 %937
    %939 = vrot.lane.b32.xlu0 %v104, 9
    %v940 = vpop.permute.xlu0 %939
    %941 = vrot.lane.b32.xlu0 %v105, 9
    %v942 = vpop.permute.xlu0 %941
    %943 = vrot.lane.b32.xlu0 %v106, 9
    %v944 = vpop.permute.xlu0 %943
    %945 = vrot.lane.b32.xlu0 %v107, 9
    %v946 = vpop.permute.xlu0 %945
    %947 = vrot.lane.b32.xlu0 %v108, 9
    %v948 = vpop.permute.xlu0 %947
    %949 = vrot.lane.b32.xlu0 %v109, 9
    %v950 = vpop.permute.xlu0 %949
    %951 = vrot.lane.b32.xlu0 %v110, 9
    %v952 = vpop.permute.xlu0 %951
    %1019 = vrot.lane.b32.xlu0 %v115, 12
    %v1020 = vpop.permute.xlu0 %1019
    %1021 = vrot.lane.b32.xlu0 %v116, 12
    %v1022 = vpop.permute.xlu0 %1021
    %1023 = vrot.lane.b32.xlu0 %v117, 12
    %v1024 = vpop.permute.xlu0 %1023
    %1025 = vrot.lane.b32.xlu0 %v118, 12
    %v1026 = vpop.permute.xlu0 %1025
    %1027 = vrot.lane.b32.xlu0 %v119, 12
    %v1028 = vpop.permute.xlu0 %1027
    %1029 = vrot.lane.b32.xlu0 %v120, 12
    %v1030 = vpop.permute.xlu0 %1029
    %1031 = vrot.lane.b32.xlu0 %v121, 12
    %v1032 = vpop.permute.xlu0 %1031
    %1033 = vrot.lane.b32.xlu0 %v122, 12
    %v1034 = vpop.permute.xlu0 %1033
    %1035 = vrot.lane.b32.xlu0 %v123, 12
    %v1036 = vpop.permute.xlu0 %1035
    %1037 = vrot.lane.b32.xlu0 %v124, 12
    %v1038 = vpop.permute.xlu0 %1037
    %1039 = vrot.lane.b32.xlu0 %v125, 12
    %v1040 = vpop.permute.xlu0 %1039
    %1041 = vrot.lane.b32.xlu0 %v126, 12
    %v1042 = vpop.permute.xlu0 %1041
    %1043 = vrot.lane.b32.xlu0 %v127, 12
    %v1044 = vpop.permute.xlu0 %1043
    %1045 = vrot.lane.b32.xlu0 %v128, 12
    %v1046 = vpop.permute.xlu0 %1045
    %1047 = vrot.lane.b32.xlu0 %v129, 12
    %v1048 = vpop.permute.xlu0 %1047
    %1049 = vrot.lane.b32.xlu0 %v130, 12
    %v1050 = vpop.permute.xlu0 %1049
    %1051 = vrot.lane.b32.xlu0 %v131, 12
    %v1052 = vpop.permute.xlu0 %1051
    %1053 = vrot.lane.b32.xlu0 %v132, 12
    %v1054 = vpop.permute.xlu0 %1053
    %1055 = vrot.lane.b32.xlu0 %v133, 12
    %v1056 = vpop.permute.xlu0 %1055
    %1057 = vrot.lane.b32.xlu0 %v134, 12
    %v1058 = vpop.permute.xlu0 %1057
    %1059 = vrot.lane.b32.xlu0 %v135, 12
    %v1060 = vpop.permute.xlu0 %1059
    %1061 = vrot.lane.b32.xlu0 %v136, 12
    %v1062 = vpop.permute.xlu0 %1061
    %1063 = vrot.lane.b32.xlu0 %v137, 12
    %v1064 = vpop.permute.xlu0 %1063
    %1065 = vrot.lane.b32.xlu0 %v138, 12
    %v1066 = vpop.permute.xlu0 %1065
    %1067 = vrot.lane.b32.xlu0 %v139, 12
    %v1068 = vpop.permute.xlu0 %1067
    %1069 = vrot.lane.b32.xlu0 %v140, 12
    %v1070 = vpop.permute.xlu0 %1069
    %1071 = vrot.lane.b32.xlu0 %v141, 12
    %v1072 = vpop.permute.xlu0 %1071
    %1073 = vrot.lane.b32.xlu0 %v142, 12
    %v1074 = vpop.permute.xlu0 %1073
    %1075 = vrot.lane.b32.xlu0 %v143, 12
    %v1076 = vpop.permute.xlu0 %1075
    %1077 = vrot.lane.b32.xlu0 %v144, 12
    %v1078 = vpop.permute.xlu0 %1077
    %1079 = vrot.lane.b32.xlu0 %v145, 12
    %v1080 = vpop.permute.xlu0 %1079
    %1081 = vrot.lane.b32.xlu0 %v146, 12
    %v1082 = vpop.permute.xlu0 %1081
    %1083 = vrot.lane.b32.xlu0 %v147, 12
    %v1084 = vpop.permute.xlu0 %1083
    %1085 = vrot.lane.b32.xlu0 %v148, 12
    %v1086 = vpop.permute.xlu0 %1085
    %1087 = vrot.lane.b32.xlu0 %v149, 12
    %v1088 = vpop.permute.xlu0 %1087
    %1089 = vrot.lane.b32.xlu0 %v150, 12
    %v1090 = vpop.permute.xlu0 %1089
    %1091 = vrot.lane.b32.xlu0 %v151, 12
    %v1092 = vpop.permute.xlu0 %1091
    %1093 = vrot.lane.b32.xlu0 %v152, 12
    %v1094 = vpop.permute.xlu0 %1093
    %1095 = vrot.lane.b32.xlu0 %v153, 12
    %v1096 = vpop.permute.xlu0 %1095
    %1097 = vrot.lane.b32.xlu0 %v154, 12
    %v1098 = vpop.permute.xlu0 %1097
    %1099 = vrot.lane.b32.xlu0 %v155, 12
    %v1100 = vpop.permute.xlu0 %1099
    %1101 = vrot.lane.b32.xlu0 %v156, 12
    %v1102 = vpop.permute.xlu0 %1101
    %1103 = vrot.lane.b32.xlu0 %v157, 12
    %v1104 = vpop.permute.xlu0 %1103
    %1105 = vrot.lane.b32.xlu0 %v158, 12
    %v1106 = vpop.permute.xlu0 %1105
    %1107 = vrot.lane.b32.xlu0 %v159, 12
    %v1108 = vpop.permute.xlu0 %1107
    %1109 = vrot.lane.b32.xlu0 %v160, 12
    %v1110 = vpop.permute.xlu0 %1109
    %1111 = vrot.lane.b32.xlu0 %v161, 12
    %v1112 = vpop.permute.xlu0 %1111
    %1113 = vrot.lane.b32.xlu0 %v162, 12
    %v1114 = vpop.permute.xlu0 %1113
    %1115 = vrot.lane.b32.xlu0 %v163, 12
    %v1116 = vpop.permute.xlu0 %1115
    %1117 = vrot.lane.b32.xlu0 %v164, 12
    %v1118 = vpop.permute.xlu0 %1117
    %1119 = vrot.lane.b32.xlu0 %v165, 12
    %v1120 = vpop.permute.xlu0 %1119
    %1121 = vrot.lane.b32.xlu0 %v166, 12
    %v1122 = vpop.permute.xlu0 %1121
    %1123 = vrot.lane.b32.xlu0 %v167, 12
    %v1124 = vpop.permute.xlu0 %1123
    %1125 = vrot.lane.b32.xlu0 %v168, 12
    %v1126 = vpop.permute.xlu0 %1125
    %1127 = vrot.lane.b32.xlu0 %v169, 12
    %v1128 = vpop.permute.xlu0 %1127
    %1129 = vrot.lane.b32.xlu0 %v170, 12
    %v1130 = vpop.permute.xlu0 %1129
    %1131 = vrot.lane.b32.xlu0 %v171, 12
    %v1132 = vpop.permute.xlu0 %1131
    %1133 = vrot.lane.b32.xlu0 %v172, 12
    %v1134 = vpop.permute.xlu0 %1133
    %1135 = vrot.lane.b32.xlu0 %v173, 12
    %v1136 = vpop.permute.xlu0 %1135
    %1137 = vrot.lane.b32.xlu0 %v174, 12
    %v1138 = vpop.permute.xlu0 %1137
    %1139 = vrot.lane.b32.xlu0 %v175, 12
    %v1140 = vpop.permute.xlu0 %1139
    %1141 = vrot.lane.b32.xlu0 %v176, 12
    %v1142 = vpop.permute.xlu0 %1141
    %1143 = vrot.lane.b32.xlu0 %v177, 12
    %v1144 = vpop.permute.xlu0 %1143
    %1145 = vrot.lane.b32.xlu0 %v178, 12
    %v1146 = vpop.permute.xlu0 %1145
    %1213 = vrot.lane.b32.xlu0 %v183, 15
    %v1214 = vpop.permute.xlu0 %1213
    %1215 = vrot.lane.b32.xlu0 %v184, 15
    %v1216 = vpop.permute.xlu0 %1215
    %1217 = vrot.lane.b32.xlu0 %v185, 15
    %v1218 = vpop.permute.xlu0 %1217
    %1219 = vrot.lane.b32.xlu0 %v186, 15
    %v1220 = vpop.permute.xlu0 %1219
    %1221 = vrot.lane.b32.xlu0 %v187, 15
    %v1222 = vpop.permute.xlu0 %1221
    %1223 = vrot.lane.b32.xlu0 %v188, 15
    %v1224 = vpop.permute.xlu0 %1223
    %1225 = vrot.lane.b32.xlu0 %v189, 15
    %v1226 = vpop.permute.xlu0 %1225
    %1227 = vrot.lane.b32.xlu0 %v190, 15
    %v1228 = vpop.permute.xlu0 %1227
    %1229 = vrot.lane.b32.xlu0 %v191, 15
    %v1230 = vpop.permute.xlu0 %1229
    %1231 = vrot.lane.b32.xlu0 %v192, 15
    %v1232 = vpop.permute.xlu0 %1231
    %1233 = vrot.lane.b32.xlu0 %v193, 15
    %v1234 = vpop.permute.xlu0 %1233
    %1235 = vrot.lane.b32.xlu0 %v194, 15
    %v1236 = vpop.permute.xlu0 %1235
    %1237 = vrot.lane.b32.xlu0 %v195, 15
    %v1238 = vpop.permute.xlu0 %1237
    %1239 = vrot.lane.b32.xlu0 %v196, 15
    %v1240 = vpop.permute.xlu0 %1239
    %1241 = vrot.lane.b32.xlu0 %v197, 15
    %v1242 = vpop.permute.xlu0 %1241
    %1243 = vrot.lane.b32.xlu0 %v198, 15
    %v1244 = vpop.permute.xlu0 %1243
    %1245 = vrot.lane.b32.xlu0 %v199, 15
    %v1246 = vpop.permute.xlu0 %1245
    %1247 = vrot.lane.b32.xlu0 %v200, 15
    %v1248 = vpop.permute.xlu0 %1247
    %1249 = vrot.lane.b32.xlu0 %v201, 15
    %v1250 = vpop.permute.xlu0 %1249
    %1251 = vrot.lane.b32.xlu0 %v202, 15
    %v1252 = vpop.permute.xlu0 %1251
    %1253 = vrot.lane.b32.xlu0 %v203, 15
    %v1254 = vpop.permute.xlu0 %1253
    %1255 = vrot.lane.b32.xlu0 %v204, 15
    %v1256 = vpop.permute.xlu0 %1255
    %1257 = vrot.lane.b32.xlu0 %v205, 15
    %v1258 = vpop.permute.xlu0 %1257
    %1259 = vrot.lane.b32.xlu0 %v206, 15
    %v1260 = vpop.permute.xlu0 %1259
    %1261 = vrot.lane.b32.xlu0 %v207, 15
    %v1262 = vpop.permute.xlu0 %1261
    %1263 = vrot.lane.b32.xlu0 %v208, 15
    %v1264 = vpop.permute.xlu0 %1263
    %1265 = vrot.lane.b32.xlu0 %v209, 15
    %v1266 = vpop.permute.xlu0 %1265
    %1267 = vrot.lane.b32.xlu0 %v210, 15
    %v1268 = vpop.permute.xlu0 %1267
    %1269 = vrot.lane.b32.xlu0 %v211, 15
    %v1270 = vpop.permute.xlu0 %1269
    %1271 = vrot.lane.b32.xlu0 %v212, 15
    %v1272 = vpop.permute.xlu0 %1271
    %1273 = vrot.lane.b32.xlu0 %v213, 15
    %v1274 = vpop.permute.xlu0 %1273
    %1275 = vrot.lane.b32.xlu0 %v214, 15
    %v1276 = vpop.permute.xlu0 %1275
    %1277 = vrot.lane.b32.xlu0 %v215, 15
    %v1278 = vpop.permute.xlu0 %1277
    %1279 = vrot.lane.b32.xlu0 %v216, 15
    %v1280 = vpop.permute.xlu0 %1279
    %1281 = vrot.lane.b32.xlu0 %v217, 15
    %v1282 = vpop.permute.xlu0 %1281
    %1283 = vrot.lane.b32.xlu0 %v218, 15
    %v1284 = vpop.permute.xlu0 %1283
    %1285 = vrot.lane.b32.xlu0 %v219, 15
    %v1286 = vpop.permute.xlu0 %1285
    %1287 = vrot.lane.b32.xlu0 %v220, 15
    %v1288 = vpop.permute.xlu0 %1287
    %1289 = vrot.lane.b32.xlu0 %v221, 15
    %v1290 = vpop.permute.xlu0 %1289
    %1291 = vrot.lane.b32.xlu0 %v222, 15
    %v1292 = vpop.permute.xlu0 %1291
    %1293 = vrot.lane.b32.xlu0 %v223, 15
    %v1294 = vpop.permute.xlu0 %1293
    %1295 = vrot.lane.b32.xlu0 %v224, 15
    %v1296 = vpop.permute.xlu0 %1295
    %1297 = vrot.lane.b32.xlu0 %v225, 15
    %v1298 = vpop.permute.xlu0 %1297
    %1299 = vrot.lane.b32.xlu0 %v226, 15
    %v1300 = vpop.permute.xlu0 %1299
    %1301 = vrot.lane.b32.xlu0 %v227, 15
    %v1302 = vpop.permute.xlu0 %1301
    %1303 = vrot.lane.b32.xlu0 %v228, 15
    %v1304 = vpop.permute.xlu0 %1303
    %1305 = vrot.lane.b32.xlu0 %v229, 15
    %v1306 = vpop.permute.xlu0 %1305
    %1307 = vrot.lane.b32.xlu0 %v230, 15
    %v1308 = vpop.permute.xlu0 %1307
    %1309 = vrot.lane.b32.xlu0 %v231, 15
    %v1310 = vpop.permute.xlu0 %1309
    %1311 = vrot.lane.b32.xlu0 %v232, 15
    %v1312 = vpop.permute.xlu0 %1311
    %1313 = vrot.lane.b32.xlu0 %v233, 15
    %v1314 = vpop.permute.xlu0 %1313
    %1315 = vrot.lane.b32.xlu0 %v234, 15
    %v1316 = vpop.permute.xlu0 %1315
    %1317 = vrot.lane.b32.xlu0 %v235, 15
    %v1318 = vpop.permute.xlu0 %1317
    %1319 = vrot.lane.b32.xlu0 %v236, 15
    %v1320 = vpop.permute.xlu0 %1319
    %1321 = vrot.lane.b32.xlu0 %v237, 15
    %v1322 = vpop.permute.xlu0 %1321
    %1323 = vrot.lane.b32.xlu0 %v238, 15
    %v1324 = vpop.permute.xlu0 %1323
    %1325 = vrot.lane.b32.xlu0 %v239, 15
    %v1326 = vpop.permute.xlu0 %1325
    %1327 = vrot.lane.b32.xlu0 %v240, 15
    %v1328 = vpop.permute.xlu0 %1327
    %1329 = vrot.lane.b32.xlu0 %v241, 15
    %v1330 = vpop.permute.xlu0 %1329
    %1331 = vrot.lane.b32.xlu0 %v242, 15
    %v1332 = vpop.permute.xlu0 %1331
    %1333 = vrot.lane.b32.xlu0 %v243, 15
    %v1334 = vpop.permute.xlu0 %1333
    %1335 = vrot.lane.b32.xlu0 %v244, 15
    %v1336 = vpop.permute.xlu0 %1335
    %1337 = vrot.lane.b32.xlu0 %v245, 15
    %v1338 = vpop.permute.xlu0 %1337
    %1339 = vrot.lane.b32.xlu0 %v246, 15
    %v1340 = vpop.permute.xlu0 %1339
    %1407 = vrot.lane.b32.xlu0 %v49, 18
    %v1408 = vpop.permute.xlu0 %1407
    %1409 = vrot.lane.b32.xlu0 %v50, 18
    %v1410 = vpop.permute.xlu0 %1409
    %1411 = vrot.lane.b32.xlu0 %v51, 18
    %v1412 = vpop.permute.xlu0 %1411
    %1413 = vrot.lane.b32.xlu0 %v52, 18
    %v1414 = vpop.permute.xlu0 %1413
    %1415 = vrot.lane.b32.xlu0 %v53, 18
    %v1416 = vpop.permute.xlu0 %1415
    %1417 = vrot.lane.b32.xlu0 %v54, 18
    %v1418 = vpop.permute.xlu0 %1417
    %1419 = vrot.lane.b32.xlu0 %v55, 18
    %v1420 = vpop.permute.xlu0 %1419
    %1421 = vrot.lane.b32.xlu0 %v56, 18
    %v1422 = vpop.permute.xlu0 %1421
    %1423 = vrot.lane.b32.xlu0 %v57, 18
    %v1424 = vpop.permute.xlu0 %1423
    %1425 = vrot.lane.b32.xlu0 %v58, 18
    %v1426 = vpop.permute.xlu0 %1425
    %1427 = vrot.lane.b32.xlu0 %v59, 18
    %v1428 = vpop.permute.xlu0 %1427
    %1429 = vrot.lane.b32.xlu0 %v60, 18
    %v1430 = vpop.permute.xlu0 %1429
    %1431 = vrot.lane.b32.xlu0 %v61, 18
    %v1432 = vpop.permute.xlu0 %1431
    %1433 = vrot.lane.b32.xlu0 %v62, 18
    %v1434 = vpop.permute.xlu0 %1433
    %1435 = vrot.lane.b32.xlu0 %v63, 18
    %v1436 = vpop.permute.xlu0 %1435
    %1437 = vrot.lane.b32.xlu0 %v64, 18
    %v1438 = vpop.permute.xlu0 %1437
    %1439 = vrot.lane.b32.xlu0 %v65, 18
    %v1440 = vpop.permute.xlu0 %1439
    %1441 = vrot.lane.b32.xlu0 %v66, 18
    %v1442 = vpop.permute.xlu0 %1441
    %1443 = vrot.lane.b32.xlu0 %v67, 18
    %v1444 = vpop.permute.xlu0 %1443
    %1445 = vrot.lane.b32.xlu0 %v68, 18
    %v1446 = vpop.permute.xlu0 %1445
    %1447 = vrot.lane.b32.xlu0 %v69, 18
    %v1448 = vpop.permute.xlu0 %1447
    %1449 = vrot.lane.b32.xlu0 %v70, 18
    %v1450 = vpop.permute.xlu0 %1449
    %1451 = vrot.lane.b32.xlu0 %v71, 18
    %v1452 = vpop.permute.xlu0 %1451
    %1453 = vrot.lane.b32.xlu0 %v72, 18
    %v1454 = vpop.permute.xlu0 %1453
    %1455 = vrot.lane.b32.xlu0 %v73, 18
    %v1456 = vpop.permute.xlu0 %1455
    %1457 = vrot.lane.b32.xlu0 %v74, 18
    %v1458 = vpop.permute.xlu0 %1457
    %1459 = vrot.lane.b32.xlu0 %v75, 18
    %v1460 = vpop.permute.xlu0 %1459
    %1461 = vrot.lane.b32.xlu0 %v76, 18
    %v1462 = vpop.permute.xlu0 %1461
    %1463 = vrot.lane.b32.xlu0 %v77, 18
    %v1464 = vpop.permute.xlu0 %1463
    %1465 = vrot.lane.b32.xlu0 %v78, 18
    %v1466 = vpop.permute.xlu0 %1465
    %1467 = vrot.lane.b32.xlu0 %v79, 18
    %v1468 = vpop.permute.xlu0 %1467
    %1469 = vrot.lane.b32.xlu0 %v80, 18
    %v1470 = vpop.permute.xlu0 %1469
    %1471 = vrot.lane.b32.xlu0 %v81, 18
    %v1472 = vpop.permute.xlu0 %1471
    %1473 = vrot.lane.b32.xlu0 %v82, 18
    %v1474 = vpop.permute.xlu0 %1473
    %1475 = vrot.lane.b32.xlu0 %v83, 18
    %v1476 = vpop.permute.xlu0 %1475
    %1477 = vrot.lane.b32.xlu0 %v84, 18
    %v1478 = vpop.permute.xlu0 %1477
    %1479 = vrot.lane.b32.xlu0 %v85, 18
    %v1480 = vpop.permute.xlu0 %1479
    %1481 = vrot.lane.b32.xlu0 %v86, 18
    %v1482 = vpop.permute.xlu0 %1481
    %1483 = vrot.lane.b32.xlu0 %v87, 18
    %v1484 = vpop.permute.xlu0 %1483
    %1485 = vrot.lane.b32.xlu0 %v88, 18
    %v1486 = vpop.permute.xlu0 %1485
    %1487 = vrot.lane.b32.xlu0 %v89, 18
    %v1488 = vpop.permute.xlu0 %1487
    %1489 = vrot.lane.b32.xlu0 %v90, 18
    %v1490 = vpop.permute.xlu0 %1489
    %1491 = vrot.lane.b32.xlu0 %v91, 18
    %v1492 = vpop.permute.xlu0 %1491
    %1493 = vrot.lane.b32.xlu0 %v92, 18
    %v1494 = vpop.permute.xlu0 %1493
    %1495 = vrot.lane.b32.xlu0 %v93, 18
    %v1496 = vpop.permute.xlu0 %1495
    %1497 = vrot.lane.b32.xlu0 %v94, 18
    %v1498 = vpop.permute.xlu0 %1497
    %1499 = vrot.lane.b32.xlu0 %v95, 18
    %v1500 = vpop.permute.xlu0 %1499
    %1501 = vrot.lane.b32.xlu0 %v96, 18
    %v1502 = vpop.permute.xlu0 %1501
    %1503 = vrot.lane.b32.xlu0 %v97, 18
    %v1504 = vpop.permute.xlu0 %1503
    %1505 = vrot.lane.b32.xlu0 %v98, 18
    %v1506 = vpop.permute.xlu0 %1505
    %1507 = vrot.lane.b32.xlu0 %v99, 18
    %v1508 = vpop.permute.xlu0 %1507
    %1509 = vrot.lane.b32.xlu0 %v100, 18
    %v1510 = vpop.permute.xlu0 %1509
    %1511 = vrot.lane.b32.xlu0 %v101, 18
    %v1512 = vpop.permute.xlu0 %1511
    %1513 = vrot.lane.b32.xlu0 %v102, 18
    %v1514 = vpop.permute.xlu0 %1513
    %1515 = vrot.lane.b32.xlu0 %v103, 18
    %v1516 = vpop.permute.xlu0 %1515
    %1517 = vrot.lane.b32.xlu0 %v104, 18
    %v1518 = vpop.permute.xlu0 %1517
    %1519 = vrot.lane.b32.xlu0 %v105, 18
    %v1520 = vpop.permute.xlu0 %1519
    %1521 = vrot.lane.b32.xlu0 %v106, 18
    %v1522 = vpop.permute.xlu0 %1521
    %1523 = vrot.lane.b32.xlu0 %v107, 18
    %v1524 = vpop.permute.xlu0 %1523
    %1525 = vrot.lane.b32.xlu0 %v108, 18
    %v1526 = vpop.permute.xlu0 %1525
    %1527 = vrot.lane.b32.xlu0 %v109, 18
    %v1528 = vpop.permute.xlu0 %1527
    %1529 = vrot.lane.b32.xlu0 %v110, 18
    %v1530 = vpop.permute.xlu0 %1529
    %1531 = vrot.lane.b32.xlu0 %v111, 18
    %v1532 = vpop.permute.xlu0 %1531
    %1533 = vrot.lane.b32.xlu0 %v112, 18
    %v1534 = vpop.permute.xlu0 %1533
    %1601 = vrot.lane.b32.xlu0 %v117, 21
    %v1602 = vpop.permute.xlu0 %1601
    %1603 = vrot.lane.b32.xlu0 %v118, 21
    %v1604 = vpop.permute.xlu0 %1603
    %1605 = vrot.lane.b32.xlu0 %v119, 21
    %v1606 = vpop.permute.xlu0 %1605
    %1607 = vrot.lane.b32.xlu0 %v120, 21
    %v1608 = vpop.permute.xlu0 %1607
    %1609 = vrot.lane.b32.xlu0 %v121, 21
    %v1610 = vpop.permute.xlu0 %1609
    %1611 = vrot.lane.b32.xlu0 %v122, 21
    %v1612 = vpop.permute.xlu0 %1611
    %1613 = vrot.lane.b32.xlu0 %v123, 21
    %v1614 = vpop.permute.xlu0 %1613
    %1615 = vrot.lane.b32.xlu0 %v124, 21
    %v1616 = vpop.permute.xlu0 %1615
    %1617 = vrot.lane.b32.xlu0 %v125, 21
    %v1618 = vpop.permute.xlu0 %1617
    %1619 = vrot.lane.b32.xlu0 %v126, 21
    %v1620 = vpop.permute.xlu0 %1619
    %1621 = vrot.lane.b32.xlu0 %v127, 21
    %v1622 = vpop.permute.xlu0 %1621
    %1623 = vrot.lane.b32.xlu0 %v128, 21
    %v1624 = vpop.permute.xlu0 %1623
    %1625 = vrot.lane.b32.xlu0 %v129, 21
    %v1626 = vpop.permute.xlu0 %1625
    %1627 = vrot.lane.b32.xlu0 %v130, 21
    %v1628 = vpop.permute.xlu0 %1627
    %1629 = vrot.lane.b32.xlu0 %v131, 21
    %v1630 = vpop.permute.xlu0 %1629
    %1631 = vrot.lane.b32.xlu0 %v132, 21
    %v1632 = vpop.permute.xlu0 %1631
    %1633 = vrot.lane.b32.xlu0 %v133, 21
    %v1634 = vpop.permute.xlu0 %1633
    %1635 = vrot.lane.b32.xlu0 %v134, 21
    %v1636 = vpop.permute.xlu0 %1635
    %1637 = vrot.lane.b32.xlu0 %v135, 21
    %v1638 = vpop.permute.xlu0 %1637
    %1639 = vrot.lane.b32.xlu0 %v136, 21
    %v1640 = vpop.permute.xlu0 %1639
    %1641 = vrot.lane.b32.xlu0 %v137, 21
    %v1642 = vpop.permute.xlu0 %1641
    %1643 = vrot.lane.b32.xlu0 %v138, 21
    %v1644 = vpop.permute.xlu0 %1643
    %1645 = vrot.lane.b32.xlu0 %v139, 21
    %v1646 = vpop.permute.xlu0 %1645
    %1647 = vrot.lane.b32.xlu0 %v140, 21
    %v1648 = vpop.permute.xlu0 %1647
    %1649 = vrot.lane.b32.xlu0 %v141, 21
    %v1650 = vpop.permute.xlu0 %1649
    %1651 = vrot.lane.b32.xlu0 %v142, 21
    %v1652 = vpop.permute.xlu0 %1651
    %1653 = vrot.lane.b32.xlu0 %v143, 21
    %v1654 = vpop.permute.xlu0 %1653
    %1655 = vrot.lane.b32.xlu0 %v144, 21
    %v1656 = vpop.permute.xlu0 %1655
    %1657 = vrot.lane.b32.xlu0 %v145, 21
    %v1658 = vpop.permute.xlu0 %1657
    %1659 = vrot.lane.b32.xlu0 %v146, 21
    %v1660 = vpop.permute.xlu0 %1659
    %1661 = vrot.lane.b32.xlu0 %v147, 21
    %v1662 = vpop.permute.xlu0 %1661
    %1663 = vrot.lane.b32.xlu0 %v148, 21
    %v1664 = vpop.permute.xlu0 %1663
    %1665 = vrot.lane.b32.xlu0 %v149, 21
    %v1666 = vpop.permute.xlu0 %1665
    %1667 = vrot.lane.b32.xlu0 %v150, 21
    %v1668 = vpop.permute.xlu0 %1667
    %1669 = vrot.lane.b32.xlu0 %v151, 21
    %v1670 = vpop.permute.xlu0 %1669
    %1671 = vrot.lane.b32.xlu0 %v152, 21
    %v1672 = vpop.permute.xlu0 %1671
    %1673 = vrot.lane.b32.xlu0 %v153, 21
    %v1674 = vpop.permute.xlu0 %1673
    %1675 = vrot.lane.b32.xlu0 %v154, 21
    %v1676 = vpop.permute.xlu0 %1675
    %1677 = vrot.lane.b32.xlu0 %v155, 21
    %v1678 = vpop.permute.xlu0 %1677
    %1679 = vrot.lane.b32.xlu0 %v156, 21
    %v1680 = vpop.permute.xlu0 %1679
    %1681 = vrot.lane.b32.xlu0 %v157, 21
    %v1682 = vpop.permute.xlu0 %1681
    %1683 = vrot.lane.b32.xlu0 %v158, 21
    %v1684 = vpop.permute.xlu0 %1683
    %1685 = vrot.lane.b32.xlu0 %v159, 21
    %v1686 = vpop.permute.xlu0 %1685
    %1687 = vrot.lane.b32.xlu0 %v160, 21
    %v1688 = vpop.permute.xlu0 %1687
    %1689 = vrot.lane.b32.xlu0 %v161, 21
    %v1690 = vpop.permute.xlu0 %1689
    %1691 = vrot.lane.b32.xlu0 %v162, 21
    %v1692 = vpop.permute.xlu0 %1691
    %1693 = vrot.lane.b32.xlu0 %v163, 21
    %v1694 = vpop.permute.xlu0 %1693
    %1695 = vrot.lane.b32.xlu0 %v164, 21
    %v1696 = vpop.permute.xlu0 %1695
    %1697 = vrot.lane.b32.xlu0 %v165, 21
    %v1698 = vpop.permute.xlu0 %1697
    %1699 = vrot.lane.b32.xlu0 %v166, 21
    %v1700 = vpop.permute.xlu0 %1699
    %1701 = vrot.lane.b32.xlu0 %v167, 21
    %v1702 = vpop.permute.xlu0 %1701
    %1703 = vrot.lane.b32.xlu0 %v168, 21
    %v1704 = vpop.permute.xlu0 %1703
    %1705 = vrot.lane.b32.xlu0 %v169, 21
    %v1706 = vpop.permute.xlu0 %1705
    %1707 = vrot.lane.b32.xlu0 %v170, 21
    %v1708 = vpop.permute.xlu0 %1707
    %1709 = vrot.lane.b32.xlu0 %v171, 21
    %v1710 = vpop.permute.xlu0 %1709
    %1711 = vrot.lane.b32.xlu0 %v172, 21
    %v1712 = vpop.permute.xlu0 %1711
    %1713 = vrot.lane.b32.xlu0 %v173, 21
    %v1714 = vpop.permute.xlu0 %1713
    %1715 = vrot.lane.b32.xlu0 %v174, 21
    %v1716 = vpop.permute.xlu0 %1715
    %1717 = vrot.lane.b32.xlu0 %v175, 21
    %v1718 = vpop.permute.xlu0 %1717
    %1719 = vrot.lane.b32.xlu0 %v176, 21
    %v1720 = vpop.permute.xlu0 %1719
    %1721 = vrot.lane.b32.xlu0 %v177, 21
    %v1722 = vpop.permute.xlu0 %1721
    %1723 = vrot.lane.b32.xlu0 %v178, 21
    %v1724 = vpop.permute.xlu0 %1723
    %1725 = vrot.lane.b32.xlu0 %v179, 21
    %v1726 = vpop.permute.xlu0 %1725
    %1727 = vrot.lane.b32.xlu0 %v180, 21
    %v1728 = vpop.permute.xlu0 %1727
    %1795 = vrot.lane.b32.xlu0 %v185, 24
    %v1796 = vpop.permute.xlu0 %1795
    %1797 = vrot.lane.b32.xlu0 %v186, 24
    %v1798 = vpop.permute.xlu0 %1797
    %1799 = vrot.lane.b32.xlu0 %v187, 24
    %v1800 = vpop.permute.xlu0 %1799
    %1801 = vrot.lane.b32.xlu0 %v188, 24
    %v1802 = vpop.permute.xlu0 %1801
    %1803 = vrot.lane.b32.xlu0 %v189, 24
    %v1804 = vpop.permute.xlu0 %1803
    %1805 = vrot.lane.b32.xlu0 %v190, 24
    %v1806 = vpop.permute.xlu0 %1805
    %1807 = vrot.lane.b32.xlu0 %v191, 24
    %v1808 = vpop.permute.xlu0 %1807
    %1809 = vrot.lane.b32.xlu0 %v192, 24
    %v1810 = vpop.permute.xlu0 %1809
    %1811 = vrot.lane.b32.xlu0 %v193, 24
    %v1812 = vpop.permute.xlu0 %1811
    %1813 = vrot.lane.b32.xlu0 %v194, 24
    %v1814 = vpop.permute.xlu0 %1813
    %1815 = vrot.lane.b32.xlu0 %v195, 24
    %v1816 = vpop.permute.xlu0 %1815
    %1817 = vrot.lane.b32.xlu0 %v196, 24
    %v1818 = vpop.permute.xlu0 %1817
    %1819 = vrot.lane.b32.xlu0 %v197, 24
    %v1820 = vpop.permute.xlu0 %1819
    %1821 = vrot.lane.b32.xlu0 %v198, 24
    %v1822 = vpop.permute.xlu0 %1821
    %1823 = vrot.lane.b32.xlu0 %v199, 24
    %v1824 = vpop.permute.xlu0 %1823
    %1825 = vrot.lane.b32.xlu0 %v200, 24
    %v1826 = vpop.permute.xlu0 %1825
    %1827 = vrot.lane.b32.xlu0 %v201, 24
    %v1828 = vpop.permute.xlu0 %1827
    %1829 = vrot.lane.b32.xlu0 %v202, 24
    %v1830 = vpop.permute.xlu0 %1829
    %1831 = vrot.lane.b32.xlu0 %v203, 24
    %v1832 = vpop.permute.xlu0 %1831
    %1833 = vrot.lane.b32.xlu0 %v204, 24
    %v1834 = vpop.permute.xlu0 %1833
    %1835 = vrot.lane.b32.xlu0 %v205, 24
    %v1836 = vpop.permute.xlu0 %1835
    %1837 = vrot.lane.b32.xlu0 %v206, 24
    %v1838 = vpop.permute.xlu0 %1837
    %1839 = vrot.lane.b32.xlu0 %v207, 24
    %v1840 = vpop.permute.xlu0 %1839
    %1841 = vrot.lane.b32.xlu0 %v208, 24
    %v1842 = vpop.permute.xlu0 %1841
    %1843 = vrot.lane.b32.xlu0 %v209, 24
    %v1844 = vpop.permute.xlu0 %1843
    %1845 = vrot.lane.b32.xlu0 %v210, 24
    %v1846 = vpop.permute.xlu0 %1845
    %1847 = vrot.lane.b32.xlu0 %v211, 24
    %v1848 = vpop.permute.xlu0 %1847
    %1849 = vrot.lane.b32.xlu0 %v212, 24
    %v1850 = vpop.permute.xlu0 %1849
    %1851 = vrot.lane.b32.xlu0 %v213, 24
    %v1852 = vpop.permute.xlu0 %1851
    %1853 = vrot.lane.b32.xlu0 %v214, 24
    %v1854 = vpop.permute.xlu0 %1853
    %1855 = vrot.lane.b32.xlu0 %v215, 24
    %v1856 = vpop.permute.xlu0 %1855
    %1857 = vrot.lane.b32.xlu0 %v216, 24
    %v1858 = vpop.permute.xlu0 %1857
    %1859 = vrot.lane.b32.xlu0 %v217, 24
    %v1860 = vpop.permute.xlu0 %1859
    %1861 = vrot.lane.b32.xlu0 %v218, 24
    %v1862 = vpop.permute.xlu0 %1861
    %1863 = vrot.lane.b32.xlu0 %v219, 24
    %v1864 = vpop.permute.xlu0 %1863
    %1865 = vrot.lane.b32.xlu0 %v220, 24
    %v1866 = vpop.permute.xlu0 %1865
    %1867 = vrot.lane.b32.xlu0 %v221, 24
    %v1868 = vpop.permute.xlu0 %1867
    %1869 = vrot.lane.b32.xlu0 %v222, 24
    %v1870 = vpop.permute.xlu0 %1869
    %1871 = vrot.lane.b32.xlu0 %v223, 24
    %v1872 = vpop.permute.xlu0 %1871
    %1873 = vrot.lane.b32.xlu0 %v224, 24
    %v1874 = vpop.permute.xlu0 %1873
    %1875 = vrot.lane.b32.xlu0 %v225, 24
    %v1876 = vpop.permute.xlu0 %1875
    %1877 = vrot.lane.b32.xlu0 %v226, 24
    %v1878 = vpop.permute.xlu0 %1877
    %1879 = vrot.lane.b32.xlu0 %v227, 24
    %v1880 = vpop.permute.xlu0 %1879
    %1881 = vrot.lane.b32.xlu0 %v228, 24
    %v1882 = vpop.permute.xlu0 %1881
    %1883 = vrot.lane.b32.xlu0 %v229, 24
    %v1884 = vpop.permute.xlu0 %1883
    %1885 = vrot.lane.b32.xlu0 %v230, 24
    %v1886 = vpop.permute.xlu0 %1885
    %1887 = vrot.lane.b32.xlu0 %v231, 24
    %v1888 = vpop.permute.xlu0 %1887
    %1889 = vrot.lane.b32.xlu0 %v232, 24
    %v1890 = vpop.permute.xlu0 %1889
    %1891 = vrot.lane.b32.xlu0 %v233, 24
    %v1892 = vpop.permute.xlu0 %1891
    %1893 = vrot.lane.b32.xlu0 %v234, 24
    %v1894 = vpop.permute.xlu0 %1893
    %1895 = vrot.lane.b32.xlu0 %v235, 24
    %v1896 = vpop.permute.xlu0 %1895
    %1897 = vrot.lane.b32.xlu0 %v236, 24
    %v1898 = vpop.permute.xlu0 %1897
    %1899 = vrot.lane.b32.xlu0 %v237, 24
    %v1900 = vpop.permute.xlu0 %1899
    %1901 = vrot.lane.b32.xlu0 %v238, 24
    %v1902 = vpop.permute.xlu0 %1901
    %1903 = vrot.lane.b32.xlu0 %v239, 24
    %v1904 = vpop.permute.xlu0 %1903
    %1905 = vrot.lane.b32.xlu0 %v240, 24
    %v1906 = vpop.permute.xlu0 %1905
    %1907 = vrot.lane.b32.xlu0 %v241, 24
    %v1908 = vpop.permute.xlu0 %1907
    %1909 = vrot.lane.b32.xlu0 %v242, 24
    %v1910 = vpop.permute.xlu0 %1909
    %1911 = vrot.lane.b32.xlu0 %v243, 24
    %v1912 = vpop.permute.xlu0 %1911
    %1913 = vrot.lane.b32.xlu0 %v244, 24
    %v1914 = vpop.permute.xlu0 %1913
    %1915 = vrot.lane.b32.xlu0 %v245, 24
    %v1916 = vpop.permute.xlu0 %1915
    %1917 = vrot.lane.b32.xlu0 %v246, 24
    %v1918 = vpop.permute.xlu0 %1917
    %1919 = vrot.lane.b32.xlu0 %v247, 24
    %v1920 = vpop.permute.xlu0 %1919
    %1921 = vrot.lane.b32.xlu0 %v248, 24
    %v1922 = vpop.permute.xlu0 %1921
    %vm1987 = vcmask 23552
    %v1988 = vsel %vm1987, %v45, %v314
    %v1989 = vsel %vm1987, %v46, %v316
    %v1990 = vsel %vm1987, %v47, %v318
    %v1991 = vsel %vm1987, %v48, %v320
    %v1992 = vsel %vm1987, %v49, %v322
    %v1993 = vsel %vm1987, %v50, %v324
    %v1994 = vsel %vm1987, %v51, %v326
    %v1995 = vsel %vm1987, %v52, %v328
    %v1996 = vsel %vm1987, %v53, %v330
    %v1997 = vsel %vm1987, %v54, %v332
    %v1998 = vsel %vm1987, %v55, %v334
    %v1999 = vsel %vm1987, %v56, %v336
    %v2000 = vsel %vm1987, %v57, %v338
    %v2001 = vsel %vm1987, %v58, %v340
    %v2002 = vsel %vm1987, %v59, %v342
    %v2003 = vsel %vm1987, %v60, %v344
    %v2004 = vsel %vm1987, %v61, %v346
    %v2005 = vsel %vm1987, %v62, %v348
    %v2006 = vsel %vm1987, %v63, %v350
    %v2007 = vsel %vm1987, %v64, %v352
    %v2008 = vsel %vm1987, %v65, %v354
    %v2009 = vsel %vm1987, %v66, %v356
    %v2010 = vsel %vm1987, %v67, %v358
    %v2011 = vsel %vm1987, %v68, %v360
    %v2012 = vsel %vm1987, %v69, %v362
    %v2013 = vsel %vm1987, %v70, %v364
    %v2014 = vsel %vm1987, %v71, %v366
    %v2015 = vsel %vm1987, %v72, %v368
    %v2016 = vsel %vm1987, %v73, %v370
    %v2017 = vsel %vm1987, %v74, %v372
    %v2018 = vsel %vm1987, %v75, %v374
    %v2019 = vsel %vm1987, %v76, %v376
    %v2020 = vsel %vm1987, %v77, %v378
    %v2021 = vsel %vm1987, %v78, %v380
    %v2022 = vsel %vm1987, %v79, %v382
    %v2023 = vsel %vm1987, %v80, %v384
    %v2024 = vsel %vm1987, %v81, %v386
    %v2025 = vsel %vm1987, %v82, %v388
    %v2026 = vsel %vm1987, %v83, %v390
    %v2027 = vsel %vm1987, %v84, %v392
    %v2028 = vsel %vm1987, %v85, %v394
    %v2029 = vsel %vm1987, %v86, %v396
    %v2030 = vsel %vm1987, %v87, %v398
    %v2031 = vsel %vm1987, %v88, %v400
    %v2032 = vsel %vm1987, %v89, %v402
    %v2033 = vsel %vm1987, %v90, %v404
    %v2034 = vsel %vm1987, %v91, %v406
    %v2035 = vsel %vm1987, %v92, %v408
    %v2036 = vsel %vm1987, %v93, %v410
    %v2037 = vsel %vm1987, %v94, %v412
    %v2038 = vsel %vm1987, %v95, %v414
    %v2039 = vsel %vm1987, %v96, %v416
    %v2040 = vsel %vm1987, %v97, %v418
    %v2041 = vsel %vm1987, %v98, %v420
    %v2042 = vsel %vm1987, %v99, %v422
    %v2043 = vsel %vm1987, %v100, %v424
    %v2044 = vsel %vm1987, %v101, %v426
    %v2045 = vsel %vm1987, %v102, %v428
    %v2046 = vsel %vm1987, %v103, %v430
    %v2047 = vsel %vm1987, %v104, %v432
    %v2048 = vsel %vm1987, %v105, %v434
    %v2049 = vsel %vm1987, %v106, %v436
    %v2050 = vsel %vm1987, %v107, %v438
    %v2051 = vsel %vm1987, %v108, %v440
    %vm2052 = vcmask 48128
    %v2053 = vsel %vm2052, %v1988, %v570
    %v2054 = vsel %vm2052, %v1989, %v572
    %v2055 = vsel %vm2052, %v1990, %v574
    %v2056 = vsel %vm2052, %v1991, %v576
    %v2057 = vsel %vm2052, %v1992, %v578
    %v2058 = vsel %vm2052, %v1993, %v580
    %v2059 = vsel %vm2052, %v1994, %v582
    %v2060 = vsel %vm2052, %v1995, %v584
    %v2061 = vsel %vm2052, %v1996, %v586
    %v2062 = vsel %vm2052, %v1997, %v588
    %v2063 = vsel %vm2052, %v1998, %v590
    %v2064 = vsel %vm2052, %v1999, %v592
    %v2065 = vsel %vm2052, %v2000, %v594
    %v2066 = vsel %vm2052, %v2001, %v596
    %v2067 = vsel %vm2052, %v2002, %v598
    %v2068 = vsel %vm2052, %v2003, %v600
    %v2069 = vsel %vm2052, %v2004, %v602
    %v2070 = vsel %vm2052, %v2005, %v604
    %v2071 = vsel %vm2052, %v2006, %v606
    %v2072 = vsel %vm2052, %v2007, %v608
    %v2073 = vsel %vm2052, %v2008, %v610
    %v2074 = vsel %vm2052, %v2009, %v612
    %v2075 = vsel %vm2052, %v2010, %v614
    %v2076 = vsel %vm2052, %v2011, %v616
    %v2077 = vsel %vm2052, %v2012, %v618
    %v2078 = vsel %vm2052, %v2013, %v620
    %v2079 = vsel %vm2052, %v2014, %v622
    %v2080 = vsel %vm2052, %v2015, %v624
    %v2081 = vsel %vm2052, %v2016, %v626
    %v2082 = vsel %vm2052, %v2017, %v628
    %v2083 = vsel %vm2052, %v2018, %v630
    %v2084 = vsel %vm2052, %v2019, %v632
    %v2085 = vsel %vm2052, %v2020, %v634
    %v2086 = vsel %vm2052, %v2021, %v636
    %v2087 = vsel %vm2052, %v2022, %v638
    %v2088 = vsel %vm2052, %v2023, %v640
    %v2089 = vsel %vm2052, %v2024, %v642
    %v2090 = vsel %vm2052, %v2025, %v644
    %v2091 = vsel %vm2052, %v2026, %v646
    %v2092 = vsel %vm2052, %v2027, %v648
    %v2093 = vsel %vm2052, %v2028, %v650
    %v2094 = vsel %vm2052, %v2029, %v652
    %v2095 = vsel %vm2052, %v2030, %v654
    %v2096 = vsel %vm2052, %v2031, %v656
    %v2097 = vsel %vm2052, %v2032, %v658
    %v2098 = vsel %vm2052, %v2033, %v660
    %v2099 = vsel %vm2052, %v2034, %v662
    %v2100 = vsel %vm2052, %v2035, %v664
    %v2101 = vsel %vm2052, %v2036, %v666
    %v2102 = vsel %vm2052, %v2037, %v668
    %v2103 = vsel %vm2052, %v2038, %v670
    %v2104 = vsel %vm2052, %v2039, %v672
    %v2105 = vsel %vm2052, %v2040, %v674
    %v2106 = vsel %vm2052, %v2041, %v676
    %v2107 = vsel %vm2052, %v2042, %v678
    %v2108 = vsel %vm2052, %v2043, %v680
    %v2109 = vsel %vm2052, %v2044, %v682
    %v2110 = vsel %vm2052, %v2045, %v684
    %v2111 = vsel %vm2052, %v2046, %v686
    %v2112 = vsel %vm2052, %v2047, %v688
    %v2113 = vsel %vm2052, %v2048, %v690
    %v2114 = vsel %vm2052, %v2049, %v692
    %v2115 = vsel %vm2052, %v2050, %v694
    %v2116 = vsel %vm2052, %v2051, %v696
    %vm2117 = vcmask 72704
    %v2118 = vsel %vm2117, %v2053, %v826
    %v2119 = vsel %vm2117, %v2054, %v828
    %v2120 = vsel %vm2117, %v2055, %v830
    %v2121 = vsel %vm2117, %v2056, %v832
    %v2122 = vsel %vm2117, %v2057, %v834
    %v2123 = vsel %vm2117, %v2058, %v836
    %v2124 = vsel %vm2117, %v2059, %v838
    %v2125 = vsel %vm2117, %v2060, %v840
    %v2126 = vsel %vm2117, %v2061, %v842
    %v2127 = vsel %vm2117, %v2062, %v844
    %v2128 = vsel %vm2117, %v2063, %v846
    %v2129 = vsel %vm2117, %v2064, %v848
    %v2130 = vsel %vm2117, %v2065, %v850
    %v2131 = vsel %vm2117, %v2066, %v852
    %v2132 = vsel %vm2117, %v2067, %v854
    %v2133 = vsel %vm2117, %v2068, %v856
    %v2134 = vsel %vm2117, %v2069, %v858
    %v2135 = vsel %vm2117, %v2070, %v860
    %v2136 = vsel %vm2117, %v2071, %v862
    %v2137 = vsel %vm2117, %v2072, %v864
    %v2138 = vsel %vm2117, %v2073, %v866
    %v2139 = vsel %vm2117, %v2074, %v868
    %v2140 = vsel %vm2117, %v2075, %v870
    %v2141 = vsel %vm2117, %v2076, %v872
    %v2142 = vsel %vm2117, %v2077, %v874
    %v2143 = vsel %vm2117, %v2078, %v876
    %v2144 = vsel %vm2117, %v2079, %v878
    %v2145 = vsel %vm2117, %v2080, %v880
    %v2146 = vsel %vm2117, %v2081, %v882
    %v2147 = vsel %vm2117, %v2082, %v884
    %v2148 = vsel %vm2117, %v2083, %v886
    %v2149 = vsel %vm2117, %v2084, %v888
    %v2150 = vsel %vm2117, %v2085, %v890
    %v2151 = vsel %vm2117, %v2086, %v892
    %v2152 = vsel %vm2117, %v2087, %v894
    %v2153 = vsel %vm2117, %v2088, %v896
    %v2154 = vsel %vm2117, %v2089, %v898
    %v2155 = vsel %vm2117, %v2090, %v900
    %v2156 = vsel %vm2117, %v2091, %v902
    %v2157 = vsel %vm2117, %v2092, %v904
    %v2158 = vsel %vm2117, %v2093, %v906
    %v2159 = vsel %vm2117, %v2094, %v908
    %v2160 = vsel %vm2117, %v2095, %v910
    %v2161 = vsel %vm2117, %v2096, %v912
    %v2162 = vsel %vm2117, %v2097, %v914
    %v2163 = vsel %vm2117, %v2098, %v916
    %v2164 = vsel %vm2117, %v2099, %v918
    %v2165 = vsel %vm2117, %v2100, %v920
    %v2166 = vsel %vm2117, %v2101, %v922
    %v2167 = vsel %vm2117, %v2102, %v924
    %v2168 = vsel %vm2117, %v2103, %v926
    %v2169 = vsel %vm2117, %v2104, %v928
    %v2170 = vsel %vm2117, %v2105, %v930
    %v2171 = vsel %vm2117, %v2106, %v932
    %v2172 = vsel %vm2117, %v2107, %v934
    %v2173 = vsel %vm2117, %v2108, %v936
    %v2174 = vsel %vm2117, %v2109, %v938
    %v2175 = vsel %vm2117, %v2110, %v940
    %v2176 = vsel %vm2117, %v2111, %v942
    %v2177 = vsel %vm2117, %v2112, %v944
    %v2178 = vsel %vm2117, %v2113, %v946
    %v2179 = vsel %vm2117, %v2114, %v948
    %v2180 = vsel %vm2117, %v2115, %v950
    %v2181 = vsel %vm2117, %v2116, %v952
    %vm2182 = vcmask 97280
    %v2183 = vsel %vm2182, %v2118, %v1020
    %v2184 = vsel %vm2182, %v2119, %v1022
    %v2185 = vsel %vm2182, %v2120, %v1024
    %v2186 = vsel %vm2182, %v2121, %v1026
    %v2187 = vsel %vm2182, %v2122, %v1028
    %v2188 = vsel %vm2182, %v2123, %v1030
    %v2189 = vsel %vm2182, %v2124, %v1032
    %v2190 = vsel %vm2182, %v2125, %v1034
    %v2191 = vsel %vm2182, %v2126, %v1036
    %v2192 = vsel %vm2182, %v2127, %v1038
    %v2193 = vsel %vm2182, %v2128, %v1040
    %v2194 = vsel %vm2182, %v2129, %v1042
    %v2195 = vsel %vm2182, %v2130, %v1044
    %v2196 = vsel %vm2182, %v2131, %v1046
    %v2197 = vsel %vm2182, %v2132, %v1048
    %v2198 = vsel %vm2182, %v2133, %v1050
    %v2199 = vsel %vm2182, %v2134, %v1052
    %v2200 = vsel %vm2182, %v2135, %v1054
    %v2201 = vsel %vm2182, %v2136, %v1056
    %v2202 = vsel %vm2182, %v2137, %v1058
    %v2203 = vsel %vm2182, %v2138, %v1060
    %v2204 = vsel %vm2182, %v2139, %v1062
    %v2205 = vsel %vm2182, %v2140, %v1064
    %v2206 = vsel %vm2182, %v2141, %v1066
    %v2207 = vsel %vm2182, %v2142, %v1068
    %v2208 = vsel %vm2182, %v2143, %v1070
    %v2209 = vsel %vm2182, %v2144, %v1072
    %v2210 = vsel %vm2182, %v2145, %v1074
    %v2211 = vsel %vm2182, %v2146, %v1076
    %v2212 = vsel %vm2182, %v2147, %v1078
    %v2213 = vsel %vm2182, %v2148, %v1080
    %v2214 = vsel %vm2182, %v2149, %v1082
    %v2215 = vsel %vm2182, %v2150, %v1084
    %v2216 = vsel %vm2182, %v2151, %v1086
    %v2217 = vsel %vm2182, %v2152, %v1088
    %v2218 = vsel %vm2182, %v2153, %v1090
    %v2219 = vsel %vm2182, %v2154, %v1092
    %v2220 = vsel %vm2182, %v2155, %v1094
    %v2221 = vsel %vm2182, %v2156, %v1096
    %v2222 = vsel %vm2182, %v2157, %v1098
    %v2223 = vsel %vm2182, %v2158, %v1100
    %v2224 = vsel %vm2182, %v2159, %v1102
    %v2225 = vsel %vm2182, %v2160, %v1104
    %v2226 = vsel %vm2182, %v2161, %v1106
    %v2227 = vsel %vm2182, %v2162, %v1108
    %v2228 = vsel %vm2182, %v2163, %v1110
    %v2229 = vsel %vm2182, %v2164, %v1112
    %v2230 = vsel %vm2182, %v2165, %v1114
    %v2231 = vsel %vm2182, %v2166, %v1116
    %v2232 = vsel %vm2182, %v2167, %v1118
    %v2233 = vsel %vm2182, %v2168, %v1120
    %v2234 = vsel %vm2182, %v2169, %v1122
    %v2235 = vsel %vm2182, %v2170, %v1124
    %v2236 = vsel %vm2182, %v2171, %v1126
    %v2237 = vsel %vm2182, %v2172, %v1128
    %v2238 = vsel %vm2182, %v2173, %v1130
    %v2239 = vsel %vm2182, %v2174, %v1132
    %v2240 = vsel %vm2182, %v2175, %v1134
    %v2241 = vsel %vm2182, %v2176, %v1136
    %v2242 = vsel %vm2182, %v2177, %v1138
    %v2243 = vsel %vm2182, %v2178, %v1140
    %v2244 = vsel %vm2182, %v2179, %v1142
    %v2245 = vsel %vm2182, %v2180, %v1144
    %v2246 = vsel %vm2182, %v2181, %v1146
    %vm2247 = vcmask 121856
    %v2248 = vsel %vm2247, %v2183, %v1214
    %v2249 = vsel %vm2247, %v2184, %v1216
    %v2250 = vsel %vm2247, %v2185, %v1218
    %v2251 = vsel %vm2247, %v2186, %v1220
    %v2252 = vsel %vm2247, %v2187, %v1222
    %v2253 = vsel %vm2247, %v2188, %v1224
    %v2254 = vsel %vm2247, %v2189, %v1226
    %v2255 = vsel %vm2247, %v2190, %v1228
    %v2256 = vsel %vm2247, %v2191, %v1230
    %v2257 = vsel %vm2247, %v2192, %v1232
    %v2258 = vsel %vm2247, %v2193, %v1234
    %v2259 = vsel %vm2247, %v2194, %v1236
    %v2260 = vsel %vm2247, %v2195, %v1238
    %v2261 = vsel %vm2247, %v2196, %v1240
    %v2262 = vsel %vm2247, %v2197, %v1242
    %v2263 = vsel %vm2247, %v2198, %v1244
    %v2264 = vsel %vm2247, %v2199, %v1246
    %v2265 = vsel %vm2247, %v2200, %v1248
    %v2266 = vsel %vm2247, %v2201, %v1250
    %v2267 = vsel %vm2247, %v2202, %v1252
    %v2268 = vsel %vm2247, %v2203, %v1254
    %v2269 = vsel %vm2247, %v2204, %v1256
    %v2270 = vsel %vm2247, %v2205, %v1258
    %v2271 = vsel %vm2247, %v2206, %v1260
    %v2272 = vsel %vm2247, %v2207, %v1262
    %v2273 = vsel %vm2247, %v2208, %v1264
    %v2274 = vsel %vm2247, %v2209, %v1266
    %v2275 = vsel %vm2247, %v2210, %v1268
    %v2276 = vsel %vm2247, %v2211, %v1270
    %v2277 = vsel %vm2247, %v2212, %v1272
    %v2278 = vsel %vm2247, %v2213, %v1274
    %v2279 = vsel %vm2247, %v2214, %v1276
    %v2280 = vsel %vm2247, %v2215, %v1278
    %v2281 = vsel %vm2247, %v2216, %v1280
    %v2282 = vsel %vm2247, %v2217, %v1282
    %v2283 = vsel %vm2247, %v2218, %v1284
    %v2284 = vsel %vm2247, %v2219, %v1286
    %v2285 = vsel %vm2247, %v2220, %v1288
    %v2286 = vsel %vm2247, %v2221, %v1290
    %v2287 = vsel %vm2247, %v2222, %v1292
    %v2288 = vsel %vm2247, %v2223, %v1294
    %v2289 = vsel %vm2247, %v2224, %v1296
    %v2290 = vsel %vm2247, %v2225, %v1298
    %v2291 = vsel %vm2247, %v2226, %v1300
    %v2292 = vsel %vm2247, %v2227, %v1302
    %v2293 = vsel %vm2247, %v2228, %v1304
    %v2294 = vsel %vm2247, %v2229, %v1306
    %v2295 = vsel %vm2247, %v2230, %v1308
    %v2296 = vsel %vm2247, %v2231, %v1310
    %v2297 = vsel %vm2247, %v2232, %v1312
    %v2298 = vsel %vm2247, %v2233, %v1314
    %v2299 = vsel %vm2247, %v2234, %v1316
    %v2300 = vsel %vm2247, %v2235, %v1318
    %v2301 = vsel %vm2247, %v2236, %v1320
    %v2302 = vsel %vm2247, %v2237, %v1322
    %v2303 = vsel %vm2247, %v2238, %v1324
    %v2304 = vsel %vm2247, %v2239, %v1326
    %v2305 = vsel %vm2247, %v2240, %v1328
    %v2306 = vsel %vm2247, %v2241, %v1330
    %v2307 = vsel %vm2247, %v2242, %v1332
    %v2308 = vsel %vm2247, %v2243, %v1334
    %v2309 = vsel %vm2247, %v2244, %v1336
    %v2310 = vsel %vm2247, %v2245, %v1338
    %v2311 = vsel %vm2247, %v2246, %v1340
    %vm2312 = vcmask 146432
    %v2313 = vsel %vm2312, %v2248, %v1408
    %v2314 = vsel %vm2312, %v2249, %v1410
    %v2315 = vsel %vm2312, %v2250, %v1412
    %v2316 = vsel %vm2312, %v2251, %v1414
    %v2317 = vsel %vm2312, %v2252, %v1416
    %v2318 = vsel %vm2312, %v2253, %v1418
    %v2319 = vsel %vm2312, %v2254, %v1420
    %v2320 = vsel %vm2312, %v2255, %v1422
    %v2321 = vsel %vm2312, %v2256, %v1424
    %v2322 = vsel %vm2312, %v2257, %v1426
    %v2323 = vsel %vm2312, %v2258, %v1428
    %v2324 = vsel %vm2312, %v2259, %v1430
    %v2325 = vsel %vm2312, %v2260, %v1432
    %v2326 = vsel %vm2312, %v2261, %v1434
    %v2327 = vsel %vm2312, %v2262, %v1436
    %v2328 = vsel %vm2312, %v2263, %v1438
    %v2329 = vsel %vm2312, %v2264, %v1440
    %v2330 = vsel %vm2312, %v2265, %v1442
    %v2331 = vsel %vm2312, %v2266, %v1444
    %v2332 = vsel %vm2312, %v2267, %v1446
    %v2333 = vsel %vm2312, %v2268, %v1448
    %v2334 = vsel %vm2312, %v2269, %v1450
    %v2335 = vsel %vm2312, %v2270, %v1452
    %v2336 = vsel %vm2312, %v2271, %v1454
    %v2337 = vsel %vm2312, %v2272, %v1456
    %v2338 = vsel %vm2312, %v2273, %v1458
    %v2339 = vsel %vm2312, %v2274, %v1460
    %v2340 = vsel %vm2312, %v2275, %v1462
    %v2341 = vsel %vm2312, %v2276, %v1464
    %v2342 = vsel %vm2312, %v2277, %v1466
    %v2343 = vsel %vm2312, %v2278, %v1468
    %v2344 = vsel %vm2312, %v2279, %v1470
    %v2345 = vsel %vm2312, %v2280, %v1472
    %v2346 = vsel %vm2312, %v2281, %v1474
    %v2347 = vsel %vm2312, %v2282, %v1476
    %v2348 = vsel %vm2312, %v2283, %v1478
    %v2349 = vsel %vm2312, %v2284, %v1480
    %v2350 = vsel %vm2312, %v2285, %v1482
    %v2351 = vsel %vm2312, %v2286, %v1484
    %v2352 = vsel %vm2312, %v2287, %v1486
    %v2353 = vsel %vm2312, %v2288, %v1488
    %v2354 = vsel %vm2312, %v2289, %v1490
    %v2355 = vsel %vm2312, %v2290, %v1492
    %v2356 = vsel %vm2312, %v2291, %v1494
    %v2357 = vsel %vm2312, %v2292, %v1496
    %v2358 = vsel %vm2312, %v2293, %v1498
    %v2359 = vsel %vm2312, %v2294, %v1500
    %v2360 = vsel %vm2312, %v2295, %v1502
    %v2361 = vsel %vm2312, %v2296, %v1504
    %v2362 = vsel %vm2312, %v2297, %v1506
    %v2363 = vsel %vm2312, %v2298, %v1508
    %v2364 = vsel %vm2312, %v2299, %v1510
    %v2365 = vsel %vm2312, %v2300, %v1512
    %v2366 = vsel %vm2312, %v2301, %v1514
    %v2367 = vsel %vm2312, %v2302, %v1516
    %v2368 = vsel %vm2312, %v2303, %v1518
    %v2369 = vsel %vm2312, %v2304, %v1520
    %v2370 = vsel %vm2312, %v2305, %v1522
    %v2371 = vsel %vm2312, %v2306, %v1524
    %v2372 = vsel %vm2312, %v2307, %v1526
    %v2373 = vsel %vm2312, %v2308, %v1528
    %v2374 = vsel %vm2312, %v2309, %v1530
    %v2375 = vsel %vm2312, %v2310, %v1532
    %v2376 = vsel %vm2312, %v2311, %v1534
    %vm2377 = vcmask 171008
    %v2378 = vsel %vm2377, %v2313, %v1602
    %v2379 = vsel %vm2377, %v2314, %v1604
    %v2380 = vsel %vm2377, %v2315, %v1606
    %v2381 = vsel %vm2377, %v2316, %v1608
    %v2382 = vsel %vm2377, %v2317, %v1610
    %v2383 = vsel %vm2377, %v2318, %v1612
    %v2384 = vsel %vm2377, %v2319, %v1614
    %v2385 = vsel %vm2377, %v2320, %v1616
    %v2386 = vsel %vm2377, %v2321, %v1618
    %v2387 = vsel %vm2377, %v2322, %v1620
    %v2388 = vsel %vm2377, %v2323, %v1622
    %v2389 = vsel %vm2377, %v2324, %v1624
    %v2390 = vsel %vm2377, %v2325, %v1626
    %v2391 = vsel %vm2377, %v2326, %v1628
    %v2392 = vsel %vm2377, %v2327, %v1630
    %v2393 = vsel %vm2377, %v2328, %v1632
    %v2394 = vsel %vm2377, %v2329, %v1634
    %v2395 = vsel %vm2377, %v2330, %v1636
    %v2396 = vsel %vm2377, %v2331, %v1638
    %v2397 = vsel %vm2377, %v2332, %v1640
    %v2398 = vsel %vm2377, %v2333, %v1642
    %v2399 = vsel %vm2377, %v2334, %v1644
    %v2400 = vsel %vm2377, %v2335, %v1646
    %v2401 = vsel %vm2377, %v2336, %v1648
    %v2402 = vsel %vm2377, %v2337, %v1650
    %v2403 = vsel %vm2377, %v2338, %v1652
    %v2404 = vsel %vm2377, %v2339, %v1654
    %v2405 = vsel %vm2377, %v2340, %v1656
    %v2406 = vsel %vm2377, %v2341, %v1658
    %v2407 = vsel %vm2377, %v2342, %v1660
    %v2408 = vsel %vm2377, %v2343, %v1662
    %v2409 = vsel %vm2377, %v2344, %v1664
    %v2410 = vsel %vm2377, %v2345, %v1666
    %v2411 = vsel %vm2377, %v2346, %v1668
    %v2412 = vsel %vm2377, %v2347, %v1670
    %v2413 = vsel %vm2377, %v2348, %v1672
    %v2414 = vsel %vm2377, %v2349, %v1674
    %v2415 = vsel %vm2377, %v2350, %v1676
    %v2416 = vsel %vm2377, %v2351, %v1678
    %v2417 = vsel %vm2377, %v2352, %v1680
    %v2418 = vsel %vm2377, %v2353, %v1682
    %v2419 = vsel %vm2377, %v2354, %v1684
    %v2420 = vsel %vm2377, %v2355, %v1686
    %v2421 = vsel %vm2377, %v2356, %v1688
    %v2422 = vsel %vm2377, %v2357, %v1690
    %v2423 = vsel %vm2377, %v2358, %v1692
    %v2424 = vsel %vm2377, %v2359, %v1694
    %v2425 = vsel %vm2377, %v2360, %v1696
    %v2426 = vsel %vm2377, %v2361, %v1698
    %v2427 = vsel %vm2377, %v2362, %v1700
    %v2428 = vsel %vm2377, %v2363, %v1702
    %v2429 = vsel %vm2377, %v2364, %v1704
    %v2430 = vsel %vm2377, %v2365, %v1706
    %v2431 = vsel %vm2377, %v2366, %v1708
    %v2432 = vsel %vm2377, %v2367, %v1710
    %v2433 = vsel %vm2377, %v2368, %v1712
    %v2434 = vsel %vm2377, %v2369, %v1714
    %v2435 = vsel %vm2377, %v2370, %v1716
    %v2436 = vsel %vm2377, %v2371, %v1718
    %v2437 = vsel %vm2377, %v2372, %v1720
    %v2438 = vsel %vm2377, %v2373, %v1722
    %v2439 = vsel %vm2377, %v2374, %v1724
    %v2440 = vsel %vm2377, %v2375, %v1726
    %v2441 = vsel %vm2377, %v2376, %v1728
    %vm2442 = vcmask 195584
    %v2443 = vsel %vm2442, %v2378, %v1796
    %v2444 = vsel %vm2442, %v2379, %v1798
    %v2445 = vsel %vm2442, %v2380, %v1800
    %v2446 = vsel %vm2442, %v2381, %v1802
    %v2447 = vsel %vm2442, %v2382, %v1804
    %v2448 = vsel %vm2442, %v2383, %v1806
    %v2449 = vsel %vm2442, %v2384, %v1808
    %v2450 = vsel %vm2442, %v2385, %v1810
    %v2451 = vsel %vm2442, %v2386, %v1812
    %v2452 = vsel %vm2442, %v2387, %v1814
    %v2453 = vsel %vm2442, %v2388, %v1816
    %v2454 = vsel %vm2442, %v2389, %v1818
    %v2455 = vsel %vm2442, %v2390, %v1820
    %v2456 = vsel %vm2442, %v2391, %v1822
    %v2457 = vsel %vm2442, %v2392, %v1824
    %v2458 = vsel %vm2442, %v2393, %v1826
    %v2459 = vsel %vm2442, %v2394, %v1828
    %v2460 = vsel %vm2442, %v2395, %v1830
    %v2461 = vsel %vm2442, %v2396, %v1832
    %v2462 = vsel %vm2442, %v2397, %v1834
    %v2463 = vsel %vm2442, %v2398, %v1836
    %v2464 = vsel %vm2442, %v2399, %v1838
    %v2465 = vsel %vm2442, %v2400, %v1840
    %v2466 = vsel %vm2442, %v2401, %v1842
    %v2467 = vsel %vm2442, %v2402, %v1844
    %v2468 = vsel %vm2442, %v2403, %v1846
    %v2469 = vsel %vm2442, %v2404, %v1848
    %v2470 = vsel %vm2442, %v2405, %v1850
    %v2471 = vsel %vm2442, %v2406, %v1852
    %v2472 = vsel %vm2442, %v2407, %v1854
    %v2473 = vsel %vm2442, %v2408, %v1856
    %v2474 = vsel %vm2442, %v2409, %v1858
    %v2475 = vsel %vm2442, %v2410, %v1860
    %v2476 = vsel %vm2442, %v2411, %v1862
    %v2477 = vsel %vm2442, %v2412, %v1864
    %v2478 = vsel %vm2442, %v2413, %v1866
    %v2479 = vsel %vm2442, %v2414, %v1868
    %v2480 = vsel %vm2442, %v2415, %v1870
    %v2481 = vsel %vm2442, %v2416, %v1872
    %v2482 = vsel %vm2442, %v2417, %v1874
    %v2483 = vsel %vm2442, %v2418, %v1876
    %v2484 = vsel %vm2442, %v2419, %v1878
    %v2485 = vsel %vm2442, %v2420, %v1880
    %v2486 = vsel %vm2442, %v2421, %v1882
    %v2487 = vsel %vm2442, %v2422, %v1884
    %v2488 = vsel %vm2442, %v2423, %v1886
    %v2489 = vsel %vm2442, %v2424, %v1888
    %v2490 = vsel %vm2442, %v2425, %v1890
    %v2491 = vsel %vm2442, %v2426, %v1892
    %v2492 = vsel %vm2442, %v2427, %v1894
    %v2493 = vsel %vm2442, %v2428, %v1896
    %v2494 = vsel %vm2442, %v2429, %v1898
    %v2495 = vsel %vm2442, %v2430, %v1900
    %v2496 = vsel %vm2442, %v2431, %v1902
    %v2497 = vsel %vm2442, %v2432, %v1904
    %v2498 = vsel %vm2442, %v2433, %v1906
    %v2499 = vsel %vm2442, %v2434, %v1908
    %v2500 = vsel %vm2442, %v2435, %v1910
    %v2501 = vsel %vm2442, %v2436, %v1912
    %v2502 = vsel %vm2442, %v2437, %v1914
    %v2503 = vsel %vm2442, %v2438, %v1916
    %v2504 = vsel %vm2442, %v2439, %v1918
    %v2505 = vsel %vm2442, %v2440, %v1920
    %v2506 = vsel %vm2442, %v2441, %v1922
    %v2507 = vld [vmem:[%s1] sm:$0xff]
    %v2508 = vld [vmem:[%s1 + $0x8] sm:$0xff]
    %v2509 = vld [vmem:[%s1 + $0x10] sm:$0xff]
    %v2510 = vld [vmem:[%s1 + $0x18] sm:$0x7]
    %v2511 = vld [vmem:[%s2] sm:$0x1]
    %v2513 = vperm.slane %v2511, 0
    %vm2515 = vcmask 220160
    %v2517 = vsel %vm2515, %v2443, 0
    %v2520 = vsel %vm2515, %v2444, 0
    %v2523 = vsel %vm2515, %v2445, 0
    %v2526 = vsel %vm2515, %v2446, 0
    %v2529 = vsel %vm2515, %v2447, 0
    %v2532 = vsel %vm2515, %v2448, 0
    %v2535 = vsel %vm2515, %v2449, 0
    %v2538 = vsel %vm2515, %v2450, 0
    %v2541 = vsel %vm2515, %v2451, 0
    %v2544 = vsel %vm2515, %v2452, 0
    %v2547 = vsel %vm2515, %v2453, 0
    %v2550 = vsel %vm2515, %v2454, 0
    %v2553 = vsel %vm2515, %v2455, 0
    %v2556 = vsel %vm2515, %v2456, 0
    %v2559 = vsel %vm2515, %v2457, 0
    %v2562 = vsel %vm2515, %v2458, 0
    %v2565 = vsel %vm2515, %v2459, 0
    %v2568 = vsel %vm2515, %v2460, 0
    %v2571 = vsel %vm2515, %v2461, 0
    %v2574 = vsel %vm2515, %v2462, 0
    %v2577 = vsel %vm2515, %v2463, 0
    %v2580 = vsel %vm2515, %v2464, 0
    %v2583 = vsel %vm2515, %v2465, 0
    %v2586 = vsel %vm2515, %v2466, 0
    %v2589 = vsel %vm2515, %v2467, 0
    %v2592 = vsel %vm2515, %v2468, 0
    %v2595 = vsel %vm2515, %v2469, 0
    %v2598 = vsel %vm2515, %v2470, 0
    %v2601 = vsel %vm2515, %v2471, 0
    %v2604 = vsel %vm2515, %v2472, 0
    %v2607 = vsel %vm2515, %v2473, 0
    %v2610 = vsel %vm2515, %v2474, 0
    %v2613 = vsel %vm2515, %v2475, 0
    %v2616 = vsel %vm2515, %v2476, 0
    %v2619 = vsel %vm2515, %v2477, 0
    %v2622 = vsel %vm2515, %v2478, 0
    %v2625 = vsel %vm2515, %v2479, 0
    %v2628 = vsel %vm2515, %v2480, 0
    %v2631 = vsel %vm2515, %v2481, 0
    %v2634 = vsel %vm2515, %v2482, 0
    %v2637 = vsel %vm2515, %v2483, 0
    %v2640 = vsel %vm2515, %v2484, 0
    %v2643 = vsel %vm2515, %v2485, 0
    %v2646 = vsel %vm2515, %v2486, 0
    %v2649 = vsel %vm2515, %v2487, 0
    %v2652 = vsel %vm2515, %v2488, 0
    %v2655 = vsel %vm2515, %v2489, 0
    %v2658 = vsel %vm2515, %v2490, 0
    %v2661 = vsel %vm2515, %v2491, 0
    %v2664 = vsel %vm2515, %v2492, 0
    %v2667 = vsel %vm2515, %v2493, 0
    %v2670 = vsel %vm2515, %v2494, 0
    %v2673 = vsel %vm2515, %v2495, 0
    %v2676 = vsel %vm2515, %v2496, 0
    %v2679 = vsel %vm2515, %v2497, 0
    %v2682 = vsel %vm2515, %v2498, 0
    %v2685 = vsel %vm2515, %v2499, 0
    %v2688 = vsel %vm2515, %v2500, 0
    %v2691 = vsel %vm2515, %v2501, 0
    %v2694 = vsel %vm2515, %v2502, 0
    %v2697 = vsel %vm2515, %v2503, 0
    %v2700 = vsel %vm2515, %v2504, 0
    %v2703 = vsel %vm2515, %v2505, 0
    %v2706 = vsel %vm2515, %v2506, 0
    %vm2708 = vcmask 1042432
    %v2710 = vsel %vm2708, %v2510, 0
    %2712 = vmatpush.msra.mxu0 0.0
    %2713 = vmatpush.msra.mxu0 0.0
    %2714 = vmatpush.msra.mxu0 0.0
    %2715 = vmatpush.msra.mxu0 0.0
    %2716 = vmatpush.msra.mxu0 0.0
    %2717 = vmatpush.msra.mxu0 0.0
    %2718 = vmatpush.msra.mxu0 0.0
    %2719 = vmatpush.msra.mxu0 0.0
    %2720 = vmatpush.msra.mxu0 0.0
    %2721 = vmatpush.msra.mxu0 0.0
    %2722 = vmatpush.msra.mxu0 0.0
    %2723 = vmatpush.msra.mxu0 0.0
    %2724 = vmatpush.msra.mxu0 %v2710
    %2725 = vmatpush.msra.mxu0 %v2509
    %2726 = vmatpush.msra.mxu0 %v2508
    %2727 = vmatpush.msra.mxu0 %v2507
    %2728 = vmatmul.f32.gmra.mxu0 %v2517
    %v2729 = vpop.f32.mrf.mxu0
    %v2730 = vadd.f32 %v2513, %v2729
    %2731 = vmatmul.f32.gmra.mxu0 %v2520
    %v2732 = vpop.f32.mrf.mxu0
    %v2733 = vadd.f32 %v2513, %v2732
    %2734 = vmatmul.f32.gmra.mxu0 %v2523
    %v2735 = vpop.f32.mrf.mxu0
    %v2736 = vadd.f32 %v2513, %v2735
    %2737 = vmatmul.f32.gmra.mxu0 %v2526
    %v2738 = vpop.f32.mrf.mxu0
    %v2739 = vadd.f32 %v2513, %v2738
    %2740 = vmatmul.f32.gmra.mxu0 %v2529
    %v2741 = vpop.f32.mrf.mxu0
    %v2742 = vadd.f32 %v2513, %v2741
    %2743 = vmatmul.f32.gmra.mxu0 %v2532
    %v2744 = vpop.f32.mrf.mxu0
    %v2745 = vadd.f32 %v2513, %v2744
    %2746 = vmatmul.f32.gmra.mxu0 %v2535
    %v2747 = vpop.f32.mrf.mxu0
    %v2748 = vadd.f32 %v2513, %v2747
    %2749 = vmatmul.f32.gmra.mxu0 %v2538
    %v2750 = vpop.f32.mrf.mxu0
    %v2751 = vadd.f32 %v2513, %v2750
    %2752 = vmatmul.f32.gmra.mxu0 %v2541
    %v2753 = vpop.f32.mrf.mxu0
    %v2754 = vadd.f32 %v2513, %v2753
    %2755 = vmatmul.f32.gmra.mxu0 %v2544
    %v2756 = vpop.f32.mrf.mxu0
    %v2757 = vadd.f32 %v2513, %v2756
    %2758 = vmatmul.f32.gmra.mxu0 %v2547
    %v2759 = vpop.f32.mrf.mxu0
    %v2760 = vadd.f32 %v2513, %v2759
    %2761 = vmatmul.f32.gmra.mxu0 %v2550
    %v2762 = vpop.f32.mrf.mxu0
    %v2763 = vadd.f32 %v2513, %v2762
    %2764 = vmatmul.f32.gmra.mxu0 %v2553
    %v2765 = vpop.f32.mrf.mxu0
    %v2766 = vadd.f32 %v2513, %v2765
    %2767 = vmatmul.f32.gmra.mxu0 %v2556
    %v2768 = vpop.f32.mrf.mxu0
    %v2769 = vadd.f32 %v2513, %v2768
    %2770 = vmatmul.f32.gmra.mxu0 %v2559
    %v2771 = vpop.f32.mrf.mxu0
    %v2772 = vadd.f32 %v2513, %v2771
    %2773 = vmatmul.f32.gmra.mxu0 %v2562
    %v2774 = vpop.f32.mrf.mxu0
    %v2775 = vadd.f32 %v2513, %v2774
    %2776 = vmatmul.f32.gmra.mxu0 %v2565
    %v2777 = vpop.f32.mrf.mxu0
    %v2778 = vadd.f32 %v2513, %v2777
    %2779 = vmatmul.f32.gmra.mxu0 %v2568
    %v2780 = vpop.f32.mrf.mxu0
    %v2781 = vadd.f32 %v2513, %v2780
    %2782 = vmatmul.f32.gmra.mxu0 %v2571
    %v2783 = vpop.f32.mrf.mxu0
    %v2784 = vadd.f32 %v2513, %v2783
    %2785 = vmatmul.f32.gmra.mxu0 %v2574
    %v2786 = vpop.f32.mrf.mxu0
    %v2787 = vadd.f32 %v2513, %v2786
    %2788 = vmatmul.f32.gmra.mxu0 %v2577
    %v2789 = vpop.f32.mrf.mxu0
    %v2790 = vadd.f32 %v2513, %v2789
    %2791 = vmatmul.f32.gmra.mxu0 %v2580
    %v2792 = vpop.f32.mrf.mxu0
    %v2793 = vadd.f32 %v2513, %v2792
    %2794 = vmatmul.f32.gmra.mxu0 %v2583
    %v2795 = vpop.f32.mrf.mxu0
    %v2796 = vadd.f32 %v2513, %v2795
    %2797 = vmatmul.f32.gmra.mxu0 %v2586
    %v2798 = vpop.f32.mrf.mxu0
    %v2799 = vadd.f32 %v2513, %v2798
    %2800 = vmatmul.f32.gmra.mxu0 %v2589
    %v2801 = vpop.f32.mrf.mxu0
    %v2802 = vadd.f32 %v2513, %v2801
    %2803 = vmatmul.f32.gmra.mxu0 %v2592
    %v2804 = vpop.f32.mrf.mxu0
    %v2805 = vadd.f32 %v2513, %v2804
    %2806 = vmatmul.f32.gmra.mxu0 %v2595
    %v2807 = vpop.f32.mrf.mxu0
    %v2808 = vadd.f32 %v2513, %v2807
    %2809 = vmatmul.f32.gmra.mxu0 %v2598
    %v2810 = vpop.f32.mrf.mxu0
    %v2811 = vadd.f32 %v2513, %v2810
    %2812 = vmatmul.f32.gmra.mxu0 %v2601
    %v2813 = vpop.f32.mrf.mxu0
    %v2814 = vadd.f32 %v2513, %v2813
    %2815 = vmatmul.f32.gmra.mxu0 %v2604
    %v2816 = vpop.f32.mrf.mxu0
    %v2817 = vadd.f32 %v2513, %v2816
    %2818 = vmatmul.f32.gmra.mxu0 %v2607
    %v2819 = vpop.f32.mrf.mxu0
    %v2820 = vadd.f32 %v2513, %v2819
    %2821 = vmatmul.f32.gmra.mxu0 %v2610
    %v2822 = vpop.f32.mrf.mxu0
    %v2823 = vadd.f32 %v2513, %v2822
    %2824 = vmatmul.f32.gmra.mxu0 %v2613
    %v2825 = vpop.f32.mrf.mxu0
    %v2826 = vadd.f32 %v2513, %v2825
    %2827 = vmatmul.f32.gmra.mxu0 %v2616
    %v2828 = vpop.f32.mrf.mxu0
    %v2829 = vadd.f32 %v2513, %v2828
    %2830 = vmatmul.f32.gmra.mxu0 %v2619
    %v2831 = vpop.f32.mrf.mxu0
    %v2832 = vadd.f32 %v2513, %v2831
    %2833 = vmatmul.f32.gmra.mxu0 %v2622
    %v2834 = vpop.f32.mrf.mxu0
    %v2835 = vadd.f32 %v2513, %v2834
    %2836 = vmatmul.f32.gmra.mxu0 %v2625
    %v2837 = vpop.f32.mrf.mxu0
    %v2838 = vadd.f32 %v2513, %v2837
    %2839 = vmatmul.f32.gmra.mxu0 %v2628
    %v2840 = vpop.f32.mrf.mxu0
    %v2841 = vadd.f32 %v2513, %v2840
    %2842 = vmatmul.f32.gmra.mxu0 %v2631
    %v2843 = vpop.f32.mrf.mxu0
    %v2844 = vadd.f32 %v2513, %v2843
    %2845 = vmatmul.f32.gmra.mxu0 %v2634
    %v2846 = vpop.f32.mrf.mxu0
    %v2847 = vadd.f32 %v2513, %v2846
    %2848 = vmatmul.f32.gmra.mxu0 %v2637
    %v2849 = vpop.f32.mrf.mxu0
    %v2850 = vadd.f32 %v2513, %v2849
    %2851 = vmatmul.f32.gmra.mxu0 %v2640
    %v2852 = vpop.f32.mrf.mxu0
    %v2853 = vadd.f32 %v2513, %v2852
    %2854 = vmatmul.f32.gmra.mxu0 %v2643
    %v2855 = vpop.f32.mrf.mxu0
    %v2856 = vadd.f32 %v2513, %v2855
    %2857 = vmatmul.f32.gmra.mxu0 %v2646
    %v2858 = vpop.f32.mrf.mxu0
    %v2859 = vadd.f32 %v2513, %v2858
    %2860 = vmatmul.f32.gmra.mxu0 %v2649
    %v2861 = vpop.f32.mrf.mxu0
    %v2862 = vadd.f32 %v2513, %v2861
    %2863 = vmatmul.f32.gmra.mxu0 %v2652
    %v2864 = vpop.f32.mrf.mxu0
    %v2865 = vadd.f32 %v2513, %v2864
    %2866 = vmatmul.f32.gmra.mxu0 %v2655
    %v2867 = vpop.f32.mrf.mxu0
    %v2868 = vadd.f32 %v2513, %v2867
    %2869 = vmatmul.f32.gmra.mxu0 %v2658
    %v2870 = vpop.f32.mrf.mxu0
    %v2871 = vadd.f32 %v2513, %v2870
    %2872 = vmatmul.f32.gmra.mxu0 %v2661
    %v2873 = vpop.f32.mrf.mxu0
    %v2874 = vadd.f32 %v2513, %v2873
    %2875 = vmatmul.f32.gmra.mxu0 %v2664
    %v2876 = vpop.f32.mrf.mxu0
    %v2877 = vadd.f32 %v2513, %v2876
    %2878 = vmatmul.f32.gmra.mxu0 %v2667
    %v2879 = vpop.f32.mrf.mxu0
    %v2880 = vadd.f32 %v2513, %v2879
    %2881 = vmatmul.f32.gmra.mxu0 %v2670
    %v2882 = vpop.f32.mrf.mxu0
    %v2883 = vadd.f32 %v2513, %v2882
    %2884 = vmatmul.f32.gmra.mxu0 %v2673
    %v2885 = vpop.f32.mrf.mxu0
    %v2886 = vadd.f32 %v2513, %v2885
    %2887 = vmatmul.f32.gmra.mxu0 %v2676
    %v2888 = vpop.f32.mrf.mxu0
    %v2889 = vadd.f32 %v2513, %v2888
    %2890 = vmatmul.f32.gmra.mxu0 %v2679
    %v2891 = vpop.f32.mrf.mxu0
    %v2892 = vadd.f32 %v2513, %v2891
    %2893 = vmatmul.f32.gmra.mxu0 %v2682
    %v2894 = vpop.f32.mrf.mxu0
    %v2895 = vadd.f32 %v2513, %v2894
    %2896 = vmatmul.f32.gmra.mxu0 %v2685
    %v2897 = vpop.f32.mrf.mxu0
    %v2898 = vadd.f32 %v2513, %v2897
    %2899 = vmatmul.f32.gmra.mxu0 %v2688
    %v2900 = vpop.f32.mrf.mxu0
    %v2901 = vadd.f32 %v2513, %v2900
    %2902 = vmatmul.f32.gmra.mxu0 %v2691
    %v2903 = vpop.f32.mrf.mxu0
    %v2904 = vadd.f32 %v2513, %v2903
    %2905 = vmatmul.f32.gmra.mxu0 %v2694
    %v2906 = vpop.f32.mrf.mxu0
    %v2907 = vadd.f32 %v2513, %v2906
    %2908 = vmatmul.f32.gmra.mxu0 %v2697
    %v2909 = vpop.f32.mrf.mxu0
    %v2910 = vadd.f32 %v2513, %v2909
    %2911 = vmatmul.f32.gmra.mxu0 %v2700
    %v2912 = vpop.f32.mrf.mxu0
    %v2913 = vadd.f32 %v2513, %v2912
    %2914 = vmatmul.f32.gmra.mxu0 %v2703
    %v2915 = vpop.f32.mrf.mxu0
    %v2916 = vadd.f32 %v2513, %v2915
    %2917 = vmatmul.f32.gmra.mxu0 %v2706
    %v2918 = vpop.f32.mrf.mxu0
    %v2919 = vadd.f32 %v2513, %v2918
    %2920 = vdwg.mxu0
    %vm2921 = vcmask 130048
    %2922 = vst.msk [vmem:[#allocation2] sm:$0xff] %vm2921, %v2730
    %2923 = vst.msk [vmem:[#allocation2 + $0x8] sm:$0xff] %vm2921, %v2733
    %2924 = vst.msk [vmem:[#allocation2 + $0x10] sm:$0xff] %vm2921, %v2736
    %2925 = vst.msk [vmem:[#allocation2 + $0x18] sm:$0xff] %vm2921, %v2739
    %2926 = vst.msk [vmem:[#allocation2 + $0x20] sm:$0xff] %vm2921, %v2742
    %2927 = vst.msk [vmem:[#allocation2 + $0x28] sm:$0xff] %vm2921, %v2745
    %2928 = vst.msk [vmem:[#allocation2 + $0x30] sm:$0xff] %vm2921, %v2748
    %2929 = vst.msk [vmem:[#allocation2 + $0x38] sm:$0xff] %vm2921, %v2751
    %2930 = vst.msk [vmem:[#allocation2 + $0x40] sm:$0xff] %vm2921, %v2754
    %2931 = vst.msk [vmem:[#allocation2 + $0x48] sm:$0xff] %vm2921, %v2757
    %2932 = vst.msk [vmem:[#allocation2 + $0x50] sm:$0xff] %vm2921, %v2760
    %2933 = vst.msk [vmem:[#allocation2 + $0x58] sm:$0xff] %vm2921, %v2763
    %2934 = vst.msk [vmem:[#allocation2 + $0x60] sm:$0xff] %vm2921, %v2766
    %2935 = vst.msk [vmem:[#allocation2 + $0x68] sm:$0xff] %vm2921, %v2769
    %2936 = vst.msk [vmem:[#allocation2 + $0x70] sm:$0xff] %vm2921, %v2772
    %2937 = vst.msk [vmem:[#allocation2 + $0x78] sm:$0xff] %vm2921, %v2775
    %2938 = vst.msk [vmem:[#allocation2 + $0x80] sm:$0xff] %vm2921, %v2778
    %2939 = vst.msk [vmem:[#allocation2 + $0x88] sm:$0xff] %vm2921, %v2781
    %2940 = vst.msk [vmem:[#allocation2 + $0x90] sm:$0xff] %vm2921, %v2784
    %2941 = vst.msk [vmem:[#allocation2 + $0x98] sm:$0xff] %vm2921, %v2787
    %2942 = vst.msk [vmem:[#allocation2 + $0xa0] sm:$0xff] %vm2921, %v2790
    %2943 = vst.msk [vmem:[#allocation2 + $0xa8] sm:$0xff] %vm2921, %v2793
    %2944 = vst.msk [vmem:[#allocation2 + $0xb0] sm:$0xff] %vm2921, %v2796
    %2945 = vst.msk [vmem:[#allocation2 + $0xb8] sm:$0xff] %vm2921, %v2799
    %2946 = vst.msk [vmem:[#allocation2 + $0xc0] sm:$0xff] %vm2921, %v2802
    %2947 = vst.msk [vmem:[#allocation2 + $0xc8] sm:$0xff] %vm2921, %v2805
    %2948 = vst.msk [vmem:[#allocation2 + $0xd0] sm:$0xff] %vm2921, %v2808
    %2949 = vst.msk [vmem:[#allocation2 + $0xd8] sm:$0xff] %vm2921, %v2811
    %2950 = vst.msk [vmem:[#allocation2 + $0xe0] sm:$0xff] %vm2921, %v2814
    %2951 = vst.msk [vmem:[#allocation2 + $0xe8] sm:$0xff] %vm2921, %v2817
    %2952 = vst.msk [vmem:[#allocation2 + $0xf0] sm:$0xff] %vm2921, %v2820
    %2953 = vst.msk [vmem:[#allocation2 + $0xf8] sm:$0xff] %vm2921, %v2823
    %2954 = vst.msk [vmem:[#allocation2 + $0x100] sm:$0xff] %vm2921, %v2826
    %2955 = vst.msk [vmem:[#allocation2 + $0x108] sm:$0xff] %vm2921, %v2829
    %2956 = vst.msk [vmem:[#allocation2 + $0x110] sm:$0xff] %vm2921, %v2832
    %2957 = vst.msk [vmem:[#allocation2 + $0x118] sm:$0xff] %vm2921, %v2835
    %2958 = vst.msk [vmem:[#allocation2 + $0x120] sm:$0xff] %vm2921, %v2838
    %2959 = vst.msk [vmem:[#allocation2 + $0x128] sm:$0xff] %vm2921, %v2841
    %2960 = vst.msk [vmem:[#allocation2 + $0x130] sm:$0xff] %vm2921, %v2844
    %2961 = vst.msk [vmem:[#allocation2 + $0x138] sm:$0xff] %vm2921, %v2847
    %2962 = vst.msk [vmem:[#allocation2 + $0x140] sm:$0xff] %vm2921, %v2850
    %2963 = vst.msk [vmem:[#allocation2 + $0x148] sm:$0xff] %vm2921, %v2853
    %2964 = vst.msk [vmem:[#allocation2 + $0x150] sm:$0xff] %vm2921, %v2856
    %2965 = vst.msk [vmem:[#allocation2 + $0x158] sm:$0xff] %vm2921, %v2859
    %2966 = vst.msk [vmem:[#allocation2 + $0x160] sm:$0xff] %vm2921, %v2862
    %2967 = vst.msk [vmem:[#allocation2 + $0x168] sm:$0xff] %vm2921, %v2865
    %2968 = vst.msk [vmem:[#allocation2 + $0x170] sm:$0xff] %vm2921, %v2868
    %2969 = vst.msk [vmem:[#allocation2 + $0x178] sm:$0xff] %vm2921, %v2871
    %2970 = vst.msk [vmem:[#allocation2 + $0x180] sm:$0xff] %vm2921, %v2874
    %2971 = vst.msk [vmem:[#allocation2 + $0x188] sm:$0xff] %vm2921, %v2877
    %2972 = vst.msk [vmem:[#allocation2 + $0x190] sm:$0xff] %vm2921, %v2880
    %2973 = vst.msk [vmem:[#allocation2 + $0x198] sm:$0xff] %vm2921, %v2883
    %2974 = vst.msk [vmem:[#allocation2 + $0x1a0] sm:$0xff] %vm2921, %v2886
    %2975 = vst.msk [vmem:[#allocation2 + $0x1a8] sm:$0xff] %vm2921, %v2889
    %2976 = vst.msk [vmem:[#allocation2 + $0x1b0] sm:$0xff] %vm2921, %v2892
    %2977 = vst.msk [vmem:[#allocation2 + $0x1b8] sm:$0xff] %vm2921, %v2895
    %2978 = vst.msk [vmem:[#allocation2 + $0x1c0] sm:$0xff] %vm2921, %v2898
    %2979 = vst.msk [vmem:[#allocation2 + $0x1c8] sm:$0xff] %vm2921, %v2901
    %2980 = vst.msk [vmem:[#allocation2 + $0x1d0] sm:$0xff] %vm2921, %v2904
    %2981 = vst.msk [vmem:[#allocation2 + $0x1d8] sm:$0xff] %vm2921, %v2907
    %2982 = vst.msk [vmem:[#allocation2 + $0x1e0] sm:$0xff] %vm2921, %v2910
    %2983 = vst.msk [vmem:[#allocation2 + $0x1e8] sm:$0xff] %vm2921, %v2913
    %2984 = vst.msk [vmem:[#allocation2 + $0x1f0] sm:$0xff] %vm2921, %v2916
    %2985 = vst.msk [vmem:[#allocation2 + $0x1f8] sm:$0xff] %vm2921, %v2919
    %2986 = vst.msk [vmem:[#allocation2 + $0x200] sm:$0xff] %vm2921, 0.0
    %2987 = vst.msk [vmem:[#allocation2 + $0x208] sm:$0xff] %vm2921, 0.0
    %2988 = vst.msk [vmem:[#allocation2 + $0x210] sm:$0xff] %vm2921, 0.0
    %2989 = vst.msk [vmem:[#allocation2 + $0x218] sm:$0xff] %vm2921, 0.0
    %2990 = vst.msk [vmem:[#allocation2 + $0x220] sm:$0xff] %vm2921, 0.0
    %v2991 = vld [vmem:[#allocation2] sm:$0xff]
    %v2992 = vld [vmem:[#allocation2 + $0x8] sm:$0xff]
    %v2993 = vld [vmem:[#allocation2 + $0x10] sm:$0xff]
    %v2994 = vld [vmem:[#allocation2 + $0x18] sm:$0xff]
    %v2995 = vld [vmem:[#allocation2 + $0x20] sm:$0xff]
    %v2996 = vld [vmem:[#allocation2 + $0x28] sm:$0xff]
    %v2997 = vld [vmem:[#allocation2 + $0x30] sm:$0xff]
    %v2998 = vld [vmem:[#allocation2 + $0x38] sm:$0xff]
    %v2999 = vld [vmem:[#allocation2 + $0x40] sm:$0xff]
    %v3000 = vld [vmem:[#allocation2 + $0x48] sm:$0xff]
    %v3001 = vld [vmem:[#allocation2 + $0x50] sm:$0xff]
    %v3002 = vld [vmem:[#allocation2 + $0x58] sm:$0xff]
    %v3003 = vld [vmem:[#allocation2 + $0x60] sm:$0xff]
    %v3004 = vld [vmem:[#allocation2 + $0x68] sm:$0xff]
    %v3005 = vld [vmem:[#allocation2 + $0x70] sm:$0xff]
    %v3006 = vld [vmem:[#allocation2 + $0x78] sm:$0xff]
    %v3007 = vld [vmem:[#allocation2 + $0x80] sm:$0xff]
    %v3008 = vld [vmem:[#allocation2 + $0x88] sm:$0xff]
    %v3009 = vld [vmem:[#allocation2 + $0x90] sm:$0xff]
    %v3010 = vld [vmem:[#allocation2 + $0x98] sm:$0xff]
    %v3011 = vld [vmem:[#allocation2 + $0xa0] sm:$0xff]
    %v3012 = vld [vmem:[#allocation2 + $0xa8] sm:$0xff]
    %v3013 = vld [vmem:[#allocation2 + $0xb0] sm:$0xff]
    %v3014 = vld [vmem:[#allocation2 + $0xb8] sm:$0xff]
    %v3015 = vld [vmem:[#allocation2 + $0xc0] sm:$0xff]
    %v3016 = vld [vmem:[#allocation2 + $0xc8] sm:$0xff]
    %v3017 = vld [vmem:[#allocation2 + $0xd0] sm:$0xff]
    %v3018 = vld [vmem:[#allocation2 + $0xd8] sm:$0xff]
    %v3019 = vld [vmem:[#allocation2 + $0xe0] sm:$0xff]
    %v3020 = vld [vmem:[#allocation2 + $0xe8] sm:$0xff]
    %v3021 = vld [vmem:[#allocation2 + $0xf0] sm:$0xff]
    %v3022 = vld [vmem:[#allocation2 + $0xf8] sm:$0xff]
    %v3023 = vld [vmem:[#allocation2 + $0x100] sm:$0xff]
    %v3024 = vld [vmem:[#allocation2 + $0x108] sm:$0xff]
    %v3025 = vld [vmem:[#allocation2 + $0x110] sm:$0xff]
    %v3026 = vld [vmem:[#allocation2 + $0x118] sm:$0xff]
    %v3027 = vld [vmem:[#allocation2 + $0x120] sm:$0xff]
    %v3028 = vld [vmem:[#allocation2 + $0x128] sm:$0xff]
    %v3029 = vld [vmem:[#allocation2 + $0x130] sm:$0xff]
    %v3030 = vld [vmem:[#allocation2 + $0x138] sm:$0xff]
    %v3031 = vld [vmem:[#allocation2 + $0x140] sm:$0xff]
    %v3032 = vld [vmem:[#allocation2 + $0x148] sm:$0xff]
    %v3033 = vld [vmem:[#allocation2 + $0x150] sm:$0xff]
    %v3034 = vld [vmem:[#allocation2 + $0x158] sm:$0xff]
    %v3035 = vld [vmem:[#allocation2 + $0x160] sm:$0xff]
    %v3036 = vld [vmem:[#allocation2 + $0x168] sm:$0xff]
    %v3037 = vld [vmem:[#allocation2 + $0x170] sm:$0xff]
    %v3038 = vld [vmem:[#allocation2 + $0x178] sm:$0xff]
    %v3039 = vld [vmem:[#allocation2 + $0x180] sm:$0xff]
    %v3040 = vld [vmem:[#allocation2 + $0x188] sm:$0xff]
    %v3041 = vld [vmem:[#allocation2 + $0x190] sm:$0xff]
    %v3042 = vld [vmem:[#allocation2 + $0x198] sm:$0xff]
    %v3043 = vld [vmem:[#allocation2 + $0x1a0] sm:$0xff]
    %v3044 = vld [vmem:[#allocation2 + $0x1a8] sm:$0xff]
    %v3045 = vld [vmem:[#allocation2 + $0x1b0] sm:$0xff]
    %v3046 = vld [vmem:[#allocation2 + $0x1b8] sm:$0xff]
    %v3047 = vld [vmem:[#allocation2 + $0x1c0] sm:$0xff]
    %v3048 = vld [vmem:[#allocation2 + $0x1c8] sm:$0xff]
    %v3049 = vld [vmem:[#allocation2 + $0x1d0] sm:$0xff]
    %v3050 = vld [vmem:[#allocation2 + $0x1d8] sm:$0xff]
    %v3051 = vld [vmem:[#allocation2 + $0x1e0] sm:$0xff]
    %v3052 = vld [vmem:[#allocation2 + $0x1e8] sm:$0xff]
    %v3053 = vld [vmem:[#allocation2 + $0x1f0] sm:$0xff]
    %v3054 = vld [vmem:[#allocation2 + $0x1f8] sm:$0xff]
    %v3055 = vld [vmem:[#allocation2 + $0x200] sm:$0xff]
    %v3056 = vld [vmem:[#allocation2 + $0x208] sm:$0xff]
    %v3057 = vld [vmem:[#allocation2 + $0x210] sm:$0xff]
    %v3058 = vld [vmem:[#allocation2 + $0x218] sm:$0xff]
    %v3059 = vld [vmem:[#allocation2 + $0x1] sm:$0xff]
    %v3060 = vld [vmem:[#allocation2 + $0x9] sm:$0xff]
    %v3061 = vld [vmem:[#allocation2 + $0x11] sm:$0xff]
    %v3062 = vld [vmem:[#allocation2 + $0x19] sm:$0xff]
    %v3063 = vld [vmem:[#allocation2 + $0x21] sm:$0xff]
    %v3064 = vld [vmem:[#allocation2 + $0x29] sm:$0xff]
    %v3065 = vld [vmem:[#allocation2 + $0x31] sm:$0xff]
    %v3066 = vld [vmem:[#allocation2 + $0x39] sm:$0xff]
    %v3067 = vld [vmem:[#allocation2 + $0x41] sm:$0xff]
    %v3068 = vld [vmem:[#allocation2 + $0x49] sm:$0xff]
    %v3069 = vld [vmem:[#allocation2 + $0x51] sm:$0xff]
    %v3070 = vld [vmem:[#allocation2 + $0x59] sm:$0xff]
    %v3071 = vld [vmem:[#allocation2 + $0x61] sm:$0xff]
    %v3072 = vld [vmem:[#allocation2 + $0x69] sm:$0xff]
    %v3073 = vld [vmem:[#allocation2 + $0x71] sm:$0xff]
    %v3074 = vld [vmem:[#allocation2 + $0x79] sm:$0xff]
    %v3075 = vld [vmem:[#allocation2 + $0x81] sm:$0xff]
    %v3076 = vld [vmem:[#allocation2 + $0x89] sm:$0xff]
    %v3077 = vld [vmem:[#allocation2 + $0x91] sm:$0xff]
    %v3078 = vld [vmem:[#allocation2 + $0x99] sm:$0xff]
    %v3079 = vld [vmem:[#allocation2 + $0xa1] sm:$0xff]
    %v3080 = vld [vmem:[#allocation2 + $0xa9] sm:$0xff]
    %v3081 = vld [vmem:[#allocation2 + $0xb1] sm:$0xff]
    %v3082 = vld [vmem:[#allocation2 + $0xb9] sm:$0xff]
    %v3083 = vld [vmem:[#allocation2 + $0xc1] sm:$0xff]
    %v3084 = vld [vmem:[#allocation2 + $0xc9] sm:$0xff]
    %v3085 = vld [vmem:[#allocation2 + $0xd1] sm:$0xff]
    %v3086 = vld [vmem:[#allocation2 + $0xd9] sm:$0xff]
    %v3087 = vld [vmem:[#allocation2 + $0xe1] sm:$0xff]
    %v3088 = vld [vmem:[#allocation2 + $0xe9] sm:$0xff]
    %v3089 = vld [vmem:[#allocation2 + $0xf1] sm:$0xff]
    %v3090 = vld [vmem:[#allocation2 + $0xf9] sm:$0xff]
    %v3091 = vld [vmem:[#allocation2 + $0x101] sm:$0xff]
    %v3092 = vld [vmem:[#allocation2 + $0x109] sm:$0xff]
    %v3093 = vld [vmem:[#allocation2 + $0x111] sm:$0xff]
    %v3094 = vld [vmem:[#allocation2 + $0x119] sm:$0xff]
    %v3095 = vld [vmem:[#allocation2 + $0x121] sm:$0xff]
    %v3096 = vld [vmem:[#allocation2 + $0x129] sm:$0xff]
    %v3097 = vld [vmem:[#allocation2 + $0x131] sm:$0xff]
    %v3098 = vld [vmem:[#allocation2 + $0x139] sm:$0xff]
    %v3099 = vld [vmem:[#allocation2 + $0x141] sm:$0xff]
    %v3100 = vld [vmem:[#allocation2 + $0x149] sm:$0xff]
    %v3101 = vld [vmem:[#allocation2 + $0x151] sm:$0xff]
    %v3102 = vld [vmem:[#allocation2 + $0x159] sm:$0xff]
    %v3103 = vld [vmem:[#allocation2 + $0x161] sm:$0xff]
    %v3104 = vld [vmem:[#allocation2 + $0x169] sm:$0xff]
    %v3105 = vld [vmem:[#allocation2 + $0x171] sm:$0xff]
    %v3106 = vld [vmem:[#allocation2 + $0x179] sm:$0xff]
    %v3107 = vld [vmem:[#allocation2 + $0x181] sm:$0xff]
    %v3108 = vld [vmem:[#allocation2 + $0x189] sm:$0xff]
    %v3109 = vld [vmem:[#allocation2 + $0x191] sm:$0xff]
    %v3110 = vld [vmem:[#allocation2 + $0x199] sm:$0xff]
    %v3111 = vld [vmem:[#allocation2 + $0x1a1] sm:$0xff]
    %v3112 = vld [vmem:[#allocation2 + $0x1a9] sm:$0xff]
    %v3113 = vld [vmem:[#allocation2 + $0x1b1] sm:$0xff]
    %v3114 = vld [vmem:[#allocation2 + $0x1b9] sm:$0xff]
    %v3115 = vld [vmem:[#allocation2 + $0x1c1] sm:$0xff]
    %v3116 = vld [vmem:[#allocation2 + $0x1c9] sm:$0xff]
    %v3117 = vld [vmem:[#allocation2 + $0x1d1] sm:$0xff]
    %v3118 = vld [vmem:[#allocation2 + $0x1d9] sm:$0xff]
    %v3119 = vld [vmem:[#allocation2 + $0x1e1] sm:$0xff]
    %v3120 = vld [vmem:[#allocation2 + $0x1e9] sm:$0xff]
    %v3121 = vld [vmem:[#allocation2 + $0x1f1] sm:$0xff]
    %v3122 = vld [vmem:[#allocation2 + $0x1f9] sm:$0xff]
    %v3123 = vld [vmem:[#allocation2 + $0x201] sm:$0xff]
    %v3124 = vld [vmem:[#allocation2 + $0x209] sm:$0xff]
    %v3125 = vld [vmem:[#allocation2 + $0x211] sm:$0xff]
    %v3126 = vld [vmem:[#allocation2 + $0x219] sm:$0xff]
    %v3127 = vld [vmem:[#allocation2 + $0x2] sm:$0xff]
    %v3128 = vld [vmem:[#allocation2 + $0xa] sm:$0xff]
    %v3129 = vld [vmem:[#allocation2 + $0x12] sm:$0xff]
    %v3130 = vld [vmem:[#allocation2 + $0x1a] sm:$0xff]
    %v3131 = vld [vmem:[#allocation2 + $0x22] sm:$0xff]
    %v3132 = vld [vmem:[#allocation2 + $0x2a] sm:$0xff]
    %v3133 = vld [vmem:[#allocation2 + $0x32] sm:$0xff]
    %v3134 = vld [vmem:[#allocation2 + $0x3a] sm:$0xff]
    %v3135 = vld [vmem:[#allocation2 + $0x42] sm:$0xff]
    %v3136 = vld [vmem:[#allocation2 + $0x4a] sm:$0xff]
    %v3137 = vld [vmem:[#allocation2 + $0x52] sm:$0xff]
    %v3138 = vld [vmem:[#allocation2 + $0x5a] sm:$0xff]
    %v3139 = vld [vmem:[#allocation2 + $0x62] sm:$0xff]
    %v3140 = vld [vmem:[#allocation2 + $0x6a] sm:$0xff]
    %v3141 = vld [vmem:[#allocation2 + $0x72] sm:$0xff]
    %v3142 = vld [vmem:[#allocation2 + $0x7a] sm:$0xff]
    %v3143 = vld [vmem:[#allocation2 + $0x82] sm:$0xff]
    %v3144 = vld [vmem:[#allocation2 + $0x8a] sm:$0xff]
    %v3145 = vld [vmem:[#allocation2 + $0x92] sm:$0xff]
    %v3146 = vld [vmem:[#allocation2 + $0x9a] sm:$0xff]
    %v3147 = vld [vmem:[#allocation2 + $0xa2] sm:$0xff]
    %v3148 = vld [vmem:[#allocation2 + $0xaa] sm:$0xff]
    %v3149 = vld [vmem:[#allocation2 + $0xb2] sm:$0xff]
    %v3150 = vld [vmem:[#allocation2 + $0xba] sm:$0xff]
    %v3151 = vld [vmem:[#allocation2 + $0xc2] sm:$0xff]
    %v3152 = vld [vmem:[#allocation2 + $0xca] sm:$0xff]
    %v3153 = vld [vmem:[#allocation2 + $0xd2] sm:$0xff]
    %v3154 = vld [vmem:[#allocation2 + $0xda] sm:$0xff]
    %v3155 = vld [vmem:[#allocation2 + $0xe2] sm:$0xff]
    %v3156 = vld [vmem:[#allocation2 + $0xea] sm:$0xff]
    %v3157 = vld [vmem:[#allocation2 + $0xf2] sm:$0xff]
    %v3158 = vld [vmem:[#allocation2 + $0xfa] sm:$0xff]
    %v3159 = vld [vmem:[#allocation2 + $0x102] sm:$0xff]
    %v3160 = vld [vmem:[#allocation2 + $0x10a] sm:$0xff]
    %v3161 = vld [vmem:[#allocation2 + $0x112] sm:$0xff]
    %v3162 = vld [vmem:[#allocation2 + $0x11a] sm:$0xff]
    %v3163 = vld [vmem:[#allocation2 + $0x122] sm:$0xff]
    %v3164 = vld [vmem:[#allocation2 + $0x12a] sm:$0xff]
    %v3165 = vld [vmem:[#allocation2 + $0x132] sm:$0xff]
    %v3166 = vld [vmem:[#allocation2 + $0x13a] sm:$0xff]
    %v3167 = vld [vmem:[#allocation2 + $0x142] sm:$0xff]
    %v3168 = vld [vmem:[#allocation2 + $0x14a] sm:$0xff]
    %v3169 = vld [vmem:[#allocation2 + $0x152] sm:$0xff]
    %v3170 = vld [vmem:[#allocation2 + $0x15a] sm:$0xff]
    %v3171 = vld [vmem:[#allocation2 + $0x162] sm:$0xff]
    %v3172 = vld [vmem:[#allocation2 + $0x16a] sm:$0xff]
    %v3173 = vld [vmem:[#allocation2 + $0x172] sm:$0xff]
    %v3174 = vld [vmem:[#allocation2 + $0x17a] sm:$0xff]
    %v3175 = vld [vmem:[#allocation2 + $0x182] sm:$0xff]
    %v3176 = vld [vmem:[#allocation2 + $0x18a] sm:$0xff]
    %v3177 = vld [vmem:[#allocation2 + $0x192] sm:$0xff]
    %v3178 = vld [vmem:[#allocation2 + $0x19a] sm:$0xff]
    %v3179 = vld [vmem:[#allocation2 + $0x1a2] sm:$0xff]
    %v3180 = vld [vmem:[#allocation2 + $0x1aa] sm:$0xff]
    %v3181 = vld [vmem:[#allocation2 + $0x1b2] sm:$0xff]
    %v3182 = vld [vmem:[#allocation2 + $0x1ba] sm:$0xff]
    %v3183 = vld [vmem:[#allocation2 + $0x1c2] sm:$0xff]
    %v3184 = vld [vmem:[#allocation2 + $0x1ca] sm:$0xff]
    %v3185 = vld [vmem:[#allocation2 + $0x1d2] sm:$0xff]
    %v3186 = vld [vmem:[#allocation2 + $0x1da] sm:$0xff]
    %v3187 = vld [vmem:[#allocation2 + $0x1e2] sm:$0xff]
    %v3188 = vld [vmem:[#allocation2 + $0x1ea] sm:$0xff]
    %v3189 = vld [vmem:[#allocation2 + $0x1f2] sm:$0xff]
    %v3190 = vld [vmem:[#allocation2 + $0x1fa] sm:$0xff]
    %v3191 = vld [vmem:[#allocation2 + $0x202] sm:$0xff]
    %v3192 = vld [vmem:[#allocation2 + $0x20a] sm:$0xff]
    %v3193 = vld [vmem:[#allocation2 + $0x212] sm:$0xff]
    %v3194 = vld [vmem:[#allocation2 + $0x21a] sm:$0xff]
    %3259 = vrot.lane.b32.xlu0 %v3059, 16
    %v3260 = vpop.permute.xlu0 %3259
    %3261 = vrot.lane.b32.xlu0 %v3060, 16
    %v3262 = vpop.permute.xlu0 %3261
    %3263 = vrot.lane.b32.xlu0 %v3061, 16
    %v3264 = vpop.permute.xlu0 %3263
    %3265 = vrot.lane.b32.xlu0 %v3062, 16
    %v3266 = vpop.permute.xlu0 %3265
    %3267 = vrot.lane.b32.xlu0 %v3063, 16
    %v3268 = vpop.permute.xlu0 %3267
    %3269 = vrot.lane.b32.xlu0 %v3064, 16
    %v3270 = vpop.permute.xlu0 %3269
    %3271 = vrot.lane.b32.xlu0 %v3065, 16
    %v3272 = vpop.permute.xlu0 %3271
    %3273 = vrot.lane.b32.xlu0 %v3066, 16
    %v3274 = vpop.permute.xlu0 %3273
    %3275 = vrot.lane.b32.xlu0 %v3067, 16
    %v3276 = vpop.permute.xlu0 %3275
    %3277 = vrot.lane.b32.xlu0 %v3068, 16
    %v3278 = vpop.permute.xlu0 %3277
    %3279 = vrot.lane.b32.xlu0 %v3069, 16
    %v3280 = vpop.permute.xlu0 %3279
    %3281 = vrot.lane.b32.xlu0 %v3070, 16
    %v3282 = vpop.permute.xlu0 %3281
    %3283 = vrot.lane.b32.xlu0 %v3071, 16
    %v3284 = vpop.permute.xlu0 %3283
    %3285 = vrot.lane.b32.xlu0 %v3072, 16
    %v3286 = vpop.permute.xlu0 %3285
    %3287 = vrot.lane.b32.xlu0 %v3073, 16
    %v3288 = vpop.permute.xlu0 %3287
    %3289 = vrot.lane.b32.xlu0 %v3074, 16
    %v3290 = vpop.permute.xlu0 %3289
    %3291 = vrot.lane.b32.xlu0 %v3075, 16
    %v3292 = vpop.permute.xlu0 %3291
    %3293 = vrot.lane.b32.xlu0 %v3076, 16
    %v3294 = vpop.permute.xlu0 %3293
    %3295 = vrot.lane.b32.xlu0 %v3077, 16
    %v3296 = vpop.permute.xlu0 %3295
    %3297 = vrot.lane.b32.xlu0 %v3078, 16
    %v3298 = vpop.permute.xlu0 %3297
    %3299 = vrot.lane.b32.xlu0 %v3079, 16
    %v3300 = vpop.permute.xlu0 %3299
    %3301 = vrot.lane.b32.xlu0 %v3080, 16
    %v3302 = vpop.permute.xlu0 %3301
    %3303 = vrot.lane.b32.xlu0 %v3081, 16
    %v3304 = vpop.permute.xlu0 %3303
    %3305 = vrot.lane.b32.xlu0 %v3082, 16
    %v3306 = vpop.permute.xlu0 %3305
    %3307 = vrot.lane.b32.xlu0 %v3083, 16
    %v3308 = vpop.permute.xlu0 %3307
    %3309 = vrot.lane.b32.xlu0 %v3084, 16
    %v3310 = vpop.permute.xlu0 %3309
    %3311 = vrot.lane.b32.xlu0 %v3085, 16
    %v3312 = vpop.permute.xlu0 %3311
    %3313 = vrot.lane.b32.xlu0 %v3086, 16
    %v3314 = vpop.permute.xlu0 %3313
    %3315 = vrot.lane.b32.xlu0 %v3087, 16
    %v3316 = vpop.permute.xlu0 %3315
    %3317 = vrot.lane.b32.xlu0 %v3088, 16
    %v3318 = vpop.permute.xlu0 %3317
    %3319 = vrot.lane.b32.xlu0 %v3089, 16
    %v3320 = vpop.permute.xlu0 %3319
    %3321 = vrot.lane.b32.xlu0 %v3090, 16
    %v3322 = vpop.permute.xlu0 %3321
    %3323 = vrot.lane.b32.xlu0 %v3091, 16
    %v3324 = vpop.permute.xlu0 %3323
    %3325 = vrot.lane.b32.xlu0 %v3092, 16
    %v3326 = vpop.permute.xlu0 %3325
    %3327 = vrot.lane.b32.xlu0 %v3093, 16
    %v3328 = vpop.permute.xlu0 %3327
    %3329 = vrot.lane.b32.xlu0 %v3094, 16
    %v3330 = vpop.permute.xlu0 %3329
    %3331 = vrot.lane.b32.xlu0 %v3095, 16
    %v3332 = vpop.permute.xlu0 %3331
    %3333 = vrot.lane.b32.xlu0 %v3096, 16
    %v3334 = vpop.permute.xlu0 %3333
    %3335 = vrot.lane.b32.xlu0 %v3097, 16
    %v3336 = vpop.permute.xlu0 %3335
    %3337 = vrot.lane.b32.xlu0 %v3098, 16
    %v3338 = vpop.permute.xlu0 %3337
    %3339 = vrot.lane.b32.xlu0 %v3099, 16
    %v3340 = vpop.permute.xlu0 %3339
    %3341 = vrot.lane.b32.xlu0 %v3100, 16
    %v3342 = vpop.permute.xlu0 %3341
    %3343 = vrot.lane.b32.xlu0 %v3101, 16
    %v3344 = vpop.permute.xlu0 %3343
    %3345 = vrot.lane.b32.xlu0 %v3102, 16
    %v3346 = vpop.permute.xlu0 %3345
    %3347 = vrot.lane.b32.xlu0 %v3103, 16
    %v3348 = vpop.permute.xlu0 %3347
    %3349 = vrot.lane.b32.xlu0 %v3104, 16
    %v3350 = vpop.permute.xlu0 %3349
    %3351 = vrot.lane.b32.xlu0 %v3105, 16
    %v3352 = vpop.permute.xlu0 %3351
    %3353 = vrot.lane.b32.xlu0 %v3106, 16
    %v3354 = vpop.permute.xlu0 %3353
    %3355 = vrot.lane.b32.xlu0 %v3107, 16
    %v3356 = vpop.permute.xlu0 %3355
    %3357 = vrot.lane.b32.xlu0 %v3108, 16
    %v3358 = vpop.permute.xlu0 %3357
    %3359 = vrot.lane.b32.xlu0 %v3109, 16
    %v3360 = vpop.permute.xlu0 %3359
    %3361 = vrot.lane.b32.xlu0 %v3110, 16
    %v3362 = vpop.permute.xlu0 %3361
    %3363 = vrot.lane.b32.xlu0 %v3111, 16
    %v3364 = vpop.permute.xlu0 %3363
    %3365 = vrot.lane.b32.xlu0 %v3112, 16
    %v3366 = vpop.permute.xlu0 %3365
    %3367 = vrot.lane.b32.xlu0 %v3113, 16
    %v3368 = vpop.permute.xlu0 %3367
    %3369 = vrot.lane.b32.xlu0 %v3114, 16
    %v3370 = vpop.permute.xlu0 %3369
    %3371 = vrot.lane.b32.xlu0 %v3115, 16
    %v3372 = vpop.permute.xlu0 %3371
    %3373 = vrot.lane.b32.xlu0 %v3116, 16
    %v3374 = vpop.permute.xlu0 %3373
    %3375 = vrot.lane.b32.xlu0 %v3117, 16
    %v3376 = vpop.permute.xlu0 %3375
    %3377 = vrot.lane.b32.xlu0 %v3118, 16
    %v3378 = vpop.permute.xlu0 %3377
    %3379 = vrot.lane.b32.xlu0 %v3119, 16
    %v3380 = vpop.permute.xlu0 %3379
    %3381 = vrot.lane.b32.xlu0 %v3120, 16
    %v3382 = vpop.permute.xlu0 %3381
    %3383 = vrot.lane.b32.xlu0 %v3121, 16
    %v3384 = vpop.permute.xlu0 %3383
    %3385 = vrot.lane.b32.xlu0 %v3122, 16
    %v3386 = vpop.permute.xlu0 %3385
    %3515 = vrot.lane.b32.xlu0 %v3127, 32
    %v3516 = vpop.permute.xlu0 %3515
    %3517 = vrot.lane.b32.xlu0 %v3128, 32
    %v3518 = vpop.permute.xlu0 %3517
    %3519 = vrot.lane.b32.xlu0 %v3129, 32
    %v3520 = vpop.permute.xlu0 %3519
    %3521 = vrot.lane.b32.xlu0 %v3130, 32
    %v3522 = vpop.permute.xlu0 %3521
    %3523 = vrot.lane.b32.xlu0 %v3131, 32
    %v3524 = vpop.permute.xlu0 %3523
    %3525 = vrot.lane.b32.xlu0 %v3132, 32
    %v3526 = vpop.permute.xlu0 %3525
    %3527 = vrot.lane.b32.xlu0 %v3133, 32
    %v3528 = vpop.permute.xlu0 %3527
    %3529 = vrot.lane.b32.xlu0 %v3134, 32
    %v3530 = vpop.permute.xlu0 %3529
    %3531 = vrot.lane.b32.xlu0 %v3135, 32
    %v3532 = vpop.permute.xlu0 %3531
    %3533 = vrot.lane.b32.xlu0 %v3136, 32
    %v3534 = vpop.permute.xlu0 %3533
    %3535 = vrot.lane.b32.xlu0 %v3137, 32
    %v3536 = vpop.permute.xlu0 %3535
    %3537 = vrot.lane.b32.xlu0 %v3138, 32
    %v3538 = vpop.permute.xlu0 %3537
    %3539 = vrot.lane.b32.xlu0 %v3139, 32
    %v3540 = vpop.permute.xlu0 %3539
    %3541 = vrot.lane.b32.xlu0 %v3140, 32
    %v3542 = vpop.permute.xlu0 %3541
    %3543 = vrot.lane.b32.xlu0 %v3141, 32
    %v3544 = vpop.permute.xlu0 %3543
    %3545 = vrot.lane.b32.xlu0 %v3142, 32
    %v3546 = vpop.permute.xlu0 %3545
    %3547 = vrot.lane.b32.xlu0 %v3143, 32
    %v3548 = vpop.permute.xlu0 %3547
    %3549 = vrot.lane.b32.xlu0 %v3144, 32
    %v3550 = vpop.permute.xlu0 %3549
    %3551 = vrot.lane.b32.xlu0 %v3145, 32
    %v3552 = vpop.permute.xlu0 %3551
    %3553 = vrot.lane.b32.xlu0 %v3146, 32
    %v3554 = vpop.permute.xlu0 %3553
    %3555 = vrot.lane.b32.xlu0 %v3147, 32
    %v3556 = vpop.permute.xlu0 %3555
    %3557 = vrot.lane.b32.xlu0 %v3148, 32
    %v3558 = vpop.permute.xlu0 %3557
    %3559 = vrot.lane.b32.xlu0 %v3149, 32
    %v3560 = vpop.permute.xlu0 %3559
    %3561 = vrot.lane.b32.xlu0 %v3150, 32
    %v3562 = vpop.permute.xlu0 %3561
    %3563 = vrot.lane.b32.xlu0 %v3151, 32
    %v3564 = vpop.permute.xlu0 %3563
    %3565 = vrot.lane.b32.xlu0 %v3152, 32
    %v3566 = vpop.permute.xlu0 %3565
    %3567 = vrot.lane.b32.xlu0 %v3153, 32
    %v3568 = vpop.permute.xlu0 %3567
    %3569 = vrot.lane.b32.xlu0 %v3154, 32
    %v3570 = vpop.permute.xlu0 %3569
    %3571 = vrot.lane.b32.xlu0 %v3155, 32
    %v3572 = vpop.permute.xlu0 %3571
    %3573 = vrot.lane.b32.xlu0 %v3156, 32
    %v3574 = vpop.permute.xlu0 %3573
    %3575 = vrot.lane.b32.xlu0 %v3157, 32
    %v3576 = vpop.permute.xlu0 %3575
    %3577 = vrot.lane.b32.xlu0 %v3158, 32
    %v3578 = vpop.permute.xlu0 %3577
    %3579 = vrot.lane.b32.xlu0 %v3159, 32
    %v3580 = vpop.permute.xlu0 %3579
    %3581 = vrot.lane.b32.xlu0 %v3160, 32
    %v3582 = vpop.permute.xlu0 %3581
    %3583 = vrot.lane.b32.xlu0 %v3161, 32
    %v3584 = vpop.permute.xlu0 %3583
    %3585 = vrot.lane.b32.xlu0 %v3162, 32
    %v3586 = vpop.permute.xlu0 %3585
    %3587 = vrot.lane.b32.xlu0 %v3163, 32
    %v3588 = vpop.permute.xlu0 %3587
    %3589 = vrot.lane.b32.xlu0 %v3164, 32
    %v3590 = vpop.permute.xlu0 %3589
    %3591 = vrot.lane.b32.xlu0 %v3165, 32
    %v3592 = vpop.permute.xlu0 %3591
    %3593 = vrot.lane.b32.xlu0 %v3166, 32
    %v3594 = vpop.permute.xlu0 %3593
    %3595 = vrot.lane.b32.xlu0 %v3167, 32
    %v3596 = vpop.permute.xlu0 %3595
    %3597 = vrot.lane.b32.xlu0 %v3168, 32
    %v3598 = vpop.permute.xlu0 %3597
    %3599 = vrot.lane.b32.xlu0 %v3169, 32
    %v3600 = vpop.permute.xlu0 %3599
    %3601 = vrot.lane.b32.xlu0 %v3170, 32
    %v3602 = vpop.permute.xlu0 %3601
    %3603 = vrot.lane.b32.xlu0 %v3171, 32
    %v3604 = vpop.permute.xlu0 %3603
    %3605 = vrot.lane.b32.xlu0 %v3172, 32
    %v3606 = vpop.permute.xlu0 %3605
    %3607 = vrot.lane.b32.xlu0 %v3173, 32
    %v3608 = vpop.permute.xlu0 %3607
    %3609 = vrot.lane.b32.xlu0 %v3174, 32
    %v3610 = vpop.permute.xlu0 %3609
    %3611 = vrot.lane.b32.xlu0 %v3175, 32
    %v3612 = vpop.permute.xlu0 %3611
    %3613 = vrot.lane.b32.xlu0 %v3176, 32
    %v3614 = vpop.permute.xlu0 %3613
    %3615 = vrot.lane.b32.xlu0 %v3177, 32
    %v3616 = vpop.permute.xlu0 %3615
    %3617 = vrot.lane.b32.xlu0 %v3178, 32
    %v3618 = vpop.permute.xlu0 %3617
    %3619 = vrot.lane.b32.xlu0 %v3179, 32
    %v3620 = vpop.permute.xlu0 %3619
    %3621 = vrot.lane.b32.xlu0 %v3180, 32
    %v3622 = vpop.permute.xlu0 %3621
    %3623 = vrot.lane.b32.xlu0 %v3181, 32
    %v3624 = vpop.permute.xlu0 %3623
    %3625 = vrot.lane.b32.xlu0 %v3182, 32
    %v3626 = vpop.permute.xlu0 %3625
    %3627 = vrot.lane.b32.xlu0 %v3183, 32
    %v3628 = vpop.permute.xlu0 %3627
    %3629 = vrot.lane.b32.xlu0 %v3184, 32
    %v3630 = vpop.permute.xlu0 %3629
    %3631 = vrot.lane.b32.xlu0 %v3185, 32
    %v3632 = vpop.permute.xlu0 %3631
    %3633 = vrot.lane.b32.xlu0 %v3186, 32
    %v3634 = vpop.permute.xlu0 %3633
    %3635 = vrot.lane.b32.xlu0 %v3187, 32
    %v3636 = vpop.permute.xlu0 %3635
    %3637 = vrot.lane.b32.xlu0 %v3188, 32
    %v3638 = vpop.permute.xlu0 %3637
    %3639 = vrot.lane.b32.xlu0 %v3189, 32
    %v3640 = vpop.permute.xlu0 %3639
    %3641 = vrot.lane.b32.xlu0 %v3190, 32
    %v3642 = vpop.permute.xlu0 %3641
    %3771 = vrot.lane.b32.xlu0 %v2993, 48
    %v3772 = vpop.permute.xlu0 %3771
    %3773 = vrot.lane.b32.xlu0 %v2994, 48
    %v3774 = vpop.permute.xlu0 %3773
    %3775 = vrot.lane.b32.xlu0 %v2995, 48
    %v3776 = vpop.permute.xlu0 %3775
    %3777 = vrot.lane.b32.xlu0 %v2996, 48
    %v3778 = vpop.permute.xlu0 %3777
    %3779 = vrot.lane.b32.xlu0 %v2997, 48
    %v3780 = vpop.permute.xlu0 %3779
    %3781 = vrot.lane.b32.xlu0 %v2998, 48
    %v3782 = vpop.permute.xlu0 %3781
    %3783 = vrot.lane.b32.xlu0 %v2999, 48
    %v3784 = vpop.permute.xlu0 %3783
    %3785 = vrot.lane.b32.xlu0 %v3000, 48
    %v3786 = vpop.permute.xlu0 %3785
    %3787 = vrot.lane.b32.xlu0 %v3001, 48
    %v3788 = vpop.permute.xlu0 %3787
    %3789 = vrot.lane.b32.xlu0 %v3002, 48
    %v3790 = vpop.permute.xlu0 %3789
    %3791 = vrot.lane.b32.xlu0 %v3003, 48
    %v3792 = vpop.permute.xlu0 %3791
    %3793 = vrot.lane.b32.xlu0 %v3004, 48
    %v3794 = vpop.permute.xlu0 %3793
    %3795 = vrot.lane.b32.xlu0 %v3005, 48
    %v3796 = vpop.permute.xlu0 %3795
    %3797 = vrot.lane.b32.xlu0 %v3006, 48
    %v3798 = vpop.permute.xlu0 %3797
    %3799 = vrot.lane.b32.xlu0 %v3007, 48
    %v3800 = vpop.permute.xlu0 %3799
    %3801 = vrot.lane.b32.xlu0 %v3008, 48
    %v3802 = vpop.permute.xlu0 %3801
    %3803 = vrot.lane.b32.xlu0 %v3009, 48
    %v3804 = vpop.permute.xlu0 %3803
    %3805 = vrot.lane.b32.xlu0 %v3010, 48
    %v3806 = vpop.permute.xlu0 %3805
    %3807 = vrot.lane.b32.xlu0 %v3011, 48
    %v3808 = vpop.permute.xlu0 %3807
    %3809 = vrot.lane.b32.xlu0 %v3012, 48
    %v3810 = vpop.permute.xlu0 %3809
    %3811 = vrot.lane.b32.xlu0 %v3013, 48
    %v3812 = vpop.permute.xlu0 %3811
    %3813 = vrot.lane.b32.xlu0 %v3014, 48
    %v3814 = vpop.permute.xlu0 %3813
    %3815 = vrot.lane.b32.xlu0 %v3015, 48
    %v3816 = vpop.permute.xlu0 %3815
    %3817 = vrot.lane.b32.xlu0 %v3016, 48
    %v3818 = vpop.permute.xlu0 %3817
    %3819 = vrot.lane.b32.xlu0 %v3017, 48
    %v3820 = vpop.permute.xlu0 %3819
    %3821 = vrot.lane.b32.xlu0 %v3018, 48
    %v3822 = vpop.permute.xlu0 %3821
    %3823 = vrot.lane.b32.xlu0 %v3019, 48
    %v3824 = vpop.permute.xlu0 %3823
    %3825 = vrot.lane.b32.xlu0 %v3020, 48
    %v3826 = vpop.permute.xlu0 %3825
    %3827 = vrot.lane.b32.xlu0 %v3021, 48
    %v3828 = vpop.permute.xlu0 %3827
    %3829 = vrot.lane.b32.xlu0 %v3022, 48
    %v3830 = vpop.permute.xlu0 %3829
    %3831 = vrot.lane.b32.xlu0 %v3023, 48
    %v3832 = vpop.permute.xlu0 %3831
    %3833 = vrot.lane.b32.xlu0 %v3024, 48
    %v3834 = vpop.permute.xlu0 %3833
    %3835 = vrot.lane.b32.xlu0 %v3025, 48
    %v3836 = vpop.permute.xlu0 %3835
    %3837 = vrot.lane.b32.xlu0 %v3026, 48
    %v3838 = vpop.permute.xlu0 %3837
    %3839 = vrot.lane.b32.xlu0 %v3027, 48
    %v3840 = vpop.permute.xlu0 %3839
    %3841 = vrot.lane.b32.xlu0 %v3028, 48
    %v3842 = vpop.permute.xlu0 %3841
    %3843 = vrot.lane.b32.xlu0 %v3029, 48
    %v3844 = vpop.permute.xlu0 %3843
    %3845 = vrot.lane.b32.xlu0 %v3030, 48
    %v3846 = vpop.permute.xlu0 %3845
    %3847 = vrot.lane.b32.xlu0 %v3031, 48
    %v3848 = vpop.permute.xlu0 %3847
    %3849 = vrot.lane.b32.xlu0 %v3032, 48
    %v3850 = vpop.permute.xlu0 %3849
    %3851 = vrot.lane.b32.xlu0 %v3033, 48
    %v3852 = vpop.permute.xlu0 %3851
    %3853 = vrot.lane.b32.xlu0 %v3034, 48
    %v3854 = vpop.permute.xlu0 %3853
    %3855 = vrot.lane.b32.xlu0 %v3035, 48
    %v3856 = vpop.permute.xlu0 %3855
    %3857 = vrot.lane.b32.xlu0 %v3036, 48
    %v3858 = vpop.permute.xlu0 %3857
    %3859 = vrot.lane.b32.xlu0 %v3037, 48
    %v3860 = vpop.permute.xlu0 %3859
    %3861 = vrot.lane.b32.xlu0 %v3038, 48
    %v3862 = vpop.permute.xlu0 %3861
    %3863 = vrot.lane.b32.xlu0 %v3039, 48
    %v3864 = vpop.permute.xlu0 %3863
    %3865 = vrot.lane.b32.xlu0 %v3040, 48
    %v3866 = vpop.permute.xlu0 %3865
    %3867 = vrot.lane.b32.xlu0 %v3041, 48
    %v3868 = vpop.permute.xlu0 %3867
    %3869 = vrot.lane.b32.xlu0 %v3042, 48
    %v3870 = vpop.permute.xlu0 %3869
    %3871 = vrot.lane.b32.xlu0 %v3043, 48
    %v3872 = vpop.permute.xlu0 %3871
    %3873 = vrot.lane.b32.xlu0 %v3044, 48
    %v3874 = vpop.permute.xlu0 %3873
    %3875 = vrot.lane.b32.xlu0 %v3045, 48
    %v3876 = vpop.permute.xlu0 %3875
    %3877 = vrot.lane.b32.xlu0 %v3046, 48
    %v3878 = vpop.permute.xlu0 %3877
    %3879 = vrot.lane.b32.xlu0 %v3047, 48
    %v3880 = vpop.permute.xlu0 %3879
    %3881 = vrot.lane.b32.xlu0 %v3048, 48
    %v3882 = vpop.permute.xlu0 %3881
    %3883 = vrot.lane.b32.xlu0 %v3049, 48
    %v3884 = vpop.permute.xlu0 %3883
    %3885 = vrot.lane.b32.xlu0 %v3050, 48
    %v3886 = vpop.permute.xlu0 %3885
    %3887 = vrot.lane.b32.xlu0 %v3051, 48
    %v3888 = vpop.permute.xlu0 %3887
    %3889 = vrot.lane.b32.xlu0 %v3052, 48
    %v3890 = vpop.permute.xlu0 %3889
    %3891 = vrot.lane.b32.xlu0 %v3053, 48
    %v3892 = vpop.permute.xlu0 %3891
    %3893 = vrot.lane.b32.xlu0 %v3054, 48
    %v3894 = vpop.permute.xlu0 %3893
    %3895 = vrot.lane.b32.xlu0 %v3055, 48
    %v3896 = vpop.permute.xlu0 %3895
    %3897 = vrot.lane.b32.xlu0 %v3056, 48
    %v3898 = vpop.permute.xlu0 %3897
    %3965 = vrot.lane.b32.xlu0 %v3061, 64
    %v3966 = vpop.permute.xlu0 %3965
    %3967 = vrot.lane.b32.xlu0 %v3062, 64
    %v3968 = vpop.permute.xlu0 %3967
    %3969 = vrot.lane.b32.xlu0 %v3063, 64
    %v3970 = vpop.permute.xlu0 %3969
    %3971 = vrot.lane.b32.xlu0 %v3064, 64
    %v3972 = vpop.permute.xlu0 %3971
    %3973 = vrot.lane.b32.xlu0 %v3065, 64
    %v3974 = vpop.permute.xlu0 %3973
    %3975 = vrot.lane.b32.xlu0 %v3066, 64
    %v3976 = vpop.permute.xlu0 %3975
    %3977 = vrot.lane.b32.xlu0 %v3067, 64
    %v3978 = vpop.permute.xlu0 %3977
    %3979 = vrot.lane.b32.xlu0 %v3068, 64
    %v3980 = vpop.permute.xlu0 %3979
    %3981 = vrot.lane.b32.xlu0 %v3069, 64
    %v3982 = vpop.permute.xlu0 %3981
    %3983 = vrot.lane.b32.xlu0 %v3070, 64
    %v3984 = vpop.permute.xlu0 %3983
    %3985 = vrot.lane.b32.xlu0 %v3071, 64
    %v3986 = vpop.permute.xlu0 %3985
    %3987 = vrot.lane.b32.xlu0 %v3072, 64
    %v3988 = vpop.permute.xlu0 %3987
    %3989 = vrot.lane.b32.xlu0 %v3073, 64
    %v3990 = vpop.permute.xlu0 %3989
    %3991 = vrot.lane.b32.xlu0 %v3074, 64
    %v3992 = vpop.permute.xlu0 %3991
    %3993 = vrot.lane.b32.xlu0 %v3075, 64
    %v3994 = vpop.permute.xlu0 %3993
    %3995 = vrot.lane.b32.xlu0 %v3076, 64
    %v3996 = vpop.permute.xlu0 %3995
    %3997 = vrot.lane.b32.xlu0 %v3077, 64
    %v3998 = vpop.permute.xlu0 %3997
    %3999 = vrot.lane.b32.xlu0 %v3078, 64
    %v4000 = vpop.permute.xlu0 %3999
    %4001 = vrot.lane.b32.xlu0 %v3079, 64
    %v4002 = vpop.permute.xlu0 %4001
    %4003 = vrot.lane.b32.xlu0 %v3080, 64
    %v4004 = vpop.permute.xlu0 %4003
    %4005 = vrot.lane.b32.xlu0 %v3081, 64
    %v4006 = vpop.permute.xlu0 %4005
    %4007 = vrot.lane.b32.xlu0 %v3082, 64
    %v4008 = vpop.permute.xlu0 %4007
    %4009 = vrot.lane.b32.xlu0 %v3083, 64
    %v4010 = vpop.permute.xlu0 %4009
    %4011 = vrot.lane.b32.xlu0 %v3084, 64
    %v4012 = vpop.permute.xlu0 %4011
    %4013 = vrot.lane.b32.xlu0 %v3085, 64
    %v4014 = vpop.permute.xlu0 %4013
    %4015 = vrot.lane.b32.xlu0 %v3086, 64
    %v4016 = vpop.permute.xlu0 %4015
    %4017 = vrot.lane.b32.xlu0 %v3087, 64
    %v4018 = vpop.permute.xlu0 %4017
    %4019 = vrot.lane.b32.xlu0 %v3088, 64
    %v4020 = vpop.permute.xlu0 %4019
    %4021 = vrot.lane.b32.xlu0 %v3089, 64
    %v4022 = vpop.permute.xlu0 %4021
    %4023 = vrot.lane.b32.xlu0 %v3090, 64
    %v4024 = vpop.permute.xlu0 %4023
    %4025 = vrot.lane.b32.xlu0 %v3091, 64
    %v4026 = vpop.permute.xlu0 %4025
    %4027 = vrot.lane.b32.xlu0 %v3092, 64
    %v4028 = vpop.permute.xlu0 %4027
    %4029 = vrot.lane.b32.xlu0 %v3093, 64
    %v4030 = vpop.permute.xlu0 %4029
    %4031 = vrot.lane.b32.xlu0 %v3094, 64
    %v4032 = vpop.permute.xlu0 %4031
    %4033 = vrot.lane.b32.xlu0 %v3095, 64
    %v4034 = vpop.permute.xlu0 %4033
    %4035 = vrot.lane.b32.xlu0 %v3096, 64
    %v4036 = vpop.permute.xlu0 %4035
    %4037 = vrot.lane.b32.xlu0 %v3097, 64
    %v4038 = vpop.permute.xlu0 %4037
    %4039 = vrot.lane.b32.xlu0 %v3098, 64
    %v4040 = vpop.permute.xlu0 %4039
    %4041 = vrot.lane.b32.xlu0 %v3099, 64
    %v4042 = vpop.permute.xlu0 %4041
    %4043 = vrot.lane.b32.xlu0 %v3100, 64
    %v4044 = vpop.permute.xlu0 %4043
    %4045 = vrot.lane.b32.xlu0 %v3101, 64
    %v4046 = vpop.permute.xlu0 %4045
    %4047 = vrot.lane.b32.xlu0 %v3102, 64
    %v4048 = vpop.permute.xlu0 %4047
    %4049 = vrot.lane.b32.xlu0 %v3103, 64
    %v4050 = vpop.permute.xlu0 %4049
    %4051 = vrot.lane.b32.xlu0 %v3104, 64
    %v4052 = vpop.permute.xlu0 %4051
    %4053 = vrot.lane.b32.xlu0 %v3105, 64
    %v4054 = vpop.permute.xlu0 %4053
    %4055 = vrot.lane.b32.xlu0 %v3106, 64
    %v4056 = vpop.permute.xlu0 %4055
    %4057 = vrot.lane.b32.xlu0 %v3107, 64
    %v4058 = vpop.permute.xlu0 %4057
    %4059 = vrot.lane.b32.xlu0 %v3108, 64
    %v4060 = vpop.permute.xlu0 %4059
    %4061 = vrot.lane.b32.xlu0 %v3109, 64
    %v4062 = vpop.permute.xlu0 %4061
    %4063 = vrot.lane.b32.xlu0 %v3110, 64
    %v4064 = vpop.permute.xlu0 %4063
    %4065 = vrot.lane.b32.xlu0 %v3111, 64
    %v4066 = vpop.permute.xlu0 %4065
    %4067 = vrot.lane.b32.xlu0 %v3112, 64
    %v4068 = vpop.permute.xlu0 %4067
    %4069 = vrot.lane.b32.xlu0 %v3113, 64
    %v4070 = vpop.permute.xlu0 %4069
    %4071 = vrot.lane.b32.xlu0 %v3114, 64
    %v4072 = vpop.permute.xlu0 %4071
    %4073 = vrot.lane.b32.xlu0 %v3115, 64
    %v4074 = vpop.permute.xlu0 %4073
    %4075 = vrot.lane.b32.xlu0 %v3116, 64
    %v4076 = vpop.permute.xlu0 %4075
    %4077 = vrot.lane.b32.xlu0 %v3117, 64
    %v4078 = vpop.permute.xlu0 %4077
    %4079 = vrot.lane.b32.xlu0 %v3118, 64
    %v4080 = vpop.permute.xlu0 %4079
    %4081 = vrot.lane.b32.xlu0 %v3119, 64
    %v4082 = vpop.permute.xlu0 %4081
    %4083 = vrot.lane.b32.xlu0 %v3120, 64
    %v4084 = vpop.permute.xlu0 %4083
    %4085 = vrot.lane.b32.xlu0 %v3121, 64
    %v4086 = vpop.permute.xlu0 %4085
    %4087 = vrot.lane.b32.xlu0 %v3122, 64
    %v4088 = vpop.permute.xlu0 %4087
    %4089 = vrot.lane.b32.xlu0 %v3123, 64
    %v4090 = vpop.permute.xlu0 %4089
    %4091 = vrot.lane.b32.xlu0 %v3124, 64
    %v4092 = vpop.permute.xlu0 %4091
    %4159 = vrot.lane.b32.xlu0 %v3129, 80
    %v4160 = vpop.permute.xlu0 %4159
    %4161 = vrot.lane.b32.xlu0 %v3130, 80
    %v4162 = vpop.permute.xlu0 %4161
    %4163 = vrot.lane.b32.xlu0 %v3131, 80
    %v4164 = vpop.permute.xlu0 %4163
    %4165 = vrot.lane.b32.xlu0 %v3132, 80
    %v4166 = vpop.permute.xlu0 %4165
    %4167 = vrot.lane.b32.xlu0 %v3133, 80
    %v4168 = vpop.permute.xlu0 %4167
    %4169 = vrot.lane.b32.xlu0 %v3134, 80
    %v4170 = vpop.permute.xlu0 %4169
    %4171 = vrot.lane.b32.xlu0 %v3135, 80
    %v4172 = vpop.permute.xlu0 %4171
    %4173 = vrot.lane.b32.xlu0 %v3136, 80
    %v4174 = vpop.permute.xlu0 %4173
    %4175 = vrot.lane.b32.xlu0 %v3137, 80
    %v4176 = vpop.permute.xlu0 %4175
    %4177 = vrot.lane.b32.xlu0 %v3138, 80
    %v4178 = vpop.permute.xlu0 %4177
    %4179 = vrot.lane.b32.xlu0 %v3139, 80
    %v4180 = vpop.permute.xlu0 %4179
    %4181 = vrot.lane.b32.xlu0 %v3140, 80
    %v4182 = vpop.permute.xlu0 %4181
    %4183 = vrot.lane.b32.xlu0 %v3141, 80
    %v4184 = vpop.permute.xlu0 %4183
    %4185 = vrot.lane.b32.xlu0 %v3142, 80
    %v4186 = vpop.permute.xlu0 %4185
    %4187 = vrot.lane.b32.xlu0 %v3143, 80
    %v4188 = vpop.permute.xlu0 %4187
    %4189 = vrot.lane.b32.xlu0 %v3144, 80
    %v4190 = vpop.permute.xlu0 %4189
    %4191 = vrot.lane.b32.xlu0 %v3145, 80
    %v4192 = vpop.permute.xlu0 %4191
    %4193 = vrot.lane.b32.xlu0 %v3146, 80
    %v4194 = vpop.permute.xlu0 %4193
    %4195 = vrot.lane.b32.xlu0 %v3147, 80
    %v4196 = vpop.permute.xlu0 %4195
    %4197 = vrot.lane.b32.xlu0 %v3148, 80
    %v4198 = vpop.permute.xlu0 %4197
    %4199 = vrot.lane.b32.xlu0 %v3149, 80
    %v4200 = vpop.permute.xlu0 %4199
    %4201 = vrot.lane.b32.xlu0 %v3150, 80
    %v4202 = vpop.permute.xlu0 %4201
    %4203 = vrot.lane.b32.xlu0 %v3151, 80
    %v4204 = vpop.permute.xlu0 %4203
    %4205 = vrot.lane.b32.xlu0 %v3152, 80
    %v4206 = vpop.permute.xlu0 %4205
    %4207 = vrot.lane.b32.xlu0 %v3153, 80
    %v4208 = vpop.permute.xlu0 %4207
    %4209 = vrot.lane.b32.xlu0 %v3154, 80
    %v4210 = vpop.permute.xlu0 %4209
    %4211 = vrot.lane.b32.xlu0 %v3155, 80
    %v4212 = vpop.permute.xlu0 %4211
    %4213 = vrot.lane.b32.xlu0 %v3156, 80
    %v4214 = vpop.permute.xlu0 %4213
    %4215 = vrot.lane.b32.xlu0 %v3157, 80
    %v4216 = vpop.permute.xlu0 %4215
    %4217 = vrot.lane.b32.xlu0 %v3158, 80
    %v4218 = vpop.permute.xlu0 %4217
    %4219 = vrot.lane.b32.xlu0 %v3159, 80
    %v4220 = vpop.permute.xlu0 %4219
    %4221 = vrot.lane.b32.xlu0 %v3160, 80
    %v4222 = vpop.permute.xlu0 %4221
    %4223 = vrot.lane.b32.xlu0 %v3161, 80
    %v4224 = vpop.permute.xlu0 %4223
    %4225 = vrot.lane.b32.xlu0 %v3162, 80
    %v4226 = vpop.permute.xlu0 %4225
    %4227 = vrot.lane.b32.xlu0 %v3163, 80
    %v4228 = vpop.permute.xlu0 %4227
    %4229 = vrot.lane.b32.xlu0 %v3164, 80
    %v4230 = vpop.permute.xlu0 %4229
    %4231 = vrot.lane.b32.xlu0 %v3165, 80
    %v4232 = vpop.permute.xlu0 %4231
    %4233 = vrot.lane.b32.xlu0 %v3166, 80
    %v4234 = vpop.permute.xlu0 %4233
    %4235 = vrot.lane.b32.xlu0 %v3167, 80
    %v4236 = vpop.permute.xlu0 %4235
    %4237 = vrot.lane.b32.xlu0 %v3168, 80
    %v4238 = vpop.permute.xlu0 %4237
    %4239 = vrot.lane.b32.xlu0 %v3169, 80
    %v4240 = vpop.permute.xlu0 %4239
    %4241 = vrot.lane.b32.xlu0 %v3170, 80
    %v4242 = vpop.permute.xlu0 %4241
    %4243 = vrot.lane.b32.xlu0 %v3171, 80
    %v4244 = vpop.permute.xlu0 %4243
    %4245 = vrot.lane.b32.xlu0 %v3172, 80
    %v4246 = vpop.permute.xlu0 %4245
    %4247 = vrot.lane.b32.xlu0 %v3173, 80
    %v4248 = vpop.permute.xlu0 %4247
    %4249 = vrot.lane.b32.xlu0 %v3174, 80
    %v4250 = vpop.permute.xlu0 %4249
    %4251 = vrot.lane.b32.xlu0 %v3175, 80
    %v4252 = vpop.permute.xlu0 %4251
    %4253 = vrot.lane.b32.xlu0 %v3176, 80
    %v4254 = vpop.permute.xlu0 %4253
    %4255 = vrot.lane.b32.xlu0 %v3177, 80
    %v4256 = vpop.permute.xlu0 %4255
    %4257 = vrot.lane.b32.xlu0 %v3178, 80
    %v4258 = vpop.permute.xlu0 %4257
    %4259 = vrot.lane.b32.xlu0 %v3179, 80
    %v4260 = vpop.permute.xlu0 %4259
    %4261 = vrot.lane.b32.xlu0 %v3180, 80
    %v4262 = vpop.permute.xlu0 %4261
    %4263 = vrot.lane.b32.xlu0 %v3181, 80
    %v4264 = vpop.permute.xlu0 %4263
    %4265 = vrot.lane.b32.xlu0 %v3182, 80
    %v4266 = vpop.permute.xlu0 %4265
    %4267 = vrot.lane.b32.xlu0 %v3183, 80
    %v4268 = vpop.permute.xlu0 %4267
    %4269 = vrot.lane.b32.xlu0 %v3184, 80
    %v4270 = vpop.permute.xlu0 %4269
    %4271 = vrot.lane.b32.xlu0 %v3185, 80
    %v4272 = vpop.permute.xlu0 %4271
    %4273 = vrot.lane.b32.xlu0 %v3186, 80
    %v4274 = vpop.permute.xlu0 %4273
    %4275 = vrot.lane.b32.xlu0 %v3187, 80
    %v4276 = vpop.permute.xlu0 %4275
    %4277 = vrot.lane.b32.xlu0 %v3188, 80
    %v4278 = vpop.permute.xlu0 %4277
    %4279 = vrot.lane.b32.xlu0 %v3189, 80
    %v4280 = vpop.permute.xlu0 %4279
    %4281 = vrot.lane.b32.xlu0 %v3190, 80
    %v4282 = vpop.permute.xlu0 %4281
    %4283 = vrot.lane.b32.xlu0 %v3191, 80
    %v4284 = vpop.permute.xlu0 %4283
    %4285 = vrot.lane.b32.xlu0 %v3192, 80
    %v4286 = vpop.permute.xlu0 %4285
    %4353 = vrot.lane.b32.xlu0 %v2995, 96
    %v4354 = vpop.permute.xlu0 %4353
    %4355 = vrot.lane.b32.xlu0 %v2996, 96
    %v4356 = vpop.permute.xlu0 %4355
    %4357 = vrot.lane.b32.xlu0 %v2997, 96
    %v4358 = vpop.permute.xlu0 %4357
    %4359 = vrot.lane.b32.xlu0 %v2998, 96
    %v4360 = vpop.permute.xlu0 %4359
    %4361 = vrot.lane.b32.xlu0 %v2999, 96
    %v4362 = vpop.permute.xlu0 %4361
    %4363 = vrot.lane.b32.xlu0 %v3000, 96
    %v4364 = vpop.permute.xlu0 %4363
    %4365 = vrot.lane.b32.xlu0 %v3001, 96
    %v4366 = vpop.permute.xlu0 %4365
    %4367 = vrot.lane.b32.xlu0 %v3002, 96
    %v4368 = vpop.permute.xlu0 %4367
    %4369 = vrot.lane.b32.xlu0 %v3003, 96
    %v4370 = vpop.permute.xlu0 %4369
    %4371 = vrot.lane.b32.xlu0 %v3004, 96
    %v4372 = vpop.permute.xlu0 %4371
    %4373 = vrot.lane.b32.xlu0 %v3005, 96
    %v4374 = vpop.permute.xlu0 %4373
    %4375 = vrot.lane.b32.xlu0 %v3006, 96
    %v4376 = vpop.permute.xlu0 %4375
    %4377 = vrot.lane.b32.xlu0 %v3007, 96
    %v4378 = vpop.permute.xlu0 %4377
    %4379 = vrot.lane.b32.xlu0 %v3008, 96
    %v4380 = vpop.permute.xlu0 %4379
    %4381 = vrot.lane.b32.xlu0 %v3009, 96
    %v4382 = vpop.permute.xlu0 %4381
    %4383 = vrot.lane.b32.xlu0 %v3010, 96
    %v4384 = vpop.permute.xlu0 %4383
    %4385 = vrot.lane.b32.xlu0 %v3011, 96
    %v4386 = vpop.permute.xlu0 %4385
    %4387 = vrot.lane.b32.xlu0 %v3012, 96
    %v4388 = vpop.permute.xlu0 %4387
    %4389 = vrot.lane.b32.xlu0 %v3013, 96
    %v4390 = vpop.permute.xlu0 %4389
    %4391 = vrot.lane.b32.xlu0 %v3014, 96
    %v4392 = vpop.permute.xlu0 %4391
    %4393 = vrot.lane.b32.xlu0 %v3015, 96
    %v4394 = vpop.permute.xlu0 %4393
    %4395 = vrot.lane.b32.xlu0 %v3016, 96
    %v4396 = vpop.permute.xlu0 %4395
    %4397 = vrot.lane.b32.xlu0 %v3017, 96
    %v4398 = vpop.permute.xlu0 %4397
    %4399 = vrot.lane.b32.xlu0 %v3018, 96
    %v4400 = vpop.permute.xlu0 %4399
    %4401 = vrot.lane.b32.xlu0 %v3019, 96
    %v4402 = vpop.permute.xlu0 %4401
    %4403 = vrot.lane.b32.xlu0 %v3020, 96
    %v4404 = vpop.permute.xlu0 %4403
    %4405 = vrot.lane.b32.xlu0 %v3021, 96
    %v4406 = vpop.permute.xlu0 %4405
    %4407 = vrot.lane.b32.xlu0 %v3022, 96
    %v4408 = vpop.permute.xlu0 %4407
    %4409 = vrot.lane.b32.xlu0 %v3023, 96
    %v4410 = vpop.permute.xlu0 %4409
    %4411 = vrot.lane.b32.xlu0 %v3024, 96
    %v4412 = vpop.permute.xlu0 %4411
    %4413 = vrot.lane.b32.xlu0 %v3025, 96
    %v4414 = vpop.permute.xlu0 %4413
    %4415 = vrot.lane.b32.xlu0 %v3026, 96
    %v4416 = vpop.permute.xlu0 %4415
    %4417 = vrot.lane.b32.xlu0 %v3027, 96
    %v4418 = vpop.permute.xlu0 %4417
    %4419 = vrot.lane.b32.xlu0 %v3028, 96
    %v4420 = vpop.permute.xlu0 %4419
    %4421 = vrot.lane.b32.xlu0 %v3029, 96
    %v4422 = vpop.permute.xlu0 %4421
    %4423 = vrot.lane.b32.xlu0 %v3030, 96
    %v4424 = vpop.permute.xlu0 %4423
    %4425 = vrot.lane.b32.xlu0 %v3031, 96
    %v4426 = vpop.permute.xlu0 %4425
    %4427 = vrot.lane.b32.xlu0 %v3032, 96
    %v4428 = vpop.permute.xlu0 %4427
    %4429 = vrot.lane.b32.xlu0 %v3033, 96
    %v4430 = vpop.permute.xlu0 %4429
    %4431 = vrot.lane.b32.xlu0 %v3034, 96
    %v4432 = vpop.permute.xlu0 %4431
    %4433 = vrot.lane.b32.xlu0 %v3035, 96
    %v4434 = vpop.permute.xlu0 %4433
    %4435 = vrot.lane.b32.xlu0 %v3036, 96
    %v4436 = vpop.permute.xlu0 %4435
    %4437 = vrot.lane.b32.xlu0 %v3037, 96
    %v4438 = vpop.permute.xlu0 %4437
    %4439 = vrot.lane.b32.xlu0 %v3038, 96
    %v4440 = vpop.permute.xlu0 %4439
    %4441 = vrot.lane.b32.xlu0 %v3039, 96
    %v4442 = vpop.permute.xlu0 %4441
    %4443 = vrot.lane.b32.xlu0 %v3040, 96
    %v4444 = vpop.permute.xlu0 %4443
    %4445 = vrot.lane.b32.xlu0 %v3041, 96
    %v4446 = vpop.permute.xlu0 %4445
    %4447 = vrot.lane.b32.xlu0 %v3042, 96
    %v4448 = vpop.permute.xlu0 %4447
    %4449 = vrot.lane.b32.xlu0 %v3043, 96
    %v4450 = vpop.permute.xlu0 %4449
    %4451 = vrot.lane.b32.xlu0 %v3044, 96
    %v4452 = vpop.permute.xlu0 %4451
    %4453 = vrot.lane.b32.xlu0 %v3045, 96
    %v4454 = vpop.permute.xlu0 %4453
    %4455 = vrot.lane.b32.xlu0 %v3046, 96
    %v4456 = vpop.permute.xlu0 %4455
    %4457 = vrot.lane.b32.xlu0 %v3047, 96
    %v4458 = vpop.permute.xlu0 %4457
    %4459 = vrot.lane.b32.xlu0 %v3048, 96
    %v4460 = vpop.permute.xlu0 %4459
    %4461 = vrot.lane.b32.xlu0 %v3049, 96
    %v4462 = vpop.permute.xlu0 %4461
    %4463 = vrot.lane.b32.xlu0 %v3050, 96
    %v4464 = vpop.permute.xlu0 %4463
    %4465 = vrot.lane.b32.xlu0 %v3051, 96
    %v4466 = vpop.permute.xlu0 %4465
    %4467 = vrot.lane.b32.xlu0 %v3052, 96
    %v4468 = vpop.permute.xlu0 %4467
    %4469 = vrot.lane.b32.xlu0 %v3053, 96
    %v4470 = vpop.permute.xlu0 %4469
    %4471 = vrot.lane.b32.xlu0 %v3054, 96
    %v4472 = vpop.permute.xlu0 %4471
    %4473 = vrot.lane.b32.xlu0 %v3055, 96
    %v4474 = vpop.permute.xlu0 %4473
    %4475 = vrot.lane.b32.xlu0 %v3056, 96
    %v4476 = vpop.permute.xlu0 %4475
    %4477 = vrot.lane.b32.xlu0 %v3057, 96
    %v4478 = vpop.permute.xlu0 %4477
    %4479 = vrot.lane.b32.xlu0 %v3058, 96
    %v4480 = vpop.permute.xlu0 %4479
    %4547 = vrot.lane.b32.xlu0 %v3063, 112
    %v4548 = vpop.permute.xlu0 %4547
    %4549 = vrot.lane.b32.xlu0 %v3064, 112
    %v4550 = vpop.permute.xlu0 %4549
    %4551 = vrot.lane.b32.xlu0 %v3065, 112
    %v4552 = vpop.permute.xlu0 %4551
    %4553 = vrot.lane.b32.xlu0 %v3066, 112
    %v4554 = vpop.permute.xlu0 %4553
    %4555 = vrot.lane.b32.xlu0 %v3067, 112
    %v4556 = vpop.permute.xlu0 %4555
    %4557 = vrot.lane.b32.xlu0 %v3068, 112
    %v4558 = vpop.permute.xlu0 %4557
    %4559 = vrot.lane.b32.xlu0 %v3069, 112
    %v4560 = vpop.permute.xlu0 %4559
    %4561 = vrot.lane.b32.xlu0 %v3070, 112
    %v4562 = vpop.permute.xlu0 %4561
    %4563 = vrot.lane.b32.xlu0 %v3071, 112
    %v4564 = vpop.permute.xlu0 %4563
    %4565 = vrot.lane.b32.xlu0 %v3072, 112
    %v4566 = vpop.permute.xlu0 %4565
    %4567 = vrot.lane.b32.xlu0 %v3073, 112
    %v4568 = vpop.permute.xlu0 %4567
    %4569 = vrot.lane.b32.xlu0 %v3074, 112
    %v4570 = vpop.permute.xlu0 %4569
    %4571 = vrot.lane.b32.xlu0 %v3075, 112
    %v4572 = vpop.permute.xlu0 %4571
    %4573 = vrot.lane.b32.xlu0 %v3076, 112
    %v4574 = vpop.permute.xlu0 %4573
    %4575 = vrot.lane.b32.xlu0 %v3077, 112
    %v4576 = vpop.permute.xlu0 %4575
    %4577 = vrot.lane.b32.xlu0 %v3078, 112
    %v4578 = vpop.permute.xlu0 %4577
    %4579 = vrot.lane.b32.xlu0 %v3079, 112
    %v4580 = vpop.permute.xlu0 %4579
    %4581 = vrot.lane.b32.xlu0 %v3080, 112
    %v4582 = vpop.permute.xlu0 %4581
    %4583 = vrot.lane.b32.xlu0 %v3081, 112
    %v4584 = vpop.permute.xlu0 %4583
    %4585 = vrot.lane.b32.xlu0 %v3082, 112
    %v4586 = vpop.permute.xlu0 %4585
    %4587 = vrot.lane.b32.xlu0 %v3083, 112
    %v4588 = vpop.permute.xlu0 %4587
    %4589 = vrot.lane.b32.xlu0 %v3084, 112
    %v4590 = vpop.permute.xlu0 %4589
    %4591 = vrot.lane.b32.xlu0 %v3085, 112
    %v4592 = vpop.permute.xlu0 %4591
    %4593 = vrot.lane.b32.xlu0 %v3086, 112
    %v4594 = vpop.permute.xlu0 %4593
    %4595 = vrot.lane.b32.xlu0 %v3087, 112
    %v4596 = vpop.permute.xlu0 %4595
    %4597 = vrot.lane.b32.xlu0 %v3088, 112
    %v4598 = vpop.permute.xlu0 %4597
    %4599 = vrot.lane.b32.xlu0 %v3089, 112
    %v4600 = vpop.permute.xlu0 %4599
    %4601 = vrot.lane.b32.xlu0 %v3090, 112
    %v4602 = vpop.permute.xlu0 %4601
    %4603 = vrot.lane.b32.xlu0 %v3091, 112
    %v4604 = vpop.permute.xlu0 %4603
    %4605 = vrot.lane.b32.xlu0 %v3092, 112
    %v4606 = vpop.permute.xlu0 %4605
    %4607 = vrot.lane.b32.xlu0 %v3093, 112
    %v4608 = vpop.permute.xlu0 %4607
    %4609 = vrot.lane.b32.xlu0 %v3094, 112
    %v4610 = vpop.permute.xlu0 %4609
    %4611 = vrot.lane.b32.xlu0 %v3095, 112
    %v4612 = vpop.permute.xlu0 %4611
    %4613 = vrot.lane.b32.xlu0 %v3096, 112
    %v4614 = vpop.permute.xlu0 %4613
    %4615 = vrot.lane.b32.xlu0 %v3097, 112
    %v4616 = vpop.permute.xlu0 %4615
    %4617 = vrot.lane.b32.xlu0 %v3098, 112
    %v4618 = vpop.permute.xlu0 %4617
    %4619 = vrot.lane.b32.xlu0 %v3099, 112
    %v4620 = vpop.permute.xlu0 %4619
    %4621 = vrot.lane.b32.xlu0 %v3100, 112
    %v4622 = vpop.permute.xlu0 %4621
    %4623 = vrot.lane.b32.xlu0 %v3101, 112
    %v4624 = vpop.permute.xlu0 %4623
    %4625 = vrot.lane.b32.xlu0 %v3102, 112
    %v4626 = vpop.permute.xlu0 %4625
    %4627 = vrot.lane.b32.xlu0 %v3103, 112
    %v4628 = vpop.permute.xlu0 %4627
    %4629 = vrot.lane.b32.xlu0 %v3104, 112
    %v4630 = vpop.permute.xlu0 %4629
    %4631 = vrot.lane.b32.xlu0 %v3105, 112
    %v4632 = vpop.permute.xlu0 %4631
    %4633 = vrot.lane.b32.xlu0 %v3106, 112
    %v4634 = vpop.permute.xlu0 %4633
    %4635 = vrot.lane.b32.xlu0 %v3107, 112
    %v4636 = vpop.permute.xlu0 %4635
    %4637 = vrot.lane.b32.xlu0 %v3108, 112
    %v4638 = vpop.permute.xlu0 %4637
    %4639 = vrot.lane.b32.xlu0 %v3109, 112
    %v4640 = vpop.permute.xlu0 %4639
    %4641 = vrot.lane.b32.xlu0 %v3110, 112
    %v4642 = vpop.permute.xlu0 %4641
    %4643 = vrot.lane.b32.xlu0 %v3111, 112
    %v4644 = vpop.permute.xlu0 %4643
    %4645 = vrot.lane.b32.xlu0 %v3112, 112
    %v4646 = vpop.permute.xlu0 %4645
    %4647 = vrot.lane.b32.xlu0 %v3113, 112
    %v4648 = vpop.permute.xlu0 %4647
    %4649 = vrot.lane.b32.xlu0 %v3114, 112
    %v4650 = vpop.permute.xlu0 %4649
    %4651 = vrot.lane.b32.xlu0 %v3115, 112
    %v4652 = vpop.permute.xlu0 %4651
    %4653 = vrot.lane.b32.xlu0 %v3116, 112
    %v4654 = vpop.permute.xlu0 %4653
    %4655 = vrot.lane.b32.xlu0 %v3117, 112
    %v4656 = vpop.permute.xlu0 %4655
    %4657 = vrot.lane.b32.xlu0 %v3118, 112
    %v4658 = vpop.permute.xlu0 %4657
    %4659 = vrot.lane.b32.xlu0 %v3119, 112
    %v4660 = vpop.permute.xlu0 %4659
    %4661 = vrot.lane.b32.xlu0 %v3120, 112
    %v4662 = vpop.permute.xlu0 %4661
    %4663 = vrot.lane.b32.xlu0 %v3121, 112
    %v4664 = vpop.permute.xlu0 %4663
    %4665 = vrot.lane.b32.xlu0 %v3122, 112
    %v4666 = vpop.permute.xlu0 %4665
    %4667 = vrot.lane.b32.xlu0 %v3123, 112
    %v4668 = vpop.permute.xlu0 %4667
    %4669 = vrot.lane.b32.xlu0 %v3124, 112
    %v4670 = vpop.permute.xlu0 %4669
    %4671 = vrot.lane.b32.xlu0 %v3125, 112
    %v4672 = vpop.permute.xlu0 %4671
    %4673 = vrot.lane.b32.xlu0 %v3126, 112
    %v4674 = vpop.permute.xlu0 %4673
    %v4739 = vsel %vm2921, %v2991, %v3260
    %v4740 = vsel %vm2921, %v2992, %v3262
    %v4741 = vsel %vm2921, %v2993, %v3264
    %v4742 = vsel %vm2921, %v2994, %v3266
    %v4743 = vsel %vm2921, %v2995, %v3268
    %v4744 = vsel %vm2921, %v2996, %v3270
    %v4745 = vsel %vm2921, %v2997, %v3272
    %v4746 = vsel %vm2921, %v2998, %v3274
    %v4747 = vsel %vm2921, %v2999, %v3276
    %v4748 = vsel %vm2921, %v3000, %v3278
    %v4749 = vsel %vm2921, %v3001, %v3280
    %v4750 = vsel %vm2921, %v3002, %v3282
    %v4751 = vsel %vm2921, %v3003, %v3284
    %v4752 = vsel %vm2921, %v3004, %v3286
    %v4753 = vsel %vm2921, %v3005, %v3288
    %v4754 = vsel %vm2921, %v3006, %v3290
    %v4755 = vsel %vm2921, %v3007, %v3292
    %v4756 = vsel %vm2921, %v3008, %v3294
    %v4757 = vsel %vm2921, %v3009, %v3296
    %v4758 = vsel %vm2921, %v3010, %v3298
    %v4759 = vsel %vm2921, %v3011, %v3300
    %v4760 = vsel %vm2921, %v3012, %v3302
    %v4761 = vsel %vm2921, %v3013, %v3304
    %v4762 = vsel %vm2921, %v3014, %v3306
    %v4763 = vsel %vm2921, %v3015, %v3308
    %v4764 = vsel %vm2921, %v3016, %v3310
    %v4765 = vsel %vm2921, %v3017, %v3312
    %v4766 = vsel %vm2921, %v3018, %v3314
    %v4767 = vsel %vm2921, %v3019, %v3316
    %v4768 = vsel %vm2921, %v3020, %v3318
    %v4769 = vsel %vm2921, %v3021, %v3320
    %v4770 = vsel %vm2921, %v3022, %v3322
    %v4771 = vsel %vm2921, %v3023, %v3324
    %v4772 = vsel %vm2921, %v3024, %v3326
    %v4773 = vsel %vm2921, %v3025, %v3328
    %v4774 = vsel %vm2921, %v3026, %v3330
    %v4775 = vsel %vm2921, %v3027, %v3332
    %v4776 = vsel %vm2921, %v3028, %v3334
    %v4777 = vsel %vm2921, %v3029, %v3336
    %v4778 = vsel %vm2921, %v3030, %v3338
    %v4779 = vsel %vm2921, %v3031, %v3340
    %v4780 = vsel %vm2921, %v3032, %v3342
    %v4781 = vsel %vm2921, %v3033, %v3344
    %v4782 = vsel %vm2921, %v3034, %v3346
    %v4783 = vsel %vm2921, %v3035, %v3348
    %v4784 = vsel %vm2921, %v3036, %v3350
    %v4785 = vsel %vm2921, %v3037, %v3352
    %v4786 = vsel %vm2921, %v3038, %v3354
    %v4787 = vsel %vm2921, %v3039, %v3356
    %v4788 = vsel %vm2921, %v3040, %v3358
    %v4789 = vsel %vm2921, %v3041, %v3360
    %v4790 = vsel %vm2921, %v3042, %v3362
    %v4791 = vsel %vm2921, %v3043, %v3364
    %v4792 = vsel %vm2921, %v3044, %v3366
    %v4793 = vsel %vm2921, %v3045, %v3368
    %v4794 = vsel %vm2921, %v3046, %v3370
    %v4795 = vsel %vm2921, %v3047, %v3372
    %v4796 = vsel %vm2921, %v3048, %v3374
    %v4797 = vsel %vm2921, %v3049, %v3376
    %v4798 = vsel %vm2921, %v3050, %v3378
    %v4799 = vsel %vm2921, %v3051, %v3380
    %v4800 = vsel %vm2921, %v3052, %v3382
    %v4801 = vsel %vm2921, %v3053, %v3384
    %v4802 = vsel %vm2921, %v3054, %v3386
    %vm4803 = vcmask 261120
    %v4804 = vsel %vm4803, %v4739, %v3516
    %v4805 = vsel %vm4803, %v4740, %v3518
    %v4806 = vsel %vm4803, %v4741, %v3520
    %v4807 = vsel %vm4803, %v4742, %v3522
    %v4808 = vsel %vm4803, %v4743, %v3524
    %v4809 = vsel %vm4803, %v4744, %v3526
    %v4810 = vsel %vm4803, %v4745, %v3528
    %v4811 = vsel %vm4803, %v4746, %v3530
    %v4812 = vsel %vm4803, %v4747, %v3532
    %v4813 = vsel %vm4803, %v4748, %v3534
    %v4814 = vsel %vm4803, %v4749, %v3536
    %v4815 = vsel %vm4803, %v4750, %v3538
    %v4816 = vsel %vm4803, %v4751, %v3540
    %v4817 = vsel %vm4803, %v4752, %v3542
    %v4818 = vsel %vm4803, %v4753, %v3544
    %v4819 = vsel %vm4803, %v4754, %v3546
    %v4820 = vsel %vm4803, %v4755, %v3548
    %v4821 = vsel %vm4803, %v4756, %v3550
    %v4822 = vsel %vm4803, %v4757, %v3552
    %v4823 = vsel %vm4803, %v4758, %v3554
    %v4824 = vsel %vm4803, %v4759, %v3556
    %v4825 = vsel %vm4803, %v4760, %v3558
    %v4826 = vsel %vm4803, %v4761, %v3560
    %v4827 = vsel %vm4803, %v4762, %v3562
    %v4828 = vsel %vm4803, %v4763, %v3564
    %v4829 = vsel %vm4803, %v4764, %v3566
    %v4830 = vsel %vm4803, %v4765, %v3568
    %v4831 = vsel %vm4803, %v4766, %v3570
    %v4832 = vsel %vm4803, %v4767, %v3572
    %v4833 = vsel %vm4803, %v4768, %v3574
    %v4834 = vsel %vm4803, %v4769, %v3576
    %v4835 = vsel %vm4803, %v4770, %v3578
    %v4836 = vsel %vm4803, %v4771, %v3580
    %v4837 = vsel %vm4803, %v4772, %v3582
    %v4838 = vsel %vm4803, %v4773, %v3584
    %v4839 = vsel %vm4803, %v4774, %v3586
    %v4840 = vsel %vm4803, %v4775, %v3588
    %v4841 = vsel %vm4803, %v4776, %v3590
    %v4842 = vsel %vm4803, %v4777, %v3592
    %v4843 = vsel %vm4803, %v4778, %v3594
    %v4844 = vsel %vm4803, %v4779, %v3596
    %v4845 = vsel %vm4803, %v4780, %v3598
    %v4846 = vsel %vm4803, %v4781, %v3600
    %v4847 = vsel %vm4803, %v4782, %v3602
    %v4848 = vsel %vm4803, %v4783, %v3604
    %v4849 = vsel %vm4803, %v4784, %v3606
    %v4850 = vsel %vm4803, %v4785, %v3608
    %v4851 = vsel %vm4803, %v4786, %v3610
    %v4852 = vsel %vm4803, %v4787, %v3612
    %v4853 = vsel %vm4803, %v4788, %v3614
    %v4854 = vsel %vm4803, %v4789, %v3616
    %v4855 = vsel %vm4803, %v4790, %v3618
    %v4856 = vsel %vm4803, %v4791, %v3620
    %v4857 = vsel %vm4803, %v4792, %v3622
    %v4858 = vsel %vm4803, %v4793, %v3624
    %v4859 = vsel %vm4803, %v4794, %v3626
    %v4860 = vsel %vm4803, %v4795, %v3628
    %v4861 = vsel %vm4803, %v4796, %v3630
    %v4862 = vsel %vm4803, %v4797, %v3632
    %v4863 = vsel %vm4803, %v4798, %v3634
    %v4864 = vsel %vm4803, %v4799, %v3636
    %v4865 = vsel %vm4803, %v4800, %v3638
    %v4866 = vsel %vm4803, %v4801, %v3640
    %v4867 = vsel %vm4803, %v4802, %v3642
    %vm4868 = vcmask 392192
    %v4869 = vsel %vm4868, %v4804, %v3772
    %v4870 = vsel %vm4868, %v4805, %v3774
    %v4871 = vsel %vm4868, %v4806, %v3776
    %v4872 = vsel %vm4868, %v4807, %v3778
    %v4873 = vsel %vm4868, %v4808, %v3780
    %v4874 = vsel %vm4868, %v4809, %v3782
    %v4875 = vsel %vm4868, %v4810, %v3784
    %v4876 = vsel %vm4868, %v4811, %v3786
    %v4877 = vsel %vm4868, %v4812, %v3788
    %v4878 = vsel %vm4868, %v4813, %v3790
    %v4879 = vsel %vm4868, %v4814, %v3792
    %v4880 = vsel %vm4868, %v4815, %v3794
    %v4881 = vsel %vm4868, %v4816, %v3796
    %v4882 = vsel %vm4868, %v4817, %v3798
    %v4883 = vsel %vm4868, %v4818, %v3800
    %v4884 = vsel %vm4868, %v4819, %v3802
    %v4885 = vsel %vm4868, %v4820, %v3804
    %v4886 = vsel %vm4868, %v4821, %v3806
    %v4887 = vsel %vm4868, %v4822, %v3808
    %v4888 = vsel %vm4868, %v4823, %v3810
    %v4889 = vsel %vm4868, %v4824, %v3812
    %v4890 = vsel %vm4868, %v4825, %v3814
    %v4891 = vsel %vm4868, %v4826, %v3816
    %v4892 = vsel %vm4868, %v4827, %v3818
    %v4893 = vsel %vm4868, %v4828, %v3820
    %v4894 = vsel %vm4868, %v4829, %v3822
    %v4895 = vsel %vm4868, %v4830, %v3824
    %v4896 = vsel %vm4868, %v4831, %v3826
    %v4897 = vsel %vm4868, %v4832, %v3828
    %v4898 = vsel %vm4868, %v4833, %v3830
    %v4899 = vsel %vm4868, %v4834, %v3832
    %v4900 = vsel %vm4868, %v4835, %v3834
    %v4901 = vsel %vm4868, %v4836, %v3836
    %v4902 = vsel %vm4868, %v4837, %v3838
    %v4903 = vsel %vm4868, %v4838, %v3840
    %v4904 = vsel %vm4868, %v4839, %v3842
    %v4905 = vsel %vm4868, %v4840, %v3844
    %v4906 = vsel %vm4868, %v4841, %v3846
    %v4907 = vsel %vm4868, %v4842, %v3848
    %v4908 = vsel %vm4868, %v4843, %v3850
    %v4909 = vsel %vm4868, %v4844, %v3852
    %v4910 = vsel %vm4868, %v4845, %v3854
    %v4911 = vsel %vm4868, %v4846, %v3856
    %v4912 = vsel %vm4868, %v4847, %v3858
    %v4913 = vsel %vm4868, %v4848, %v3860
    %v4914 = vsel %vm4868, %v4849, %v3862
    %v4915 = vsel %vm4868, %v4850, %v3864
    %v4916 = vsel %vm4868, %v4851, %v3866
    %v4917 = vsel %vm4868, %v4852, %v3868
    %v4918 = vsel %vm4868, %v4853, %v3870
    %v4919 = vsel %vm4868, %v4854, %v3872
    %v4920 = vsel %vm4868, %v4855, %v3874
    %v4921 = vsel %vm4868, %v4856, %v3876
    %v4922 = vsel %vm4868, %v4857, %v3878
    %v4923 = vsel %vm4868, %v4858, %v3880
    %v4924 = vsel %vm4868, %v4859, %v3882
    %v4925 = vsel %vm4868, %v4860, %v3884
    %v4926 = vsel %vm4868, %v4861, %v3886
    %v4927 = vsel %vm4868, %v4862, %v3888
    %v4928 = vsel %vm4868, %v4863, %v3890
    %v4929 = vsel %vm4868, %v4864, %v3892
    %v4930 = vsel %vm4868, %v4865, %v3894
    %v4931 = vsel %vm4868, %v4866, %v3896
    %v4932 = vsel %vm4868, %v4867, %v3898
    %vm4933 = vcmask 523264
    %v4934 = vsel %vm4933, %v4869, %v3966
    %v4935 = vsel %vm4933, %v4870, %v3968
    %v4936 = vsel %vm4933, %v4871, %v3970
    %v4937 = vsel %vm4933, %v4872, %v3972
    %v4938 = vsel %vm4933, %v4873, %v3974
    %v4939 = vsel %vm4933, %v4874, %v3976
    %v4940 = vsel %vm4933, %v4875, %v3978
    %v4941 = vsel %vm4933, %v4876, %v3980
    %v4942 = vsel %vm4933, %v4877, %v3982
    %v4943 = vsel %vm4933, %v4878, %v3984
    %v4944 = vsel %vm4933, %v4879, %v3986
    %v4945 = vsel %vm4933, %v4880, %v3988
    %v4946 = vsel %vm4933, %v4881, %v3990
    %v4947 = vsel %vm4933, %v4882, %v3992
    %v4948 = vsel %vm4933, %v4883, %v3994
    %v4949 = vsel %vm4933, %v4884, %v3996
    %v4950 = vsel %vm4933, %v4885, %v3998
    %v4951 = vsel %vm4933, %v4886, %v4000
    %v4952 = vsel %vm4933, %v4887, %v4002
    %v4953 = vsel %vm4933, %v4888, %v4004
    %v4954 = vsel %vm4933, %v4889, %v4006
    %v4955 = vsel %vm4933, %v4890, %v4008
    %v4956 = vsel %vm4933, %v4891, %v4010
    %v4957 = vsel %vm4933, %v4892, %v4012
    %v4958 = vsel %vm4933, %v4893, %v4014
    %v4959 = vsel %vm4933, %v4894, %v4016
    %v4960 = vsel %vm4933, %v4895, %v4018
    %v4961 = vsel %vm4933, %v4896, %v4020
    %v4962 = vsel %vm4933, %v4897, %v4022
    %v4963 = vsel %vm4933, %v4898, %v4024
    %v4964 = vsel %vm4933, %v4899, %v4026
    %v4965 = vsel %vm4933, %v4900, %v4028
    %v4966 = vsel %vm4933, %v4901, %v4030
    %v4967 = vsel %vm4933, %v4902, %v4032
    %v4968 = vsel %vm4933, %v4903, %v4034
    %v4969 = vsel %vm4933, %v4904, %v4036
    %v4970 = vsel %vm4933, %v4905, %v4038
    %v4971 = vsel %vm4933, %v4906, %v4040
    %v4972 = vsel %vm4933, %v4907, %v4042
    %v4973 = vsel %vm4933, %v4908, %v4044
    %v4974 = vsel %vm4933, %v4909, %v4046
    %v4975 = vsel %vm4933, %v4910, %v4048
    %v4976 = vsel %vm4933, %v4911, %v4050
    %v4977 = vsel %vm4933, %v4912, %v4052
    %v4978 = vsel %vm4933, %v4913, %v4054
    %v4979 = vsel %vm4933, %v4914, %v4056
    %v4980 = vsel %vm4933, %v4915, %v4058
    %v4981 = vsel %vm4933, %v4916, %v4060
    %v4982 = vsel %vm4933, %v4917, %v4062
    %v4983 = vsel %vm4933, %v4918, %v4064
    %v4984 = vsel %vm4933, %v4919, %v4066
    %v4985 = vsel %vm4933, %v4920, %v4068
    %v4986 = vsel %vm4933, %v4921, %v4070
    %v4987 = vsel %vm4933, %v4922, %v4072
    %v4988 = vsel %vm4933, %v4923, %v4074
    %v4989 = vsel %vm4933, %v4924, %v4076
    %v4990 = vsel %vm4933, %v4925, %v4078
    %v4991 = vsel %vm4933, %v4926, %v4080
    %v4992 = vsel %vm4933, %v4927, %v4082
    %v4993 = vsel %vm4933, %v4928, %v4084
    %v4994 = vsel %vm4933, %v4929, %v4086
    %v4995 = vsel %vm4933, %v4930, %v4088
    %v4996 = vsel %vm4933, %v4931, %v4090
    %v4997 = vsel %vm4933, %v4932, %v4092
    %vm4998 = vcmask 654336
    %v4999 = vsel %vm4998, %v4934, %v4160
    %v5000 = vsel %vm4998, %v4935, %v4162
    %v5001 = vsel %vm4998, %v4936, %v4164
    %v5002 = vsel %vm4998, %v4937, %v4166
    %v5003 = vsel %vm4998, %v4938, %v4168
    %v5004 = vsel %vm4998, %v4939, %v4170
    %v5005 = vsel %vm4998, %v4940, %v4172
    %v5006 = vsel %vm4998, %v4941, %v4174
    %v5007 = vsel %vm4998, %v4942, %v4176
    %v5008 = vsel %vm4998, %v4943, %v4178
    %v5009 = vsel %vm4998, %v4944, %v4180
    %v5010 = vsel %vm4998, %v4945, %v4182
    %v5011 = vsel %vm4998, %v4946, %v4184
    %v5012 = vsel %vm4998, %v4947, %v4186
    %v5013 = vsel %vm4998, %v4948, %v4188
    %v5014 = vsel %vm4998, %v4949, %v4190
    %v5015 = vsel %vm4998, %v4950, %v4192
    %v5016 = vsel %vm4998, %v4951, %v4194
    %v5017 = vsel %vm4998, %v4952, %v4196
    %v5018 = vsel %vm4998, %v4953, %v4198
    %v5019 = vsel %vm4998, %v4954, %v4200
    %v5020 = vsel %vm4998, %v4955, %v4202
    %v5021 = vsel %vm4998, %v4956, %v4204
    %v5022 = vsel %vm4998, %v4957, %v4206
    %v5023 = vsel %vm4998, %v4958, %v4208
    %v5024 = vsel %vm4998, %v4959, %v4210
    %v5025 = vsel %vm4998, %v4960, %v4212
    %v5026 = vsel %vm4998, %v4961, %v4214
    %v5027 = vsel %vm4998, %v4962, %v4216
    %v5028 = vsel %vm4998, %v4963, %v4218
    %v5029 = vsel %vm4998, %v4964, %v4220
    %v5030 = vsel %vm4998, %v4965, %v4222
    %v5031 = vsel %vm4998, %v4966, %v4224
    %v5032 = vsel %vm4998, %v4967, %v4226
    %v5033 = vsel %vm4998, %v4968, %v4228
    %v5034 = vsel %vm4998, %v4969, %v4230
    %v5035 = vsel %vm4998, %v4970, %v4232
    %v5036 = vsel %vm4998, %v4971, %v4234
    %v5037 = vsel %vm4998, %v4972, %v4236
    %v5038 = vsel %vm4998, %v4973, %v4238
    %v5039 = vsel %vm4998, %v4974, %v4240
    %v5040 = vsel %vm4998, %v4975, %v4242
    %v5041 = vsel %vm4998, %v4976, %v4244
    %v5042 = vsel %vm4998, %v4977, %v4246
    %v5043 = vsel %vm4998, %v4978, %v4248
    %v5044 = vsel %vm4998, %v4979, %v4250
    %v5045 = vsel %vm4998, %v4980, %v4252
    %v5046 = vsel %vm4998, %v4981, %v4254
    %v5047 = vsel %vm4998, %v4982, %v4256
    %v5048 = vsel %vm4998, %v4983, %v4258
    %v5049 = vsel %vm4998, %v4984, %v4260
    %v5050 = vsel %vm4998, %v4985, %v4262
    %v5051 = vsel %vm4998, %v4986, %v4264
    %v5052 = vsel %vm4998, %v4987, %v4266
    %v5053 = vsel %vm4998, %v4988, %v4268
    %v5054 = vsel %vm4998, %v4989, %v4270
    %v5055 = vsel %vm4998, %v4990, %v4272
    %v5056 = vsel %vm4998, %v4991, %v4274
    %v5057 = vsel %vm4998, %v4992, %v4276
    %v5058 = vsel %vm4998, %v4993, %v4278
    %v5059 = vsel %vm4998, %v4994, %v4280
    %v5060 = vsel %vm4998, %v4995, %v4282
    %v5061 = vsel %vm4998, %v4996, %v4284
    %v5062 = vsel %vm4998, %v4997, %v4286
    %vm5063 = vcmask 785408
    %v5064 = vsel %vm5063, %v4999, %v4354
    %v5065 = vsel %vm5063, %v5000, %v4356
    %v5066 = vsel %vm5063, %v5001, %v4358
    %v5067 = vsel %vm5063, %v5002, %v4360
    %v5068 = vsel %vm5063, %v5003, %v4362
    %v5069 = vsel %vm5063, %v5004, %v4364
    %v5070 = vsel %vm5063, %v5005, %v4366
    %v5071 = vsel %vm5063, %v5006, %v4368
    %v5072 = vsel %vm5063, %v5007, %v4370
    %v5073 = vsel %vm5063, %v5008, %v4372
    %v5074 = vsel %vm5063, %v5009, %v4374
    %v5075 = vsel %vm5063, %v5010, %v4376
    %v5076 = vsel %vm5063, %v5011, %v4378
    %v5077 = vsel %vm5063, %v5012, %v4380
    %v5078 = vsel %vm5063, %v5013, %v4382
    %v5079 = vsel %vm5063, %v5014, %v4384
    %v5080 = vsel %vm5063, %v5015, %v4386
    %v5081 = vsel %vm5063, %v5016, %v4388
    %v5082 = vsel %vm5063, %v5017, %v4390
    %v5083 = vsel %vm5063, %v5018, %v4392
    %v5084 = vsel %vm5063, %v5019, %v4394
    %v5085 = vsel %vm5063, %v5020, %v4396
    %v5086 = vsel %vm5063, %v5021, %v4398
    %v5087 = vsel %vm5063, %v5022, %v4400
    %v5088 = vsel %vm5063, %v5023, %v4402
    %v5089 = vsel %vm5063, %v5024, %v4404
    %v5090 = vsel %vm5063, %v5025, %v4406
    %v5091 = vsel %vm5063, %v5026, %v4408
    %v5092 = vsel %vm5063, %v5027, %v4410
    %v5093 = vsel %vm5063, %v5028, %v4412
    %v5094 = vsel %vm5063, %v5029, %v4414
    %v5095 = vsel %vm5063, %v5030, %v4416
    %v5096 = vsel %vm5063, %v5031, %v4418
    %v5097 = vsel %vm5063, %v5032, %v4420
    %v5098 = vsel %vm5063, %v5033, %v4422
    %v5099 = vsel %vm5063, %v5034, %v4424
    %v5100 = vsel %vm5063, %v5035, %v4426
    %v5101 = vsel %vm5063, %v5036, %v4428
    %v5102 = vsel %vm5063, %v5037, %v4430
    %v5103 = vsel %vm5063, %v5038, %v4432
    %v5104 = vsel %vm5063, %v5039, %v4434
    %v5105 = vsel %vm5063, %v5040, %v4436
    %v5106 = vsel %vm5063, %v5041, %v4438
    %v5107 = vsel %vm5063, %v5042, %v4440
    %v5108 = vsel %vm5063, %v5043, %v4442
    %v5109 = vsel %vm5063, %v5044, %v4444
    %v5110 = vsel %vm5063, %v5045, %v4446
    %v5111 = vsel %vm5063, %v5046, %v4448
    %v5112 = vsel %vm5063, %v5047, %v4450
    %v5113 = vsel %vm5063, %v5048, %v4452
    %v5114 = vsel %vm5063, %v5049, %v4454
    %v5115 = vsel %vm5063, %v5050, %v4456
    %v5116 = vsel %vm5063, %v5051, %v4458
    %v5117 = vsel %vm5063, %v5052, %v4460
    %v5118 = vsel %vm5063, %v5053, %v4462
    %v5119 = vsel %vm5063, %v5054, %v4464
    %v5120 = vsel %vm5063, %v5055, %v4466
    %v5121 = vsel %vm5063, %v5056, %v4468
    %v5122 = vsel %vm5063, %v5057, %v4470
    %v5123 = vsel %vm5063, %v5058, %v4472
    %v5124 = vsel %vm5063, %v5059, %v4474
    %v5125 = vsel %vm5063, %v5060, %v4476
    %v5126 = vsel %vm5063, %v5061, %v4478
    %v5127 = vsel %vm5063, %v5062, %v4480
    %vm5128 = vcmask 916480
    %v5129 = vsel %vm5128, %v5064, %v4548
    %v5130 = vsel %vm5128, %v5065, %v4550
    %v5131 = vsel %vm5128, %v5066, %v4552
    %v5132 = vsel %vm5128, %v5067, %v4554
    %v5133 = vsel %vm5128, %v5068, %v4556
    %v5134 = vsel %vm5128, %v5069, %v4558
    %v5135 = vsel %vm5128, %v5070, %v4560
    %v5136 = vsel %vm5128, %v5071, %v4562
    %v5137 = vsel %vm5128, %v5072, %v4564
    %v5138 = vsel %vm5128, %v5073, %v4566
    %v5139 = vsel %vm5128, %v5074, %v4568
    %v5140 = vsel %vm5128, %v5075, %v4570
    %v5141 = vsel %vm5128, %v5076, %v4572
    %v5142 = vsel %vm5128, %v5077, %v4574
    %v5143 = vsel %vm5128, %v5078, %v4576
    %v5144 = vsel %vm5128, %v5079, %v4578
    %v5145 = vsel %vm5128, %v5080, %v4580
    %v5146 = vsel %vm5128, %v5081, %v4582
    %v5147 = vsel %vm5128, %v5082, %v4584
    %v5148 = vsel %vm5128, %v5083, %v4586
    %v5149 = vsel %vm5128, %v5084, %v4588
    %v5150 = vsel %vm5128, %v5085, %v4590
    %v5151 = vsel %vm5128, %v5086, %v4592
    %v5152 = vsel %vm5128, %v5087, %v4594
    %v5153 = vsel %vm5128, %v5088, %v4596
    %v5154 = vsel %vm5128, %v5089, %v4598
    %v5155 = vsel %vm5128, %v5090, %v4600
    %v5156 = vsel %vm5128, %v5091, %v4602
    %v5157 = vsel %vm5128, %v5092, %v4604
    %v5158 = vsel %vm5128, %v5093, %v4606
    %v5159 = vsel %vm5128, %v5094, %v4608
    %v5160 = vsel %vm5128, %v5095, %v4610
    %v5161 = vsel %vm5128, %v5096, %v4612
    %v5162 = vsel %vm5128, %v5097, %v4614
    %v5163 = vsel %vm5128, %v5098, %v4616
    %v5164 = vsel %vm5128, %v5099, %v4618
    %v5165 = vsel %vm5128, %v5100, %v4620
    %v5166 = vsel %vm5128, %v5101, %v4622
    %v5167 = vsel %vm5128, %v5102, %v4624
    %v5168 = vsel %vm5128, %v5103, %v4626
    %v5169 = vsel %vm5128, %v5104, %v4628
    %v5170 = vsel %vm5128, %v5105, %v4630
    %v5171 = vsel %vm5128, %v5106, %v4632
    %v5172 = vsel %vm5128, %v5107, %v4634
    %v5173 = vsel %vm5128, %v5108, %v4636
    %v5174 = vsel %vm5128, %v5109, %v4638
    %v5175 = vsel %vm5128, %v5110, %v4640
    %v5176 = vsel %vm5128, %v5111, %v4642
    %v5177 = vsel %vm5128, %v5112, %v4644
    %v5178 = vsel %vm5128, %v5113, %v4646
    %v5179 = vsel %vm5128, %v5114, %v4648
    %v5180 = vsel %vm5128, %v5115, %v4650
    %v5181 = vsel %vm5128, %v5116, %v4652
    %v5182 = vsel %vm5128, %v5117, %v4654
    %v5183 = vsel %vm5128, %v5118, %v4656
    %v5184 = vsel %vm5128, %v5119, %v4658
    %v5185 = vsel %vm5128, %v5120, %v4660
    %v5186 = vsel %vm5128, %v5121, %v4662
    %v5187 = vsel %vm5128, %v5122, %v4664
    %v5188 = vsel %vm5128, %v5123, %v4666
    %v5189 = vsel %vm5128, %v5124, %v4668
    %v5190 = vsel %vm5128, %v5125, %v4670
    %v5191 = vsel %vm5128, %v5126, %v4672
    %v5192 = vsel %vm5128, %v5127, %v4674
    %v5193 = vld [vmem:[%s3] sm:$0xff]
    %v5194 = vld [vmem:[%s3 + $0x8] sm:$0xff]
    %v5195 = vld [vmem:[%s3 + $0x10] sm:$0xff]
    %v5196 = vld [vmem:[%s3 + $0x18] sm:$0xff]
    %v5197 = vld [vmem:[%s3 + $0x20] sm:$0xff]
    %v5198 = vld [vmem:[%s3 + $0x28] sm:$0xff]
    %v5199 = vld [vmem:[%s3 + $0x30] sm:$0xff]
    %v5200 = vld [vmem:[%s3 + $0x38] sm:$0xff]
    %v5201 = vld [vmem:[%s3 + $0x40] sm:$0xff]
    %v5202 = vld [vmem:[%s3 + $0x48] sm:$0xff]
    %v5203 = vld [vmem:[%s3 + $0x50] sm:$0xff]
    %v5204 = vld [vmem:[%s3 + $0x58] sm:$0xff]
    %v5205 = vld [vmem:[%s3 + $0x60] sm:$0xff]
    %v5206 = vld [vmem:[%s3 + $0x68] sm:$0xff]
    %v5207 = vld [vmem:[%s3 + $0x70] sm:$0xff]
    %v5208 = vld [vmem:[%s3 + $0x78] sm:$0xff]
    %v5209 = vld [vmem:[%s3 + $0x80] sm:$0xff]
    %v5210 = vld [vmem:[%s3 + $0x88] sm:$0xff]
    %v5211 = vld [vmem:[%s4] sm:$0x1]
    %v5213 = vperm.slane %v5211, 0
    %v5215 = vsel %vm2921, %v3131, 0
    %v5217 = vsel %vm2921, %v3132, 0
    %v5219 = vsel %vm2921, %v3133, 0
    %v5221 = vsel %vm2921, %v3134, 0
    %v5223 = vsel %vm2921, %v3135, 0
    %v5225 = vsel %vm2921, %v3136, 0
    %v5227 = vsel %vm2921, %v3137, 0
    %v5229 = vsel %vm2921, %v3138, 0
    %v5231 = vsel %vm2921, %v3139, 0
    %v5233 = vsel %vm2921, %v3140, 0
    %v5235 = vsel %vm2921, %v3141, 0
    %v5237 = vsel %vm2921, %v3142, 0
    %v5239 = vsel %vm2921, %v3143, 0
    %v5241 = vsel %vm2921, %v3144, 0
    %v5243 = vsel %vm2921, %v3145, 0
    %v5245 = vsel %vm2921, %v3146, 0
    %v5247 = vsel %vm2921, %v3147, 0
    %v5249 = vsel %vm2921, %v3148, 0
    %v5251 = vsel %vm2921, %v3149, 0
    %v5253 = vsel %vm2921, %v3150, 0
    %v5255 = vsel %vm2921, %v3151, 0
    %v5257 = vsel %vm2921, %v3152, 0
    %v5259 = vsel %vm2921, %v3153, 0
    %v5261 = vsel %vm2921, %v3154, 0
    %v5263 = vsel %vm2921, %v3155, 0
    %v5265 = vsel %vm2921, %v3156, 0
    %v5267 = vsel %vm2921, %v3157, 0
    %v5269 = vsel %vm2921, %v3158, 0
    %v5271 = vsel %vm2921, %v3159, 0
    %v5273 = vsel %vm2921, %v3160, 0
    %v5275 = vsel %vm2921, %v3161, 0
    %v5277 = vsel %vm2921, %v3162, 0
    %v5279 = vsel %vm2921, %v3163, 0
    %v5281 = vsel %vm2921, %v3164, 0
    %v5283 = vsel %vm2921, %v3165, 0
    %v5285 = vsel %vm2921, %v3166, 0
    %v5287 = vsel %vm2921, %v3167, 0
    %v5289 = vsel %vm2921, %v3168, 0
    %v5291 = vsel %vm2921, %v3169, 0
    %v5293 = vsel %vm2921, %v3170, 0
    %v5295 = vsel %vm2921, %v3171, 0
    %v5297 = vsel %vm2921, %v3172, 0
    %v5299 = vsel %vm2921, %v3173, 0
    %v5301 = vsel %vm2921, %v3174, 0
    %v5303 = vsel %vm2921, %v3175, 0
    %v5305 = vsel %vm2921, %v3176, 0
    %v5307 = vsel %vm2921, %v3177, 0
    %v5309 = vsel %vm2921, %v3178, 0
    %v5311 = vsel %vm2921, %v3179, 0
    %v5313 = vsel %vm2921, %v3180, 0
    %v5315 = vsel %vm2921, %v3181, 0
    %v5317 = vsel %vm2921, %v3182, 0
    %v5319 = vsel %vm2921, %v3183, 0
    %v5321 = vsel %vm2921, %v3184, 0
    %v5323 = vsel %vm2921, %v3185, 0
    %v5325 = vsel %vm2921, %v3186, 0
    %v5327 = vsel %vm2921, %v3187, 0
    %v5329 = vsel %vm2921, %v3188, 0
    %v5331 = vsel %vm2921, %v3189, 0
    %v5333 = vsel %vm2921, %v3190, 0
    %v5335 = vsel %vm2921, %v3191, 0
    %v5337 = vsel %vm2921, %v3192, 0
    %v5340 = vsel %vm2921, %v3193, 0
    %v5343 = vsel %vm2921, %v3194, 0
    %5345 = vmatpush.msra.mxu0 %v5208
    %5346 = vmatpush.msra.mxu0 %v5207
    %5347 = vmatpush.msra.mxu0 %v5206
    %5348 = vmatpush.msra.mxu0 %v5205
    %5349 = vmatpush.msra.mxu0 %v5204
    %5350 = vmatpush.msra.mxu0 %v5203
    %5351 = vmatpush.msra.mxu0 %v5202
    %5352 = vmatpush.msra.mxu0 %v5201
    %5353 = vmatpush.msra.mxu0 %v5200
    %5354 = vmatpush.msra.mxu0 %v5199
    %5355 = vmatpush.msra.mxu0 %v5198
    %5356 = vmatpush.msra.mxu0 %v5197
    %5357 = vmatpush.msra.mxu0 %v5196
    %5358 = vmatpush.msra.mxu0 %v5195
    %5359 = vmatpush.msra.mxu0 %v5194
    %5360 = vmatpush.msra.mxu0 %v5193
    %5361 = vmatmul.f32.gmra.mxu0 %v5129
    %v5362 = vpop.f32.mrf.mxu0
    %v5363 = vadd.f32 %v5213, %v5362
    %5364 = vmatmul.f32.gmra.mxu0 %v5130
    %v5365 = vpop.f32.mrf.mxu0
    %v5366 = vadd.f32 %v5213, %v5365
    %5367 = vmatmul.f32.gmra.mxu0 %v5131
    %v5368 = vpop.f32.mrf.mxu0
    %v5369 = vadd.f32 %v5213, %v5368
    %5370 = vmatmul.f32.gmra.mxu0 %v5132
    %v5371 = vpop.f32.mrf.mxu0
    %v5372 = vadd.f32 %v5213, %v5371
    %5373 = vmatmul.f32.gmra.mxu0 %v5133
    %v5374 = vpop.f32.mrf.mxu0
    %v5375 = vadd.f32 %v5213, %v5374
    %5376 = vmatmul.f32.gmra.mxu0 %v5134
    %v5377 = vpop.f32.mrf.mxu0
    %v5378 = vadd.f32 %v5213, %v5377
    %5379 = vmatmul.f32.gmra.mxu0 %v5135
    %v5380 = vpop.f32.mrf.mxu0
    %v5381 = vadd.f32 %v5213, %v5380
    %5382 = vmatmul.f32.gmra.mxu0 %v5136
    %v5383 = vpop.f32.mrf.mxu0
    %v5384 = vadd.f32 %v5213, %v5383
    %5385 = vmatmul.f32.gmra.mxu0 %v5137
    %v5386 = vpop.f32.mrf.mxu0
    %v5387 = vadd.f32 %v5213, %v5386
    %5388 = vmatmul.f32.gmra.mxu0 %v5138
    %v5389 = vpop.f32.mrf.mxu0
    %v5390 = vadd.f32 %v5213, %v5389
    %5391 = vmatmul.f32.gmra.mxu0 %v5139
    %v5392 = vpop.f32.mrf.mxu0
    %v5393 = vadd.f32 %v5213, %v5392
    %5394 = vmatmul.f32.gmra.mxu0 %v5140
    %v5395 = vpop.f32.mrf.mxu0
    %v5396 = vadd.f32 %v5213, %v5395
    %5397 = vmatmul.f32.gmra.mxu0 %v5141
    %v5398 = vpop.f32.mrf.mxu0
    %v5399 = vadd.f32 %v5213, %v5398
    %5400 = vmatmul.f32.gmra.mxu0 %v5142
    %v5401 = vpop.f32.mrf.mxu0
    %v5402 = vadd.f32 %v5213, %v5401
    %5403 = vmatmul.f32.gmra.mxu0 %v5143
    %v5404 = vpop.f32.mrf.mxu0
    %v5405 = vadd.f32 %v5213, %v5404
    %5406 = vmatmul.f32.gmra.mxu0 %v5144
    %v5407 = vpop.f32.mrf.mxu0
    %v5408 = vadd.f32 %v5213, %v5407
    %5409 = vmatmul.f32.gmra.mxu0 %v5145
    %v5410 = vpop.f32.mrf.mxu0
    %v5411 = vadd.f32 %v5213, %v5410
    %5412 = vmatmul.f32.gmra.mxu0 %v5146
    %v5413 = vpop.f32.mrf.mxu0
    %v5414 = vadd.f32 %v5213, %v5413
    %5415 = vmatmul.f32.gmra.mxu0 %v5147
    %v5416 = vpop.f32.mrf.mxu0
    %v5417 = vadd.f32 %v5213, %v5416
    %5418 = vmatmul.f32.gmra.mxu0 %v5148
    %v5419 = vpop.f32.mrf.mxu0
    %v5420 = vadd.f32 %v5213, %v5419
    %5421 = vmatmul.f32.gmra.mxu0 %v5149
    %v5422 = vpop.f32.mrf.mxu0
    %v5423 = vadd.f32 %v5213, %v5422
    %5424 = vmatmul.f32.gmra.mxu0 %v5150
    %v5425 = vpop.f32.mrf.mxu0
    %v5426 = vadd.f32 %v5213, %v5425
    %5427 = vmatmul.f32.gmra.mxu0 %v5151
    %v5428 = vpop.f32.mrf.mxu0
    %v5429 = vadd.f32 %v5213, %v5428
    %5430 = vmatmul.f32.gmra.mxu0 %v5152
    %v5431 = vpop.f32.mrf.mxu0
    %v5432 = vadd.f32 %v5213, %v5431
    %5433 = vmatmul.f32.gmra.mxu0 %v5153
    %v5434 = vpop.f32.mrf.mxu0
    %v5435 = vadd.f32 %v5213, %v5434
    %5436 = vmatmul.f32.gmra.mxu0 %v5154
    %v5437 = vpop.f32.mrf.mxu0
    %v5438 = vadd.f32 %v5213, %v5437
    %5439 = vmatmul.f32.gmra.mxu0 %v5155
    %v5440 = vpop.f32.mrf.mxu0
    %v5441 = vadd.f32 %v5213, %v5440
    %5442 = vmatmul.f32.gmra.mxu0 %v5156
    %v5443 = vpop.f32.mrf.mxu0
    %v5444 = vadd.f32 %v5213, %v5443
    %5445 = vmatmul.f32.gmra.mxu0 %v5157
    %v5446 = vpop.f32.mrf.mxu0
    %v5447 = vadd.f32 %v5213, %v5446
    %5448 = vmatmul.f32.gmra.mxu0 %v5158
    %v5449 = vpop.f32.mrf.mxu0
    %v5450 = vadd.f32 %v5213, %v5449
    %5451 = vmatmul.f32.gmra.mxu0 %v5159
    %v5452 = vpop.f32.mrf.mxu0
    %v5453 = vadd.f32 %v5213, %v5452
    %5454 = vmatmul.f32.gmra.mxu0 %v5160
    %v5455 = vpop.f32.mrf.mxu0
    %v5456 = vadd.f32 %v5213, %v5455
    %5457 = vmatmul.f32.gmra.mxu0 %v5161
    %v5458 = vpop.f32.mrf.mxu0
    %v5459 = vadd.f32 %v5213, %v5458
    %5460 = vmatmul.f32.gmra.mxu0 %v5162
    %v5461 = vpop.f32.mrf.mxu0
    %v5462 = vadd.f32 %v5213, %v5461
    %5463 = vmatmul.f32.gmra.mxu0 %v5163
    %v5464 = vpop.f32.mrf.mxu0
    %v5465 = vadd.f32 %v5213, %v5464
    %5466 = vmatmul.f32.gmra.mxu0 %v5164
    %v5467 = vpop.f32.mrf.mxu0
    %v5468 = vadd.f32 %v5213, %v5467
    %5469 = vmatmul.f32.gmra.mxu0 %v5165
    %v5470 = vpop.f32.mrf.mxu0
    %v5471 = vadd.f32 %v5213, %v5470
    %5472 = vmatmul.f32.gmra.mxu0 %v5166
    %v5473 = vpop.f32.mrf.mxu0
    %v5474 = vadd.f32 %v5213, %v5473
    %5475 = vmatmul.f32.gmra.mxu0 %v5167
    %v5476 = vpop.f32.mrf.mxu0
    %v5477 = vadd.f32 %v5213, %v5476
    %5478 = vmatmul.f32.gmra.mxu0 %v5168
    %v5479 = vpop.f32.mrf.mxu0
    %v5480 = vadd.f32 %v5213, %v5479
    %5481 = vmatmul.f32.gmra.mxu0 %v5169
    %v5482 = vpop.f32.mrf.mxu0
    %v5483 = vadd.f32 %v5213, %v5482
    %5484 = vmatmul.f32.gmra.mxu0 %v5170
    %v5485 = vpop.f32.mrf.mxu0
    %v5486 = vadd.f32 %v5213, %v5485
    %5487 = vmatmul.f32.gmra.mxu0 %v5171
    %v5488 = vpop.f32.mrf.mxu0
    %v5489 = vadd.f32 %v5213, %v5488
    %5490 = vmatmul.f32.gmra.mxu0 %v5172
    %v5491 = vpop.f32.mrf.mxu0
    %v5492 = vadd.f32 %v5213, %v5491
    %5493 = vmatmul.f32.gmra.mxu0 %v5173
    %v5494 = vpop.f32.mrf.mxu0
    %v5495 = vadd.f32 %v5213, %v5494
    %5496 = vmatmul.f32.gmra.mxu0 %v5174
    %v5497 = vpop.f32.mrf.mxu0
    %v5498 = vadd.f32 %v5213, %v5497
    %5499 = vmatmul.f32.gmra.mxu0 %v5175
    %v5500 = vpop.f32.mrf.mxu0
    %v5501 = vadd.f32 %v5213, %v5500
    %5502 = vmatmul.f32.gmra.mxu0 %v5176
    %v5503 = vpop.f32.mrf.mxu0
    %v5504 = vadd.f32 %v5213, %v5503
    %5505 = vmatmul.f32.gmra.mxu0 %v5177
    %v5506 = vpop.f32.mrf.mxu0
    %v5507 = vadd.f32 %v5213, %v5506
    %5508 = vmatmul.f32.gmra.mxu0 %v5178
    %v5509 = vpop.f32.mrf.mxu0
    %v5510 = vadd.f32 %v5213, %v5509
    %5511 = vmatmul.f32.gmra.mxu0 %v5179
    %v5512 = vpop.f32.mrf.mxu0
    %v5513 = vadd.f32 %v5213, %v5512
    %5514 = vmatmul.f32.gmra.mxu0 %v5180
    %v5515 = vpop.f32.mrf.mxu0
    %v5516 = vadd.f32 %v5213, %v5515
    %5517 = vmatmul.f32.gmra.mxu0 %v5181
    %v5518 = vpop.f32.mrf.mxu0
    %v5519 = vadd.f32 %v5213, %v5518
    %5520 = vmatmul.f32.gmra.mxu0 %v5182
    %v5521 = vpop.f32.mrf.mxu0
    %v5522 = vadd.f32 %v5213, %v5521
    %5523 = vmatmul.f32.gmra.mxu0 %v5183
    %v5524 = vpop.f32.mrf.mxu0
    %v5525 = vadd.f32 %v5213, %v5524
    %5526 = vmatmul.f32.gmra.mxu0 %v5184
    %v5527 = vpop.f32.mrf.mxu0
    %v5528 = vadd.f32 %v5213, %v5527
    %5529 = vmatmul.f32.gmra.mxu0 %v5185
    %v5530 = vpop.f32.mrf.mxu0
    %v5531 = vadd.f32 %v5213, %v5530
    %5532 = vmatmul.f32.gmra.mxu0 %v5186
    %v5533 = vpop.f32.mrf.mxu0
    %v5534 = vadd.f32 %v5213, %v5533
    %5535 = vmatmul.f32.gmra.mxu0 %v5187
    %v5536 = vpop.f32.mrf.mxu0
    %v5537 = vadd.f32 %v5213, %v5536
    %5538 = vmatmul.f32.gmra.mxu0 %v5188
    %v5539 = vpop.f32.mrf.mxu0
    %v5540 = vadd.f32 %v5213, %v5539
    %5541 = vmatmul.f32.gmra.mxu0 %v5189
    %v5542 = vpop.f32.mrf.mxu0
    %v5543 = vadd.f32 %v5213, %v5542
    %5544 = vmatmul.f32.gmra.mxu0 %v5190
    %v5545 = vpop.f32.mrf.mxu0
    %v5546 = vadd.f32 %v5213, %v5545
    %5547 = vmatmul.f32.gmra.mxu0 %v5191
    %v5548 = vpop.f32.mrf.mxu0
    %v5549 = vadd.f32 %v5213, %v5548
    %5550 = vmatmul.f32.gmra.mxu0 %v5192
    %v5551 = vpop.f32.mrf.mxu0
    %v5552 = vadd.f32 %v5213, %v5551
    %5553 = vdwg.mxu0
    %5554 = vmatpush.msra.mxu0 0.0
    %5555 = vmatpush.msra.mxu0 0.0
    %5556 = vmatpush.msra.mxu0 0.0
    %5557 = vmatpush.msra.mxu0 0.0
    %5558 = vmatpush.msra.mxu0 0.0
    %5559 = vmatpush.msra.mxu0 0.0
    %5560 = vmatpush.msra.mxu0 0.0
    %5561 = vmatpush.msra.mxu0 0.0
    %5562 = vmatpush.msra.mxu0 0.0
    %5563 = vmatpush.msra.mxu0 0.0
    %5564 = vmatpush.msra.mxu0 0.0
    %5565 = vmatpush.msra.mxu0 0.0
    %5566 = vmatpush.msra.mxu0 0.0
    %5567 = vmatpush.msra.mxu0 0.0
    %5568 = vmatpush.msra.mxu0 %v5210
    %5569 = vmatpush.msra.mxu0 %v5209
    %5570 = vmatmul.f32.gmra.mxu0 %v5215
    %v5571 = vpop.f32.mrf.mxu0
    %v5572 = vadd.f32 %v5363, %v5571
    %5573 = vmatmul.f32.gmra.mxu0 %v5217
    %v5574 = vpop.f32.mrf.mxu0
    %v5575 = vadd.f32 %v5366, %v5574
    %5576 = vmatmul.f32.gmra.mxu0 %v5219
    %v5577 = vpop.f32.mrf.mxu0
    %v5578 = vadd.f32 %v5369, %v5577
    %5579 = vmatmul.f32.gmra.mxu0 %v5221
    %v5580 = vpop.f32.mrf.mxu0
    %v5581 = vadd.f32 %v5372, %v5580
    %5582 = vmatmul.f32.gmra.mxu0 %v5223
    %v5583 = vpop.f32.mrf.mxu0
    %v5584 = vadd.f32 %v5375, %v5583
    %5585 = vmatmul.f32.gmra.mxu0 %v5225
    %v5586 = vpop.f32.mrf.mxu0
    %v5587 = vadd.f32 %v5378, %v5586
    %5588 = vmatmul.f32.gmra.mxu0 %v5227
    %v5589 = vpop.f32.mrf.mxu0
    %v5590 = vadd.f32 %v5381, %v5589
    %5591 = vmatmul.f32.gmra.mxu0 %v5229
    %v5592 = vpop.f32.mrf.mxu0
    %v5593 = vadd.f32 %v5384, %v5592
    %5594 = vmatmul.f32.gmra.mxu0 %v5231
    %v5595 = vpop.f32.mrf.mxu0
    %v5596 = vadd.f32 %v5387, %v5595
    %5597 = vmatmul.f32.gmra.mxu0 %v5233
    %v5598 = vpop.f32.mrf.mxu0
    %v5599 = vadd.f32 %v5390, %v5598
    %5600 = vmatmul.f32.gmra.mxu0 %v5235
    %v5601 = vpop.f32.mrf.mxu0
    %v5602 = vadd.f32 %v5393, %v5601
    %5603 = vmatmul.f32.gmra.mxu0 %v5237
    %v5604 = vpop.f32.mrf.mxu0
    %v5605 = vadd.f32 %v5396, %v5604
    %5606 = vmatmul.f32.gmra.mxu0 %v5239
    %v5607 = vpop.f32.mrf.mxu0
    %v5608 = vadd.f32 %v5399, %v5607
    %5609 = vmatmul.f32.gmra.mxu0 %v5241
    %v5610 = vpop.f32.mrf.mxu0
    %v5611 = vadd.f32 %v5402, %v5610
    %5612 = vmatmul.f32.gmra.mxu0 %v5243
    %v5613 = vpop.f32.mrf.mxu0
    %v5614 = vadd.f32 %v5405, %v5613
    %5615 = vmatmul.f32.gmra.mxu0 %v5245
    %v5616 = vpop.f32.mrf.mxu0
    %v5617 = vadd.f32 %v5408, %v5616
    %5618 = vmatmul.f32.gmra.mxu0 %v5247
    %v5619 = vpop.f32.mrf.mxu0
    %v5620 = vadd.f32 %v5411, %v5619
    %5621 = vmatmul.f32.gmra.mxu0 %v5249
    %v5622 = vpop.f32.mrf.mxu0
    %v5623 = vadd.f32 %v5414, %v5622
    %5624 = vmatmul.f32.gmra.mxu0 %v5251
    %v5625 = vpop.f32.mrf.mxu0
    %v5626 = vadd.f32 %v5417, %v5625
    %5627 = vmatmul.f32.gmra.mxu0 %v5253
    %v5628 = vpop.f32.mrf.mxu0
    %v5629 = vadd.f32 %v5420, %v5628
    %5630 = vmatmul.f32.gmra.mxu0 %v5255
    %v5631 = vpop.f32.mrf.mxu0
    %v5632 = vadd.f32 %v5423, %v5631
    %5633 = vmatmul.f32.gmra.mxu0 %v5257
    %v5634 = vpop.f32.mrf.mxu0
    %v5635 = vadd.f32 %v5426, %v5634
    %5636 = vmatmul.f32.gmra.mxu0 %v5259
    %v5637 = vpop.f32.mrf.mxu0
    %v5638 = vadd.f32 %v5429, %v5637
    %5639 = vmatmul.f32.gmra.mxu0 %v5261
    %v5640 = vpop.f32.mrf.mxu0
    %v5641 = vadd.f32 %v5432, %v5640
    %5642 = vmatmul.f32.gmra.mxu0 %v5263
    %v5643 = vpop.f32.mrf.mxu0
    %v5644 = vadd.f32 %v5435, %v5643
    %5645 = vmatmul.f32.gmra.mxu0 %v5265
    %v5646 = vpop.f32.mrf.mxu0
    %v5647 = vadd.f32 %v5438, %v5646
    %5648 = vmatmul.f32.gmra.mxu0 %v5267
    %v5649 = vpop.f32.mrf.mxu0
    %v5650 = vadd.f32 %v5441, %v5649
    %5651 = vmatmul.f32.gmra.mxu0 %v5269
    %v5652 = vpop.f32.mrf.mxu0
    %v5653 = vadd.f32 %v5444, %v5652
    %5654 = vmatmul.f32.gmra.mxu0 %v5271
    %v5655 = vpop.f32.mrf.mxu0
    %v5656 = vadd.f32 %v5447, %v5655
    %5657 = vmatmul.f32.gmra.mxu0 %v5273
    %v5658 = vpop.f32.mrf.mxu0
    %v5659 = vadd.f32 %v5450, %v5658
    %5660 = vmatmul.f32.gmra.mxu0 %v5275
    %v5661 = vpop.f32.mrf.mxu0
    %v5662 = vadd.f32 %v5453, %v5661
    %5663 = vmatmul.f32.gmra.mxu0 %v5277
    %v5664 = vpop.f32.mrf.mxu0
    %v5665 = vadd.f32 %v5456, %v5664
    %5666 = vmatmul.f32.gmra.mxu0 %v5279
    %v5667 = vpop.f32.mrf.mxu0
    %v5668 = vadd.f32 %v5459, %v5667
    %5669 = vmatmul.f32.gmra.mxu0 %v5281
    %v5670 = vpop.f32.mrf.mxu0
    %v5671 = vadd.f32 %v5462, %v5670
    %5672 = vmatmul.f32.gmra.mxu0 %v5283
    %v5673 = vpop.f32.mrf.mxu0
    %v5674 = vadd.f32 %v5465, %v5673
    %5675 = vmatmul.f32.gmra.mxu0 %v5285
    %v5676 = vpop.f32.mrf.mxu0
    %v5677 = vadd.f32 %v5468, %v5676
    %5678 = vmatmul.f32.gmra.mxu0 %v5287
    %v5679 = vpop.f32.mrf.mxu0
    %v5680 = vadd.f32 %v5471, %v5679
    %5681 = vmatmul.f32.gmra.mxu0 %v5289
    %v5682 = vpop.f32.mrf.mxu0
    %v5683 = vadd.f32 %v5474, %v5682
    %5684 = vmatmul.f32.gmra.mxu0 %v5291
    %v5685 = vpop.f32.mrf.mxu0
    %v5686 = vadd.f32 %v5477, %v5685
    %5687 = vmatmul.f32.gmra.mxu0 %v5293
    %v5688 = vpop.f32.mrf.mxu0
    %v5689 = vadd.f32 %v5480, %v5688
    %5690 = vmatmul.f32.gmra.mxu0 %v5295
    %v5691 = vpop.f32.mrf.mxu0
    %v5692 = vadd.f32 %v5483, %v5691
    %5693 = vmatmul.f32.gmra.mxu0 %v5297
    %v5694 = vpop.f32.mrf.mxu0
    %v5695 = vadd.f32 %v5486, %v5694
    %5696 = vmatmul.f32.gmra.mxu0 %v5299
    %v5697 = vpop.f32.mrf.mxu0
    %v5698 = vadd.f32 %v5489, %v5697
    %5699 = vmatmul.f32.gmra.mxu0 %v5301
    %v5700 = vpop.f32.mrf.mxu0
    %v5701 = vadd.f32 %v5492, %v5700
    %5702 = vmatmul.f32.gmra.mxu0 %v5303
    %v5703 = vpop.f32.mrf.mxu0
    %v5704 = vadd.f32 %v5495, %v5703
    %5705 = vmatmul.f32.gmra.mxu0 %v5305
    %v5706 = vpop.f32.mrf.mxu0
    %v5707 = vadd.f32 %v5498, %v5706
    %5708 = vmatmul.f32.gmra.mxu0 %v5307
    %v5709 = vpop.f32.mrf.mxu0
    %v5710 = vadd.f32 %v5501, %v5709
    %5711 = vmatmul.f32.gmra.mxu0 %v5309
    %v5712 = vpop.f32.mrf.mxu0
    %v5713 = vadd.f32 %v5504, %v5712
    %5714 = vmatmul.f32.gmra.mxu0 %v5311
    %v5715 = vpop.f32.mrf.mxu0
    %v5716 = vadd.f32 %v5507, %v5715
    %5717 = vmatmul.f32.gmra.mxu0 %v5313
    %v5718 = vpop.f32.mrf.mxu0
    %v5719 = vadd.f32 %v5510, %v5718
    %5720 = vmatmul.f32.gmra.mxu0 %v5315
    %v5721 = vpop.f32.mrf.mxu0
    %v5722 = vadd.f32 %v5513, %v5721
    %5723 = vmatmul.f32.gmra.mxu0 %v5317
    %v5724 = vpop.f32.mrf.mxu0
    %v5725 = vadd.f32 %v5516, %v5724
    %5726 = vmatmul.f32.gmra.mxu0 %v5319
    %v5727 = vpop.f32.mrf.mxu0
    %v5728 = vadd.f32 %v5519, %v5727
    %5729 = vmatmul.f32.gmra.mxu0 %v5321
    %v5730 = vpop.f32.mrf.mxu0
    %v5731 = vadd.f32 %v5522, %v5730
    %5732 = vmatmul.f32.gmra.mxu0 %v5323
    %v5733 = vpop.f32.mrf.mxu0
    %v5734 = vadd.f32 %v5525, %v5733
    %5735 = vmatmul.f32.gmra.mxu0 %v5325
    %v5736 = vpop.f32.mrf.mxu0
    %v5737 = vadd.f32 %v5528, %v5736
    %5738 = vmatmul.f32.gmra.mxu0 %v5327
    %v5739 = vpop.f32.mrf.mxu0
    %v5740 = vadd.f32 %v5531, %v5739
    %5741 = vmatmul.f32.gmra.mxu0 %v5329
    %v5742 = vpop.f32.mrf.mxu0
    %v5743 = vadd.f32 %v5534, %v5742
    %5744 = vmatmul.f32.gmra.mxu0 %v5331
    %v5745 = vpop.f32.mrf.mxu0
    %v5746 = vadd.f32 %v5537, %v5745
    %5747 = vmatmul.f32.gmra.mxu0 %v5333
    %v5748 = vpop.f32.mrf.mxu0
    %v5749 = vadd.f32 %v5540, %v5748
    %5750 = vmatmul.f32.gmra.mxu0 %v5335
    %v5751 = vpop.f32.mrf.mxu0
    %v5752 = vadd.f32 %v5543, %v5751
    %5753 = vmatmul.f32.gmra.mxu0 %v5337
    %v5754 = vpop.f32.mrf.mxu0
    %v5755 = vadd.f32 %v5546, %v5754
    %5756 = vmatmul.f32.gmra.mxu0 %v5340
    %v5757 = vpop.f32.mrf.mxu0
    %v5758 = vadd.f32 %v5549, %v5757
    %5759 = vmatmul.f32.gmra.mxu0 %v5343
    %v5760 = vpop.f32.mrf.mxu0
    %v5761 = vadd.f32 %v5552, %v5760
    %5762 = vdwg.mxu0
    %5763 = vst.msk [vmem:[#allocation3] sm:$0xff] %vm4803, %v5572
    %5764 = vst.msk [vmem:[#allocation3 + $0x8] sm:$0xff] %vm4803, %v5575
    %5765 = vst.msk [vmem:[#allocation3 + $0x10] sm:$0xff] %vm4803, %v5578
    %5766 = vst.msk [vmem:[#allocation3 + $0x18] sm:$0xff] %vm4803, %v5581
    %5767 = vst.msk [vmem:[#allocation3 + $0x20] sm:$0xff] %vm4803, %v5584
    %5768 = vst.msk [vmem:[#allocation3 + $0x28] sm:$0xff] %vm4803, %v5587
    %5769 = vst.msk [vmem:[#allocation3 + $0x30] sm:$0xff] %vm4803, %v5590
    %5770 = vst.msk [vmem:[#allocation3 + $0x38] sm:$0xff] %vm4803, %v5593
    %5771 = vst.msk [vmem:[#allocation3 + $0x40] sm:$0xff] %vm4803, %v5596
    %5772 = vst.msk [vmem:[#allocation3 + $0x48] sm:$0xff] %vm4803, %v5599
    %5773 = vst.msk [vmem:[#allocation3 + $0x50] sm:$0xff] %vm4803, %v5602
    %5774 = vst.msk [vmem:[#allocation3 + $0x58] sm:$0xff] %vm4803, %v5605
    %5775 = vst.msk [vmem:[#allocation3 + $0x60] sm:$0xff] %vm4803, %v5608
    %5776 = vst.msk [vmem:[#allocation3 + $0x68] sm:$0xff] %vm4803, %v5611
    %5777 = vst.msk [vmem:[#allocation3 + $0x70] sm:$0xff] %vm4803, %v5614
    %5778 = vst.msk [vmem:[#allocation3 + $0x78] sm:$0xff] %vm4803, %v5617
    %5779 = vst.msk [vmem:[#allocation3 + $0x80] sm:$0xff] %vm4803, %v5620
    %5780 = vst.msk [vmem:[#allocation3 + $0x88] sm:$0xff] %vm4803, %v5623
    %5781 = vst.msk [vmem:[#allocation3 + $0x90] sm:$0xff] %vm4803, %v5626
    %5782 = vst.msk [vmem:[#allocation3 + $0x98] sm:$0xff] %vm4803, %v5629
    %5783 = vst.msk [vmem:[#allocation3 + $0xa0] sm:$0xff] %vm4803, %v5632
    %5784 = vst.msk [vmem:[#allocation3 + $0xa8] sm:$0xff] %vm4803, %v5635
    %5785 = vst.msk [vmem:[#allocation3 + $0xb0] sm:$0xff] %vm4803, %v5638
    %5786 = vst.msk [vmem:[#allocation3 + $0xb8] sm:$0xff] %vm4803, %v5641
    %5787 = vst.msk [vmem:[#allocation3 + $0xc0] sm:$0xff] %vm4803, %v5644
    %5788 = vst.msk [vmem:[#allocation3 + $0xc8] sm:$0xff] %vm4803, %v5647
    %5789 = vst.msk [vmem:[#allocation3 + $0xd0] sm:$0xff] %vm4803, %v5650
    %5790 = vst.msk [vmem:[#allocation3 + $0xd8] sm:$0xff] %vm4803, %v5653
    %5791 = vst.msk [vmem:[#allocation3 + $0xe0] sm:$0xff] %vm4803, %v5656
    %5792 = vst.msk [vmem:[#allocation3 + $0xe8] sm:$0xff] %vm4803, %v5659
    %5793 = vst.msk [vmem:[#allocation3 + $0xf0] sm:$0xff] %vm4803, %v5662
    %5794 = vst.msk [vmem:[#allocation3 + $0xf8] sm:$0xff] %vm4803, %v5665
    %5795 = vst.msk [vmem:[#allocation3 + $0x100] sm:$0xff] %vm4803, %v5668
    %5796 = vst.msk [vmem:[#allocation3 + $0x108] sm:$0xff] %vm4803, %v5671
    %5797 = vst.msk [vmem:[#allocation3 + $0x110] sm:$0xff] %vm4803, %v5674
    %5798 = vst.msk [vmem:[#allocation3 + $0x118] sm:$0xff] %vm4803, %v5677
    %5799 = vst.msk [vmem:[#allocation3 + $0x120] sm:$0xff] %vm4803, %v5680
    %5800 = vst.msk [vmem:[#allocation3 + $0x128] sm:$0xff] %vm4803, %v5683
    %5801 = vst.msk [vmem:[#allocation3 + $0x130] sm:$0xff] %vm4803, %v5686
    %5802 = vst.msk [vmem:[#allocation3 + $0x138] sm:$0xff] %vm4803, %v5689
    %5803 = vst.msk [vmem:[#allocation3 + $0x140] sm:$0xff] %vm4803, %v5692
    %5804 = vst.msk [vmem:[#allocation3 + $0x148] sm:$0xff] %vm4803, %v5695
    %5805 = vst.msk [vmem:[#allocation3 + $0x150] sm:$0xff] %vm4803, %v5698
    %5806 = vst.msk [vmem:[#allocation3 + $0x158] sm:$0xff] %vm4803, %v5701
    %5807 = vst.msk [vmem:[#allocation3 + $0x160] sm:$0xff] %vm4803, %v5704
    %5808 = vst.msk [vmem:[#allocation3 + $0x168] sm:$0xff] %vm4803, %v5707
    %5809 = vst.msk [vmem:[#allocation3 + $0x170] sm:$0xff] %vm4803, %v5710
    %5810 = vst.msk [vmem:[#allocation3 + $0x178] sm:$0xff] %vm4803, %v5713
    %5811 = vst.msk [vmem:[#allocation3 + $0x180] sm:$0xff] %vm4803, %v5716
    %5812 = vst.msk [vmem:[#allocation3 + $0x188] sm:$0xff] %vm4803, %v5719
    %5813 = vst.msk [vmem:[#allocation3 + $0x190] sm:$0xff] %vm4803, %v5722
    %5814 = vst.msk [vmem:[#allocation3 + $0x198] sm:$0xff] %vm4803, %v5725
    %5815 = vst.msk [vmem:[#allocation3 + $0x1a0] sm:$0xff] %vm4803, %v5728
    %5816 = vst.msk [vmem:[#allocation3 + $0x1a8] sm:$0xff] %vm4803, %v5731
    %5817 = vst.msk [vmem:[#allocation3 + $0x1b0] sm:$0xff] %vm4803, %v5734
    %5818 = vst.msk [vmem:[#allocation3 + $0x1b8] sm:$0xff] %vm4803, %v5737
    %5819 = vst.msk [vmem:[#allocation3 + $0x1c0] sm:$0xff] %vm4803, %v5740
    %5820 = vst.msk [vmem:[#allocation3 + $0x1c8] sm:$0xff] %vm4803, %v5743
    %5821 = vst.msk [vmem:[#allocation3 + $0x1d0] sm:$0xff] %vm4803, %v5746
    %5822 = vst.msk [vmem:[#allocation3 + $0x1d8] sm:$0xff] %vm4803, %v5749
    %5823 = vst.msk [vmem:[#allocation3 + $0x1e0] sm:$0xff] %vm4803, %v5752
    %5824 = vst.msk [vmem:[#allocation3 + $0x1e8] sm:$0xff] %vm4803, %v5755
    %5825 = vst.msk [vmem:[#allocation3 + $0x1f0] sm:$0xff] %vm4803, %v5758
    %5826 = vst.msk [vmem:[#allocation3 + $0x1f8] sm:$0xff] %vm4803, %v5761
    %5827 = vst.msk [vmem:[#allocation3 + $0x200] sm:$0xff] %vm4803, 0.0
    %5828 = vst.msk [vmem:[#allocation3 + $0x208] sm:$0xff] %vm4803, 0.0
    %5829 = vst.msk [vmem:[#allocation3 + $0x210] sm:$0xff] %vm4803, 0.0
    %5830 = vst.msk [vmem:[#allocation3 + $0x218] sm:$0xff] %vm4803, 0.0
    %5831 = vst.msk [vmem:[#allocation3 + $0x220] sm:$0xff] %vm4803, 0.0
    %v5832 = vld [vmem:[#allocation3] sm:$0xff]
    %v5833 = vld [vmem:[#allocation3 + $0x8] sm:$0xff]
    %v5834 = vld [vmem:[#allocation3 + $0x10] sm:$0xff]
    %v5835 = vld [vmem:[#allocation3 + $0x18] sm:$0xff]
    %v5836 = vld [vmem:[#allocation3 + $0x20] sm:$0xff]
    %v5837 = vld [vmem:[#allocation3 + $0x28] sm:$0xff]
    %v5838 = vld [vmem:[#allocation3 + $0x30] sm:$0xff]
    %v5839 = vld [vmem:[#allocation3 + $0x38] sm:$0xff]
    %v5840 = vld [vmem:[#allocation3 + $0x40] sm:$0xff]
    %v5841 = vld [vmem:[#allocation3 + $0x48] sm:$0xff]
    %v5842 = vld [vmem:[#allocation3 + $0x50] sm:$0xff]
    %v5843 = vld [vmem:[#allocation3 + $0x58] sm:$0xff]
    %v5844 = vld [vmem:[#allocation3 + $0x60] sm:$0xff]
    %v5845 = vld [vmem:[#allocation3 + $0x68] sm:$0xff]
    %v5846 = vld [vmem:[#allocation3 + $0x70] sm:$0xff]
    %v5847 = vld [vmem:[#allocation3 + $0x78] sm:$0xff]
    %v5848 = vld [vmem:[#allocation3 + $0x80] sm:$0xff]
    %v5849 = vld [vmem:[#allocation3 + $0x88] sm:$0xff]
    %v5850 = vld [vmem:[#allocation3 + $0x90] sm:$0xff]
    %v5851 = vld [vmem:[#allocation3 + $0x98] sm:$0xff]
    %v5852 = vld [vmem:[#allocation3 + $0xa0] sm:$0xff]
    %v5853 = vld [vmem:[#allocation3 + $0xa8] sm:$0xff]
    %v5854 = vld [vmem:[#allocation3 + $0xb0] sm:$0xff]
    %v5855 = vld [vmem:[#allocation3 + $0xb8] sm:$0xff]
    %v5856 = vld [vmem:[#allocation3 + $0xc0] sm:$0xff]
    %v5857 = vld [vmem:[#allocation3 + $0xc8] sm:$0xff]
    %v5858 = vld [vmem:[#allocation3 + $0xd0] sm:$0xff]
    %v5859 = vld [vmem:[#allocation3 + $0xd8] sm:$0xff]
    %v5860 = vld [vmem:[#allocation3 + $0xe0] sm:$0xff]
    %v5861 = vld [vmem:[#allocation3 + $0xe8] sm:$0xff]
    %v5862 = vld [vmem:[#allocation3 + $0xf0] sm:$0xff]
    %v5863 = vld [vmem:[#allocation3 + $0xf8] sm:$0xff]
    %v5864 = vld [vmem:[#allocation3 + $0x100] sm:$0xff]
    %v5865 = vld [vmem:[#allocation3 + $0x108] sm:$0xff]
    %v5866 = vld [vmem:[#allocation3 + $0x110] sm:$0xff]
    %v5867 = vld [vmem:[#allocation3 + $0x118] sm:$0xff]
    %v5868 = vld [vmem:[#allocation3 + $0x120] sm:$0xff]
    %v5869 = vld [vmem:[#allocation3 + $0x128] sm:$0xff]
    %v5870 = vld [vmem:[#allocation3 + $0x130] sm:$0xff]
    %v5871 = vld [vmem:[#allocation3 + $0x138] sm:$0xff]
    %v5872 = vld [vmem:[#allocation3 + $0x140] sm:$0xff]
    %v5873 = vld [vmem:[#allocation3 + $0x148] sm:$0xff]
    %v5874 = vld [vmem:[#allocation3 + $0x150] sm:$0xff]
    %v5875 = vld [vmem:[#allocation3 + $0x158] sm:$0xff]
    %v5876 = vld [vmem:[#allocation3 + $0x160] sm:$0xff]
    %v5877 = vld [vmem:[#allocation3 + $0x168] sm:$0xff]
    %v5878 = vld [vmem:[#allocation3 + $0x170] sm:$0xff]
    %v5879 = vld [vmem:[#allocation3 + $0x178] sm:$0xff]
    %v5880 = vld [vmem:[#allocation3 + $0x180] sm:$0xff]
    %v5881 = vld [vmem:[#allocation3 + $0x188] sm:$0xff]
    %v5882 = vld [vmem:[#allocation3 + $0x190] sm:$0xff]
    %v5883 = vld [vmem:[#allocation3 + $0x198] sm:$0xff]
    %v5884 = vld [vmem:[#allocation3 + $0x1a0] sm:$0xff]
    %v5885 = vld [vmem:[#allocation3 + $0x1a8] sm:$0xff]
    %v5886 = vld [vmem:[#allocation3 + $0x1b0] sm:$0xff]
    %v5887 = vld [vmem:[#allocation3 + $0x1b8] sm:$0xff]
    %v5888 = vld [vmem:[#allocation3 + $0x1c0] sm:$0xff]
    %v5889 = vld [vmem:[#allocation3 + $0x1c8] sm:$0xff]
    %v5890 = vld [vmem:[#allocation3 + $0x1d0] sm:$0xff]
    %v5891 = vld [vmem:[#allocation3 + $0x1d8] sm:$0xff]
    %v5892 = vld [vmem:[#allocation3 + $0x1e0] sm:$0xff]
    %v5893 = vld [vmem:[#allocation3 + $0x1e8] sm:$0xff]
    %v5894 = vld [vmem:[#allocation3 + $0x1f0] sm:$0xff]
    %v5895 = vld [vmem:[#allocation3 + $0x1f8] sm:$0xff]
    %v5896 = vld [vmem:[#allocation3 + $0x200] sm:$0xff]
    %v5897 = vld [vmem:[#allocation3 + $0x208] sm:$0xff]
    %v5898 = vld [vmem:[#allocation3 + $0x210] sm:$0xff]
    %v5899 = vld [vmem:[#allocation3 + $0x218] sm:$0xff]
    %v5900 = vld [vmem:[#allocation3 + $0x1] sm:$0xff]
    %v5901 = vld [vmem:[#allocation3 + $0x9] sm:$0xff]
    %v5902 = vld [vmem:[#allocation3 + $0x11] sm:$0xff]
    %v5903 = vld [vmem:[#allocation3 + $0x19] sm:$0xff]
    %v5904 = vld [vmem:[#allocation3 + $0x21] sm:$0xff]
    %v5905 = vld [vmem:[#allocation3 + $0x29] sm:$0xff]
    %v5906 = vld [vmem:[#allocation3 + $0x31] sm:$0xff]
    %v5907 = vld [vmem:[#allocation3 + $0x39] sm:$0xff]
    %v5908 = vld [vmem:[#allocation3 + $0x41] sm:$0xff]
    %v5909 = vld [vmem:[#allocation3 + $0x49] sm:$0xff]
    %v5910 = vld [vmem:[#allocation3 + $0x51] sm:$0xff]
    %v5911 = vld [vmem:[#allocation3 + $0x59] sm:$0xff]
    %v5912 = vld [vmem:[#allocation3 + $0x61] sm:$0xff]
    %v5913 = vld [vmem:[#allocation3 + $0x69] sm:$0xff]
    %v5914 = vld [vmem:[#allocation3 + $0x71] sm:$0xff]
    %v5915 = vld [vmem:[#allocation3 + $0x79] sm:$0xff]
    %v5916 = vld [vmem:[#allocation3 + $0x81] sm:$0xff]
    %v5917 = vld [vmem:[#allocation3 + $0x89] sm:$0xff]
    %v5918 = vld [vmem:[#allocation3 + $0x91] sm:$0xff]
    %v5919 = vld [vmem:[#allocation3 + $0x99] sm:$0xff]
    %v5920 = vld [vmem:[#allocation3 + $0xa1] sm:$0xff]
    %v5921 = vld [vmem:[#allocation3 + $0xa9] sm:$0xff]
    %v5922 = vld [vmem:[#allocation3 + $0xb1] sm:$0xff]
    %v5923 = vld [vmem:[#allocation3 + $0xb9] sm:$0xff]
    %v5924 = vld [vmem:[#allocation3 + $0xc1] sm:$0xff]
    %v5925 = vld [vmem:[#allocation3 + $0xc9] sm:$0xff]
    %v5926 = vld [vmem:[#allocation3 + $0xd1] sm:$0xff]
    %v5927 = vld [vmem:[#allocation3 + $0xd9] sm:$0xff]
    %v5928 = vld [vmem:[#allocation3 + $0xe1] sm:$0xff]
    %v5929 = vld [vmem:[#allocation3 + $0xe9] sm:$0xff]
    %v5930 = vld [vmem:[#allocation3 + $0xf1] sm:$0xff]
    %v5931 = vld [vmem:[#allocation3 + $0xf9] sm:$0xff]
    %v5932 = vld [vmem:[#allocation3 + $0x101] sm:$0xff]
    %v5933 = vld [vmem:[#allocation3 + $0x109] sm:$0xff]
    %v5934 = vld [vmem:[#allocation3 + $0x111] sm:$0xff]
    %v5935 = vld [vmem:[#allocation3 + $0x119] sm:$0xff]
    %v5936 = vld [vmem:[#allocation3 + $0x121] sm:$0xff]
    %v5937 = vld [vmem:[#allocation3 + $0x129] sm:$0xff]
    %v5938 = vld [vmem:[#allocation3 + $0x131] sm:$0xff]
    %v5939 = vld [vmem:[#allocation3 + $0x139] sm:$0xff]
    %v5940 = vld [vmem:[#allocation3 + $0x141] sm:$0xff]
    %v5941 = vld [vmem:[#allocation3 + $0x149] sm:$0xff]
    %v5942 = vld [vmem:[#allocation3 + $0x151] sm:$0xff]
    %v5943 = vld [vmem:[#allocation3 + $0x159] sm:$0xff]
    %v5944 = vld [vmem:[#allocation3 + $0x161] sm:$0xff]
    %v5945 = vld [vmem:[#allocation3 + $0x169] sm:$0xff]
    %v5946 = vld [vmem:[#allocation3 + $0x171] sm:$0xff]
    %v5947 = vld [vmem:[#allocation3 + $0x179] sm:$0xff]
    %v5948 = vld [vmem:[#allocation3 + $0x181] sm:$0xff]
    %v5949 = vld [vmem:[#allocation3 + $0x189] sm:$0xff]
    %v5950 = vld [vmem:[#allocation3 + $0x191] sm:$0xff]
    %v5951 = vld [vmem:[#allocation3 + $0x199] sm:$0xff]
    %v5952 = vld [vmem:[#allocation3 + $0x1a1] sm:$0xff]
    %v5953 = vld [vmem:[#allocation3 + $0x1a9] sm:$0xff]
    %v5954 = vld [vmem:[#allocation3 + $0x1b1] sm:$0xff]
    %v5955 = vld [vmem:[#allocation3 + $0x1b9] sm:$0xff]
    %v5956 = vld [vmem:[#allocation3 + $0x1c1] sm:$0xff]
    %v5957 = vld [vmem:[#allocation3 + $0x1c9] sm:$0xff]
    %v5958 = vld [vmem:[#allocation3 + $0x1d1] sm:$0xff]
    %v5959 = vld [vmem:[#allocation3 + $0x1d9] sm:$0xff]
    %v5960 = vld [vmem:[#allocation3 + $0x1e1] sm:$0xff]
    %v5961 = vld [vmem:[#allocation3 + $0x1e9] sm:$0xff]
    %v5962 = vld [vmem:[#allocation3 + $0x1f1] sm:$0xff]
    %v5963 = vld [vmem:[#allocation3 + $0x1f9] sm:$0xff]
    %v5964 = vld [vmem:[#allocation3 + $0x201] sm:$0xff]
    %v5965 = vld [vmem:[#allocation3 + $0x209] sm:$0xff]
    %v5966 = vld [vmem:[#allocation3 + $0x211] sm:$0xff]
    %v5967 = vld [vmem:[#allocation3 + $0x219] sm:$0xff]
    %v5968 = vld [vmem:[#allocation3 + $0x2] sm:$0xff]
    %v5969 = vld [vmem:[#allocation3 + $0xa] sm:$0xff]
    %v5970 = vld [vmem:[#allocation3 + $0x12] sm:$0xff]
    %v5971 = vld [vmem:[#allocation3 + $0x1a] sm:$0xff]
    %v5972 = vld [vmem:[#allocation3 + $0x22] sm:$0xff]
    %v5973 = vld [vmem:[#allocation3 + $0x2a] sm:$0xff]
    %v5974 = vld [vmem:[#allocation3 + $0x32] sm:$0xff]
    %v5975 = vld [vmem:[#allocation3 + $0x3a] sm:$0xff]
    %v5976 = vld [vmem:[#allocation3 + $0x42] sm:$0xff]
    %v5977 = vld [vmem:[#allocation3 + $0x4a] sm:$0xff]
    %v5978 = vld [vmem:[#allocation3 + $0x52] sm:$0xff]
    %v5979 = vld [vmem:[#allocation3 + $0x5a] sm:$0xff]
    %v5980 = vld [vmem:[#allocation3 + $0x62] sm:$0xff]
    %v5981 = vld [vmem:[#allocation3 + $0x6a] sm:$0xff]
    %v5982 = vld [vmem:[#allocation3 + $0x72] sm:$0xff]
    %v5983 = vld [vmem:[#allocation3 + $0x7a] sm:$0xff]
    %v5984 = vld [vmem:[#allocation3 + $0x82] sm:$0xff]
    %v5985 = vld [vmem:[#allocation3 + $0x8a] sm:$0xff]
    %v5986 = vld [vmem:[#allocation3 + $0x92] sm:$0xff]
    %v5987 = vld [vmem:[#allocation3 + $0x9a] sm:$0xff]
    %v5988 = vld [vmem:[#allocation3 + $0xa2] sm:$0xff]
    %v5989 = vld [vmem:[#allocation3 + $0xaa] sm:$0xff]
    %v5990 = vld [vmem:[#allocation3 + $0xb2] sm:$0xff]
    %v5991 = vld [vmem:[#allocation3 + $0xba] sm:$0xff]
    %v5992 = vld [vmem:[#allocation3 + $0xc2] sm:$0xff]
    %v5993 = vld [vmem:[#allocation3 + $0xca] sm:$0xff]
    %v5994 = vld [vmem:[#allocation3 + $0xd2] sm:$0xff]
    %v5995 = vld [vmem:[#allocation3 + $0xda] sm:$0xff]
    %v5996 = vld [vmem:[#allocation3 + $0xe2] sm:$0xff]
    %v5997 = vld [vmem:[#allocation3 + $0xea] sm:$0xff]
    %v5998 = vld [vmem:[#allocation3 + $0xf2] sm:$0xff]
    %v5999 = vld [vmem:[#allocation3 + $0xfa] sm:$0xff]
    %v6000 = vld [vmem:[#allocation3 + $0x102] sm:$0xff]
    %v6001 = vld [vmem:[#allocation3 + $0x10a] sm:$0xff]
    %v6002 = vld [vmem:[#allocation3 + $0x112] sm:$0xff]
    %v6003 = vld [vmem:[#allocation3 + $0x11a] sm:$0xff]
    %v6004 = vld [vmem:[#allocation3 + $0x122] sm:$0xff]
    %v6005 = vld [vmem:[#allocation3 + $0x12a] sm:$0xff]
    %v6006 = vld [vmem:[#allocation3 + $0x132] sm:$0xff]
    %v6007 = vld [vmem:[#allocation3 + $0x13a] sm:$0xff]
    %v6008 = vld [vmem:[#allocation3 + $0x142] sm:$0xff]
    %v6009 = vld [vmem:[#allocation3 + $0x14a] sm:$0xff]
    %v6010 = vld [vmem:[#allocation3 + $0x152] sm:$0xff]
    %v6011 = vld [vmem:[#allocation3 + $0x15a] sm:$0xff]
    %v6012 = vld [vmem:[#allocation3 + $0x162] sm:$0xff]
    %v6013 = vld [vmem:[#allocation3 + $0x16a] sm:$0xff]
    %v6014 = vld [vmem:[#allocation3 + $0x172] sm:$0xff]
    %v6015 = vld [vmem:[#allocation3 + $0x17a] sm:$0xff]
    %v6016 = vld [vmem:[#allocation3 + $0x182] sm:$0xff]
    %v6017 = vld [vmem:[#allocation3 + $0x18a] sm:$0xff]
    %v6018 = vld [vmem:[#allocation3 + $0x192] sm:$0xff]
    %v6019 = vld [vmem:[#allocation3 + $0x19a] sm:$0xff]
    %v6020 = vld [vmem:[#allocation3 + $0x1a2] sm:$0xff]
    %v6021 = vld [vmem:[#allocation3 + $0x1aa] sm:$0xff]
    %v6022 = vld [vmem:[#allocation3 + $0x1b2] sm:$0xff]
    %v6023 = vld [vmem:[#allocation3 + $0x1ba] sm:$0xff]
    %v6024 = vld [vmem:[#allocation3 + $0x1c2] sm:$0xff]
    %v6025 = vld [vmem:[#allocation3 + $0x1ca] sm:$0xff]
    %v6026 = vld [vmem:[#allocation3 + $0x1d2] sm:$0xff]
    %v6027 = vld [vmem:[#allocation3 + $0x1da] sm:$0xff]
    %v6028 = vld [vmem:[#allocation3 + $0x1e2] sm:$0xff]
    %v6029 = vld [vmem:[#allocation3 + $0x1ea] sm:$0xff]
    %v6030 = vld [vmem:[#allocation3 + $0x1f2] sm:$0xff]
    %v6031 = vld [vmem:[#allocation3 + $0x1fa] sm:$0xff]
    %v6032 = vld [vmem:[#allocation3 + $0x202] sm:$0xff]
    %v6033 = vld [vmem:[#allocation3 + $0x20a] sm:$0xff]
    %v6034 = vld [vmem:[#allocation3 + $0x212] sm:$0xff]
    %v6035 = vld [vmem:[#allocation3 + $0x21a] sm:$0xff]
    %6100 = vrot.lane.b32.xlu0 %v5900, 32
    %v6101 = vpop.permute.xlu0 %6100
    %6102 = vrot.lane.b32.xlu0 %v5901, 32
    %v6103 = vpop.permute.xlu0 %6102
    %6104 = vrot.lane.b32.xlu0 %v5902, 32
    %v6105 = vpop.permute.xlu0 %6104
    %6106 = vrot.lane.b32.xlu0 %v5903, 32
    %v6107 = vpop.permute.xlu0 %6106
    %6108 = vrot.lane.b32.xlu0 %v5904, 32
    %v6109 = vpop.permute.xlu0 %6108
    %6110 = vrot.lane.b32.xlu0 %v5905, 32
    %v6111 = vpop.permute.xlu0 %6110
    %6112 = vrot.lane.b32.xlu0 %v5906, 32
    %v6113 = vpop.permute.xlu0 %6112
    %6114 = vrot.lane.b32.xlu0 %v5907, 32
    %v6115 = vpop.permute.xlu0 %6114
    %6116 = vrot.lane.b32.xlu0 %v5908, 32
    %v6117 = vpop.permute.xlu0 %6116
    %6118 = vrot.lane.b32.xlu0 %v5909, 32
    %v6119 = vpop.permute.xlu0 %6118
    %6120 = vrot.lane.b32.xlu0 %v5910, 32
    %v6121 = vpop.permute.xlu0 %6120
    %6122 = vrot.lane.b32.xlu0 %v5911, 32
    %v6123 = vpop.permute.xlu0 %6122
    %6124 = vrot.lane.b32.xlu0 %v5912, 32
    %v6125 = vpop.permute.xlu0 %6124
    %6126 = vrot.lane.b32.xlu0 %v5913, 32
    %v6127 = vpop.permute.xlu0 %6126
    %6128 = vrot.lane.b32.xlu0 %v5914, 32
    %v6129 = vpop.permute.xlu0 %6128
    %6130 = vrot.lane.b32.xlu0 %v5915, 32
    %v6131 = vpop.permute.xlu0 %6130
    %6132 = vrot.lane.b32.xlu0 %v5916, 32
    %v6133 = vpop.permute.xlu0 %6132
    %6134 = vrot.lane.b32.xlu0 %v5917, 32
    %v6135 = vpop.permute.xlu0 %6134
    %6136 = vrot.lane.b32.xlu0 %v5918, 32
    %v6137 = vpop.permute.xlu0 %6136
    %6138 = vrot.lane.b32.xlu0 %v5919, 32
    %v6139 = vpop.permute.xlu0 %6138
    %6140 = vrot.lane.b32.xlu0 %v5920, 32
    %v6141 = vpop.permute.xlu0 %6140
    %6142 = vrot.lane.b32.xlu0 %v5921, 32
    %v6143 = vpop.permute.xlu0 %6142
    %6144 = vrot.lane.b32.xlu0 %v5922, 32
    %v6145 = vpop.permute.xlu0 %6144
    %6146 = vrot.lane.b32.xlu0 %v5923, 32
    %v6147 = vpop.permute.xlu0 %6146
    %6148 = vrot.lane.b32.xlu0 %v5924, 32
    %v6149 = vpop.permute.xlu0 %6148
    %6150 = vrot.lane.b32.xlu0 %v5925, 32
    %v6151 = vpop.permute.xlu0 %6150
    %6152 = vrot.lane.b32.xlu0 %v5926, 32
    %v6153 = vpop.permute.xlu0 %6152
    %6154 = vrot.lane.b32.xlu0 %v5927, 32
    %v6155 = vpop.permute.xlu0 %6154
    %6156 = vrot.lane.b32.xlu0 %v5928, 32
    %v6157 = vpop.permute.xlu0 %6156
    %6158 = vrot.lane.b32.xlu0 %v5929, 32
    %v6159 = vpop.permute.xlu0 %6158
    %6160 = vrot.lane.b32.xlu0 %v5930, 32
    %v6161 = vpop.permute.xlu0 %6160
    %6162 = vrot.lane.b32.xlu0 %v5931, 32
    %v6163 = vpop.permute.xlu0 %6162
    %6164 = vrot.lane.b32.xlu0 %v5932, 32
    %v6165 = vpop.permute.xlu0 %6164
    %6166 = vrot.lane.b32.xlu0 %v5933, 32
    %v6167 = vpop.permute.xlu0 %6166
    %6168 = vrot.lane.b32.xlu0 %v5934, 32
    %v6169 = vpop.permute.xlu0 %6168
    %6170 = vrot.lane.b32.xlu0 %v5935, 32
    %v6171 = vpop.permute.xlu0 %6170
    %6172 = vrot.lane.b32.xlu0 %v5936, 32
    %v6173 = vpop.permute.xlu0 %6172
    %6174 = vrot.lane.b32.xlu0 %v5937, 32
    %v6175 = vpop.permute.xlu0 %6174
    %6176 = vrot.lane.b32.xlu0 %v5938, 32
    %v6177 = vpop.permute.xlu0 %6176
    %6178 = vrot.lane.b32.xlu0 %v5939, 32
    %v6179 = vpop.permute.xlu0 %6178
    %6180 = vrot.lane.b32.xlu0 %v5940, 32
    %v6181 = vpop.permute.xlu0 %6180
    %6182 = vrot.lane.b32.xlu0 %v5941, 32
    %v6183 = vpop.permute.xlu0 %6182
    %6184 = vrot.lane.b32.xlu0 %v5942, 32
    %v6185 = vpop.permute.xlu0 %6184
    %6186 = vrot.lane.b32.xlu0 %v5943, 32
    %v6187 = vpop.permute.xlu0 %6186
    %6188 = vrot.lane.b32.xlu0 %v5944, 32
    %v6189 = vpop.permute.xlu0 %6188
    %6190 = vrot.lane.b32.xlu0 %v5945, 32
    %v6191 = vpop.permute.xlu0 %6190
    %6192 = vrot.lane.b32.xlu0 %v5946, 32
    %v6193 = vpop.permute.xlu0 %6192
    %6194 = vrot.lane.b32.xlu0 %v5947, 32
    %v6195 = vpop.permute.xlu0 %6194
    %6196 = vrot.lane.b32.xlu0 %v5948, 32
    %v6197 = vpop.permute.xlu0 %6196
    %6198 = vrot.lane.b32.xlu0 %v5949, 32
    %v6199 = vpop.permute.xlu0 %6198
    %6200 = vrot.lane.b32.xlu0 %v5950, 32
    %v6201 = vpop.permute.xlu0 %6200
    %6202 = vrot.lane.b32.xlu0 %v5951, 32
    %v6203 = vpop.permute.xlu0 %6202
    %6204 = vrot.lane.b32.xlu0 %v5952, 32
    %v6205 = vpop.permute.xlu0 %6204
    %6206 = vrot.lane.b32.xlu0 %v5953, 32
    %v6207 = vpop.permute.xlu0 %6206
    %6208 = vrot.lane.b32.xlu0 %v5954, 32
    %v6209 = vpop.permute.xlu0 %6208
    %6210 = vrot.lane.b32.xlu0 %v5955, 32
    %v6211 = vpop.permute.xlu0 %6210
    %6212 = vrot.lane.b32.xlu0 %v5956, 32
    %v6213 = vpop.permute.xlu0 %6212
    %6214 = vrot.lane.b32.xlu0 %v5957, 32
    %v6215 = vpop.permute.xlu0 %6214
    %6216 = vrot.lane.b32.xlu0 %v5958, 32
    %v6217 = vpop.permute.xlu0 %6216
    %6218 = vrot.lane.b32.xlu0 %v5959, 32
    %v6219 = vpop.permute.xlu0 %6218
    %6220 = vrot.lane.b32.xlu0 %v5960, 32
    %v6221 = vpop.permute.xlu0 %6220
    %6222 = vrot.lane.b32.xlu0 %v5961, 32
    %v6223 = vpop.permute.xlu0 %6222
    %6224 = vrot.lane.b32.xlu0 %v5962, 32
    %v6225 = vpop.permute.xlu0 %6224
    %6226 = vrot.lane.b32.xlu0 %v5963, 32
    %v6227 = vpop.permute.xlu0 %6226
    %6356 = vrot.lane.b32.xlu0 %v5968, 64
    %v6357 = vpop.permute.xlu0 %6356
    %6358 = vrot.lane.b32.xlu0 %v5969, 64
    %v6359 = vpop.permute.xlu0 %6358
    %6360 = vrot.lane.b32.xlu0 %v5970, 64
    %v6361 = vpop.permute.xlu0 %6360
    %6362 = vrot.lane.b32.xlu0 %v5971, 64
    %v6363 = vpop.permute.xlu0 %6362
    %6364 = vrot.lane.b32.xlu0 %v5972, 64
    %v6365 = vpop.permute.xlu0 %6364
    %6366 = vrot.lane.b32.xlu0 %v5973, 64
    %v6367 = vpop.permute.xlu0 %6366
    %6368 = vrot.lane.b32.xlu0 %v5974, 64
    %v6369 = vpop.permute.xlu0 %6368
    %6370 = vrot.lane.b32.xlu0 %v5975, 64
    %v6371 = vpop.permute.xlu0 %6370
    %6372 = vrot.lane.b32.xlu0 %v5976, 64
    %v6373 = vpop.permute.xlu0 %6372
    %6374 = vrot.lane.b32.xlu0 %v5977, 64
    %v6375 = vpop.permute.xlu0 %6374
    %6376 = vrot.lane.b32.xlu0 %v5978, 64
    %v6377 = vpop.permute.xlu0 %6376
    %6378 = vrot.lane.b32.xlu0 %v5979, 64
    %v6379 = vpop.permute.xlu0 %6378
    %6380 = vrot.lane.b32.xlu0 %v5980, 64
    %v6381 = vpop.permute.xlu0 %6380
    %6382 = vrot.lane.b32.xlu0 %v5981, 64
    %v6383 = vpop.permute.xlu0 %6382
    %6384 = vrot.lane.b32.xlu0 %v5982, 64
    %v6385 = vpop.permute.xlu0 %6384
    %6386 = vrot.lane.b32.xlu0 %v5983, 64
    %v6387 = vpop.permute.xlu0 %6386
    %6388 = vrot.lane.b32.xlu0 %v5984, 64
    %v6389 = vpop.permute.xlu0 %6388
    %6390 = vrot.lane.b32.xlu0 %v5985, 64
    %v6391 = vpop.permute.xlu0 %6390
    %6392 = vrot.lane.b32.xlu0 %v5986, 64
    %v6393 = vpop.permute.xlu0 %6392
    %6394 = vrot.lane.b32.xlu0 %v5987, 64
    %v6395 = vpop.permute.xlu0 %6394
    %6396 = vrot.lane.b32.xlu0 %v5988, 64
    %v6397 = vpop.permute.xlu0 %6396
    %6398 = vrot.lane.b32.xlu0 %v5989, 64
    %v6399 = vpop.permute.xlu0 %6398
    %6400 = vrot.lane.b32.xlu0 %v5990, 64
    %v6401 = vpop.permute.xlu0 %6400
    %6402 = vrot.lane.b32.xlu0 %v5991, 64
    %v6403 = vpop.permute.xlu0 %6402
    %6404 = vrot.lane.b32.xlu0 %v5992, 64
    %v6405 = vpop.permute.xlu0 %6404
    %6406 = vrot.lane.b32.xlu0 %v5993, 64
    %v6407 = vpop.permute.xlu0 %6406
    %6408 = vrot.lane.b32.xlu0 %v5994, 64
    %v6409 = vpop.permute.xlu0 %6408
    %6410 = vrot.lane.b32.xlu0 %v5995, 64
    %v6411 = vpop.permute.xlu0 %6410
    %6412 = vrot.lane.b32.xlu0 %v5996, 64
    %v6413 = vpop.permute.xlu0 %6412
    %6414 = vrot.lane.b32.xlu0 %v5997, 64
    %v6415 = vpop.permute.xlu0 %6414
    %6416 = vrot.lane.b32.xlu0 %v5998, 64
    %v6417 = vpop.permute.xlu0 %6416
    %6418 = vrot.lane.b32.xlu0 %v5999, 64
    %v6419 = vpop.permute.xlu0 %6418
    %6420 = vrot.lane.b32.xlu0 %v6000, 64
    %v6421 = vpop.permute.xlu0 %6420
    %6422 = vrot.lane.b32.xlu0 %v6001, 64
    %v6423 = vpop.permute.xlu0 %6422
    %6424 = vrot.lane.b32.xlu0 %v6002, 64
    %v6425 = vpop.permute.xlu0 %6424
    %6426 = vrot.lane.b32.xlu0 %v6003, 64
    %v6427 = vpop.permute.xlu0 %6426
    %6428 = vrot.lane.b32.xlu0 %v6004, 64
    %v6429 = vpop.permute.xlu0 %6428
    %6430 = vrot.lane.b32.xlu0 %v6005, 64
    %v6431 = vpop.permute.xlu0 %6430
    %6432 = vrot.lane.b32.xlu0 %v6006, 64
    %v6433 = vpop.permute.xlu0 %6432
    %6434 = vrot.lane.b32.xlu0 %v6007, 64
    %v6435 = vpop.permute.xlu0 %6434
    %6436 = vrot.lane.b32.xlu0 %v6008, 64
    %v6437 = vpop.permute.xlu0 %6436
    %6438 = vrot.lane.b32.xlu0 %v6009, 64
    %v6439 = vpop.permute.xlu0 %6438
    %6440 = vrot.lane.b32.xlu0 %v6010, 64
    %v6441 = vpop.permute.xlu0 %6440
    %6442 = vrot.lane.b32.xlu0 %v6011, 64
    %v6443 = vpop.permute.xlu0 %6442
    %6444 = vrot.lane.b32.xlu0 %v6012, 64
    %v6445 = vpop.permute.xlu0 %6444
    %6446 = vrot.lane.b32.xlu0 %v6013, 64
    %v6447 = vpop.permute.xlu0 %6446
    %6448 = vrot.lane.b32.xlu0 %v6014, 64
    %v6449 = vpop.permute.xlu0 %6448
    %6450 = vrot.lane.b32.xlu0 %v6015, 64
    %v6451 = vpop.permute.xlu0 %6450
    %6452 = vrot.lane.b32.xlu0 %v6016, 64
    %v6453 = vpop.permute.xlu0 %6452
    %6454 = vrot.lane.b32.xlu0 %v6017, 64
    %v6455 = vpop.permute.xlu0 %6454
    %6456 = vrot.lane.b32.xlu0 %v6018, 64
    %v6457 = vpop.permute.xlu0 %6456
    %6458 = vrot.lane.b32.xlu0 %v6019, 64
    %v6459 = vpop.permute.xlu0 %6458
    %6460 = vrot.lane.b32.xlu0 %v6020, 64
    %v6461 = vpop.permute.xlu0 %6460
    %6462 = vrot.lane.b32.xlu0 %v6021, 64
    %v6463 = vpop.permute.xlu0 %6462
    %6464 = vrot.lane.b32.xlu0 %v6022, 64
    %v6465 = vpop.permute.xlu0 %6464
    %6466 = vrot.lane.b32.xlu0 %v6023, 64
    %v6467 = vpop.permute.xlu0 %6466
    %6468 = vrot.lane.b32.xlu0 %v6024, 64
    %v6469 = vpop.permute.xlu0 %6468
    %6470 = vrot.lane.b32.xlu0 %v6025, 64
    %v6471 = vpop.permute.xlu0 %6470
    %6472 = vrot.lane.b32.xlu0 %v6026, 64
    %v6473 = vpop.permute.xlu0 %6472
    %6474 = vrot.lane.b32.xlu0 %v6027, 64
    %v6475 = vpop.permute.xlu0 %6474
    %6476 = vrot.lane.b32.xlu0 %v6028, 64
    %v6477 = vpop.permute.xlu0 %6476
    %6478 = vrot.lane.b32.xlu0 %v6029, 64
    %v6479 = vpop.permute.xlu0 %6478
    %6480 = vrot.lane.b32.xlu0 %v6030, 64
    %v6481 = vpop.permute.xlu0 %6480
    %6482 = vrot.lane.b32.xlu0 %v6031, 64
    %v6483 = vpop.permute.xlu0 %6482
    %6612 = vrot.lane.b32.xlu0 %v5834, 96
    %v6613 = vpop.permute.xlu0 %6612
    %6614 = vrot.lane.b32.xlu0 %v5835, 96
    %v6615 = vpop.permute.xlu0 %6614
    %6616 = vrot.lane.b32.xlu0 %v5836, 96
    %v6617 = vpop.permute.xlu0 %6616
    %6618 = vrot.lane.b32.xlu0 %v5837, 96
    %v6619 = vpop.permute.xlu0 %6618
    %6620 = vrot.lane.b32.xlu0 %v5838, 96
    %v6621 = vpop.permute.xlu0 %6620
    %6622 = vrot.lane.b32.xlu0 %v5839, 96
    %v6623 = vpop.permute.xlu0 %6622
    %6624 = vrot.lane.b32.xlu0 %v5840, 96
    %v6625 = vpop.permute.xlu0 %6624
    %6626 = vrot.lane.b32.xlu0 %v5841, 96
    %v6627 = vpop.permute.xlu0 %6626
    %6628 = vrot.lane.b32.xlu0 %v5842, 96
    %v6629 = vpop.permute.xlu0 %6628
    %6630 = vrot.lane.b32.xlu0 %v5843, 96
    %v6631 = vpop.permute.xlu0 %6630
    %6632 = vrot.lane.b32.xlu0 %v5844, 96
    %v6633 = vpop.permute.xlu0 %6632
    %6634 = vrot.lane.b32.xlu0 %v5845, 96
    %v6635 = vpop.permute.xlu0 %6634
    %6636 = vrot.lane.b32.xlu0 %v5846, 96
    %v6637 = vpop.permute.xlu0 %6636
    %6638 = vrot.lane.b32.xlu0 %v5847, 96
    %v6639 = vpop.permute.xlu0 %6638
    %6640 = vrot.lane.b32.xlu0 %v5848, 96
    %v6641 = vpop.permute.xlu0 %6640
    %6642 = vrot.lane.b32.xlu0 %v5849, 96
    %v6643 = vpop.permute.xlu0 %6642
    %6644 = vrot.lane.b32.xlu0 %v5850, 96
    %v6645 = vpop.permute.xlu0 %6644
    %6646 = vrot.lane.b32.xlu0 %v5851, 96
    %v6647 = vpop.permute.xlu0 %6646
    %6648 = vrot.lane.b32.xlu0 %v5852, 96
    %v6649 = vpop.permute.xlu0 %6648
    %6650 = vrot.lane.b32.xlu0 %v5853, 96
    %v6651 = vpop.permute.xlu0 %6650
    %6652 = vrot.lane.b32.xlu0 %v5854, 96
    %v6653 = vpop.permute.xlu0 %6652
    %6654 = vrot.lane.b32.xlu0 %v5855, 96
    %v6655 = vpop.permute.xlu0 %6654
    %6656 = vrot.lane.b32.xlu0 %v5856, 96
    %v6657 = vpop.permute.xlu0 %6656
    %6658 = vrot.lane.b32.xlu0 %v5857, 96
    %v6659 = vpop.permute.xlu0 %6658
    %6660 = vrot.lane.b32.xlu0 %v5858, 96
    %v6661 = vpop.permute.xlu0 %6660
    %6662 = vrot.lane.b32.xlu0 %v5859, 96
    %v6663 = vpop.permute.xlu0 %6662
    %6664 = vrot.lane.b32.xlu0 %v5860, 96
    %v6665 = vpop.permute.xlu0 %6664
    %6666 = vrot.lane.b32.xlu0 %v5861, 96
    %v6667 = vpop.permute.xlu0 %6666
    %6668 = vrot.lane.b32.xlu0 %v5862, 96
    %v6669 = vpop.permute.xlu0 %6668
    %6670 = vrot.lane.b32.xlu0 %v5863, 96
    %v6671 = vpop.permute.xlu0 %6670
    %6672 = vrot.lane.b32.xlu0 %v5864, 96
    %v6673 = vpop.permute.xlu0 %6672
    %6674 = vrot.lane.b32.xlu0 %v5865, 96
    %v6675 = vpop.permute.xlu0 %6674
    %6676 = vrot.lane.b32.xlu0 %v5866, 96
    %v6677 = vpop.permute.xlu0 %6676
    %6678 = vrot.lane.b32.xlu0 %v5867, 96
    %v6679 = vpop.permute.xlu0 %6678
    %6680 = vrot.lane.b32.xlu0 %v5868, 96
    %v6681 = vpop.permute.xlu0 %6680
    %6682 = vrot.lane.b32.xlu0 %v5869, 96
    %v6683 = vpop.permute.xlu0 %6682
    %6684 = vrot.lane.b32.xlu0 %v5870, 96
    %v6685 = vpop.permute.xlu0 %6684
    %6686 = vrot.lane.b32.xlu0 %v5871, 96
    %v6687 = vpop.permute.xlu0 %6686
    %6688 = vrot.lane.b32.xlu0 %v5872, 96
    %v6689 = vpop.permute.xlu0 %6688
    %6690 = vrot.lane.b32.xlu0 %v5873, 96
    %v6691 = vpop.permute.xlu0 %6690
    %6692 = vrot.lane.b32.xlu0 %v5874, 96
    %v6693 = vpop.permute.xlu0 %6692
    %6694 = vrot.lane.b32.xlu0 %v5875, 96
    %v6695 = vpop.permute.xlu0 %6694
    %6696 = vrot.lane.b32.xlu0 %v5876, 96
    %v6697 = vpop.permute.xlu0 %6696
    %6698 = vrot.lane.b32.xlu0 %v5877, 96
    %v6699 = vpop.permute.xlu0 %6698
    %6700 = vrot.lane.b32.xlu0 %v5878, 96
    %v6701 = vpop.permute.xlu0 %6700
    %6702 = vrot.lane.b32.xlu0 %v5879, 96
    %v6703 = vpop.permute.xlu0 %6702
    %6704 = vrot.lane.b32.xlu0 %v5880, 96
    %v6705 = vpop.permute.xlu0 %6704
    %6706 = vrot.lane.b32.xlu0 %v5881, 96
    %v6707 = vpop.permute.xlu0 %6706
    %6708 = vrot.lane.b32.xlu0 %v5882, 96
    %v6709 = vpop.permute.xlu0 %6708
    %6710 = vrot.lane.b32.xlu0 %v5883, 96
    %v6711 = vpop.permute.xlu0 %6710
    %6712 = vrot.lane.b32.xlu0 %v5884, 96
    %v6713 = vpop.permute.xlu0 %6712
    %6714 = vrot.lane.b32.xlu0 %v5885, 96
    %v6715 = vpop.permute.xlu0 %6714
    %6716 = vrot.lane.b32.xlu0 %v5886, 96
    %v6717 = vpop.permute.xlu0 %6716
    %6718 = vrot.lane.b32.xlu0 %v5887, 96
    %v6719 = vpop.permute.xlu0 %6718
    %6720 = vrot.lane.b32.xlu0 %v5888, 96
    %v6721 = vpop.permute.xlu0 %6720
    %6722 = vrot.lane.b32.xlu0 %v5889, 96
    %v6723 = vpop.permute.xlu0 %6722
    %6724 = vrot.lane.b32.xlu0 %v5890, 96
    %v6725 = vpop.permute.xlu0 %6724
    %6726 = vrot.lane.b32.xlu0 %v5891, 96
    %v6727 = vpop.permute.xlu0 %6726
    %6728 = vrot.lane.b32.xlu0 %v5892, 96
    %v6729 = vpop.permute.xlu0 %6728
    %6730 = vrot.lane.b32.xlu0 %v5893, 96
    %v6731 = vpop.permute.xlu0 %6730
    %6732 = vrot.lane.b32.xlu0 %v5894, 96
    %v6733 = vpop.permute.xlu0 %6732
    %6734 = vrot.lane.b32.xlu0 %v5895, 96
    %v6735 = vpop.permute.xlu0 %6734
    %6736 = vrot.lane.b32.xlu0 %v5896, 96
    %v6737 = vpop.permute.xlu0 %6736
    %6738 = vrot.lane.b32.xlu0 %v5897, 96
    %v6739 = vpop.permute.xlu0 %6738
    %6806 = vrot.lane.b32.xlu0 %v5970, 32
    %v6807 = vpop.permute.xlu0 %6806
    %6808 = vrot.lane.b32.xlu0 %v5971, 32
    %v6809 = vpop.permute.xlu0 %6808
    %6810 = vrot.lane.b32.xlu0 %v5972, 32
    %v6811 = vpop.permute.xlu0 %6810
    %6812 = vrot.lane.b32.xlu0 %v5973, 32
    %v6813 = vpop.permute.xlu0 %6812
    %6814 = vrot.lane.b32.xlu0 %v5974, 32
    %v6815 = vpop.permute.xlu0 %6814
    %6816 = vrot.lane.b32.xlu0 %v5975, 32
    %v6817 = vpop.permute.xlu0 %6816
    %6818 = vrot.lane.b32.xlu0 %v5976, 32
    %v6819 = vpop.permute.xlu0 %6818
    %6820 = vrot.lane.b32.xlu0 %v5977, 32
    %v6821 = vpop.permute.xlu0 %6820
    %6822 = vrot.lane.b32.xlu0 %v5978, 32
    %v6823 = vpop.permute.xlu0 %6822
    %6824 = vrot.lane.b32.xlu0 %v5979, 32
    %v6825 = vpop.permute.xlu0 %6824
    %6826 = vrot.lane.b32.xlu0 %v5980, 32
    %v6827 = vpop.permute.xlu0 %6826
    %6828 = vrot.lane.b32.xlu0 %v5981, 32
    %v6829 = vpop.permute.xlu0 %6828
    %6830 = vrot.lane.b32.xlu0 %v5982, 32
    %v6831 = vpop.permute.xlu0 %6830
    %6832 = vrot.lane.b32.xlu0 %v5983, 32
    %v6833 = vpop.permute.xlu0 %6832
    %6834 = vrot.lane.b32.xlu0 %v5984, 32
    %v6835 = vpop.permute.xlu0 %6834
    %6836 = vrot.lane.b32.xlu0 %v5985, 32
    %v6837 = vpop.permute.xlu0 %6836
    %6838 = vrot.lane.b32.xlu0 %v5986, 32
    %v6839 = vpop.permute.xlu0 %6838
    %6840 = vrot.lane.b32.xlu0 %v5987, 32
    %v6841 = vpop.permute.xlu0 %6840
    %6842 = vrot.lane.b32.xlu0 %v5988, 32
    %v6843 = vpop.permute.xlu0 %6842
    %6844 = vrot.lane.b32.xlu0 %v5989, 32
    %v6845 = vpop.permute.xlu0 %6844
    %6846 = vrot.lane.b32.xlu0 %v5990, 32
    %v6847 = vpop.permute.xlu0 %6846
    %6848 = vrot.lane.b32.xlu0 %v5991, 32
    %v6849 = vpop.permute.xlu0 %6848
    %6850 = vrot.lane.b32.xlu0 %v5992, 32
    %v6851 = vpop.permute.xlu0 %6850
    %6852 = vrot.lane.b32.xlu0 %v5993, 32
    %v6853 = vpop.permute.xlu0 %6852
    %6854 = vrot.lane.b32.xlu0 %v5994, 32
    %v6855 = vpop.permute.xlu0 %6854
    %6856 = vrot.lane.b32.xlu0 %v5995, 32
    %v6857 = vpop.permute.xlu0 %6856
    %6858 = vrot.lane.b32.xlu0 %v5996, 32
    %v6859 = vpop.permute.xlu0 %6858
    %6860 = vrot.lane.b32.xlu0 %v5997, 32
    %v6861 = vpop.permute.xlu0 %6860
    %6862 = vrot.lane.b32.xlu0 %v5998, 32
    %v6863 = vpop.permute.xlu0 %6862
    %6864 = vrot.lane.b32.xlu0 %v5999, 32
    %v6865 = vpop.permute.xlu0 %6864
    %6866 = vrot.lane.b32.xlu0 %v6000, 32
    %v6867 = vpop.permute.xlu0 %6866
    %6868 = vrot.lane.b32.xlu0 %v6001, 32
    %v6869 = vpop.permute.xlu0 %6868
    %6870 = vrot.lane.b32.xlu0 %v6002, 32
    %v6871 = vpop.permute.xlu0 %6870
    %6872 = vrot.lane.b32.xlu0 %v6003, 32
    %v6873 = vpop.permute.xlu0 %6872
    %6874 = vrot.lane.b32.xlu0 %v6004, 32
    %v6875 = vpop.permute.xlu0 %6874
    %6876 = vrot.lane.b32.xlu0 %v6005, 32
    %v6877 = vpop.permute.xlu0 %6876
    %6878 = vrot.lane.b32.xlu0 %v6006, 32
    %v6879 = vpop.permute.xlu0 %6878
    %6880 = vrot.lane.b32.xlu0 %v6007, 32
    %v6881 = vpop.permute.xlu0 %6880
    %6882 = vrot.lane.b32.xlu0 %v6008, 32
    %v6883 = vpop.permute.xlu0 %6882
    %6884 = vrot.lane.b32.xlu0 %v6009, 32
    %v6885 = vpop.permute.xlu0 %6884
    %6886 = vrot.lane.b32.xlu0 %v6010, 32
    %v6887 = vpop.permute.xlu0 %6886
    %6888 = vrot.lane.b32.xlu0 %v6011, 32
    %v6889 = vpop.permute.xlu0 %6888
    %6890 = vrot.lane.b32.xlu0 %v6012, 32
    %v6891 = vpop.permute.xlu0 %6890
    %6892 = vrot.lane.b32.xlu0 %v6013, 32
    %v6893 = vpop.permute.xlu0 %6892
    %6894 = vrot.lane.b32.xlu0 %v6014, 32
    %v6895 = vpop.permute.xlu0 %6894
    %6896 = vrot.lane.b32.xlu0 %v6015, 32
    %v6897 = vpop.permute.xlu0 %6896
    %6898 = vrot.lane.b32.xlu0 %v6016, 32
    %v6899 = vpop.permute.xlu0 %6898
    %6900 = vrot.lane.b32.xlu0 %v6017, 32
    %v6901 = vpop.permute.xlu0 %6900
    %6902 = vrot.lane.b32.xlu0 %v6018, 32
    %v6903 = vpop.permute.xlu0 %6902
    %6904 = vrot.lane.b32.xlu0 %v6019, 32
    %v6905 = vpop.permute.xlu0 %6904
    %6906 = vrot.lane.b32.xlu0 %v6020, 32
    %v6907 = vpop.permute.xlu0 %6906
    %6908 = vrot.lane.b32.xlu0 %v6021, 32
    %v6909 = vpop.permute.xlu0 %6908
    %6910 = vrot.lane.b32.xlu0 %v6022, 32
    %v6911 = vpop.permute.xlu0 %6910
    %6912 = vrot.lane.b32.xlu0 %v6023, 32
    %v6913 = vpop.permute.xlu0 %6912
    %6914 = vrot.lane.b32.xlu0 %v6024, 32
    %v6915 = vpop.permute.xlu0 %6914
    %6916 = vrot.lane.b32.xlu0 %v6025, 32
    %v6917 = vpop.permute.xlu0 %6916
    %6918 = vrot.lane.b32.xlu0 %v6026, 32
    %v6919 = vpop.permute.xlu0 %6918
    %6920 = vrot.lane.b32.xlu0 %v6027, 32
    %v6921 = vpop.permute.xlu0 %6920
    %6922 = vrot.lane.b32.xlu0 %v6028, 32
    %v6923 = vpop.permute.xlu0 %6922
    %6924 = vrot.lane.b32.xlu0 %v6029, 32
    %v6925 = vpop.permute.xlu0 %6924
    %6926 = vrot.lane.b32.xlu0 %v6030, 32
    %v6927 = vpop.permute.xlu0 %6926
    %6928 = vrot.lane.b32.xlu0 %v6031, 32
    %v6929 = vpop.permute.xlu0 %6928
    %6930 = vrot.lane.b32.xlu0 %v6032, 32
    %v6931 = vpop.permute.xlu0 %6930
    %6932 = vrot.lane.b32.xlu0 %v6033, 32
    %v6933 = vpop.permute.xlu0 %6932
    %7000 = vrot.lane.b32.xlu0 %v5836, 64
    %v7001 = vpop.permute.xlu0 %7000
    %7002 = vrot.lane.b32.xlu0 %v5837, 64
    %v7003 = vpop.permute.xlu0 %7002
    %7004 = vrot.lane.b32.xlu0 %v5838, 64
    %v7005 = vpop.permute.xlu0 %7004
    %7006 = vrot.lane.b32.xlu0 %v5839, 64
    %v7007 = vpop.permute.xlu0 %7006
    %7008 = vrot.lane.b32.xlu0 %v5840, 64
    %v7009 = vpop.permute.xlu0 %7008
    %7010 = vrot.lane.b32.xlu0 %v5841, 64
    %v7011 = vpop.permute.xlu0 %7010
    %7012 = vrot.lane.b32.xlu0 %v5842, 64
    %v7013 = vpop.permute.xlu0 %7012
    %7014 = vrot.lane.b32.xlu0 %v5843, 64
    %v7015 = vpop.permute.xlu0 %7014
    %7016 = vrot.lane.b32.xlu0 %v5844, 64
    %v7017 = vpop.permute.xlu0 %7016
    %7018 = vrot.lane.b32.xlu0 %v5845, 64
    %v7019 = vpop.permute.xlu0 %7018
    %7020 = vrot.lane.b32.xlu0 %v5846, 64
    %v7021 = vpop.permute.xlu0 %7020
    %7022 = vrot.lane.b32.xlu0 %v5847, 64
    %v7023 = vpop.permute.xlu0 %7022
    %7024 = vrot.lane.b32.xlu0 %v5848, 64
    %v7025 = vpop.permute.xlu0 %7024
    %7026 = vrot.lane.b32.xlu0 %v5849, 64
    %v7027 = vpop.permute.xlu0 %7026
    %7028 = vrot.lane.b32.xlu0 %v5850, 64
    %v7029 = vpop.permute.xlu0 %7028
    %7030 = vrot.lane.b32.xlu0 %v5851, 64
    %v7031 = vpop.permute.xlu0 %7030
    %7032 = vrot.lane.b32.xlu0 %v5852, 64
    %v7033 = vpop.permute.xlu0 %7032
    %7034 = vrot.lane.b32.xlu0 %v5853, 64
    %v7035 = vpop.permute.xlu0 %7034
    %7036 = vrot.lane.b32.xlu0 %v5854, 64
    %v7037 = vpop.permute.xlu0 %7036
    %7038 = vrot.lane.b32.xlu0 %v5855, 64
    %v7039 = vpop.permute.xlu0 %7038
    %7040 = vrot.lane.b32.xlu0 %v5856, 64
    %v7041 = vpop.permute.xlu0 %7040
    %7042 = vrot.lane.b32.xlu0 %v5857, 64
    %v7043 = vpop.permute.xlu0 %7042
    %7044 = vrot.lane.b32.xlu0 %v5858, 64
    %v7045 = vpop.permute.xlu0 %7044
    %7046 = vrot.lane.b32.xlu0 %v5859, 64
    %v7047 = vpop.permute.xlu0 %7046
    %7048 = vrot.lane.b32.xlu0 %v5860, 64
    %v7049 = vpop.permute.xlu0 %7048
    %7050 = vrot.lane.b32.xlu0 %v5861, 64
    %v7051 = vpop.permute.xlu0 %7050
    %7052 = vrot.lane.b32.xlu0 %v5862, 64
    %v7053 = vpop.permute.xlu0 %7052
    %7054 = vrot.lane.b32.xlu0 %v5863, 64
    %v7055 = vpop.permute.xlu0 %7054
    %7056 = vrot.lane.b32.xlu0 %v5864, 64
    %v7057 = vpop.permute.xlu0 %7056
    %7058 = vrot.lane.b32.xlu0 %v5865, 64
    %v7059 = vpop.permute.xlu0 %7058
    %7060 = vrot.lane.b32.xlu0 %v5866, 64
    %v7061 = vpop.permute.xlu0 %7060
    %7062 = vrot.lane.b32.xlu0 %v5867, 64
    %v7063 = vpop.permute.xlu0 %7062
    %7064 = vrot.lane.b32.xlu0 %v5868, 64
    %v7065 = vpop.permute.xlu0 %7064
    %7066 = vrot.lane.b32.xlu0 %v5869, 64
    %v7067 = vpop.permute.xlu0 %7066
    %7068 = vrot.lane.b32.xlu0 %v5870, 64
    %v7069 = vpop.permute.xlu0 %7068
    %7070 = vrot.lane.b32.xlu0 %v5871, 64
    %v7071 = vpop.permute.xlu0 %7070
    %7072 = vrot.lane.b32.xlu0 %v5872, 64
    %v7073 = vpop.permute.xlu0 %7072
    %7074 = vrot.lane.b32.xlu0 %v5873, 64
    %v7075 = vpop.permute.xlu0 %7074
    %7076 = vrot.lane.b32.xlu0 %v5874, 64
    %v7077 = vpop.permute.xlu0 %7076
    %7078 = vrot.lane.b32.xlu0 %v5875, 64
    %v7079 = vpop.permute.xlu0 %7078
    %7080 = vrot.lane.b32.xlu0 %v5876, 64
    %v7081 = vpop.permute.xlu0 %7080
    %7082 = vrot.lane.b32.xlu0 %v5877, 64
    %v7083 = vpop.permute.xlu0 %7082
    %7084 = vrot.lane.b32.xlu0 %v5878, 64
    %v7085 = vpop.permute.xlu0 %7084
    %7086 = vrot.lane.b32.xlu0 %v5879, 64
    %v7087 = vpop.permute.xlu0 %7086
    %7088 = vrot.lane.b32.xlu0 %v5880, 64
    %v7089 = vpop.permute.xlu0 %7088
    %7090 = vrot.lane.b32.xlu0 %v5881, 64
    %v7091 = vpop.permute.xlu0 %7090
    %7092 = vrot.lane.b32.xlu0 %v5882, 64
    %v7093 = vpop.permute.xlu0 %7092
    %7094 = vrot.lane.b32.xlu0 %v5883, 64
    %v7095 = vpop.permute.xlu0 %7094
    %7096 = vrot.lane.b32.xlu0 %v5884, 64
    %v7097 = vpop.permute.xlu0 %7096
    %7098 = vrot.lane.b32.xlu0 %v5885, 64
    %v7099 = vpop.permute.xlu0 %7098
    %7100 = vrot.lane.b32.xlu0 %v5886, 64
    %v7101 = vpop.permute.xlu0 %7100
    %7102 = vrot.lane.b32.xlu0 %v5887, 64
    %v7103 = vpop.permute.xlu0 %7102
    %7104 = vrot.lane.b32.xlu0 %v5888, 64
    %v7105 = vpop.permute.xlu0 %7104
    %7106 = vrot.lane.b32.xlu0 %v5889, 64
    %v7107 = vpop.permute.xlu0 %7106
    %7108 = vrot.lane.b32.xlu0 %v5890, 64
    %v7109 = vpop.permute.xlu0 %7108
    %7110 = vrot.lane.b32.xlu0 %v5891, 64
    %v7111 = vpop.permute.xlu0 %7110
    %7112 = vrot.lane.b32.xlu0 %v5892, 64
    %v7113 = vpop.permute.xlu0 %7112
    %7114 = vrot.lane.b32.xlu0 %v5893, 64
    %v7115 = vpop.permute.xlu0 %7114
    %7116 = vrot.lane.b32.xlu0 %v5894, 64
    %v7117 = vpop.permute.xlu0 %7116
    %7118 = vrot.lane.b32.xlu0 %v5895, 64
    %v7119 = vpop.permute.xlu0 %7118
    %7120 = vrot.lane.b32.xlu0 %v5896, 64
    %v7121 = vpop.permute.xlu0 %7120
    %7122 = vrot.lane.b32.xlu0 %v5897, 64
    %v7123 = vpop.permute.xlu0 %7122
    %7124 = vrot.lane.b32.xlu0 %v5898, 64
    %v7125 = vpop.permute.xlu0 %7124
    %7126 = vrot.lane.b32.xlu0 %v5899, 64
    %v7127 = vpop.permute.xlu0 %7126
    %7196 = vrot.lane.b32.xlu0 %v5904, 96
    %v7197 = vpop.permute.xlu0 %7196
    %7198 = vrot.lane.b32.xlu0 %v5905, 96
    %v7199 = vpop.permute.xlu0 %7198
    %7200 = vrot.lane.b32.xlu0 %v5906, 96
    %v7201 = vpop.permute.xlu0 %7200
    %7202 = vrot.lane.b32.xlu0 %v5907, 96
    %v7203 = vpop.permute.xlu0 %7202
    %7204 = vrot.lane.b32.xlu0 %v5908, 96
    %v7205 = vpop.permute.xlu0 %7204
    %7206 = vrot.lane.b32.xlu0 %v5909, 96
    %v7207 = vpop.permute.xlu0 %7206
    %7208 = vrot.lane.b32.xlu0 %v5910, 96
    %v7209 = vpop.permute.xlu0 %7208
    %7210 = vrot.lane.b32.xlu0 %v5911, 96
    %v7211 = vpop.permute.xlu0 %7210
    %7212 = vrot.lane.b32.xlu0 %v5912, 96
    %v7213 = vpop.permute.xlu0 %7212
    %7214 = vrot.lane.b32.xlu0 %v5913, 96
    %v7215 = vpop.permute.xlu0 %7214
    %7216 = vrot.lane.b32.xlu0 %v5914, 96
    %v7217 = vpop.permute.xlu0 %7216
    %7218 = vrot.lane.b32.xlu0 %v5915, 96
    %v7219 = vpop.permute.xlu0 %7218
    %7220 = vrot.lane.b32.xlu0 %v5916, 96
    %v7221 = vpop.permute.xlu0 %7220
    %7222 = vrot.lane.b32.xlu0 %v5917, 96
    %v7223 = vpop.permute.xlu0 %7222
    %7224 = vrot.lane.b32.xlu0 %v5918, 96
    %v7225 = vpop.permute.xlu0 %7224
    %7226 = vrot.lane.b32.xlu0 %v5919, 96
    %v7227 = vpop.permute.xlu0 %7226
    %7228 = vrot.lane.b32.xlu0 %v5920, 96
    %v7229 = vpop.permute.xlu0 %7228
    %7230 = vrot.lane.b32.xlu0 %v5921, 96
    %v7231 = vpop.permute.xlu0 %7230
    %7232 = vrot.lane.b32.xlu0 %v5922, 96
    %v7233 = vpop.permute.xlu0 %7232
    %7234 = vrot.lane.b32.xlu0 %v5923, 96
    %v7235 = vpop.permute.xlu0 %7234
    %7236 = vrot.lane.b32.xlu0 %v5924, 96
    %v7237 = vpop.permute.xlu0 %7236
    %7238 = vrot.lane.b32.xlu0 %v5925, 96
    %v7239 = vpop.permute.xlu0 %7238
    %7240 = vrot.lane.b32.xlu0 %v5926, 96
    %v7241 = vpop.permute.xlu0 %7240
    %7242 = vrot.lane.b32.xlu0 %v5927, 96
    %v7243 = vpop.permute.xlu0 %7242
    %7244 = vrot.lane.b32.xlu0 %v5928, 96
    %v7245 = vpop.permute.xlu0 %7244
    %7246 = vrot.lane.b32.xlu0 %v5929, 96
    %v7247 = vpop.permute.xlu0 %7246
    %7248 = vrot.lane.b32.xlu0 %v5930, 96
    %v7249 = vpop.permute.xlu0 %7248
    %7250 = vrot.lane.b32.xlu0 %v5931, 96
    %v7251 = vpop.permute.xlu0 %7250
    %7252 = vrot.lane.b32.xlu0 %v5932, 96
    %v7253 = vpop.permute.xlu0 %7252
    %7254 = vrot.lane.b32.xlu0 %v5933, 96
    %v7255 = vpop.permute.xlu0 %7254
    %7256 = vrot.lane.b32.xlu0 %v5934, 96
    %v7257 = vpop.permute.xlu0 %7256
    %7258 = vrot.lane.b32.xlu0 %v5935, 96
    %v7259 = vpop.permute.xlu0 %7258
    %7260 = vrot.lane.b32.xlu0 %v5936, 96
    %v7261 = vpop.permute.xlu0 %7260
    %7262 = vrot.lane.b32.xlu0 %v5937, 96
    %v7263 = vpop.permute.xlu0 %7262
    %7264 = vrot.lane.b32.xlu0 %v5938, 96
    %v7265 = vpop.permute.xlu0 %7264
    %7266 = vrot.lane.b32.xlu0 %v5939, 96
    %v7267 = vpop.permute.xlu0 %7266
    %7268 = vrot.lane.b32.xlu0 %v5940, 96
    %v7269 = vpop.permute.xlu0 %7268
    %7270 = vrot.lane.b32.xlu0 %v5941, 96
    %v7271 = vpop.permute.xlu0 %7270
    %7272 = vrot.lane.b32.xlu0 %v5942, 96
    %v7273 = vpop.permute.xlu0 %7272
    %7274 = vrot.lane.b32.xlu0 %v5943, 96
    %v7275 = vpop.permute.xlu0 %7274
    %7276 = vrot.lane.b32.xlu0 %v5944, 96
    %v7277 = vpop.permute.xlu0 %7276
    %7278 = vrot.lane.b32.xlu0 %v5945, 96
    %v7279 = vpop.permute.xlu0 %7278
    %7280 = vrot.lane.b32.xlu0 %v5946, 96
    %v7281 = vpop.permute.xlu0 %7280
    %7282 = vrot.lane.b32.xlu0 %v5947, 96
    %v7283 = vpop.permute.xlu0 %7282
    %7284 = vrot.lane.b32.xlu0 %v5948, 96
    %v7285 = vpop.permute.xlu0 %7284
    %7286 = vrot.lane.b32.xlu0 %v5949, 96
    %v7287 = vpop.permute.xlu0 %7286
    %7288 = vrot.lane.b32.xlu0 %v5950, 96
    %v7289 = vpop.permute.xlu0 %7288
    %7290 = vrot.lane.b32.xlu0 %v5951, 96
    %v7291 = vpop.permute.xlu0 %7290
    %7292 = vrot.lane.b32.xlu0 %v5952, 96
    %v7293 = vpop.permute.xlu0 %7292
    %7294 = vrot.lane.b32.xlu0 %v5953, 96
    %v7295 = vpop.permute.xlu0 %7294
    %7296 = vrot.lane.b32.xlu0 %v5954, 96
    %v7297 = vpop.permute.xlu0 %7296
    %7298 = vrot.lane.b32.xlu0 %v5955, 96
    %v7299 = vpop.permute.xlu0 %7298
    %7300 = vrot.lane.b32.xlu0 %v5956, 96
    %v7301 = vpop.permute.xlu0 %7300
    %7302 = vrot.lane.b32.xlu0 %v5957, 96
    %v7303 = vpop.permute.xlu0 %7302
    %7304 = vrot.lane.b32.xlu0 %v5958, 96
    %v7305 = vpop.permute.xlu0 %7304
    %7306 = vrot.lane.b32.xlu0 %v5959, 96
    %v7307 = vpop.permute.xlu0 %7306
    %7308 = vrot.lane.b32.xlu0 %v5960, 96
    %v7309 = vpop.permute.xlu0 %7308
    %7310 = vrot.lane.b32.xlu0 %v5961, 96
    %v7311 = vpop.permute.xlu0 %7310
    %7312 = vrot.lane.b32.xlu0 %v5962, 96
    %v7313 = vpop.permute.xlu0 %7312
    %7314 = vrot.lane.b32.xlu0 %v5963, 96
    %v7315 = vpop.permute.xlu0 %7314
    %7316 = vrot.lane.b32.xlu0 %v5964, 96
    %v7317 = vpop.permute.xlu0 %7316
    %7318 = vrot.lane.b32.xlu0 %v5965, 96
    %v7319 = vpop.permute.xlu0 %7318
    %7320 = vrot.lane.b32.xlu0 %v5966, 96
    %v7321 = vpop.permute.xlu0 %7320
    %7322 = vrot.lane.b32.xlu0 %v5967, 96
    %v7323 = vpop.permute.xlu0 %7322
    %v7388 = vsel %vm4803, %v5832, %v6101
    %v7389 = vsel %vm4803, %v5833, %v6103
    %v7390 = vsel %vm4803, %v5834, %v6105
    %v7391 = vsel %vm4803, %v5835, %v6107
    %v7392 = vsel %vm4803, %v5836, %v6109
    %v7393 = vsel %vm4803, %v5837, %v6111
    %v7394 = vsel %vm4803, %v5838, %v6113
    %v7395 = vsel %vm4803, %v5839, %v6115
    %v7396 = vsel %vm4803, %v5840, %v6117
    %v7397 = vsel %vm4803, %v5841, %v6119
    %v7398 = vsel %vm4803, %v5842, %v6121
    %v7399 = vsel %vm4803, %v5843, %v6123
    %v7400 = vsel %vm4803, %v5844, %v6125
    %v7401 = vsel %vm4803, %v5845, %v6127
    %v7402 = vsel %vm4803, %v5846, %v6129
    %v7403 = vsel %vm4803, %v5847, %v6131
    %v7404 = vsel %vm4803, %v5848, %v6133
    %v7405 = vsel %vm4803, %v5849, %v6135
    %v7406 = vsel %vm4803, %v5850, %v6137
    %v7407 = vsel %vm4803, %v5851, %v6139
    %v7408 = vsel %vm4803, %v5852, %v6141
    %v7409 = vsel %vm4803, %v5853, %v6143
    %v7410 = vsel %vm4803, %v5854, %v6145
    %v7411 = vsel %vm4803, %v5855, %v6147
    %v7412 = vsel %vm4803, %v5856, %v6149
    %v7413 = vsel %vm4803, %v5857, %v6151
    %v7414 = vsel %vm4803, %v5858, %v6153
    %v7415 = vsel %vm4803, %v5859, %v6155
    %v7416 = vsel %vm4803, %v5860, %v6157
    %v7417 = vsel %vm4803, %v5861, %v6159
    %v7418 = vsel %vm4803, %v5862, %v6161
    %v7419 = vsel %vm4803, %v5863, %v6163
    %v7420 = vsel %vm4803, %v5864, %v6165
    %v7421 = vsel %vm4803, %v5865, %v6167
    %v7422 = vsel %vm4803, %v5866, %v6169
    %v7423 = vsel %vm4803, %v5867, %v6171
    %v7424 = vsel %vm4803, %v5868, %v6173
    %v7425 = vsel %vm4803, %v5869, %v6175
    %v7426 = vsel %vm4803, %v5870, %v6177
    %v7427 = vsel %vm4803, %v5871, %v6179
    %v7428 = vsel %vm4803, %v5872, %v6181
    %v7429 = vsel %vm4803, %v5873, %v6183
    %v7430 = vsel %vm4803, %v5874, %v6185
    %v7431 = vsel %vm4803, %v5875, %v6187
    %v7432 = vsel %vm4803, %v5876, %v6189
    %v7433 = vsel %vm4803, %v5877, %v6191
    %v7434 = vsel %vm4803, %v5878, %v6193
    %v7435 = vsel %vm4803, %v5879, %v6195
    %v7436 = vsel %vm4803, %v5880, %v6197
    %v7437 = vsel %vm4803, %v5881, %v6199
    %v7438 = vsel %vm4803, %v5882, %v6201
    %v7439 = vsel %vm4803, %v5883, %v6203
    %v7440 = vsel %vm4803, %v5884, %v6205
    %v7441 = vsel %vm4803, %v5885, %v6207
    %v7442 = vsel %vm4803, %v5886, %v6209
    %v7443 = vsel %vm4803, %v5887, %v6211
    %v7444 = vsel %vm4803, %v5888, %v6213
    %v7445 = vsel %vm4803, %v5889, %v6215
    %v7446 = vsel %vm4803, %v5890, %v6217
    %v7447 = vsel %vm4803, %v5891, %v6219
    %v7448 = vsel %vm4803, %v5892, %v6221
    %v7449 = vsel %vm4803, %v5893, %v6223
    %v7450 = vsel %vm4803, %v5894, %v6225
    %v7451 = vsel %vm4803, %v5895, %v6227
    %v7452 = vsel %vm4933, %v7388, %v6357
    %v7453 = vsel %vm4933, %v7389, %v6359
    %v7454 = vsel %vm4933, %v7390, %v6361
    %v7455 = vsel %vm4933, %v7391, %v6363
    %v7456 = vsel %vm4933, %v7392, %v6365
    %v7457 = vsel %vm4933, %v7393, %v6367
    %v7458 = vsel %vm4933, %v7394, %v6369
    %v7459 = vsel %vm4933, %v7395, %v6371
    %v7460 = vsel %vm4933, %v7396, %v6373
    %v7461 = vsel %vm4933, %v7397, %v6375
    %v7462 = vsel %vm4933, %v7398, %v6377
    %v7463 = vsel %vm4933, %v7399, %v6379
    %v7464 = vsel %vm4933, %v7400, %v6381
    %v7465 = vsel %vm4933, %v7401, %v6383
    %v7466 = vsel %vm4933, %v7402, %v6385
    %v7467 = vsel %vm4933, %v7403, %v6387
    %v7468 = vsel %vm4933, %v7404, %v6389
    %v7469 = vsel %vm4933, %v7405, %v6391
    %v7470 = vsel %vm4933, %v7406, %v6393
    %v7471 = vsel %vm4933, %v7407, %v6395
    %v7472 = vsel %vm4933, %v7408, %v6397
    %v7473 = vsel %vm4933, %v7409, %v6399
    %v7474 = vsel %vm4933, %v7410, %v6401
    %v7475 = vsel %vm4933, %v7411, %v6403
    %v7476 = vsel %vm4933, %v7412, %v6405
    %v7477 = vsel %vm4933, %v7413, %v6407
    %v7478 = vsel %vm4933, %v7414, %v6409
    %v7479 = vsel %vm4933, %v7415, %v6411
    %v7480 = vsel %vm4933, %v7416, %v6413
    %v7481 = vsel %vm4933, %v7417, %v6415
    %v7482 = vsel %vm4933, %v7418, %v6417
    %v7483 = vsel %vm4933, %v7419, %v6419
    %v7484 = vsel %vm4933, %v7420, %v6421
    %v7485 = vsel %vm4933, %v7421, %v6423
    %v7486 = vsel %vm4933, %v7422, %v6425
    %v7487 = vsel %vm4933, %v7423, %v6427
    %v7488 = vsel %vm4933, %v7424, %v6429
    %v7489 = vsel %vm4933, %v7425, %v6431
    %v7490 = vsel %vm4933, %v7426, %v6433
    %v7491 = vsel %vm4933, %v7427, %v6435
    %v7492 = vsel %vm4933, %v7428, %v6437
    %v7493 = vsel %vm4933, %v7429, %v6439
    %v7494 = vsel %vm4933, %v7430, %v6441
    %v7495 = vsel %vm4933, %v7431, %v6443
    %v7496 = vsel %vm4933, %v7432, %v6445
    %v7497 = vsel %vm4933, %v7433, %v6447
    %v7498 = vsel %vm4933, %v7434, %v6449
    %v7499 = vsel %vm4933, %v7435, %v6451
    %v7500 = vsel %vm4933, %v7436, %v6453
    %v7501 = vsel %vm4933, %v7437, %v6455
    %v7502 = vsel %vm4933, %v7438, %v6457
    %v7503 = vsel %vm4933, %v7439, %v6459
    %v7504 = vsel %vm4933, %v7440, %v6461
    %v7505 = vsel %vm4933, %v7441, %v6463
    %v7506 = vsel %vm4933, %v7442, %v6465
    %v7507 = vsel %vm4933, %v7443, %v6467
    %v7508 = vsel %vm4933, %v7444, %v6469
    %v7509 = vsel %vm4933, %v7445, %v6471
    %v7510 = vsel %vm4933, %v7446, %v6473
    %v7511 = vsel %vm4933, %v7447, %v6475
    %v7512 = vsel %vm4933, %v7448, %v6477
    %v7513 = vsel %vm4933, %v7449, %v6479
    %v7514 = vsel %vm4933, %v7450, %v6481
    %v7515 = vsel %vm4933, %v7451, %v6483
    %v7516 = vsel %vm5063, %v7452, %v6613
    %v7517 = vsel %vm5063, %v7453, %v6615
    %v7518 = vsel %vm5063, %v7454, %v6617
    %v7519 = vsel %vm5063, %v7455, %v6619
    %v7520 = vsel %vm5063, %v7456, %v6621
    %v7521 = vsel %vm5063, %v7457, %v6623
    %v7522 = vsel %vm5063, %v7458, %v6625
    %v7523 = vsel %vm5063, %v7459, %v6627
    %v7524 = vsel %vm5063, %v7460, %v6629
    %v7525 = vsel %vm5063, %v7461, %v6631
    %v7526 = vsel %vm5063, %v7462, %v6633
    %v7527 = vsel %vm5063, %v7463, %v6635
    %v7528 = vsel %vm5063, %v7464, %v6637
    %v7529 = vsel %vm5063, %v7465, %v6639
    %v7530 = vsel %vm5063, %v7466, %v6641
    %v7531 = vsel %vm5063, %v7467, %v6643
    %v7532 = vsel %vm5063, %v7468, %v6645
    %v7533 = vsel %vm5063, %v7469, %v6647
    %v7534 = vsel %vm5063, %v7470, %v6649
    %v7535 = vsel %vm5063, %v7471, %v6651
    %v7536 = vsel %vm5063, %v7472, %v6653
    %v7537 = vsel %vm5063, %v7473, %v6655
    %v7538 = vsel %vm5063, %v7474, %v6657
    %v7539 = vsel %vm5063, %v7475, %v6659
    %v7540 = vsel %vm5063, %v7476, %v6661
    %v7541 = vsel %vm5063, %v7477, %v6663
    %v7542 = vsel %vm5063, %v7478, %v6665
    %v7543 = vsel %vm5063, %v7479, %v6667
    %v7544 = vsel %vm5063, %v7480, %v6669
    %v7545 = vsel %vm5063, %v7481, %v6671
    %v7546 = vsel %vm5063, %v7482, %v6673
    %v7547 = vsel %vm5063, %v7483, %v6675
    %v7548 = vsel %vm5063, %v7484, %v6677
    %v7549 = vsel %vm5063, %v7485, %v6679
    %v7550 = vsel %vm5063, %v7486, %v6681
    %v7551 = vsel %vm5063, %v7487, %v6683
    %v7552 = vsel %vm5063, %v7488, %v6685
    %v7553 = vsel %vm5063, %v7489, %v6687
    %v7554 = vsel %vm5063, %v7490, %v6689
    %v7555 = vsel %vm5063, %v7491, %v6691
    %v7556 = vsel %vm5063, %v7492, %v6693
    %v7557 = vsel %vm5063, %v7493, %v6695
    %v7558 = vsel %vm5063, %v7494, %v6697
    %v7559 = vsel %vm5063, %v7495, %v6699
    %v7560 = vsel %vm5063, %v7496, %v6701
    %v7561 = vsel %vm5063, %v7497, %v6703
    %v7562 = vsel %vm5063, %v7498, %v6705
    %v7563 = vsel %vm5063, %v7499, %v6707
    %v7564 = vsel %vm5063, %v7500, %v6709
    %v7565 = vsel %vm5063, %v7501, %v6711
    %v7566 = vsel %vm5063, %v7502, %v6713
    %v7567 = vsel %vm5063, %v7503, %v6715
    %v7568 = vsel %vm5063, %v7504, %v6717
    %v7569 = vsel %vm5063, %v7505, %v6719
    %v7570 = vsel %vm5063, %v7506, %v6721
    %v7571 = vsel %vm5063, %v7507, %v6723
    %v7572 = vsel %vm5063, %v7508, %v6725
    %v7573 = vsel %vm5063, %v7509, %v6727
    %v7574 = vsel %vm5063, %v7510, %v6729
    %v7575 = vsel %vm5063, %v7511, %v6731
    %v7576 = vsel %vm5063, %v7512, %v6733
    %v7577 = vsel %vm5063, %v7513, %v6735
    %v7578 = vsel %vm5063, %v7514, %v6737
    %v7579 = vsel %vm5063, %v7515, %v6739
    %v7580 = vsel %vm4803, %v5902, %v6807
    %v7581 = vsel %vm4803, %v5903, %v6809
    %v7582 = vsel %vm4803, %v5904, %v6811
    %v7583 = vsel %vm4803, %v5905, %v6813
    %v7584 = vsel %vm4803, %v5906, %v6815
    %v7585 = vsel %vm4803, %v5907, %v6817
    %v7586 = vsel %vm4803, %v5908, %v6819
    %v7587 = vsel %vm4803, %v5909, %v6821
    %v7588 = vsel %vm4803, %v5910, %v6823
    %v7589 = vsel %vm4803, %v5911, %v6825
    %v7590 = vsel %vm4803, %v5912, %v6827
    %v7591 = vsel %vm4803, %v5913, %v6829
    %v7592 = vsel %vm4803, %v5914, %v6831
    %v7593 = vsel %vm4803, %v5915, %v6833
    %v7594 = vsel %vm4803, %v5916, %v6835
    %v7595 = vsel %vm4803, %v5917, %v6837
    %v7596 = vsel %vm4803, %v5918, %v6839
    %v7597 = vsel %vm4803, %v5919, %v6841
    %v7598 = vsel %vm4803, %v5920, %v6843
    %v7599 = vsel %vm4803, %v5921, %v6845
    %v7600 = vsel %vm4803, %v5922, %v6847
    %v7601 = vsel %vm4803, %v5923, %v6849
    %v7602 = vsel %vm4803, %v5924, %v6851
    %v7603 = vsel %vm4803, %v5925, %v6853
    %v7604 = vsel %vm4803, %v5926, %v6855
    %v7605 = vsel %vm4803, %v5927, %v6857
    %v7606 = vsel %vm4803, %v5928, %v6859
    %v7607 = vsel %vm4803, %v5929, %v6861
    %v7608 = vsel %vm4803, %v5930, %v6863
    %v7609 = vsel %vm4803, %v5931, %v6865
    %v7610 = vsel %vm4803, %v5932, %v6867
    %v7611 = vsel %vm4803, %v5933, %v6869
    %v7612 = vsel %vm4803, %v5934, %v6871
    %v7613 = vsel %vm4803, %v5935, %v6873
    %v7614 = vsel %vm4803, %v5936, %v6875
    %v7615 = vsel %vm4803, %v5937, %v6877
    %v7616 = vsel %vm4803, %v5938, %v6879
    %v7617 = vsel %vm4803, %v5939, %v6881
    %v7618 = vsel %vm4803, %v5940, %v6883
    %v7619 = vsel %vm4803, %v5941, %v6885
    %v7620 = vsel %vm4803, %v5942, %v6887
    %v7621 = vsel %vm4803, %v5943, %v6889
    %v7622 = vsel %vm4803, %v5944, %v6891
    %v7623 = vsel %vm4803, %v5945, %v6893
    %v7624 = vsel %vm4803, %v5946, %v6895
    %v7625 = vsel %vm4803, %v5947, %v6897
    %v7626 = vsel %vm4803, %v5948, %v6899
    %v7627 = vsel %vm4803, %v5949, %v6901
    %v7628 = vsel %vm4803, %v5950, %v6903
    %v7629 = vsel %vm4803, %v5951, %v6905
    %v7630 = vsel %vm4803, %v5952, %v6907
    %v7631 = vsel %vm4803, %v5953, %v6909
    %v7632 = vsel %vm4803, %v5954, %v6911
    %v7633 = vsel %vm4803, %v5955, %v6913
    %v7634 = vsel %vm4803, %v5956, %v6915
    %v7635 = vsel %vm4803, %v5957, %v6917
    %v7636 = vsel %vm4803, %v5958, %v6919
    %v7637 = vsel %vm4803, %v5959, %v6921
    %v7638 = vsel %vm4803, %v5960, %v6923
    %v7639 = vsel %vm4803, %v5961, %v6925
    %v7640 = vsel %vm4803, %v5962, %v6927
    %v7641 = vsel %vm4803, %v5963, %v6929
    %v7642 = vsel %vm4803, %v5964, %v6931
    %v7643 = vsel %vm4803, %v5965, %v6933
    %v7644 = vsel %vm4933, %v7580, %v7001
    %v7645 = vsel %vm4933, %v7581, %v7003
    %v7646 = vsel %vm4933, %v7582, %v7005
    %v7647 = vsel %vm4933, %v7583, %v7007
    %v7648 = vsel %vm4933, %v7584, %v7009
    %v7649 = vsel %vm4933, %v7585, %v7011
    %v7650 = vsel %vm4933, %v7586, %v7013
    %v7651 = vsel %vm4933, %v7587, %v7015
    %v7652 = vsel %vm4933, %v7588, %v7017
    %v7653 = vsel %vm4933, %v7589, %v7019
    %v7654 = vsel %vm4933, %v7590, %v7021
    %v7655 = vsel %vm4933, %v7591, %v7023
    %v7656 = vsel %vm4933, %v7592, %v7025
    %v7657 = vsel %vm4933, %v7593, %v7027
    %v7658 = vsel %vm4933, %v7594, %v7029
    %v7659 = vsel %vm4933, %v7595, %v7031
    %v7660 = vsel %vm4933, %v7596, %v7033
    %v7661 = vsel %vm4933, %v7597, %v7035
    %v7662 = vsel %vm4933, %v7598, %v7037
    %v7663 = vsel %vm4933, %v7599, %v7039
    %v7664 = vsel %vm4933, %v7600, %v7041
    %v7665 = vsel %vm4933, %v7601, %v7043
    %v7666 = vsel %vm4933, %v7602, %v7045
    %v7667 = vsel %vm4933, %v7603, %v7047
    %v7668 = vsel %vm4933, %v7604, %v7049
    %v7669 = vsel %vm4933, %v7605, %v7051
    %v7670 = vsel %vm4933, %v7606, %v7053
    %v7671 = vsel %vm4933, %v7607, %v7055
    %v7672 = vsel %vm4933, %v7608, %v7057
    %v7673 = vsel %vm4933, %v7609, %v7059
    %v7674 = vsel %vm4933, %v7610, %v7061
    %v7675 = vsel %vm4933, %v7611, %v7063
    %v7676 = vsel %vm4933, %v7612, %v7065
    %v7677 = vsel %vm4933, %v7613, %v7067
    %v7678 = vsel %vm4933, %v7614, %v7069
    %v7679 = vsel %vm4933, %v7615, %v7071
    %v7680 = vsel %vm4933, %v7616, %v7073
    %v7681 = vsel %vm4933, %v7617, %v7075
    %v7682 = vsel %vm4933, %v7618, %v7077
    %v7683 = vsel %vm4933, %v7619, %v7079
    %v7684 = vsel %vm4933, %v7620, %v7081
    %v7685 = vsel %vm4933, %v7621, %v7083
    %v7686 = vsel %vm4933, %v7622, %v7085
    %v7687 = vsel %vm4933, %v7623, %v7087
    %v7688 = vsel %vm4933, %v7624, %v7089
    %v7689 = vsel %vm4933, %v7625, %v7091
    %v7690 = vsel %vm4933, %v7626, %v7093
    %v7691 = vsel %vm4933, %v7627, %v7095
    %v7692 = vsel %vm4933, %v7628, %v7097
    %v7693 = vsel %vm4933, %v7629, %v7099
    %v7694 = vsel %vm4933, %v7630, %v7101
    %v7695 = vsel %vm4933, %v7631, %v7103
    %v7696 = vsel %vm4933, %v7632, %v7105
    %v7697 = vsel %vm4933, %v7633, %v7107
    %v7698 = vsel %vm4933, %v7634, %v7109
    %v7699 = vsel %vm4933, %v7635, %v7111
    %v7700 = vsel %vm4933, %v7636, %v7113
    %v7701 = vsel %vm4933, %v7637, %v7115
    %v7702 = vsel %vm4933, %v7638, %v7117
    %v7703 = vsel %vm4933, %v7639, %v7119
    %v7704 = vsel %vm4933, %v7640, %v7121
    %v7705 = vsel %vm4933, %v7641, %v7123
    %v7706 = vsel %vm4933, %v7642, %v7125
    %v7707 = vsel %vm4933, %v7643, %v7127
    %v7708 = vsel %vm5063, %v7644, %v7197
    %v7709 = vsel %vm5063, %v7645, %v7199
    %v7710 = vsel %vm5063, %v7646, %v7201
    %v7711 = vsel %vm5063, %v7647, %v7203
    %v7712 = vsel %vm5063, %v7648, %v7205
    %v7713 = vsel %vm5063, %v7649, %v7207
    %v7714 = vsel %vm5063, %v7650, %v7209
    %v7715 = vsel %vm5063, %v7651, %v7211
    %v7716 = vsel %vm5063, %v7652, %v7213
    %v7717 = vsel %vm5063, %v7653, %v7215
    %v7718 = vsel %vm5063, %v7654, %v7217
    %v7719 = vsel %vm5063, %v7655, %v7219
    %v7720 = vsel %vm5063, %v7656, %v7221
    %v7721 = vsel %vm5063, %v7657, %v7223
    %v7722 = vsel %vm5063, %v7658, %v7225
    %v7723 = vsel %vm5063, %v7659, %v7227
    %v7724 = vsel %vm5063, %v7660, %v7229
    %v7725 = vsel %vm5063, %v7661, %v7231
    %v7726 = vsel %vm5063, %v7662, %v7233
    %v7727 = vsel %vm5063, %v7663, %v7235
    %v7728 = vsel %vm5063, %v7664, %v7237
    %v7729 = vsel %vm5063, %v7665, %v7239
    %v7730 = vsel %vm5063, %v7666, %v7241
    %v7731 = vsel %vm5063, %v7667, %v7243
    %v7732 = vsel %vm5063, %v7668, %v7245
    %v7733 = vsel %vm5063, %v7669, %v7247
    %v7734 = vsel %vm5063, %v7670, %v7249
    %v7735 = vsel %vm5063, %v7671, %v7251
    %v7736 = vsel %vm5063, %v7672, %v7253
    %v7737 = vsel %vm5063, %v7673, %v7255
    %v7738 = vsel %vm5063, %v7674, %v7257
    %v7739 = vsel %vm5063, %v7675, %v7259
    %v7740 = vsel %vm5063, %v7676, %v7261
    %v7741 = vsel %vm5063, %v7677, %v7263
    %v7742 = vsel %vm5063, %v7678, %v7265
    %v7743 = vsel %vm5063, %v7679, %v7267
    %v7744 = vsel %vm5063, %v7680, %v7269
    %v7745 = vsel %vm5063, %v7681, %v7271
    %v7746 = vsel %vm5063, %v7682, %v7273
    %v7747 = vsel %vm5063, %v7683, %v7275
    %v7748 = vsel %vm5063, %v7684, %v7277
    %v7749 = vsel %vm5063, %v7685, %v7279
    %v7750 = vsel %vm5063, %v7686, %v7281
    %v7751 = vsel %vm5063, %v7687, %v7283
    %v7752 = vsel %vm5063, %v7688, %v7285
    %v7753 = vsel %vm5063, %v7689, %v7287
    %v7754 = vsel %vm5063, %v7690, %v7289
    %v7755 = vsel %vm5063, %v7691, %v7291
    %v7756 = vsel %vm5063, %v7692, %v7293
    %v7757 = vsel %vm5063, %v7693, %v7295
    %v7758 = vsel %vm5063, %v7694, %v7297
    %v7759 = vsel %vm5063, %v7695, %v7299
    %v7760 = vsel %vm5063, %v7696, %v7301
    %v7761 = vsel %vm5063, %v7697, %v7303
    %v7762 = vsel %vm5063, %v7698, %v7305
    %v7763 = vsel %vm5063, %v7699, %v7307
    %v7764 = vsel %vm5063, %v7700, %v7309
    %v7765 = vsel %vm5063, %v7701, %v7311
    %v7766 = vsel %vm5063, %v7702, %v7313
    %v7767 = vsel %vm5063, %v7703, %v7315
    %v7768 = vsel %vm5063, %v7704, %v7317
    %v7769 = vsel %vm5063, %v7705, %v7319
    %v7770 = vsel %vm5063, %v7706, %v7321
    %v7771 = vsel %vm5063, %v7707, %v7323
    %v7772 = vld [vmem:[%s5] sm:$0xff]
    %v7773 = vld [vmem:[%s5 + $0x8] sm:$0xff]
    %v7774 = vld [vmem:[%s5 + $0x10] sm:$0xff]
    %v7775 = vld [vmem:[%s5 + $0x18] sm:$0xff]
    %v7776 = vld [vmem:[%s5 + $0x20] sm:$0xff]
    %v7777 = vld [vmem:[%s5 + $0x28] sm:$0xff]
    %v7778 = vld [vmem:[%s5 + $0x30] sm:$0xff]
    %v7779 = vld [vmem:[%s5 + $0x38] sm:$0xff]
    %v7780 = vld [vmem:[%s5 + $0x40] sm:$0xff]
    %v7781 = vld [vmem:[%s5 + $0x48] sm:$0xff]
    %v7782 = vld [vmem:[%s5 + $0x50] sm:$0xff]
    %v7783 = vld [vmem:[%s5 + $0x58] sm:$0xff]
    %v7784 = vld [vmem:[%s5 + $0x60] sm:$0xff]
    %v7785 = vld [vmem:[%s5 + $0x68] sm:$0xff]
    %v7786 = vld [vmem:[%s5 + $0x70] sm:$0xff]
    %v7787 = vld [vmem:[%s5 + $0x78] sm:$0xff]
    %v7788 = vld [vmem:[%s5 + $0x80] sm:$0xff]
    %v7789 = vld [vmem:[%s5 + $0x88] sm:$0xff]
    %v7790 = vld [vmem:[%s5 + $0x90] sm:$0xff]
    %v7791 = vld [vmem:[%s5 + $0x98] sm:$0xff]
    %v7792 = vld [vmem:[%s5 + $0xa0] sm:$0xff]
    %v7793 = vld [vmem:[%s5 + $0xa8] sm:$0xff]
    %v7794 = vld [vmem:[%s5 + $0xb0] sm:$0xff]
    %v7795 = vld [vmem:[%s5 + $0xb8] sm:$0xff]
    %v7796 = vld [vmem:[%s5 + $0xc0] sm:$0xff]
    %v7797 = vld [vmem:[%s5 + $0xc8] sm:$0xff]
    %v7798 = vld [vmem:[%s5 + $0xd0] sm:$0xff]
    %v7799 = vld [vmem:[%s5 + $0xd8] sm:$0xff]
    %v7800 = vld [vmem:[%s5 + $0xe0] sm:$0xff]
    %v7801 = vld [vmem:[%s5 + $0xe8] sm:$0xff]
    %v7802 = vld [vmem:[%s5 + $0xf0] sm:$0xff]
    %v7803 = vld [vmem:[%s5 + $0xf8] sm:$0xff]
    %v7804 = vld [vmem:[%s5 + $0x100] sm:$0xff]
    %v7805 = vld [vmem:[%s5 + $0x108] sm:$0xff]
    %v7806 = vld [vmem:[%s5 + $0x110] sm:$0xff]
    %v7807 = vld [vmem:[%s5 + $0x118] sm:$0xff]
    %v7808 = vld [vmem:[%s6] sm:$0x1]
    %v7810 = vperm.slane %v7808, 0
    %v7812 = vsel %vm4803, %v5972, 0
    %v7814 = vsel %vm4803, %v5973, 0
    %v7816 = vsel %vm4803, %v5974, 0
    %v7818 = vsel %vm4803, %v5975, 0
    %v7820 = vsel %vm4803, %v5976, 0
    %v7822 = vsel %vm4803, %v5977, 0
    %v7824 = vsel %vm4803, %v5978, 0
    %v7826 = vsel %vm4803, %v5979, 0
    %v7828 = vsel %vm4803, %v5980, 0
    %v7830 = vsel %vm4803, %v5981, 0
    %v7832 = vsel %vm4803, %v5982, 0
    %v7834 = vsel %vm4803, %v5983, 0
    %v7836 = vsel %vm4803, %v5984, 0
    %v7838 = vsel %vm4803, %v5985, 0
    %v7840 = vsel %vm4803, %v5986, 0
    %v7842 = vsel %vm4803, %v5987, 0
    %v7844 = vsel %vm4803, %v5988, 0
    %v7846 = vsel %vm4803, %v5989, 0
    %v7848 = vsel %vm4803, %v5990, 0
    %v7850 = vsel %vm4803, %v5991, 0
    %v7852 = vsel %vm4803, %v5992, 0
    %v7854 = vsel %vm4803, %v5993, 0
    %v7856 = vsel %vm4803, %v5994, 0
    %v7858 = vsel %vm4803, %v5995, 0
    %v7860 = vsel %vm4803, %v5996, 0
    %v7862 = vsel %vm4803, %v5997, 0
    %v7864 = vsel %vm4803, %v5998, 0
    %v7866 = vsel %vm4803, %v5999, 0
    %v7868 = vsel %vm4803, %v6000, 0
    %v7870 = vsel %vm4803, %v6001, 0
    %v7872 = vsel %vm4803, %v6002, 0
    %v7874 = vsel %vm4803, %v6003, 0
    %v7876 = vsel %vm4803, %v6004, 0
    %v7878 = vsel %vm4803, %v6005, 0
    %v7880 = vsel %vm4803, %v6006, 0
    %v7882 = vsel %vm4803, %v6007, 0
    %v7884 = vsel %vm4803, %v6008, 0
    %v7886 = vsel %vm4803, %v6009, 0
    %v7888 = vsel %vm4803, %v6010, 0
    %v7890 = vsel %vm4803, %v6011, 0
    %v7892 = vsel %vm4803, %v6012, 0
    %v7894 = vsel %vm4803, %v6013, 0
    %v7896 = vsel %vm4803, %v6014, 0
    %v7898 = vsel %vm4803, %v6015, 0
    %v7900 = vsel %vm4803, %v6016, 0
    %v7902 = vsel %vm4803, %v6017, 0
    %v7904 = vsel %vm4803, %v6018, 0
    %v7906 = vsel %vm4803, %v6019, 0
    %v7908 = vsel %vm4803, %v6020, 0
    %v7910 = vsel %vm4803, %v6021, 0
    %v7912 = vsel %vm4803, %v6022, 0
    %v7914 = vsel %vm4803, %v6023, 0
    %v7916 = vsel %vm4803, %v6024, 0
    %v7918 = vsel %vm4803, %v6025, 0
    %v7920 = vsel %vm4803, %v6026, 0
    %v7922 = vsel %vm4803, %v6027, 0
    %v7924 = vsel %vm4803, %v6028, 0
    %v7926 = vsel %vm4803, %v6029, 0
    %v7928 = vsel %vm4803, %v6030, 0
    %v7930 = vsel %vm4803, %v6031, 0
    %v7932 = vsel %vm4803, %v6032, 0
    %v7934 = vsel %vm4803, %v6033, 0
    %v7937 = vsel %vm4803, %v6034, 0
    %v7940 = vsel %vm4803, %v6035, 0
    %7942 = vmatpush.msra.mxu0 %v7787
    %7943 = vmatpush.msra.mxu0 %v7786
    %7944 = vmatpush.msra.mxu0 %v7785
    %7945 = vmatpush.msra.mxu0 %v7784
    %7946 = vmatpush.msra.mxu0 %v7783
    %7947 = vmatpush.msra.mxu0 %v7782
    %7948 = vmatpush.msra.mxu0 %v7781
    %7949 = vmatpush.msra.mxu0 %v7780
    %7950 = vmatpush.msra.mxu0 %v7779
    %7951 = vmatpush.msra.mxu0 %v7778
    %7952 = vmatpush.msra.mxu0 %v7777
    %7953 = vmatpush.msra.mxu0 %v7776
    %7954 = vmatpush.msra.mxu0 %v7775
    %7955 = vmatpush.msra.mxu0 %v7774
    %7956 = vmatpush.msra.mxu0 %v7773
    %7957 = vmatpush.msra.mxu0 %v7772
    %7958 = vmatmul.f32.gmra.mxu0 %v7516
    %v7959 = vpop.f32.mrf.mxu0
    %v7960 = vadd.f32 %v7810, %v7959
    %7961 = vmatmul.f32.gmra.mxu0 %v7517
    %v7962 = vpop.f32.mrf.mxu0
    %v7963 = vadd.f32 %v7810, %v7962
    %7964 = vmatmul.f32.gmra.mxu0 %v7518
    %v7965 = vpop.f32.mrf.mxu0
    %v7966 = vadd.f32 %v7810, %v7965
    %7967 = vmatmul.f32.gmra.mxu0 %v7519
    %v7968 = vpop.f32.mrf.mxu0
    %v7969 = vadd.f32 %v7810, %v7968
    %7970 = vmatmul.f32.gmra.mxu0 %v7520
    %v7971 = vpop.f32.mrf.mxu0
    %v7972 = vadd.f32 %v7810, %v7971
    %7973 = vmatmul.f32.gmra.mxu0 %v7521
    %v7974 = vpop.f32.mrf.mxu0
    %v7975 = vadd.f32 %v7810, %v7974
    %7976 = vmatmul.f32.gmra.mxu0 %v7522
    %v7977 = vpop.f32.mrf.mxu0
    %v7978 = vadd.f32 %v7810, %v7977
    %7979 = vmatmul.f32.gmra.mxu0 %v7523
    %v7980 = vpop.f32.mrf.mxu0
    %v7981 = vadd.f32 %v7810, %v7980
    %7982 = vmatmul.f32.gmra.mxu0 %v7524
    %v7983 = vpop.f32.mrf.mxu0
    %v7984 = vadd.f32 %v7810, %v7983
    %7985 = vmatmul.f32.gmra.mxu0 %v7525
    %v7986 = vpop.f32.mrf.mxu0
    %v7987 = vadd.f32 %v7810, %v7986
    %7988 = vmatmul.f32.gmra.mxu0 %v7526
    %v7989 = vpop.f32.mrf.mxu0
    %v7990 = vadd.f32 %v7810, %v7989
    %7991 = vmatmul.f32.gmra.mxu0 %v7527
    %v7992 = vpop.f32.mrf.mxu0
    %v7993 = vadd.f32 %v7810, %v7992
    %7994 = vmatmul.f32.gmra.mxu0 %v7528
    %v7995 = vpop.f32.mrf.mxu0
    %v7996 = vadd.f32 %v7810, %v7995
    %7997 = vmatmul.f32.gmra.mxu0 %v7529
    %v7998 = vpop.f32.mrf.mxu0
    %v7999 = vadd.f32 %v7810, %v7998
    %8000 = vmatmul.f32.gmra.mxu0 %v7530
    %v8001 = vpop.f32.mrf.mxu0
    %v8002 = vadd.f32 %v7810, %v8001
    %8003 = vmatmul.f32.gmra.mxu0 %v7531
    %v8004 = vpop.f32.mrf.mxu0
    %v8005 = vadd.f32 %v7810, %v8004
    %8006 = vmatmul.f32.gmra.mxu0 %v7532
    %v8007 = vpop.f32.mrf.mxu0
    %v8008 = vadd.f32 %v7810, %v8007
    %8009 = vmatmul.f32.gmra.mxu0 %v7533
    %v8010 = vpop.f32.mrf.mxu0
    %v8011 = vadd.f32 %v7810, %v8010
    %8012 = vmatmul.f32.gmra.mxu0 %v7534
    %v8013 = vpop.f32.mrf.mxu0
    %v8014 = vadd.f32 %v7810, %v8013
    %8015 = vmatmul.f32.gmra.mxu0 %v7535
    %v8016 = vpop.f32.mrf.mxu0
    %v8017 = vadd.f32 %v7810, %v8016
    %8018 = vmatmul.f32.gmra.mxu0 %v7536
    %v8019 = vpop.f32.mrf.mxu0
    %v8020 = vadd.f32 %v7810, %v8019
    %8021 = vmatmul.f32.gmra.mxu0 %v7537
    %v8022 = vpop.f32.mrf.mxu0
    %v8023 = vadd.f32 %v7810, %v8022
    %8024 = vmatmul.f32.gmra.mxu0 %v7538
    %v8025 = vpop.f32.mrf.mxu0
    %v8026 = vadd.f32 %v7810, %v8025
    %8027 = vmatmul.f32.gmra.mxu0 %v7539
    %v8028 = vpop.f32.mrf.mxu0
    %v8029 = vadd.f32 %v7810, %v8028
    %8030 = vmatmul.f32.gmra.mxu0 %v7540
    %v8031 = vpop.f32.mrf.mxu0
    %v8032 = vadd.f32 %v7810, %v8031
    %8033 = vmatmul.f32.gmra.mxu0 %v7541
    %v8034 = vpop.f32.mrf.mxu0
    %v8035 = vadd.f32 %v7810, %v8034
    %8036 = vmatmul.f32.gmra.mxu0 %v7542
    %v8037 = vpop.f32.mrf.mxu0
    %v8038 = vadd.f32 %v7810, %v8037
    %8039 = vmatmul.f32.gmra.mxu0 %v7543
    %v8040 = vpop.f32.mrf.mxu0
    %v8041 = vadd.f32 %v7810, %v8040
    %8042 = vmatmul.f32.gmra.mxu0 %v7544
    %v8043 = vpop.f32.mrf.mxu0
    %v8044 = vadd.f32 %v7810, %v8043
    %8045 = vmatmul.f32.gmra.mxu0 %v7545
    %v8046 = vpop.f32.mrf.mxu0
    %v8047 = vadd.f32 %v7810, %v8046
    %8048 = vmatmul.f32.gmra.mxu0 %v7546
    %v8049 = vpop.f32.mrf.mxu0
    %v8050 = vadd.f32 %v7810, %v8049
    %8051 = vmatmul.f32.gmra.mxu0 %v7547
    %v8052 = vpop.f32.mrf.mxu0
    %v8053 = vadd.f32 %v7810, %v8052
    %8054 = vmatmul.f32.gmra.mxu0 %v7548
    %v8055 = vpop.f32.mrf.mxu0
    %v8056 = vadd.f32 %v7810, %v8055
    %8057 = vmatmul.f32.gmra.mxu0 %v7549
    %v8058 = vpop.f32.mrf.mxu0
    %v8059 = vadd.f32 %v7810, %v8058
    %8060 = vmatmul.f32.gmra.mxu0 %v7550
    %v8061 = vpop.f32.mrf.mxu0
    %v8062 = vadd.f32 %v7810, %v8061
    %8063 = vmatmul.f32.gmra.mxu0 %v7551
    %v8064 = vpop.f32.mrf.mxu0
    %v8065 = vadd.f32 %v7810, %v8064
    %8066 = vmatmul.f32.gmra.mxu0 %v7552
    %v8067 = vpop.f32.mrf.mxu0
    %v8068 = vadd.f32 %v7810, %v8067
    %8069 = vmatmul.f32.gmra.mxu0 %v7553
    %v8070 = vpop.f32.mrf.mxu0
    %v8071 = vadd.f32 %v7810, %v8070
    %8072 = vmatmul.f32.gmra.mxu0 %v7554
    %v8073 = vpop.f32.mrf.mxu0
    %v8074 = vadd.f32 %v7810, %v8073
    %8075 = vmatmul.f32.gmra.mxu0 %v7555
    %v8076 = vpop.f32.mrf.mxu0
    %v8077 = vadd.f32 %v7810, %v8076
    %8078 = vmatmul.f32.gmra.mxu0 %v7556
    %v8079 = vpop.f32.mrf.mxu0
    %v8080 = vadd.f32 %v7810, %v8079
    %8081 = vmatmul.f32.gmra.mxu0 %v7557
    %v8082 = vpop.f32.mrf.mxu0
    %v8083 = vadd.f32 %v7810, %v8082
    %8084 = vmatmul.f32.gmra.mxu0 %v7558
    %v8085 = vpop.f32.mrf.mxu0
    %v8086 = vadd.f32 %v7810, %v8085
    %8087 = vmatmul.f32.gmra.mxu0 %v7559
    %v8088 = vpop.f32.mrf.mxu0
    %v8089 = vadd.f32 %v7810, %v8088
    %8090 = vmatmul.f32.gmra.mxu0 %v7560
    %v8091 = vpop.f32.mrf.mxu0
    %v8092 = vadd.f32 %v7810, %v8091
    %8093 = vmatmul.f32.gmra.mxu0 %v7561
    %v8094 = vpop.f32.mrf.mxu0
    %v8095 = vadd.f32 %v7810, %v8094
    %8096 = vmatmul.f32.gmra.mxu0 %v7562
    %v8097 = vpop.f32.mrf.mxu0
    %v8098 = vadd.f32 %v7810, %v8097
    %8099 = vmatmul.f32.gmra.mxu0 %v7563
    %v8100 = vpop.f32.mrf.mxu0
    %v8101 = vadd.f32 %v7810, %v8100
    %8102 = vmatmul.f32.gmra.mxu0 %v7564
    %v8103 = vpop.f32.mrf.mxu0
    %v8104 = vadd.f32 %v7810, %v8103
    %8105 = vmatmul.f32.gmra.mxu0 %v7565
    %v8106 = vpop.f32.mrf.mxu0
    %v8107 = vadd.f32 %v7810, %v8106
    %8108 = vmatmul.f32.gmra.mxu0 %v7566
    %v8109 = vpop.f32.mrf.mxu0
    %v8110 = vadd.f32 %v7810, %v8109
    %8111 = vmatmul.f32.gmra.mxu0 %v7567
    %v8112 = vpop.f32.mrf.mxu0
    %v8113 = vadd.f32 %v7810, %v8112
    %8114 = vmatmul.f32.gmra.mxu0 %v7568
    %v8115 = vpop.f32.mrf.mxu0
    %v8116 = vadd.f32 %v7810, %v8115
    %8117 = vmatmul.f32.gmra.mxu0 %v7569
    %v8118 = vpop.f32.mrf.mxu0
    %v8119 = vadd.f32 %v7810, %v8118
    %8120 = vmatmul.f32.gmra.mxu0 %v7570
    %v8121 = vpop.f32.mrf.mxu0
    %v8122 = vadd.f32 %v7810, %v8121
    %8123 = vmatmul.f32.gmra.mxu0 %v7571
    %v8124 = vpop.f32.mrf.mxu0
    %v8125 = vadd.f32 %v7810, %v8124
    %8126 = vmatmul.f32.gmra.mxu0 %v7572
    %v8127 = vpop.f32.mrf.mxu0
    %v8128 = vadd.f32 %v7810, %v8127
    %8129 = vmatmul.f32.gmra.mxu0 %v7573
    %v8130 = vpop.f32.mrf.mxu0
    %v8131 = vadd.f32 %v7810, %v8130
    %8132 = vmatmul.f32.gmra.mxu0 %v7574
    %v8133 = vpop.f32.mrf.mxu0
    %v8134 = vadd.f32 %v7810, %v8133
    %8135 = vmatmul.f32.gmra.mxu0 %v7575
    %v8136 = vpop.f32.mrf.mxu0
    %v8137 = vadd.f32 %v7810, %v8136
    %8138 = vmatmul.f32.gmra.mxu0 %v7576
    %v8139 = vpop.f32.mrf.mxu0
    %v8140 = vadd.f32 %v7810, %v8139
    %8141 = vmatmul.f32.gmra.mxu0 %v7577
    %v8142 = vpop.f32.mrf.mxu0
    %v8143 = vadd.f32 %v7810, %v8142
    %8144 = vmatmul.f32.gmra.mxu0 %v7578
    %v8145 = vpop.f32.mrf.mxu0
    %v8146 = vadd.f32 %v7810, %v8145
    %8147 = vmatmul.f32.gmra.mxu0 %v7579
    %v8148 = vpop.f32.mrf.mxu0
    %v8149 = vadd.f32 %v7810, %v8148
    %8150 = vdwg.mxu0
    %8151 = vmatpush.msra.mxu0 %v7803
    %8152 = vmatpush.msra.mxu0 %v7802
    %8153 = vmatpush.msra.mxu0 %v7801
    %8154 = vmatpush.msra.mxu0 %v7800
    %8155 = vmatpush.msra.mxu0 %v7799
    %8156 = vmatpush.msra.mxu0 %v7798
    %8157 = vmatpush.msra.mxu0 %v7797
    %8158 = vmatpush.msra.mxu0 %v7796
    %8159 = vmatpush.msra.mxu0 %v7795
    %8160 = vmatpush.msra.mxu0 %v7794
    %8161 = vmatpush.msra.mxu0 %v7793
    %8162 = vmatpush.msra.mxu0 %v7792
    %8163 = vmatpush.msra.mxu0 %v7791
    %8164 = vmatpush.msra.mxu0 %v7790
    %8165 = vmatpush.msra.mxu0 %v7789
    %8166 = vmatpush.msra.mxu0 %v7788
    %8167 = vmatmul.f32.gmra.mxu0 %v7708
    %v8168 = vpop.f32.mrf.mxu0
    %v8169 = vadd.f32 %v7960, %v8168
    %8170 = vmatmul.f32.gmra.mxu0 %v7709
    %v8171 = vpop.f32.mrf.mxu0
    %v8172 = vadd.f32 %v7963, %v8171
    %8173 = vmatmul.f32.gmra.mxu0 %v7710
    %v8174 = vpop.f32.mrf.mxu0
    %v8175 = vadd.f32 %v7966, %v8174
    %8176 = vmatmul.f32.gmra.mxu0 %v7711
    %v8177 = vpop.f32.mrf.mxu0
    %v8178 = vadd.f32 %v7969, %v8177
    %8179 = vmatmul.f32.gmra.mxu0 %v7712
    %v8180 = vpop.f32.mrf.mxu0
    %v8181 = vadd.f32 %v7972, %v8180
    %8182 = vmatmul.f32.gmra.mxu0 %v7713
    %v8183 = vpop.f32.mrf.mxu0
    %v8184 = vadd.f32 %v7975, %v8183
    %8185 = vmatmul.f32.gmra.mxu0 %v7714
    %v8186 = vpop.f32.mrf.mxu0
    %v8187 = vadd.f32 %v7978, %v8186
    %8188 = vmatmul.f32.gmra.mxu0 %v7715
    %v8189 = vpop.f32.mrf.mxu0
    %v8190 = vadd.f32 %v7981, %v8189
    %8191 = vmatmul.f32.gmra.mxu0 %v7716
    %v8192 = vpop.f32.mrf.mxu0
    %v8193 = vadd.f32 %v7984, %v8192
    %8194 = vmatmul.f32.gmra.mxu0 %v7717
    %v8195 = vpop.f32.mrf.mxu0
    %v8196 = vadd.f32 %v7987, %v8195
    %8197 = vmatmul.f32.gmra.mxu0 %v7718
    %v8198 = vpop.f32.mrf.mxu0
    %v8199 = vadd.f32 %v7990, %v8198
    %8200 = vmatmul.f32.gmra.mxu0 %v7719
    %v8201 = vpop.f32.mrf.mxu0
    %v8202 = vadd.f32 %v7993, %v8201
    %8203 = vmatmul.f32.gmra.mxu0 %v7720
    %v8204 = vpop.f32.mrf.mxu0
    %v8205 = vadd.f32 %v7996, %v8204
    %8206 = vmatmul.f32.gmra.mxu0 %v7721
    %v8207 = vpop.f32.mrf.mxu0
    %v8208 = vadd.f32 %v7999, %v8207
    %8209 = vmatmul.f32.gmra.mxu0 %v7722
    %v8210 = vpop.f32.mrf.mxu0
    %v8211 = vadd.f32 %v8002, %v8210
    %8212 = vmatmul.f32.gmra.mxu0 %v7723
    %v8213 = vpop.f32.mrf.mxu0
    %v8214 = vadd.f32 %v8005, %v8213
    %8215 = vmatmul.f32.gmra.mxu0 %v7724
    %v8216 = vpop.f32.mrf.mxu0
    %v8217 = vadd.f32 %v8008, %v8216
    %8218 = vmatmul.f32.gmra.mxu0 %v7725
    %v8219 = vpop.f32.mrf.mxu0
    %v8220 = vadd.f32 %v8011, %v8219
    %8221 = vmatmul.f32.gmra.mxu0 %v7726
    %v8222 = vpop.f32.mrf.mxu0
    %v8223 = vadd.f32 %v8014, %v8222
    %8224 = vmatmul.f32.gmra.mxu0 %v7727
    %v8225 = vpop.f32.mrf.mxu0
    %v8226 = vadd.f32 %v8017, %v8225
    %8227 = vmatmul.f32.gmra.mxu0 %v7728
    %v8228 = vpop.f32.mrf.mxu0
    %v8229 = vadd.f32 %v8020, %v8228
    %8230 = vmatmul.f32.gmra.mxu0 %v7729
    %v8231 = vpop.f32.mrf.mxu0
    %v8232 = vadd.f32 %v8023, %v8231
    %8233 = vmatmul.f32.gmra.mxu0 %v7730
    %v8234 = vpop.f32.mrf.mxu0
    %v8235 = vadd.f32 %v8026, %v8234
    %8236 = vmatmul.f32.gmra.mxu0 %v7731
    %v8237 = vpop.f32.mrf.mxu0
    %v8238 = vadd.f32 %v8029, %v8237
    %8239 = vmatmul.f32.gmra.mxu0 %v7732
    %v8240 = vpop.f32.mrf.mxu0
    %v8241 = vadd.f32 %v8032, %v8240
    %8242 = vmatmul.f32.gmra.mxu0 %v7733
    %v8243 = vpop.f32.mrf.mxu0
    %v8244 = vadd.f32 %v8035, %v8243
    %8245 = vmatmul.f32.gmra.mxu0 %v7734
    %v8246 = vpop.f32.mrf.mxu0
    %v8247 = vadd.f32 %v8038, %v8246
    %8248 = vmatmul.f32.gmra.mxu0 %v7735
    %v8249 = vpop.f32.mrf.mxu0
    %v8250 = vadd.f32 %v8041, %v8249
    %8251 = vmatmul.f32.gmra.mxu0 %v7736
    %v8252 = vpop.f32.mrf.mxu0
    %v8253 = vadd.f32 %v8044, %v8252
    %8254 = vmatmul.f32.gmra.mxu0 %v7737
    %v8255 = vpop.f32.mrf.mxu0
    %v8256 = vadd.f32 %v8047, %v8255
    %8257 = vmatmul.f32.gmra.mxu0 %v7738
    %v8258 = vpop.f32.mrf.mxu0
    %v8259 = vadd.f32 %v8050, %v8258
    %8260 = vmatmul.f32.gmra.mxu0 %v7739
    %v8261 = vpop.f32.mrf.mxu0
    %v8262 = vadd.f32 %v8053, %v8261
    %8263 = vmatmul.f32.gmra.mxu0 %v7740
    %v8264 = vpop.f32.mrf.mxu0
    %v8265 = vadd.f32 %v8056, %v8264
    %8266 = vmatmul.f32.gmra.mxu0 %v7741
    %v8267 = vpop.f32.mrf.mxu0
    %v8268 = vadd.f32 %v8059, %v8267
    %8269 = vmatmul.f32.gmra.mxu0 %v7742
    %v8270 = vpop.f32.mrf.mxu0
    %v8271 = vadd.f32 %v8062, %v8270
    %8272 = vmatmul.f32.gmra.mxu0 %v7743
    %v8273 = vpop.f32.mrf.mxu0
    %v8274 = vadd.f32 %v8065, %v8273
    %8275 = vmatmul.f32.gmra.mxu0 %v7744
    %v8276 = vpop.f32.mrf.mxu0
    %v8277 = vadd.f32 %v8068, %v8276
    %8278 = vmatmul.f32.gmra.mxu0 %v7745
    %v8279 = vpop.f32.mrf.mxu0
    %v8280 = vadd.f32 %v8071, %v8279
    %8281 = vmatmul.f32.gmra.mxu0 %v7746
    %v8282 = vpop.f32.mrf.mxu0
    %v8283 = vadd.f32 %v8074, %v8282
    %8284 = vmatmul.f32.gmra.mxu0 %v7747
    %v8285 = vpop.f32.mrf.mxu0
    %v8286 = vadd.f32 %v8077, %v8285
    %8287 = vmatmul.f32.gmra.mxu0 %v7748
    %v8288 = vpop.f32.mrf.mxu0
    %v8289 = vadd.f32 %v8080, %v8288
    %8290 = vmatmul.f32.gmra.mxu0 %v7749
    %v8291 = vpop.f32.mrf.mxu0
    %v8292 = vadd.f32 %v8083, %v8291
    %8293 = vmatmul.f32.gmra.mxu0 %v7750
    %v8294 = vpop.f32.mrf.mxu0
    %v8295 = vadd.f32 %v8086, %v8294
    %8296 = vmatmul.f32.gmra.mxu0 %v7751
    %v8297 = vpop.f32.mrf.mxu0
    %v8298 = vadd.f32 %v8089, %v8297
    %8299 = vmatmul.f32.gmra.mxu0 %v7752
    %v8300 = vpop.f32.mrf.mxu0
    %v8301 = vadd.f32 %v8092, %v8300
    %8302 = vmatmul.f32.gmra.mxu0 %v7753
    %v8303 = vpop.f32.mrf.mxu0
    %v8304 = vadd.f32 %v8095, %v8303
    %8305 = vmatmul.f32.gmra.mxu0 %v7754
    %v8306 = vpop.f32.mrf.mxu0
    %v8307 = vadd.f32 %v8098, %v8306
    %8308 = vmatmul.f32.gmra.mxu0 %v7755
    %v8309 = vpop.f32.mrf.mxu0
    %v8310 = vadd.f32 %v8101, %v8309
    %8311 = vmatmul.f32.gmra.mxu0 %v7756
    %v8312 = vpop.f32.mrf.mxu0
    %v8313 = vadd.f32 %v8104, %v8312
    %8314 = vmatmul.f32.gmra.mxu0 %v7757
    %v8315 = vpop.f32.mrf.mxu0
    %v8316 = vadd.f32 %v8107, %v8315
    %8317 = vmatmul.f32.gmra.mxu0 %v7758
    %v8318 = vpop.f32.mrf.mxu0
    %v8319 = vadd.f32 %v8110, %v8318
    %8320 = vmatmul.f32.gmra.mxu0 %v7759
    %v8321 = vpop.f32.mrf.mxu0
    %v8322 = vadd.f32 %v8113, %v8321
    %8323 = vmatmul.f32.gmra.mxu0 %v7760
    %v8324 = vpop.f32.mrf.mxu0
    %v8325 = vadd.f32 %v8116, %v8324
    %8326 = vmatmul.f32.gmra.mxu0 %v7761
    %v8327 = vpop.f32.mrf.mxu0
    %v8328 = vadd.f32 %v8119, %v8327
    %8329 = vmatmul.f32.gmra.mxu0 %v7762
    %v8330 = vpop.f32.mrf.mxu0
    %v8331 = vadd.f32 %v8122, %v8330
    %8332 = vmatmul.f32.gmra.mxu0 %v7763
    %v8333 = vpop.f32.mrf.mxu0
    %v8334 = vadd.f32 %v8125, %v8333
    %8335 = vmatmul.f32.gmra.mxu0 %v7764
    %v8336 = vpop.f32.mrf.mxu0
    %v8337 = vadd.f32 %v8128, %v8336
    %8338 = vmatmul.f32.gmra.mxu0 %v7765
    %v8339 = vpop.f32.mrf.mxu0
    %v8340 = vadd.f32 %v8131, %v8339
    %8341 = vmatmul.f32.gmra.mxu0 %v7766
    %v8342 = vpop.f32.mrf.mxu0
    %v8343 = vadd.f32 %v8134, %v8342
    %8344 = vmatmul.f32.gmra.mxu0 %v7767
    %v8345 = vpop.f32.mrf.mxu0
    %v8346 = vadd.f32 %v8137, %v8345
    %8347 = vmatmul.f32.gmra.mxu0 %v7768
    %v8348 = vpop.f32.mrf.mxu0
    %v8349 = vadd.f32 %v8140, %v8348
    %8350 = vmatmul.f32.gmra.mxu0 %v7769
    %v8351 = vpop.f32.mrf.mxu0
    %v8352 = vadd.f32 %v8143, %v8351
    %8353 = vmatmul.f32.gmra.mxu0 %v7770
    %v8354 = vpop.f32.mrf.mxu0
    %v8355 = vadd.f32 %v8146, %v8354
    %8356 = vmatmul.f32.gmra.mxu0 %v7771
    %v8357 = vpop.f32.mrf.mxu0
    %v8358 = vadd.f32 %v8149, %v8357
    %8359 = vdwg.mxu0
    %8360 = vmatpush.msra.mxu0 0.0
    %8361 = vmatpush.msra.mxu0 0.0
    %8362 = vmatpush.msra.mxu0 0.0
    %8363 = vmatpush.msra.mxu0 0.0
    %8364 = vmatpush.msra.mxu0 0.0
    %8365 = vmatpush.msra.mxu0 0.0
    %8366 = vmatpush.msra.mxu0 0.0
    %8367 = vmatpush.msra.mxu0 0.0
    %8368 = vmatpush.msra.mxu0 0.0
    %8369 = vmatpush.msra.mxu0 0.0
    %8370 = vmatpush.msra.mxu0 0.0
    %8371 = vmatpush.msra.mxu0 0.0
    %8372 = vmatpush.msra.mxu0 %v7807
    %8373 = vmatpush.msra.mxu0 %v7806
    %8374 = vmatpush.msra.mxu0 %v7805
    %8375 = vmatpush.msra.mxu0 %v7804
    %8376 = vmatmul.f32.gmra.mxu0 %v7812
    %v8377 = vpop.f32.mrf.mxu0
    %v8378 = vadd.f32 %v8169, %v8377
    %8379 = vmatmul.f32.gmra.mxu0 %v7814
    %v8380 = vpop.f32.mrf.mxu0
    %v8381 = vadd.f32 %v8172, %v8380
    %8382 = vmatmul.f32.gmra.mxu0 %v7816
    %v8383 = vpop.f32.mrf.mxu0
    %v8384 = vadd.f32 %v8175, %v8383
    %8385 = vmatmul.f32.gmra.mxu0 %v7818
    %v8386 = vpop.f32.mrf.mxu0
    %v8387 = vadd.f32 %v8178, %v8386
    %8388 = vmatmul.f32.gmra.mxu0 %v7820
    %v8389 = vpop.f32.mrf.mxu0
    %v8390 = vadd.f32 %v8181, %v8389
    %8391 = vmatmul.f32.gmra.mxu0 %v7822
    %v8392 = vpop.f32.mrf.mxu0
    %v8393 = vadd.f32 %v8184, %v8392
    %8394 = vmatmul.f32.gmra.mxu0 %v7824
    %v8395 = vpop.f32.mrf.mxu0
    %v8396 = vadd.f32 %v8187, %v8395
    %8397 = vmatmul.f32.gmra.mxu0 %v7826
    %v8398 = vpop.f32.mrf.mxu0
    %v8399 = vadd.f32 %v8190, %v8398
    %8400 = vmatmul.f32.gmra.mxu0 %v7828
    %v8401 = vpop.f32.mrf.mxu0
    %v8402 = vadd.f32 %v8193, %v8401
    %8403 = vmatmul.f32.gmra.mxu0 %v7830
    %v8404 = vpop.f32.mrf.mxu0
    %v8405 = vadd.f32 %v8196, %v8404
    %8406 = vmatmul.f32.gmra.mxu0 %v7832
    %v8407 = vpop.f32.mrf.mxu0
    %v8408 = vadd.f32 %v8199, %v8407
    %8409 = vmatmul.f32.gmra.mxu0 %v7834
    %v8410 = vpop.f32.mrf.mxu0
    %v8411 = vadd.f32 %v8202, %v8410
    %8412 = vmatmul.f32.gmra.mxu0 %v7836
    %v8413 = vpop.f32.mrf.mxu0
    %v8414 = vadd.f32 %v8205, %v8413
    %8415 = vmatmul.f32.gmra.mxu0 %v7838
    %v8416 = vpop.f32.mrf.mxu0
    %v8417 = vadd.f32 %v8208, %v8416
    %8418 = vmatmul.f32.gmra.mxu0 %v7840
    %v8419 = vpop.f32.mrf.mxu0
    %v8420 = vadd.f32 %v8211, %v8419
    %8421 = vmatmul.f32.gmra.mxu0 %v7842
    %v8422 = vpop.f32.mrf.mxu0
    %v8423 = vadd.f32 %v8214, %v8422
    %8424 = vmatmul.f32.gmra.mxu0 %v7844
    %v8425 = vpop.f32.mrf.mxu0
    %v8426 = vadd.f32 %v8217, %v8425
    %8427 = vmatmul.f32.gmra.mxu0 %v7846
    %v8428 = vpop.f32.mrf.mxu0
    %v8429 = vadd.f32 %v8220, %v8428
    %8430 = vmatmul.f32.gmra.mxu0 %v7848
    %v8431 = vpop.f32.mrf.mxu0
    %v8432 = vadd.f32 %v8223, %v8431
    %8433 = vmatmul.f32.gmra.mxu0 %v7850
    %v8434 = vpop.f32.mrf.mxu0
    %v8435 = vadd.f32 %v8226, %v8434
    %8436 = vmatmul.f32.gmra.mxu0 %v7852
    %v8437 = vpop.f32.mrf.mxu0
    %v8438 = vadd.f32 %v8229, %v8437
    %8439 = vmatmul.f32.gmra.mxu0 %v7854
    %v8440 = vpop.f32.mrf.mxu0
    %v8441 = vadd.f32 %v8232, %v8440
    %8442 = vmatmul.f32.gmra.mxu0 %v7856
    %v8443 = vpop.f32.mrf.mxu0
    %v8444 = vadd.f32 %v8235, %v8443
    %8445 = vmatmul.f32.gmra.mxu0 %v7858
    %v8446 = vpop.f32.mrf.mxu0
    %v8447 = vadd.f32 %v8238, %v8446
    %8448 = vmatmul.f32.gmra.mxu0 %v7860
    %v8449 = vpop.f32.mrf.mxu0
    %v8450 = vadd.f32 %v8241, %v8449
    %8451 = vmatmul.f32.gmra.mxu0 %v7862
    %v8452 = vpop.f32.mrf.mxu0
    %v8453 = vadd.f32 %v8244, %v8452
    %8454 = vmatmul.f32.gmra.mxu0 %v7864
    %v8455 = vpop.f32.mrf.mxu0
    %v8456 = vadd.f32 %v8247, %v8455
    %8457 = vmatmul.f32.gmra.mxu0 %v7866
    %v8458 = vpop.f32.mrf.mxu0
    %v8459 = vadd.f32 %v8250, %v8458
    %8460 = vmatmul.f32.gmra.mxu0 %v7868
    %v8461 = vpop.f32.mrf.mxu0
    %v8462 = vadd.f32 %v8253, %v8461
    %8463 = vmatmul.f32.gmra.mxu0 %v7870
    %v8464 = vpop.f32.mrf.mxu0
    %v8465 = vadd.f32 %v8256, %v8464
    %8466 = vmatmul.f32.gmra.mxu0 %v7872
    %v8467 = vpop.f32.mrf.mxu0
    %v8468 = vadd.f32 %v8259, %v8467
    %8469 = vmatmul.f32.gmra.mxu0 %v7874
    %v8470 = vpop.f32.mrf.mxu0
    %v8471 = vadd.f32 %v8262, %v8470
    %8472 = vmatmul.f32.gmra.mxu0 %v7876
    %v8473 = vpop.f32.mrf.mxu0
    %v8474 = vadd.f32 %v8265, %v8473
    %8475 = vmatmul.f32.gmra.mxu0 %v7878
    %v8476 = vpop.f32.mrf.mxu0
    %v8477 = vadd.f32 %v8268, %v8476
    %8478 = vmatmul.f32.gmra.mxu0 %v7880
    %v8479 = vpop.f32.mrf.mxu0
    %v8480 = vadd.f32 %v8271, %v8479
    %8481 = vmatmul.f32.gmra.mxu0 %v7882
    %v8482 = vpop.f32.mrf.mxu0
    %v8483 = vadd.f32 %v8274, %v8482
    %8484 = vmatmul.f32.gmra.mxu0 %v7884
    %v8485 = vpop.f32.mrf.mxu0
    %v8486 = vadd.f32 %v8277, %v8485
    %8487 = vmatmul.f32.gmra.mxu0 %v7886
    %v8488 = vpop.f32.mrf.mxu0
    %v8489 = vadd.f32 %v8280, %v8488
    %8490 = vmatmul.f32.gmra.mxu0 %v7888
    %v8491 = vpop.f32.mrf.mxu0
    %v8492 = vadd.f32 %v8283, %v8491
    %8493 = vmatmul.f32.gmra.mxu0 %v7890
    %v8494 = vpop.f32.mrf.mxu0
    %v8495 = vadd.f32 %v8286, %v8494
    %8496 = vmatmul.f32.gmra.mxu0 %v7892
    %v8497 = vpop.f32.mrf.mxu0
    %v8498 = vadd.f32 %v8289, %v8497
    %8499 = vmatmul.f32.gmra.mxu0 %v7894
    %v8500 = vpop.f32.mrf.mxu0
    %v8501 = vadd.f32 %v8292, %v8500
    %8502 = vmatmul.f32.gmra.mxu0 %v7896
    %v8503 = vpop.f32.mrf.mxu0
    %v8504 = vadd.f32 %v8295, %v8503
    %8505 = vmatmul.f32.gmra.mxu0 %v7898
    %v8506 = vpop.f32.mrf.mxu0
    %v8507 = vadd.f32 %v8298, %v8506
    %8508 = vmatmul.f32.gmra.mxu0 %v7900
    %v8509 = vpop.f32.mrf.mxu0
    %v8510 = vadd.f32 %v8301, %v8509
    %8511 = vmatmul.f32.gmra.mxu0 %v7902
    %v8512 = vpop.f32.mrf.mxu0
    %v8513 = vadd.f32 %v8304, %v8512
    %8514 = vmatmul.f32.gmra.mxu0 %v7904
    %v8515 = vpop.f32.mrf.mxu0
    %v8516 = vadd.f32 %v8307, %v8515
    %8517 = vmatmul.f32.gmra.mxu0 %v7906
    %v8518 = vpop.f32.mrf.mxu0
    %v8519 = vadd.f32 %v8310, %v8518
    %8520 = vmatmul.f32.gmra.mxu0 %v7908
    %v8521 = vpop.f32.mrf.mxu0
    %v8522 = vadd.f32 %v8313, %v8521
    %8523 = vmatmul.f32.gmra.mxu0 %v7910
    %v8524 = vpop.f32.mrf.mxu0
    %v8525 = vadd.f32 %v8316, %v8524
    %8526 = vmatmul.f32.gmra.mxu0 %v7912
    %v8527 = vpop.f32.mrf.mxu0
    %v8528 = vadd.f32 %v8319, %v8527
    %8529 = vmatmul.f32.gmra.mxu0 %v7914
    %v8530 = vpop.f32.mrf.mxu0
    %v8531 = vadd.f32 %v8322, %v8530
    %8532 = vmatmul.f32.gmra.mxu0 %v7916
    %v8533 = vpop.f32.mrf.mxu0
    %v8534 = vadd.f32 %v8325, %v8533
    %8535 = vmatmul.f32.gmra.mxu0 %v7918
    %v8536 = vpop.f32.mrf.mxu0
    %v8537 = vadd.f32 %v8328, %v8536
    %8538 = vmatmul.f32.gmra.mxu0 %v7920
    %v8539 = vpop.f32.mrf.mxu0
    %v8540 = vadd.f32 %v8331, %v8539
    %8541 = vmatmul.f32.gmra.mxu0 %v7922
    %v8542 = vpop.f32.mrf.mxu0
    %v8543 = vadd.f32 %v8334, %v8542
    %8544 = vmatmul.f32.gmra.mxu0 %v7924
    %v8545 = vpop.f32.mrf.mxu0
    %v8546 = vadd.f32 %v8337, %v8545
    %8547 = vmatmul.f32.gmra.mxu0 %v7926
    %v8548 = vpop.f32.mrf.mxu0
    %v8549 = vadd.f32 %v8340, %v8548
    %8550 = vmatmul.f32.gmra.mxu0 %v7928
    %v8551 = vpop.f32.mrf.mxu0
    %v8552 = vadd.f32 %v8343, %v8551
    %8553 = vmatmul.f32.gmra.mxu0 %v7930
    %v8554 = vpop.f32.mrf.mxu0
    %v8555 = vadd.f32 %v8346, %v8554
    %8556 = vmatmul.f32.gmra.mxu0 %v7932
    %v8557 = vpop.f32.mrf.mxu0
    %v8558 = vadd.f32 %v8349, %v8557
    %8559 = vmatmul.f32.gmra.mxu0 %v7934
    %v8560 = vpop.f32.mrf.mxu0
    %v8561 = vadd.f32 %v8352, %v8560
    %8562 = vmatmul.f32.gmra.mxu0 %v7937
    %v8563 = vpop.f32.mrf.mxu0
    %v8564 = vadd.f32 %v8355, %v8563
    %8565 = vmatmul.f32.gmra.mxu0 %v7940
    %v8566 = vpop.f32.mrf.mxu0
    %v8567 = vadd.f32 %v8358, %v8566
    %8568 = vdwg.mxu0
    %v8569 = vlaneseq
    %v8570 = vshrl.u32 %v8569, 7
    %v8571 = vadd.s32 %v8570, 8
    %v8572 = vadd.s32 %v8570, 16
    %v8573 = vadd.s32 %v8570, 24
    %v8574 = vadd.s32 %v8570, 32
    %v8575 = vadd.s32 %v8570, 40
    %v8576 = vadd.s32 %v8570, 48
    %v8577 = vadd.s32 %v8570, 56
    %v8578 = vadd.s32 %v8570, 64
    %v8579 = vadd.s32 %v8570, 72
    %v8580 = vadd.s32 %v8570, 80
    %v8581 = vadd.s32 %v8570, 88
    %v8582 = vadd.s32 %v8570, 96
    %v8583 = vadd.s32 %v8570, 104
    %v8584 = vadd.s32 %v8570, 112
    %v8585 = vadd.s32 %v8570, 120
    %v8586 = vadd.s32 %v8570, 128
    %v8587 = vadd.s32 %v8570, 136
    %v8588 = vadd.s32 %v8570, 144
    %v8589 = vadd.s32 %v8570, 152
    %v8590 = vadd.s32 %v8570, 160
    %v8591 = vadd.s32 %v8570, 168
    %v8592 = vadd.s32 %v8570, 176
    %v8593 = vadd.s32 %v8570, 184
    %v8594 = vadd.s32 %v8570, 192
    %v8595 = vadd.s32 %v8570, 200
    %v8596 = vadd.s32 %v8570, 208
    %v8597 = vadd.s32 %v8570, 216
    %v8598 = vadd.s32 %v8570, 224
    %v8599 = vadd.s32 %v8570, 232
    %v8600 = vadd.s32 %v8570, 240
    %v8601 = vadd.s32 %v8570, 248
    %v8602 = vadd.s32 %v8570, 256
    %v8603 = vadd.s32 %v8570, 264
    %v8604 = vadd.s32 %v8570, 272
    %v8605 = vadd.s32 %v8570, 280
    %v8606 = vadd.s32 %v8570, 288
    %v8607 = vadd.s32 %v8570, 296
    %v8608 = vadd.s32 %v8570, 304
    %v8609 = vadd.s32 %v8570, 312
    %v8610 = vadd.s32 %v8570, 320
    %v8611 = vadd.s32 %v8570, 328
    %v8612 = vadd.s32 %v8570, 336
    %v8613 = vadd.s32 %v8570, 344
    %v8614 = vadd.s32 %v8570, 352
    %v8615 = vadd.s32 %v8570, 360
    %v8616 = vadd.s32 %v8570, 368
    %v8617 = vadd.s32 %v8570, 376
    %v8618 = vadd.s32 %v8570, 384
    %v8619 = vadd.s32 %v8570, 392
    %v8620 = vadd.s32 %v8570, 400
    %v8621 = vadd.s32 %v8570, 408
    %v8622 = vadd.s32 %v8570, 416
    %v8623 = vadd.s32 %v8570, 424
    %v8624 = vadd.s32 %v8570, 432
    %v8625 = vadd.s32 %v8570, 440
    %v8626 = vadd.s32 %v8570, 448
    %v8627 = vadd.s32 %v8570, 456
    %v8628 = vadd.s32 %v8570, 464
    %v8629 = vadd.s32 %v8570, 472
    %v8630 = vadd.s32 %v8570, 480
    %v8631 = vadd.s32 %v8570, 488
    %v8632 = vadd.s32 %v8570, 496
    %v8633 = vadd.s32 %v8570, 504
    %v8634 = vand.u32 %v8570, 255
    %v8635 = vand.u32 %v8571, 255
    %v8636 = vand.u32 %v8572, 255
    %v8637 = vand.u32 %v8573, 255
    %v8638 = vand.u32 %v8574, 255
    %v8639 = vand.u32 %v8575, 255
    %v8640 = vand.u32 %v8576, 255
    %v8641 = vand.u32 %v8577, 255
    %v8642 = vand.u32 %v8578, 255
    %v8643 = vand.u32 %v8579, 255
    %v8644 = vand.u32 %v8580, 255
    %v8645 = vand.u32 %v8581, 255
    %v8646 = vand.u32 %v8582, 255
    %v8647 = vand.u32 %v8583, 255
    %v8648 = vand.u32 %v8584, 255
    %v8649 = vand.u32 %v8585, 255
    %v8650 = vand.u32 %v8586, 255
    %v8651 = vand.u32 %v8587, 255
    %v8652 = vand.u32 %v8588, 255
    %v8653 = vand.u32 %v8589, 255
    %v8654 = vand.u32 %v8590, 255
    %v8655 = vand.u32 %v8591, 255
    %v8656 = vand.u32 %v8592, 255
    %v8657 = vand.u32 %v8593, 255
    %v8658 = vand.u32 %v8594, 255
    %v8659 = vand.u32 %v8595, 255
    %v8660 = vand.u32 %v8596, 255
    %v8661 = vand.u32 %v8597, 255
    %v8662 = vand.u32 %v8598, 255
    %v8663 = vand.u32 %v8599, 255
    %v8664 = vand.u32 %v8600, 255
    %v8665 = vand.u32 %v8601, 255
    %v8666 = vand.u32 %v8602, 255
    %v8667 = vand.u32 %v8603, 255
    %v8668 = vand.u32 %v8604, 255
    %v8669 = vand.u32 %v8605, 255
    %v8670 = vand.u32 %v8606, 255
    %v8671 = vand.u32 %v8607, 255
    %v8672 = vand.u32 %v8608, 255
    %v8673 = vand.u32 %v8609, 255
    %v8674 = vand.u32 %v8610, 255
    %v8675 = vand.u32 %v8611, 255
    %v8676 = vand.u32 %v8612, 255
    %v8677 = vand.u32 %v8613, 255
    %v8678 = vand.u32 %v8614, 255
    %v8679 = vand.u32 %v8615, 255
    %v8680 = vand.u32 %v8616, 255
    %v8681 = vand.u32 %v8617, 255
    %v8682 = vand.u32 %v8618, 255
    %v8683 = vand.u32 %v8619, 255
    %v8684 = vand.u32 %v8620, 255
    %v8685 = vand.u32 %v8621, 255
    %v8686 = vand.u32 %v8622, 255
    %v8687 = vand.u32 %v8623, 255
    %v8688 = vand.u32 %v8624, 255
    %v8689 = vand.u32 %v8625, 255
    %v8690 = vand.u32 %v8626, 255
    %v8691 = vand.u32 %v8627, 255
    %v8692 = vand.u32 %v8628, 255
    %v8693 = vand.u32 %v8629, 255
    %v8694 = vand.u32 %v8630, 255
    %v8695 = vand.u32 %v8631, 255
    %v8696 = vand.u32 %v8632, 255
    %v8697 = vand.u32 %v8633, 255
    %v8698 = vshra.s32 %v8634, 4
    %v8699 = vshra.s32 %v8635, 4
    %v8700 = vshra.s32 %v8636, 4
    %v8701 = vshra.s32 %v8637, 4
    %v8702 = vshra.s32 %v8638, 4
    %v8703 = vshra.s32 %v8639, 4
    %v8704 = vshra.s32 %v8640, 4
    %v8705 = vshra.s32 %v8641, 4
    %v8706 = vshra.s32 %v8642, 4
    %v8707 = vshra.s32 %v8643, 4
    %v8708 = vshra.s32 %v8644, 4
    %v8709 = vshra.s32 %v8645, 4
    %v8710 = vshra.s32 %v8646, 4
    %v8711 = vshra.s32 %v8647, 4
    %v8712 = vshra.s32 %v8648, 4
    %v8713 = vshra.s32 %v8649, 4
    %v8714 = vshra.s32 %v8650, 4
    %v8715 = vshra.s32 %v8651, 4
    %v8716 = vshra.s32 %v8652, 4
    %v8717 = vshra.s32 %v8653, 4
    %v8718 = vshra.s32 %v8654, 4
    %v8719 = vshra.s32 %v8655, 4
    %v8720 = vshra.s32 %v8656, 4
    %v8721 = vshra.s32 %v8657, 4
    %v8722 = vshra.s32 %v8658, 4
    %v8723 = vshra.s32 %v8659, 4
    %v8724 = vshra.s32 %v8660, 4
    %v8725 = vshra.s32 %v8661, 4
    %v8726 = vshra.s32 %v8662, 4
    %v8727 = vshra.s32 %v8663, 4
    %v8728 = vshra.s32 %v8664, 4
    %v8729 = vshra.s32 %v8665, 4
    %v8730 = vshra.s32 %v8666, 4
    %v8731 = vshra.s32 %v8667, 4
    %v8732 = vshra.s32 %v8668, 4
    %v8733 = vshra.s32 %v8669, 4
    %v8734 = vshra.s32 %v8670, 4
    %v8735 = vshra.s32 %v8671, 4
    %v8736 = vshra.s32 %v8672, 4
    %v8737 = vshra.s32 %v8673, 4
    %v8738 = vshra.s32 %v8674, 4
    %v8739 = vshra.s32 %v8675, 4
    %v8740 = vshra.s32 %v8676, 4
    %v8741 = vshra.s32 %v8677, 4
    %v8742 = vshra.s32 %v8678, 4
    %v8743 = vshra.s32 %v8679, 4
    %v8744 = vshra.s32 %v8680, 4
    %v8745 = vshra.s32 %v8681, 4
    %v8746 = vshra.s32 %v8682, 4
    %v8747 = vshra.s32 %v8683, 4
    %v8748 = vshra.s32 %v8684, 4
    %v8749 = vshra.s32 %v8685, 4
    %v8750 = vshra.s32 %v8686, 4
    %v8751 = vshra.s32 %v8687, 4
    %v8752 = vshra.s32 %v8688, 4
    %v8753 = vshra.s32 %v8689, 4
    %v8754 = vshra.s32 %v8690, 4
    %v8755 = vshra.s32 %v8691, 4
    %v8756 = vshra.s32 %v8692, 4
    %v8757 = vshra.s32 %v8693, 4
    %v8758 = vshra.s32 %v8694, 4
    %v8759 = vshra.s32 %v8695, 4
    %v8760 = vshra.s32 %v8696, 4
    %v8761 = vshra.s32 %v8697, 4
    %v8762 = vand.u32 %v8634, 15
    %v8763 = vand.u32 %v8635, 15
    %v8764 = vand.u32 %v8636, 15
    %v8765 = vand.u32 %v8637, 15
    %v8766 = vand.u32 %v8638, 15
    %v8767 = vand.u32 %v8639, 15
    %v8768 = vand.u32 %v8640, 15
    %v8769 = vand.u32 %v8641, 15
    %v8770 = vand.u32 %v8642, 15
    %v8771 = vand.u32 %v8643, 15
    %v8772 = vand.u32 %v8644, 15
    %v8773 = vand.u32 %v8645, 15
    %v8774 = vand.u32 %v8646, 15
    %v8775 = vand.u32 %v8647, 15
    %v8776 = vand.u32 %v8648, 15
    %v8777 = vand.u32 %v8649, 15
    %v8778 = vand.u32 %v8650, 15
    %v8779 = vand.u32 %v8651, 15
    %v8780 = vand.u32 %v8652, 15
    %v8781 = vand.u32 %v8653, 15
    %v8782 = vand.u32 %v8654, 15
    %v8783 = vand.u32 %v8655, 15
    %v8784 = vand.u32 %v8656, 15
    %v8785 = vand.u32 %v8657, 15
    %v8786 = vand.u32 %v8658, 15
    %v8787 = vand.u32 %v8659, 15
    %v8788 = vand.u32 %v8660, 15
    %v8789 = vand.u32 %v8661, 15
    %v8790 = vand.u32 %v8662, 15
    %v8791 = vand.u32 %v8663, 15
    %v8792 = vand.u32 %v8664, 15
    %v8793 = vand.u32 %v8665, 15
    %v8794 = vand.u32 %v8666, 15
    %v8795 = vand.u32 %v8667, 15
    %v8796 = vand.u32 %v8668, 15
    %v8797 = vand.u32 %v8669, 15
    %v8798 = vand.u32 %v8670, 15
    %v8799 = vand.u32 %v8671, 15
    %v8800 = vand.u32 %v8672, 15
    %v8801 = vand.u32 %v8673, 15
    %v8802 = vand.u32 %v8674, 15
    %v8803 = vand.u32 %v8675, 15
    %v8804 = vand.u32 %v8676, 15
    %v8805 = vand.u32 %v8677, 15
    %v8806 = vand.u32 %v8678, 15
    %v8807 = vand.u32 %v8679, 15
    %v8808 = vand.u32 %v8680, 15
    %v8809 = vand.u32 %v8681, 15
    %v8810 = vand.u32 %v8682, 15
    %v8811 = vand.u32 %v8683, 15
    %v8812 = vand.u32 %v8684, 15
    %v8813 = vand.u32 %v8685, 15
    %v8814 = vand.u32 %v8686, 15
    %v8815 = vand.u32 %v8687, 15
    %v8816 = vand.u32 %v8688, 15
    %v8817 = vand.u32 %v8689, 15
    %v8818 = vand.u32 %v8690, 15
    %v8819 = vand.u32 %v8691, 15
    %v8820 = vand.u32 %v8692, 15
    %v8821 = vand.u32 %v8693, 15
    %v8822 = vand.u32 %v8694, 15
    %v8823 = vand.u32 %v8695, 15
    %v8824 = vand.u32 %v8696, 15
    %v8825 = vand.u32 %v8697, 15
    %vm8826 = vcmp.lt.s32.totalorder %v8698, 10
    %vm8827 = vcmp.lt.s32.totalorder %v8699, 10
    %vm8828 = vcmp.lt.s32.totalorder %v8700, 10
    %vm8829 = vcmp.lt.s32.totalorder %v8701, 10
    %vm8830 = vcmp.lt.s32.totalorder %v8702, 10
    %vm8831 = vcmp.lt.s32.totalorder %v8703, 10
    %vm8832 = vcmp.lt.s32.totalorder %v8704, 10
    %vm8833 = vcmp.lt.s32.totalorder %v8705, 10
    %vm8834 = vcmp.lt.s32.totalorder %v8706, 10
    %vm8835 = vcmp.lt.s32.totalorder %v8707, 10
    %vm8836 = vcmp.lt.s32.totalorder %v8708, 10
    %vm8837 = vcmp.lt.s32.totalorder %v8709, 10
    %vm8838 = vcmp.lt.s32.totalorder %v8710, 10
    %vm8839 = vcmp.lt.s32.totalorder %v8711, 10
    %vm8840 = vcmp.lt.s32.totalorder %v8712, 10
    %vm8841 = vcmp.lt.s32.totalorder %v8713, 10
    %vm8842 = vcmp.lt.s32.totalorder %v8714, 10
    %vm8843 = vcmp.lt.s32.totalorder %v8715, 10
    %vm8844 = vcmp.lt.s32.totalorder %v8716, 10
    %vm8845 = vcmp.lt.s32.totalorder %v8717, 10
    %vm8846 = vcmp.lt.s32.totalorder %v8718, 10
    %vm8847 = vcmp.lt.s32.totalorder %v8719, 10
    %vm8848 = vcmp.lt.s32.totalorder %v8720, 10
    %vm8849 = vcmp.lt.s32.totalorder %v8721, 10
    %vm8850 = vcmp.lt.s32.totalorder %v8722, 10
    %vm8851 = vcmp.lt.s32.totalorder %v8723, 10
    %vm8852 = vcmp.lt.s32.totalorder %v8724, 10
    %vm8853 = vcmp.lt.s32.totalorder %v8725, 10
    %vm8854 = vcmp.lt.s32.totalorder %v8726, 10
    %vm8855 = vcmp.lt.s32.totalorder %v8727, 10
    %vm8856 = vcmp.lt.s32.totalorder %v8728, 10
    %vm8857 = vcmp.lt.s32.totalorder %v8729, 10
    %vm8858 = vcmp.lt.s32.totalorder %v8730, 10
    %vm8859 = vcmp.lt.s32.totalorder %v8731, 10
    %vm8860 = vcmp.lt.s32.totalorder %v8732, 10
    %vm8861 = vcmp.lt.s32.totalorder %v8733, 10
    %vm8862 = vcmp.lt.s32.totalorder %v8734, 10
    %vm8863 = vcmp.lt.s32.totalorder %v8735, 10
    %vm8864 = vcmp.lt.s32.totalorder %v8736, 10
    %vm8865 = vcmp.lt.s32.totalorder %v8737, 10
    %vm8866 = vcmp.lt.s32.totalorder %v8738, 10
    %vm8867 = vcmp.lt.s32.totalorder %v8739, 10
    %vm8868 = vcmp.lt.s32.totalorder %v8740, 10
    %vm8869 = vcmp.lt.s32.totalorder %v8741, 10
    %vm8870 = vcmp.lt.s32.totalorder %v8742, 10
    %vm8871 = vcmp.lt.s32.totalorder %v8743, 10
    %vm8872 = vcmp.lt.s32.totalorder %v8744, 10
    %vm8873 = vcmp.lt.s32.totalorder %v8745, 10
    %vm8874 = vcmp.lt.s32.totalorder %v8746, 10
    %vm8875 = vcmp.lt.s32.totalorder %v8747, 10
    %vm8876 = vcmp.lt.s32.totalorder %v8748, 10
    %vm8877 = vcmp.lt.s32.totalorder %v8749, 10
    %vm8878 = vcmp.lt.s32.totalorder %v8750, 10
    %vm8879 = vcmp.lt.s32.totalorder %v8751, 10
    %vm8880 = vcmp.lt.s32.totalorder %v8752, 10
    %vm8881 = vcmp.lt.s32.totalorder %v8753, 10
    %vm8882 = vcmp.lt.s32.totalorder %v8754, 10
    %vm8883 = vcmp.lt.s32.totalorder %v8755, 10
    %vm8884 = vcmp.lt.s32.totalorder %v8756, 10
    %vm8885 = vcmp.lt.s32.totalorder %v8757, 10
    %vm8886 = vcmp.lt.s32.totalorder %v8758, 10
    %vm8887 = vcmp.lt.s32.totalorder %v8759, 10
    %vm8888 = vcmp.lt.s32.totalorder %v8760, 10
    %vm8889 = vcmp.lt.s32.totalorder %v8761, 10
    %vm8890 = vcmp.lt.s32.totalorder %v8762, 10
    %vm8891 = vcmp.lt.s32.totalorder %v8763, 10
    %vm8892 = vcmp.lt.s32.totalorder %v8764, 10
    %vm8893 = vcmp.lt.s32.totalorder %v8765, 10
    %vm8894 = vcmp.lt.s32.totalorder %v8766, 10
    %vm8895 = vcmp.lt.s32.totalorder %v8767, 10
    %vm8896 = vcmp.lt.s32.totalorder %v8768, 10
    %vm8897 = vcmp.lt.s32.totalorder %v8769, 10
    %vm8898 = vcmp.lt.s32.totalorder %v8770, 10
    %vm8899 = vcmp.lt.s32.totalorder %v8771, 10
    %vm8900 = vcmp.lt.s32.totalorder %v8772, 10
    %vm8901 = vcmp.lt.s32.totalorder %v8773, 10
    %vm8902 = vcmp.lt.s32.totalorder %v8774, 10
    %vm8903 = vcmp.lt.s32.totalorder %v8775, 10
    %vm8904 = vcmp.lt.s32.totalorder %v8776, 10
    %vm8905 = vcmp.lt.s32.totalorder %v8777, 10
    %vm8906 = vcmp.lt.s32.totalorder %v8778, 10
    %vm8907 = vcmp.lt.s32.totalorder %v8779, 10
    %vm8908 = vcmp.lt.s32.totalorder %v8780, 10
    %vm8909 = vcmp.lt.s32.totalorder %v8781, 10
    %vm8910 = vcmp.lt.s32.totalorder %v8782, 10
    %vm8911 = vcmp.lt.s32.totalorder %v8783, 10
    %vm8912 = vcmp.lt.s32.totalorder %v8784, 10
    %vm8913 = vcmp.lt.s32.totalorder %v8785, 10
    %vm8914 = vcmp.lt.s32.totalorder %v8786, 10
    %vm8915 = vcmp.lt.s32.totalorder %v8787, 10
    %vm8916 = vcmp.lt.s32.totalorder %v8788, 10
    %vm8917 = vcmp.lt.s32.totalorder %v8789, 10
    %vm8918 = vcmp.lt.s32.totalorder %v8790, 10
    %vm8919 = vcmp.lt.s32.totalorder %v8791, 10
    %vm8920 = vcmp.lt.s32.totalorder %v8792, 10
    %vm8921 = vcmp.lt.s32.totalorder %v8793, 10
    %vm8922 = vcmp.lt.s32.totalorder %v8794, 10
    %vm8923 = vcmp.lt.s32.totalorder %v8795, 10
    %vm8924 = vcmp.lt.s32.totalorder %v8796, 10
    %vm8925 = vcmp.lt.s32.totalorder %v8797, 10
    %vm8926 = vcmp.lt.s32.totalorder %v8798, 10
    %vm8927 = vcmp.lt.s32.totalorder %v8799, 10
    %vm8928 = vcmp.lt.s32.totalorder %v8800, 10
    %vm8929 = vcmp.lt.s32.totalorder %v8801, 10
    %vm8930 = vcmp.lt.s32.totalorder %v8802, 10
    %vm8931 = vcmp.lt.s32.totalorder %v8803, 10
    %vm8932 = vcmp.lt.s32.totalorder %v8804, 10
    %vm8933 = vcmp.lt.s32.totalorder %v8805, 10
    %vm8934 = vcmp.lt.s32.totalorder %v8806, 10
    %vm8935 = vcmp.lt.s32.totalorder %v8807, 10
    %vm8936 = vcmp.lt.s32.totalorder %v8808, 10
    %vm8937 = vcmp.lt.s32.totalorder %v8809, 10
    %vm8938 = vcmp.lt.s32.totalorder %v8810, 10
    %vm8939 = vcmp.lt.s32.totalorder %v8811, 10
    %vm8940 = vcmp.lt.s32.totalorder %v8812, 10
    %vm8941 = vcmp.lt.s32.totalorder %v8813, 10
    %vm8942 = vcmp.lt.s32.totalorder %v8814, 10
    %vm8943 = vcmp.lt.s32.totalorder %v8815, 10
    %vm8944 = vcmp.lt.s32.totalorder %v8816, 10
    %vm8945 = vcmp.lt.s32.totalorder %v8817, 10
    %vm8946 = vcmp.lt.s32.totalorder %v8818, 10
    %vm8947 = vcmp.lt.s32.totalorder %v8819, 10
    %vm8948 = vcmp.lt.s32.totalorder %v8820, 10
    %vm8949 = vcmp.lt.s32.totalorder %v8821, 10
    %vm8950 = vcmp.lt.s32.totalorder %v8822, 10
    %vm8951 = vcmp.lt.s32.totalorder %v8823, 10
    %vm8952 = vcmp.lt.s32.totalorder %v8824, 10
    %vm8953 = vcmp.lt.s32.totalorder %v8825, 10
    %vm8954 = vmand %vm8826, %vm8890
    %vm8955 = vmand %vm8827, %vm8891
    %vm8956 = vmand %vm8828, %vm8892
    %vm8957 = vmand %vm8829, %vm8893
    %vm8958 = vmand %vm8830, %vm8894
    %vm8959 = vmand %vm8831, %vm8895
    %vm8960 = vmand %vm8832, %vm8896
    %vm8961 = vmand %vm8833, %vm8897
    %vm8962 = vmand %vm8834, %vm8898
    %vm8963 = vmand %vm8835, %vm8899
    %vm8964 = vmand %vm8836, %vm8900
    %vm8965 = vmand %vm8837, %vm8901
    %vm8966 = vmand %vm8838, %vm8902
    %vm8967 = vmand %vm8839, %vm8903
    %vm8968 = vmand %vm8840, %vm8904
    %vm8969 = vmand %vm8841, %vm8905
    %vm8970 = vmand %vm8842, %vm8906
    %vm8971 = vmand %vm8843, %vm8907
    %vm8972 = vmand %vm8844, %vm8908
    %vm8973 = vmand %vm8845, %vm8909
    %vm8974 = vmand %vm8846, %vm8910
    %vm8975 = vmand %vm8847, %vm8911
    %vm8976 = vmand %vm8848, %vm8912
    %vm8977 = vmand %vm8849, %vm8913
    %vm8978 = vmand %vm8850, %vm8914
    %vm8979 = vmand %vm8851, %vm8915
    %vm8980 = vmand %vm8852, %vm8916
    %vm8981 = vmand %vm8853, %vm8917
    %vm8982 = vmand %vm8854, %vm8918
    %vm8983 = vmand %vm8855, %vm8919
    %vm8984 = vmand %vm8856, %vm8920
    %vm8985 = vmand %vm8857, %vm8921
    %vm8986 = vmand %vm8858, %vm8922
    %vm8987 = vmand %vm8859, %vm8923
    %vm8988 = vmand %vm8860, %vm8924
    %vm8989 = vmand %vm8861, %vm8925
    %vm8990 = vmand %vm8862, %vm8926
    %vm8991 = vmand %vm8863, %vm8927
    %vm8992 = vmand %vm8864, %vm8928
    %vm8993 = vmand %vm8865, %vm8929
    %vm8994 = vmand %vm8866, %vm8930
    %vm8995 = vmand %vm8867, %vm8931
    %vm8996 = vmand %vm8868, %vm8932
    %vm8997 = vmand %vm8869, %vm8933
    %vm8998 = vmand %vm8870, %vm8934
    %vm8999 = vmand %vm8871, %vm8935
    %vm9000 = vmand %vm8872, %vm8936
    %vm9001 = vmand %vm8873, %vm8937
    %vm9002 = vmand %vm8874, %vm8938
    %vm9003 = vmand %vm8875, %vm8939
    %vm9004 = vmand %vm8876, %vm8940
    %vm9005 = vmand %vm8877, %vm8941
    %vm9006 = vmand %vm8878, %vm8942
    %vm9007 = vmand %vm8879, %vm8943
    %vm9008 = vmand %vm8880, %vm8944
    %vm9009 = vmand %vm8881, %vm8945
    %vm9010 = vmand %vm8882, %vm8946
    %vm9011 = vmand %vm8883, %vm8947
    %vm9012 = vmand %vm8884, %vm8948
    %vm9013 = vmand %vm8885, %vm8949
    %vm9014 = vmand %vm8886, %vm8950
    %vm9015 = vmand %vm8887, %vm8951
    %vm9016 = vmand %vm8888, %vm8952
    %vm9017 = vmand %vm8889, %vm8953
    %v9018 = vsel %vm8954, 1, 0
    %v9019 = vsel %vm8955, 1, 0
    %v9020 = vsel %vm8956, 1, 0
    %v9021 = vsel %vm8957, 1, 0
    %v9022 = vsel %vm8958, 1, 0
    %v9023 = vsel %vm8959, 1, 0
    %v9024 = vsel %vm8960, 1, 0
    %v9025 = vsel %vm8961, 1, 0
    %v9026 = vsel %vm8962, 1, 0
    %v9027 = vsel %vm8963, 1, 0
    %v9028 = vsel %vm8964, 1, 0
    %v9029 = vsel %vm8965, 1, 0
    %v9030 = vsel %vm8966, 1, 0
    %v9031 = vsel %vm8967, 1, 0
    %v9032 = vsel %vm8968, 1, 0
    %v9033 = vsel %vm8969, 1, 0
    %v9034 = vsel %vm8970, 1, 0
    %v9035 = vsel %vm8971, 1, 0
    %v9036 = vsel %vm8972, 1, 0
    %v9037 = vsel %vm8973, 1, 0
    %v9038 = vsel %vm8974, 1, 0
    %v9039 = vsel %vm8975, 1, 0
    %v9040 = vsel %vm8976, 1, 0
    %v9041 = vsel %vm8977, 1, 0
    %v9042 = vsel %vm8978, 1, 0
    %v9043 = vsel %vm8979, 1, 0
    %v9044 = vsel %vm8980, 1, 0
    %v9045 = vsel %vm8981, 1, 0
    %v9046 = vsel %vm8982, 1, 0
    %v9047 = vsel %vm8983, 1, 0
    %v9048 = vsel %vm8984, 1, 0
    %v9049 = vsel %vm8985, 1, 0
    %v9050 = vsel %vm8986, 1, 0
    %v9051 = vsel %vm8987, 1, 0
    %v9052 = vsel %vm8988, 1, 0
    %v9053 = vsel %vm8989, 1, 0
    %v9054 = vsel %vm8990, 1, 0
    %v9055 = vsel %vm8991, 1, 0
    %v9056 = vsel %vm8992, 1, 0
    %v9057 = vsel %vm8993, 1, 0
    %v9058 = vsel %vm8994, 1, 0
    %v9059 = vsel %vm8995, 1, 0
    %v9060 = vsel %vm8996, 1, 0
    %v9061 = vsel %vm8997, 1, 0
    %v9062 = vsel %vm8998, 1, 0
    %v9063 = vsel %vm8999, 1, 0
    %v9064 = vsel %vm9000, 1, 0
    %v9065 = vsel %vm9001, 1, 0
    %v9066 = vsel %vm9002, 1, 0
    %v9067 = vsel %vm9003, 1, 0
    %v9068 = vsel %vm9004, 1, 0
    %v9069 = vsel %vm9005, 1, 0
    %v9070 = vsel %vm9006, 1, 0
    %v9071 = vsel %vm9007, 1, 0
    %v9072 = vsel %vm9008, 1, 0
    %v9073 = vsel %vm9009, 1, 0
    %v9074 = vsel %vm9010, 1, 0
    %v9075 = vsel %vm9011, 1, 0
    %v9076 = vsel %vm9012, 1, 0
    %v9077 = vsel %vm9013, 1, 0
    %v9078 = vsel %vm9014, 1, 0
    %v9079 = vsel %vm9015, 1, 0
    %v9080 = vsel %vm9016, 1, 0
    %v9081 = vsel %vm9017, 1, 0
    %vm9082 = vcmp.eq.s32.totalorder %v9018, 1
    %vm9083 = vcmp.eq.s32.totalorder %v9019, 1
    %vm9084 = vcmp.eq.s32.totalorder %v9020, 1
    %vm9085 = vcmp.eq.s32.totalorder %v9021, 1
    %vm9086 = vcmp.eq.s32.totalorder %v9022, 1
    %vm9087 = vcmp.eq.s32.totalorder %v9023, 1
    %vm9088 = vcmp.eq.s32.totalorder %v9024, 1
    %vm9089 = vcmp.eq.s32.totalorder %v9025, 1
    %vm9090 = vcmp.eq.s32.totalorder %v9026, 1
    %vm9091 = vcmp.eq.s32.totalorder %v9027, 1
    %vm9092 = vcmp.eq.s32.totalorder %v9028, 1
    %vm9093 = vcmp.eq.s32.totalorder %v9029, 1
    %vm9094 = vcmp.eq.s32.totalorder %v9030, 1
    %vm9095 = vcmp.eq.s32.totalorder %v9031, 1
    %vm9096 = vcmp.eq.s32.totalorder %v9032, 1
    %vm9097 = vcmp.eq.s32.totalorder %v9033, 1
    %vm9098 = vcmp.eq.s32.totalorder %v9034, 1
    %vm9099 = vcmp.eq.s32.totalorder %v9035, 1
    %vm9100 = vcmp.eq.s32.totalorder %v9036, 1
    %vm9101 = vcmp.eq.s32.totalorder %v9037, 1
    %vm9102 = vcmp.eq.s32.totalorder %v9038, 1
    %vm9103 = vcmp.eq.s32.totalorder %v9039, 1
    %vm9104 = vcmp.eq.s32.totalorder %v9040, 1
    %vm9105 = vcmp.eq.s32.totalorder %v9041, 1
    %vm9106 = vcmp.eq.s32.totalorder %v9042, 1
    %vm9107 = vcmp.eq.s32.totalorder %v9043, 1
    %vm9108 = vcmp.eq.s32.totalorder %v9044, 1
    %vm9109 = vcmp.eq.s32.totalorder %v9045, 1
    %vm9110 = vcmp.eq.s32.totalorder %v9046, 1
    %vm9111 = vcmp.eq.s32.totalorder %v9047, 1
    %vm9112 = vcmp.eq.s32.totalorder %v9048, 1
    %vm9113 = vcmp.eq.s32.totalorder %v9049, 1
    %vm9114 = vcmp.eq.s32.totalorder %v9050, 1
    %vm9115 = vcmp.eq.s32.totalorder %v9051, 1
    %vm9116 = vcmp.eq.s32.totalorder %v9052, 1
    %vm9117 = vcmp.eq.s32.totalorder %v9053, 1
    %vm9118 = vcmp.eq.s32.totalorder %v9054, 1
    %vm9119 = vcmp.eq.s32.totalorder %v9055, 1
    %vm9120 = vcmp.eq.s32.totalorder %v9056, 1
    %vm9121 = vcmp.eq.s32.totalorder %v9057, 1
    %vm9122 = vcmp.eq.s32.totalorder %v9058, 1
    %vm9123 = vcmp.eq.s32.totalorder %v9059, 1
    %vm9124 = vcmp.eq.s32.totalorder %v9060, 1
    %vm9125 = vcmp.eq.s32.totalorder %v9061, 1
    %vm9126 = vcmp.eq.s32.totalorder %v9062, 1
    %vm9127 = vcmp.eq.s32.totalorder %v9063, 1
    %vm9128 = vcmp.eq.s32.totalorder %v9064, 1
    %vm9129 = vcmp.eq.s32.totalorder %v9065, 1
    %vm9130 = vcmp.eq.s32.totalorder %v9066, 1
    %vm9131 = vcmp.eq.s32.totalorder %v9067, 1
    %vm9132 = vcmp.eq.s32.totalorder %v9068, 1
    %vm9133 = vcmp.eq.s32.totalorder %v9069, 1
    %vm9134 = vcmp.eq.s32.totalorder %v9070, 1
    %vm9135 = vcmp.eq.s32.totalorder %v9071, 1
    %vm9136 = vcmp.eq.s32.totalorder %v9072, 1
    %vm9137 = vcmp.eq.s32.totalorder %v9073, 1
    %vm9138 = vcmp.eq.s32.totalorder %v9074, 1
    %vm9139 = vcmp.eq.s32.totalorder %v9075, 1
    %vm9140 = vcmp.eq.s32.totalorder %v9076, 1
    %vm9141 = vcmp.eq.s32.totalorder %v9077, 1
    %vm9142 = vcmp.eq.s32.totalorder %v9078, 1
    %vm9143 = vcmp.eq.s32.totalorder %v9079, 1
    %vm9144 = vcmp.eq.s32.totalorder %v9080, 1
    %vm9145 = vcmp.eq.s32.totalorder %v9081, 1
    %v9146 = vsel %vm9082, %v8378, 0.0
    %v9147 = vsel %vm9083, %v8381, 0.0
    %v9148 = vsel %vm9084, %v8384, 0.0
    %v9149 = vsel %vm9085, %v8387, 0.0
    %v9150 = vsel %vm9086, %v8390, 0.0
    %v9151 = vsel %vm9087, %v8393, 0.0
    %v9152 = vsel %vm9088, %v8396, 0.0
    %v9153 = vsel %vm9089, %v8399, 0.0
    %v9154 = vsel %vm9090, %v8402, 0.0
    %v9155 = vsel %vm9091, %v8405, 0.0
    %v9156 = vsel %vm9092, %v8408, 0.0
    %v9157 = vsel %vm9093, %v8411, 0.0
    %v9158 = vsel %vm9094, %v8414, 0.0
    %v9159 = vsel %vm9095, %v8417, 0.0
    %v9160 = vsel %vm9096, %v8420, 0.0
    %v9161 = vsel %vm9097, %v8423, 0.0
    %v9162 = vsel %vm9098, %v8426, 0.0
    %v9163 = vsel %vm9099, %v8429, 0.0
    %v9164 = vsel %vm9100, %v8432, 0.0
    %v9165 = vsel %vm9101, %v8435, 0.0
    %v9166 = vsel %vm9102, %v8438, 0.0
    %v9167 = vsel %vm9103, %v8441, 0.0
    %v9168 = vsel %vm9104, %v8444, 0.0
    %v9169 = vsel %vm9105, %v8447, 0.0
    %v9170 = vsel %vm9106, %v8450, 0.0
    %v9171 = vsel %vm9107, %v8453, 0.0
    %v9172 = vsel %vm9108, %v8456, 0.0
    %v9173 = vsel %vm9109, %v8459, 0.0
    %v9174 = vsel %vm9110, %v8462, 0.0
    %v9175 = vsel %vm9111, %v8465, 0.0
    %v9176 = vsel %vm9112, %v8468, 0.0
    %v9177 = vsel %vm9113, %v8471, 0.0
    %v9178 = vsel %vm9114, %v8474, 0.0
    %v9179 = vsel %vm9115, %v8477, 0.0
    %v9180 = vsel %vm9116, %v8480, 0.0
    %v9181 = vsel %vm9117, %v8483, 0.0
    %v9182 = vsel %vm9118, %v8486, 0.0
    %v9183 = vsel %vm9119, %v8489, 0.0
    %v9184 = vsel %vm9120, %v8492, 0.0
    %v9185 = vsel %vm9121, %v8495, 0.0
    %v9186 = vsel %vm9122, %v8498, 0.0
    %v9187 = vsel %vm9123, %v8501, 0.0
    %v9188 = vsel %vm9124, %v8504, 0.0
    %v9189 = vsel %vm9125, %v8507, 0.0
    %v9190 = vsel %vm9126, %v8510, 0.0
    %v9191 = vsel %vm9127, %v8513, 0.0
    %v9192 = vsel %vm9128, %v8516, 0.0
    %v9193 = vsel %vm9129, %v8519, 0.0
    %v9194 = vsel %vm9130, %v8522, 0.0
    %v9195 = vsel %vm9131, %v8525, 0.0
    %v9196 = vsel %vm9132, %v8528, 0.0
    %v9197 = vsel %vm9133, %v8531, 0.0
    %v9198 = vsel %vm9134, %v8534, 0.0
    %v9199 = vsel %vm9135, %v8537, 0.0
    %v9200 = vsel %vm9136, %v8540, 0.0
    %v9201 = vsel %vm9137, %v8543, 0.0
    %v9202 = vsel %vm9138, %v8546, 0.0
    %v9203 = vsel %vm9139, %v8549, 0.0
    %v9204 = vsel %vm9140, %v8552, 0.0
    %v9205 = vsel %vm9141, %v8555, 0.0
    %v9206 = vsel %vm9142, %v8558, 0.0
    %v9207 = vsel %vm9143, %v8561, 0.0
    %v9208 = vsel %vm9144, %v8564, 0.0
    %v9209 = vsel %vm9145, %v8567, 0.0
    %v9210 = vmul.f32 %v9146, 0.01
    %v9211 = vmul.f32 %v9147, 0.01
    %v9212 = vmul.f32 %v9148, 0.01
    %v9213 = vmul.f32 %v9149, 0.01
    %v9214 = vmul.f32 %v9150, 0.01
    %v9215 = vmul.f32 %v9151, 0.01
    %v9216 = vmul.f32 %v9152, 0.01
    %v9217 = vmul.f32 %v9153, 0.01
    %v9218 = vmul.f32 %v9154, 0.01
    %v9219 = vmul.f32 %v9155, 0.01
    %v9220 = vmul.f32 %v9156, 0.01
    %v9221 = vmul.f32 %v9157, 0.01
    %v9222 = vmul.f32 %v9158, 0.01
    %v9223 = vmul.f32 %v9159, 0.01
    %v9224 = vmul.f32 %v9160, 0.01
    %v9225 = vmul.f32 %v9161, 0.01
    %v9226 = vmul.f32 %v9162, 0.01
    %v9227 = vmul.f32 %v9163, 0.01
    %v9228 = vmul.f32 %v9164, 0.01
    %v9229 = vmul.f32 %v9165, 0.01
    %v9230 = vmul.f32 %v9166, 0.01
    %v9231 = vmul.f32 %v9167, 0.01
    %v9232 = vmul.f32 %v9168, 0.01
    %v9233 = vmul.f32 %v9169, 0.01
    %v9234 = vmul.f32 %v9170, 0.01
    %v9235 = vmul.f32 %v9171, 0.01
    %v9236 = vmul.f32 %v9172, 0.01
    %v9237 = vmul.f32 %v9173, 0.01
    %v9238 = vmul.f32 %v9174, 0.01
    %v9239 = vmul.f32 %v9175, 0.01
    %v9240 = vmul.f32 %v9176, 0.01
    %v9241 = vmul.f32 %v9177, 0.01
    %v9242 = vmul.f32 %v9178, 0.01
    %v9243 = vmul.f32 %v9179, 0.01
    %v9244 = vmul.f32 %v9180, 0.01
    %v9245 = vmul.f32 %v9181, 0.01
    %v9246 = vmul.f32 %v9182, 0.01
    %v9247 = vmul.f32 %v9183, 0.01
    %v9248 = vmul.f32 %v9184, 0.01
    %v9249 = vmul.f32 %v9185, 0.01
    %v9250 = vmul.f32 %v9186, 0.01
    %v9251 = vmul.f32 %v9187, 0.01
    %v9252 = vmul.f32 %v9188, 0.01
    %v9253 = vmul.f32 %v9189, 0.01
    %v9254 = vmul.f32 %v9190, 0.01
    %v9255 = vmul.f32 %v9191, 0.01
    %v9256 = vmul.f32 %v9192, 0.01
    %v9257 = vmul.f32 %v9193, 0.01
    %v9258 = vmul.f32 %v9194, 0.01
    %v9259 = vmul.f32 %v9195, 0.01
    %v9260 = vmul.f32 %v9196, 0.01
    %v9261 = vmul.f32 %v9197, 0.01
    %v9262 = vmul.f32 %v9198, 0.01
    %v9263 = vmul.f32 %v9199, 0.01
    %v9264 = vmul.f32 %v9200, 0.01
    %v9265 = vmul.f32 %v9201, 0.01
    %v9266 = vmul.f32 %v9202, 0.01
    %v9267 = vmul.f32 %v9203, 0.01
    %v9268 = vmul.f32 %v9204, 0.01
    %v9269 = vmul.f32 %v9205, 0.01
    %v9270 = vmul.f32 %v9206, 0.01
    %v9271 = vmul.f32 %v9207, 0.01
    %v9272 = vmul.f32 %v9208, 0.01
    %v9273 = vmul.f32 %v9209, 0.01
    %v9274 = vsel %vm4868, %v9210, 0.0
    %v9275 = vsel %vm4868, %v9211, 0.0
    %v9276 = vadd.f32 %v9274, %v9275
    %v9277 = vsel %vm4868, %v9212, 0.0
    %v9278 = vadd.f32 %v9276, %v9277
    %v9279 = vsel %vm4868, %v9213, 0.0
    %v9280 = vadd.f32 %v9278, %v9279
    %v9281 = vsel %vm4868, %v9214, 0.0
    %v9282 = vadd.f32 %v9280, %v9281
    %v9283 = vsel %vm4868, %v9215, 0.0
    %v9284 = vadd.f32 %v9282, %v9283
    %v9285 = vsel %vm4868, %v9216, 0.0
    %v9286 = vadd.f32 %v9284, %v9285
    %v9287 = vsel %vm4868, %v9217, 0.0
    %v9288 = vadd.f32 %v9286, %v9287
    %v9289 = vsel %vm4868, %v9218, 0.0
    %v9290 = vadd.f32 %v9288, %v9289
    %v9291 = vsel %vm4868, %v9219, 0.0
    %v9292 = vadd.f32 %v9290, %v9291
    %v9293 = vsel %vm4868, %v9220, 0.0
    %v9294 = vadd.f32 %v9292, %v9293
    %v9295 = vsel %vm4868, %v9221, 0.0
    %v9296 = vadd.f32 %v9294, %v9295
    %v9297 = vsel %vm4868, %v9222, 0.0
    %v9298 = vadd.f32 %v9296, %v9297
    %v9299 = vsel %vm4868, %v9223, 0.0
    %v9300 = vadd.f32 %v9298, %v9299
    %v9301 = vsel %vm4868, %v9224, 0.0
    %v9302 = vadd.f32 %v9300, %v9301
    %v9303 = vsel %vm4868, %v9225, 0.0
    %v9304 = vadd.f32 %v9302, %v9303
    %v9305 = vsel %vm4868, %v9226, 0.0
    %v9306 = vadd.f32 %v9304, %v9305
    %v9307 = vsel %vm4868, %v9227, 0.0
    %v9308 = vadd.f32 %v9306, %v9307
    %v9309 = vsel %vm4868, %v9228, 0.0
    %v9310 = vadd.f32 %v9308, %v9309
    %v9311 = vsel %vm4868, %v9229, 0.0
    %v9312 = vadd.f32 %v9310, %v9311
    %v9313 = vsel %vm4868, %v9230, 0.0
    %v9314 = vadd.f32 %v9312, %v9313
    %v9315 = vsel %vm4868, %v9231, 0.0
    %v9316 = vadd.f32 %v9314, %v9315
    %v9317 = vsel %vm4868, %v9232, 0.0
    %v9318 = vadd.f32 %v9316, %v9317
    %v9319 = vsel %vm4868, %v9233, 0.0
    %v9320 = vadd.f32 %v9318, %v9319
    %v9321 = vsel %vm4868, %v9234, 0.0
    %v9322 = vadd.f32 %v9320, %v9321
    %v9323 = vsel %vm4868, %v9235, 0.0
    %v9324 = vadd.f32 %v9322, %v9323
    %v9325 = vsel %vm4868, %v9236, 0.0
    %v9326 = vadd.f32 %v9324, %v9325
    %v9327 = vsel %vm4868, %v9237, 0.0
    %v9328 = vadd.f32 %v9326, %v9327
    %v9329 = vsel %vm4868, %v9238, 0.0
    %v9330 = vadd.f32 %v9328, %v9329
    %v9331 = vsel %vm4868, %v9239, 0.0
    %v9332 = vadd.f32 %v9330, %v9331
    %v9333 = vsel %vm4868, %v9240, 0.0
    %v9334 = vadd.f32 %v9332, %v9333
    %v9335 = vsel %vm4868, %v9241, 0.0
    %v9336 = vadd.f32 %v9334, %v9335
    %v9337 = vrot.slane %v9336, 4
    %v9338 = vadd.f32 %v9336, %v9337
    %v9339 = vrot.slane %v9338, 2
    %v9340 = vadd.f32 %v9338, %v9339
    %v9341 = vrot.slane %v9340, 1
    %v9342 = vadd.f32 %v9340, %v9341
    %v9343 = vsel %vm4868, %v9242, 0.0
    %v9344 = vsel %vm4868, %v9243, 0.0
    %v9345 = vadd.f32 %v9343, %v9344
    %v9346 = vsel %vm4868, %v9244, 0.0
    %v9347 = vadd.f32 %v9345, %v9346
    %v9348 = vsel %vm4868, %v9245, 0.0
    %v9349 = vadd.f32 %v9347, %v9348
    %v9350 = vsel %vm4868, %v9246, 0.0
    %v9351 = vadd.f32 %v9349, %v9350
    %v9352 = vsel %vm4868, %v9247, 0.0
    %v9353 = vadd.f32 %v9351, %v9352
    %v9354 = vsel %vm4868, %v9248, 0.0
    %v9355 = vadd.f32 %v9353, %v9354
    %v9356 = vsel %vm4868, %v9249, 0.0
    %v9357 = vadd.f32 %v9355, %v9356
    %v9358 = vsel %vm4868, %v9250, 0.0
    %v9359 = vadd.f32 %v9357, %v9358
    %v9360 = vsel %vm4868, %v9251, 0.0
    %v9361 = vadd.f32 %v9359, %v9360
    %v9362 = vsel %vm4868, %v9252, 0.0
    %v9363 = vadd.f32 %v9361, %v9362
    %v9364 = vsel %vm4868, %v9253, 0.0
    %v9365 = vadd.f32 %v9363, %v9364
    %v9366 = vsel %vm4868, %v9254, 0.0
    %v9367 = vadd.f32 %v9365, %v9366
    %v9368 = vsel %vm4868, %v9255, 0.0
    %v9369 = vadd.f32 %v9367, %v9368
    %v9370 = vsel %vm4868, %v9256, 0.0
    %v9371 = vadd.f32 %v9369, %v9370
    %v9372 = vsel %vm4868, %v9257, 0.0
    %v9373 = vadd.f32 %v9371, %v9372
    %v9374 = vsel %vm4868, %v9258, 0.0
    %v9375 = vadd.f32 %v9373, %v9374
    %v9376 = vsel %vm4868, %v9259, 0.0
    %v9377 = vadd.f32 %v9375, %v9376
    %v9378 = vsel %vm4868, %v9260, 0.0
    %v9379 = vadd.f32 %v9377, %v9378
    %v9380 = vsel %vm4868, %v9261, 0.0
    %v9381 = vadd.f32 %v9379, %v9380
    %v9382 = vsel %vm4868, %v9262, 0.0
    %v9383 = vadd.f32 %v9381, %v9382
    %v9384 = vsel %vm4868, %v9263, 0.0
    %v9385 = vadd.f32 %v9383, %v9384
    %v9386 = vsel %vm4868, %v9264, 0.0
    %v9387 = vadd.f32 %v9385, %v9386
    %v9388 = vsel %vm4868, %v9265, 0.0
    %v9389 = vadd.f32 %v9387, %v9388
    %v9390 = vsel %vm4868, %v9266, 0.0
    %v9391 = vadd.f32 %v9389, %v9390
    %v9392 = vsel %vm4868, %v9267, 0.0
    %v9393 = vadd.f32 %v9391, %v9392
    %v9394 = vsel %vm4868, %v9268, 0.0
    %v9395 = vadd.f32 %v9393, %v9394
    %v9396 = vsel %vm4868, %v9269, 0.0
    %v9397 = vadd.f32 %v9395, %v9396
    %v9398 = vsel %vm4868, %v9270, 0.0
    %v9399 = vadd.f32 %v9397, %v9398
    %v9400 = vsel %vm4868, %v9271, 0.0
    %v9401 = vadd.f32 %v9399, %v9400
    %v9402 = vsel %vm4868, %v9272, 0.0
    %v9403 = vadd.f32 %v9401, %v9402
    %v9404 = vsel %vm4868, %v9273, 0.0
    %v9405 = vadd.f32 %v9403, %v9404
    %v9406 = vrot.slane %v9405, 4
    %v9407 = vadd.f32 %v9405, %v9406
    %v9408 = vrot.slane %v9407, 2
    %v9409 = vadd.f32 %v9407, %v9408
    %v9410 = vrot.slane %v9409, 1
    %v9411 = vadd.f32 %v9409, %v9410
    %vm9412 = vcmask 1040384
    %v9413 = vsel %vm9412, %v9342, %v9411
    %v9414 = vld [vmem:[%s7] sm:$0xff]
    %v9415 = vld [vmem:[%s7 + $0x8] sm:$0xff]
    %v9416 = vld [vmem:[%s7 + $0x10] sm:$0xff]
    %v9417 = vld [vmem:[%s7 + $0x18] sm:$0xff]
    %v9418 = vld [vmem:[%s7 + $0x20] sm:$0xff]
    %v9419 = vld [vmem:[%s7 + $0x28] sm:$0xff]
    %v9420 = vld [vmem:[%s8] sm:$0x1]
    %v9422 = vperm.slane %v9420, 0
    %v9425 = vsel %vm4868, %v9413, 0
    %9427 = vmatpush.msra.mxu0 0.0
    %9428 = vmatpush.msra.mxu0 0.0
    %9429 = vmatpush.msra.mxu0 0.0
    %9430 = vmatpush.msra.mxu0 0.0
    %9431 = vmatpush.msra.mxu0 0.0
    %9432 = vmatpush.msra.mxu0 0.0
    %9433 = vmatpush.msra.mxu0 0.0
    %9434 = vmatpush.msra.mxu0 0.0
    %9435 = vmatpush.msra.mxu0 0.0
    %9436 = vmatpush.msra.mxu0 0.0
    %9437 = vmatpush.msra.mxu0 %v9419
    %9438 = vmatpush.msra.mxu0 %v9418
    %9439 = vmatpush.msra.mxu0 %v9417
    %9440 = vmatpush.msra.mxu0 %v9416
    %9441 = vmatpush.msra.mxu0 %v9415
    %9442 = vmatpush.msra.mxu0 %v9414
    %9443 = vmatmul.f32.gmra.mxu0 %v9425
    %v9444 = vpop.f32.mrf.mxu0
    %v9445 = vadd.f32 %v9422, %v9444
    %9446 = vdwg.mxu0
    %9448 = vrot.lane.b32.xlu0 %v9445, 120
    %v9449 = vpop.permute.xlu0 %9448
    %9451 = vxpose.xlu0.b32.start [1/16] %v9449, 128
    %9452 = vxpose.xlu0.b32.cont [2/16] 0.0, 128
    %9453 = vxpose.xlu0.b32.cont [3/16] 0.0, 128
    %9454 = vxpose.xlu0.b32.cont [4/16] 0.0, 128
    %9455 = vxpose.xlu0.b32.cont [5/16] 0.0, 128
    %9456 = vxpose.xlu0.b32.cont [6/16] 0.0, 128
    %9457 = vxpose.xlu0.b32.cont [7/16] 0.0, 128
    %9458 = vxpose.xlu0.b32.cont [8/16] 0.0, 128
    %9459 = vxpose.xlu0.b32.cont [9/16] 0.0, 128
    %9460 = vxpose.xlu0.b32.cont [10/16] 0.0, 128
    %9461 = vxpose.xlu0.b32.cont [11/16] 0.0, 128
    %9462 = vxpose.xlu0.b32.cont [12/16] 0.0, 128
    %9463 = vxpose.xlu0.b32.cont [13/16] 0.0, 128
    %9464 = vxpose.xlu0.b32.cont [14/16] 0.0, 128
    %9465 = vxpose.xlu0.b32.cont [15/16] 0.0, 128
    %9466 = vxpose.xlu0.b32.end [16/16] 0.0, 128
    %v9467 = vpop.trf.xlu0
    %v9468 = vpop.trf.xlu0
    %v9469 = vpop.trf.xlu0
    %v9470 = vpop.trf.xlu0
    %v9471 = vpop.trf.xlu0
    %v9472 = vpop.trf.xlu0
    %v9473 = vpop.trf.xlu0
    %v9474 = vpop.trf.xlu0
    %v9475 = vpop.trf.xlu0
    %v9476 = vpop.trf.xlu0
    %v9477 = vpop.trf.xlu0
    %v9478 = vpop.trf.xlu0
    %v9479 = vpop.trf.xlu0
    %v9480 = vpop.trf.xlu0
    %v9481 = vpop.trf.xlu0
    %v9482 = vpop.trf.xlu0
    %vm9483 = vcmask 15360
    %v9485 = vsel %vm9483, %v9467, 0
    %vm9487 = vcmask 1041408
    %v9488 = vsel %vm9487, %v9445, 0
    %9490 = vmatpush.msra.mxu0 0.0
    %9491 = vmatpush.msra.mxu0 0.0
    %9492 = vmatpush.msra.mxu0 0.0
    %9493 = vmatpush.msra.mxu0 0.0
    %9494 = vmatpush.msra.mxu0 0.0
    %9495 = vmatpush.msra.mxu0 0.0
    %9496 = vmatpush.msra.mxu0 0.0
    %9497 = vmatpush.msra.mxu0 0.0
    %9498 = vmatpush.msra.mxu0 0.0
    %9499 = vmatpush.msra.mxu0 0.0
    %9500 = vmatpush.msra.mxu0 0.0
    %9501 = vmatpush.msra.mxu0 0.0
    %9502 = vmatpush.msra.mxu0 0.0
    %9503 = vmatpush.msra.mxu0 0.0
    %9504 = vmatpush.msra.mxu0 0.0
    %9505 = vmatpush.msra.mxu0 %v9488
    %9506 = vmatmul.f32.gmra.mxu0 %v9485
    %v9507 = vpop.f32.mrf.mxu0
    %v9508 = vadd.f32 0.0, %v9507
    %9509 = vdwg.mxu0
    %vm9510 = vcmask 64512
    %v9511 = vsel %vm9510, %v9508, -inf
    %9512 = vmax.xlane.f32.xlu0 %v9511
    %v9513 = vpop.xlane.xlu0 %9512
    %v9514 = vsub.f32 %v9508, %v9513
    %v9515 = vmul.f32 %v9514, 1.442695
    %v9516 = vpow.pop %v9515
    %v9517 = vsel %vm9510, %v9516, 0.0
    %9518 = vadd.xlane.f32.xlu0 %v9517
    %v9519 = vpop.xlane.xlu0 %9518
    %v9520 = vrcp.pop %v9519
    %v9521 = vmul.f32 %v9519, %v9520
    %v9522 = vsub.f32 1.0, %v9521
    %v9523 = vmul.f32 %v9520, %v9522
    %v9524 = vadd.f32 %v9520, %v9523
    %vm9525 = vweird.f32 %v9519
    %vm9526 = vweird.f32 %v9520
    %vm9527 = vmor %vm9525, %vm9526
    %v9528 = vsel %vm9527, %v9520, %v9524
    %v9529 = vand.u32 2147483647, %v9519
    %vm9530 = vcmp.eq.f32.partialorder %v9529, 8.507059e+37
    %v9531 = vand.u32 %v9519, 2147483648
    %v9532 = vor.u32 1.1754944e-38, %v9531
    %v9533 = vsel %vm9530, %v9532, %v9528
    %v9534 = vmul.f32 %v9516, %v9533
    %v9535 = vmul.f32 %v9534, 0.35355338
    %9536 = vrot.lane.b32.xlu0 %v9445, 112
    %v9537 = vpop.permute.xlu0 %9536
    %v9538 = vsel %vm9510, %v9537, 0
    %9540 = vmatpush.msra.mxu0 0.0
    %9541 = vmatpush.msra.mxu0 0.0
    %9542 = vmatpush.msra.mxu0 0.0
    %9543 = vmatpush.msra.mxu0 0.0
    %9544 = vmatpush.msra.mxu0 0.0
    %9545 = vmatpush.msra.mxu0 0.0
    %9546 = vmatpush.msra.mxu0 0.0
    %9547 = vmatpush.msra.mxu0 0.0
    %9548 = vmatpush.msra.mxu0 0.0
    %9549 = vmatpush.msra.mxu0 0.0
    %9550 = vmatpush.msra.mxu0 0.0
    %9551 = vmatpush.msra.mxu0 0.0
    %9552 = vmatpush.msra.mxu0 0.0
    %9553 = vmatpush.msra.mxu0 0.0
    %9554 = vmatpush.msra.mxu0 0.0
    %9555 = vmatpush.msra.mxu0 %v9535
    %9556 = vmatmul.f32.gmra.mxu0 %v9538
    %v9557 = vpop.f32.mrf.mxu0
    %v9558 = vadd.f32 0.0, %v9557
    %9559 = vdwg.mxu0
    %v9560 = vld [vmem:[%s9] sm:$0xff]
    %v9561 = vld [vmem:[%s10] sm:$0x1]
    %v9563 = vperm.slane %v9561, 0
    %v9566 = vsel %vm9510, %v9558, 0
    %9568 = vmatpush.msra.mxu0 0.0
    %9569 = vmatpush.msra.mxu0 0.0
    %9570 = vmatpush.msra.mxu0 0.0
    %9571 = vmatpush.msra.mxu0 0.0
    %9572 = vmatpush.msra.mxu0 0.0
    %9573 = vmatpush.msra.mxu0 0.0
    %9574 = vmatpush.msra.mxu0 0.0
    %9575 = vmatpush.msra.mxu0 0.0
    %9576 = vmatpush.msra.mxu0 0.0
    %9577 = vmatpush.msra.mxu0 0.0
    %9578 = vmatpush.msra.mxu0 0.0
    %9579 = vmatpush.msra.mxu0 0.0
    %9580 = vmatpush.msra.mxu0 0.0
    %9581 = vmatpush.msra.mxu0 0.0
    %9582 = vmatpush.msra.mxu0 0.0
    %9583 = vmatpush.msra.mxu0 %v9560
    %9584 = vmatmul.f32.gmra.mxu0 %v9566
    %v9585 = vpop.f32.mrf.mxu0
    %v9586 = vadd.f32 %v9563, %v9585
    %9587 = vdwg.mxu0
    %s9588 = scalar_lea.vmem %s7, 48
    %v9589 = vld [vmem:[%s9588] sm:$0xff]
    %v9590 = vld [vmem:[%s9588 + $0x8] sm:$0xff]
    %v9591 = vld [vmem:[%s9588 + $0x10] sm:$0xff]
    %v9592 = vld [vmem:[%s9588 + $0x18] sm:$0xff]
    %v9593 = vld [vmem:[%s9588 + $0x20] sm:$0xff]
    %v9594 = vld [vmem:[%s9588 + $0x28] sm:$0xff]
    %s9595 = scalar_lea.vmem %s8, 1
    %v9596 = vld [vmem:[%s9595] sm:$0x1]
    %v9598 = vperm.slane %v9596, 0
    %v9601 = vsel %vm4868, %v9586, 0
    %9603 = vmatpush.msra.mxu0 0.0
    %9604 = vmatpush.msra.mxu0 0.0
    %9605 = vmatpush.msra.mxu0 0.0
    %9606 = vmatpush.msra.mxu0 0.0
    %9607 = vmatpush.msra.mxu0 0.0
    %9608 = vmatpush.msra.mxu0 0.0
    %9609 = vmatpush.msra.mxu0 0.0
    %9610 = vmatpush.msra.mxu0 0.0
    %9611 = vmatpush.msra.mxu0 0.0
    %9612 = vmatpush.msra.mxu0 0.0
    %9613 = vmatpush.msra.mxu0 %v9594
    %9614 = vmatpush.msra.mxu0 %v9593
    %9615 = vmatpush.msra.mxu0 %v9592
    %9616 = vmatpush.msra.mxu0 %v9591
    %9617 = vmatpush.msra.mxu0 %v9590
    %9618 = vmatpush.msra.mxu0 %v9589
    %9619 = vmatmul.f32.gmra.mxu0 %v9601
    %v9620 = vpop.f32.mrf.mxu0
    %v9621 = vadd.f32 %v9598, %v9620
    %9622 = vdwg.mxu0
    %9624 = vrot.lane.b32.xlu0 %v9621, 120
    %v9625 = vpop.permute.xlu0 %9624
    %9627 = vxpose.xlu0.b32.start [1/16] %v9625, 128
    %9628 = vxpose.xlu0.b32.cont [2/16] 0.0, 128
    %9629 = vxpose.xlu0.b32.cont [3/16] 0.0, 128
    %9630 = vxpose.xlu0.b32.cont [4/16] 0.0, 128
    %9631 = vxpose.xlu0.b32.cont [5/16] 0.0, 128
    %9632 = vxpose.xlu0.b32.cont [6/16] 0.0, 128
    %9633 = vxpose.xlu0.b32.cont [7/16] 0.0, 128
    %9634 = vxpose.xlu0.b32.cont [8/16] 0.0, 128
    %9635 = vxpose.xlu0.b32.cont [9/16] 0.0, 128
    %9636 = vxpose.xlu0.b32.cont [10/16] 0.0, 128
    %9637 = vxpose.xlu0.b32.cont [11/16] 0.0, 128
    %9638 = vxpose.xlu0.b32.cont [12/16] 0.0, 128
    %9639 = vxpose.xlu0.b32.cont [13/16] 0.0, 128
    %9640 = vxpose.xlu0.b32.cont [14/16] 0.0, 128
    %9641 = vxpose.xlu0.b32.cont [15/16] 0.0, 128
    %9642 = vxpose.xlu0.b32.end [16/16] 0.0, 128
    %v9643 = vpop.trf.xlu0
    %v9644 = vpop.trf.xlu0
    %v9645 = vpop.trf.xlu0
    %v9646 = vpop.trf.xlu0
    %v9647 = vpop.trf.xlu0
    %v9648 = vpop.trf.xlu0
    %v9649 = vpop.trf.xlu0
    %v9650 = vpop.trf.xlu0
    %v9651 = vpop.trf.xlu0
    %v9652 = vpop.trf.xlu0
    %v9653 = vpop.trf.xlu0
    %v9654 = vpop.trf.xlu0
    %v9655 = vpop.trf.xlu0
    %v9656 = vpop.trf.xlu0
    %v9657 = vpop.trf.xlu0
    %v9658 = vpop.trf.xlu0
    %v9660 = vsel %vm9483, %v9643, 0
    %v9662 = vsel %vm9487, %v9621, 0
    %9664 = vmatpush.msra.mxu0 0.0
    %9665 = vmatpush.msra.mxu0 0.0
    %9666 = vmatpush.msra.mxu0 0.0
    %9667 = vmatpush.msra.mxu0 0.0
    %9668 = vmatpush.msra.mxu0 0.0
    %9669 = vmatpush.msra.mxu0 0.0
    %9670 = vmatpush.msra.mxu0 0.0
    %9671 = vmatpush.msra.mxu0 0.0
    %9672 = vmatpush.msra.mxu0 0.0
    %9673 = vmatpush.msra.mxu0 0.0
    %9674 = vmatpush.msra.mxu0 0.0
    %9675 = vmatpush.msra.mxu0 0.0
    %9676 = vmatpush.msra.mxu0 0.0
    %9677 = vmatpush.msra.mxu0 0.0
    %9678 = vmatpush.msra.mxu0 0.0
    %9679 = vmatpush.msra.mxu0 %v9662
    %9680 = vmatmul.f32.gmra.mxu0 %v9660
    %v9681 = vpop.f32.mrf.mxu0
    %v9682 = vadd.f32 0.0, %v9681
    %9683 = vdwg.mxu0
    %v9684 = vsel %vm9510, %v9682, -inf
    %9685 = vmax.xlane.f32.xlu0 %v9684
    %v9686 = vpop.xlane.xlu0 %9685
    %v9687 = vsub.f32 %v9682, %v9686
    %v9688 = vmul.f32 %v9687, 1.442695
    %v9689 = vpow.pop %v9688
    %v9690 = vsel %vm9510, %v9689, 0.0
    %9691 = vadd.xlane.f32.xlu0 %v9690
    %v9692 = vpop.xlane.xlu0 %9691
    %v9693 = vrcp.pop %v9692
    %v9694 = vmul.f32 %v9692, %v9693
    %v9695 = vsub.f32 1.0, %v9694
    %v9696 = vmul.f32 %v9693, %v9695
    %v9697 = vadd.f32 %v9693, %v9696
    %vm9698 = vweird.f32 %v9692
    %vm9699 = vweird.f32 %v9693
    %vm9700 = vmor %vm9698, %vm9699
    %v9701 = vsel %vm9700, %v9693, %v9697
    %v9702 = vand.u32 2147483647, %v9692
    %vm9703 = vcmp.eq.f32.partialorder %v9702, 8.507059e+37
    %v9704 = vand.u32 %v9692, 2147483648
    %v9705 = vor.u32 1.1754944e-38, %v9704
    %v9706 = vsel %vm9703, %v9705, %v9701
    %v9707 = vmul.f32 %v9689, %v9706
    %v9708 = vmul.f32 %v9707, 0.35355338
    %9709 = vrot.lane.b32.xlu0 %v9621, 112
    %v9710 = vpop.permute.xlu0 %9709
    %v9711 = vsel %vm9510, %v9710, 0
    %9713 = vmatpush.msra.mxu0 0.0
    %9714 = vmatpush.msra.mxu0 0.0
    %9715 = vmatpush.msra.mxu0 0.0
    %9716 = vmatpush.msra.mxu0 0.0
    %9717 = vmatpush.msra.mxu0 0.0
    %9718 = vmatpush.msra.mxu0 0.0
    %9719 = vmatpush.msra.mxu0 0.0
    %9720 = vmatpush.msra.mxu0 0.0
    %9721 = vmatpush.msra.mxu0 0.0
    %9722 = vmatpush.msra.mxu0 0.0
    %9723 = vmatpush.msra.mxu0 0.0
    %9724 = vmatpush.msra.mxu0 0.0
    %9725 = vmatpush.msra.mxu0 0.0
    %9726 = vmatpush.msra.mxu0 0.0
    %9727 = vmatpush.msra.mxu0 0.0
    %9728 = vmatpush.msra.mxu0 %v9708
    %9729 = vmatmul.f32.gmra.mxu0 %v9711
    %v9730 = vpop.f32.mrf.mxu0
    %v9731 = vadd.f32 0.0, %v9730
    %9732 = vdwg.mxu0
    %s9733 = scalar_lea.vmem %s9, 8
    %v9734 = vld [vmem:[%s9733] sm:$0xff]
    %s9735 = scalar_lea.vmem %s10, 1
    %v9736 = vld [vmem:[%s9735] sm:$0x1]
    %v9738 = vperm.slane %v9736, 0
    %v9741 = vsel %vm9510, %v9731, 0
    %9743 = vmatpush.msra.mxu0 0.0
    %9744 = vmatpush.msra.mxu0 0.0
    %9745 = vmatpush.msra.mxu0 0.0
    %9746 = vmatpush.msra.mxu0 0.0
    %9747 = vmatpush.msra.mxu0 0.0
    %9748 = vmatpush.msra.mxu0 0.0
    %9749 = vmatpush.msra.mxu0 0.0
    %9750 = vmatpush.msra.mxu0 0.0
    %9751 = vmatpush.msra.mxu0 0.0
    %9752 = vmatpush.msra.mxu0 0.0
    %9753 = vmatpush.msra.mxu0 0.0
    %9754 = vmatpush.msra.mxu0 0.0
    %9755 = vmatpush.msra.mxu0 0.0
    %9756 = vmatpush.msra.mxu0 0.0
    %9757 = vmatpush.msra.mxu0 0.0
    %9758 = vmatpush.msra.mxu0 %v9734
    %9759 = vmatmul.f32.gmra.mxu0 %v9741
    %v9760 = vpop.f32.mrf.mxu0
    %v9761 = vadd.f32 %v9738, %v9760
    %9762 = vdwg.mxu0
    %s9763 = scalar_lea.vmem %s7, 96
    %v9764 = vld [vmem:[%s9763] sm:$0xff]
    %v9765 = vld [vmem:[%s9763 + $0x8] sm:$0xff]
    %v9766 = vld [vmem:[%s9763 + $0x10] sm:$0xff]
    %v9767 = vld [vmem:[%s9763 + $0x18] sm:$0xff]
    %v9768 = vld [vmem:[%s9763 + $0x20] sm:$0xff]
    %v9769 = vld [vmem:[%s9763 + $0x28] sm:$0xff]
    %s9770 = scalar_lea.vmem %s8, 2
    %v9771 = vld [vmem:[%s9770] sm:$0x1]
    %v9773 = vperm.slane %v9771, 0
    %v9776 = vsel %vm4868, %v9761, 0
    %9778 = vmatpush.msra.mxu0 0.0
    %9779 = vmatpush.msra.mxu0 0.0
    %9780 = vmatpush.msra.mxu0 0.0
    %9781 = vmatpush.msra.mxu0 0.0
    %9782 = vmatpush.msra.mxu0 0.0
    %9783 = vmatpush.msra.mxu0 0.0
    %9784 = vmatpush.msra.mxu0 0.0
    %9785 = vmatpush.msra.mxu0 0.0
    %9786 = vmatpush.msra.mxu0 0.0
    %9787 = vmatpush.msra.mxu0 0.0
    %9788 = vmatpush.msra.mxu0 %v9769
    %9789 = vmatpush.msra.mxu0 %v9768
    %9790 = vmatpush.msra.mxu0 %v9767
    %9791 = vmatpush.msra.mxu0 %v9766
    %9792 = vmatpush.msra.mxu0 %v9765
    %9793 = vmatpush.msra.mxu0 %v9764
    %9794 = vmatmul.f32.gmra.mxu0 %v9776
    %v9795 = vpop.f32.mrf.mxu0
    %v9796 = vadd.f32 %v9773, %v9795
    %9797 = vdwg.mxu0
    %9799 = vrot.lane.b32.xlu0 %v9796, 120
    %v9800 = vpop.permute.xlu0 %9799
    %9802 = vxpose.xlu0.b32.start [1/16] %v9800, 128
    %9803 = vxpose.xlu0.b32.cont [2/16] 0.0, 128
    %9804 = vxpose.xlu0.b32.cont [3/16] 0.0, 128
    %9805 = vxpose.xlu0.b32.cont [4/16] 0.0, 128
    %9806 = vxpose.xlu0.b32.cont [5/16] 0.0, 128
    %9807 = vxpose.xlu0.b32.cont [6/16] 0.0, 128
    %9808 = vxpose.xlu0.b32.cont [7/16] 0.0, 128
    %9809 = vxpose.xlu0.b32.cont [8/16] 0.0, 128
    %9810 = vxpose.xlu0.b32.cont [9/16] 0.0, 128
    %9811 = vxpose.xlu0.b32.cont [10/16] 0.0, 128
    %9812 = vxpose.xlu0.b32.cont [11/16] 0.0, 128
    %9813 = vxpose.xlu0.b32.cont [12/16] 0.0, 128
    %9814 = vxpose.xlu0.b32.cont [13/16] 0.0, 128
    %9815 = vxpose.xlu0.b32.cont [14/16] 0.0, 128
    %9816 = vxpose.xlu0.b32.cont [15/16] 0.0, 128
    %9817 = vxpose.xlu0.b32.end [16/16] 0.0, 128
    %v9818 = vpop.trf.xlu0
    %v9819 = vpop.trf.xlu0
    %v9820 = vpop.trf.xlu0
    %v9821 = vpop.trf.xlu0
    %v9822 = vpop.trf.xlu0
    %v9823 = vpop.trf.xlu0
    %v9824 = vpop.trf.xlu0
    %v9825 = vpop.trf.xlu0
    %v9826 = vpop.trf.xlu0
    %v9827 = vpop.trf.xlu0
    %v9828 = vpop.trf.xlu0
    %v9829 = vpop.trf.xlu0
    %v9830 = vpop.trf.xlu0
    %v9831 = vpop.trf.xlu0
    %v9832 = vpop.trf.xlu0
    %v9833 = vpop.trf.xlu0
    %v9835 = vsel %vm9483, %v9818, 0
    %v9837 = vsel %vm9487, %v9796, 0
    %9839 = vmatpush.msra.mxu0 0.0
    %9840 = vmatpush.msra.mxu0 0.0
    %9841 = vmatpush.msra.mxu0 0.0
    %9842 = vmatpush.msra.mxu0 0.0
    %9843 = vmatpush.msra.mxu0 0.0
    %9844 = vmatpush.msra.mxu0 0.0
    %9845 = vmatpush.msra.mxu0 0.0
    %9846 = vmatpush.msra.mxu0 0.0
    %9847 = vmatpush.msra.mxu0 0.0
    %9848 = vmatpush.msra.mxu0 0.0
    %9849 = vmatpush.msra.mxu0 0.0
    %9850 = vmatpush.msra.mxu0 0.0
    %9851 = vmatpush.msra.mxu0 0.0
    %9852 = vmatpush.msra.mxu0 0.0
    %9853 = vmatpush.msra.mxu0 0.0
    %9854 = vmatpush.msra.mxu0 %v9837
    %9855 = vmatmul.f32.gmra.mxu0 %v9835
    %v9856 = vpop.f32.mrf.mxu0
    %v9857 = vadd.f32 0.0, %v9856
    %9858 = vdwg.mxu0
    %v9859 = vsel %vm9510, %v9857, -inf
    %9860 = vmax.xlane.f32.xlu0 %v9859
    %v9861 = vpop.xlane.xlu0 %9860
    %v9862 = vsub.f32 %v9857, %v9861
    %v9863 = vmul.f32 %v9862, 1.442695
    %v9864 = vpow.pop %v9863
    %v9865 = vsel %vm9510, %v9864, 0.0
    %9866 = vadd.xlane.f32.xlu0 %v9865
    %v9867 = vpop.xlane.xlu0 %9866
    %v9868 = vrcp.pop %v9867
    %v9869 = vmul.f32 %v9867, %v9868
    %v9870 = vsub.f32 1.0, %v9869
    %v9871 = vmul.f32 %v9868, %v9870
    %v9872 = vadd.f32 %v9868, %v9871
    %vm9873 = vweird.f32 %v9867
    %vm9874 = vweird.f32 %v9868
    %vm9875 = vmor %vm9873, %vm9874
    %v9876 = vsel %vm9875, %v9868, %v9872
    %v9877 = vand.u32 2147483647, %v9867
    %vm9878 = vcmp.eq.f32.partialorder %v9877, 8.507059e+37
    %v9879 = vand.u32 %v9867, 2147483648
    %v9880 = vor.u32 1.1754944e-38, %v9879
    %v9881 = vsel %vm9878, %v9880, %v9876
    %v9882 = vmul.f32 %v9864, %v9881
    %v9883 = vmul.f32 %v9882, 0.35355338
    %9884 = vrot.lane.b32.xlu0 %v9796, 112
    %v9885 = vpop.permute.xlu0 %9884
    %v9886 = vsel %vm9510, %v9885, 0
    %9888 = vmatpush.msra.mxu0 0.0
    %9889 = vmatpush.msra.mxu0 0.0
    %9890 = vmatpush.msra.mxu0 0.0
    %9891 = vmatpush.msra.mxu0 0.0
    %9892 = vmatpush.msra.mxu0 0.0
    %9893 = vmatpush.msra.mxu0 0.0
    %9894 = vmatpush.msra.mxu0 0.0
    %9895 = vmatpush.msra.mxu0 0.0
    %9896 = vmatpush.msra.mxu0 0.0
    %9897 = vmatpush.msra.mxu0 0.0
    %9898 = vmatpush.msra.mxu0 0.0
    %9899 = vmatpush.msra.mxu0 0.0
    %9900 = vmatpush.msra.mxu0 0.0
    %9901 = vmatpush.msra.mxu0 0.0
    %9902 = vmatpush.msra.mxu0 0.0
    %9903 = vmatpush.msra.mxu0 %v9883
    %9904 = vmatmul.f32.gmra.mxu0 %v9886
    %v9905 = vpop.f32.mrf.mxu0
    %v9906 = vadd.f32 0.0, %v9905
    %9907 = vdwg.mxu0
    %s9908 = scalar_lea.vmem %s9, 16
    %v9909 = vld [vmem:[%s9908] sm:$0xff]
    %s9910 = scalar_lea.vmem %s10, 2
    %v9911 = vld [vmem:[%s9910] sm:$0x1]
    %v9913 = vperm.slane %v9911, 0
    %v9916 = vsel %vm9510, %v9906, 0
    %9918 = vmatpush.msra.mxu0 0.0
    %9919 = vmatpush.msra.mxu0 0.0
    %9920 = vmatpush.msra.mxu0 0.0
    %9921 = vmatpush.msra.mxu0 0.0
    %9922 = vmatpush.msra.mxu0 0.0
    %9923 = vmatpush.msra.mxu0 0.0
    %9924 = vmatpush.msra.mxu0 0.0
    %9925 = vmatpush.msra.mxu0 0.0
    %9926 = vmatpush.msra.mxu0 0.0
    %9927 = vmatpush.msra.mxu0 0.0
    %9928 = vmatpush.msra.mxu0 0.0
    %9929 = vmatpush.msra.mxu0 0.0
    %9930 = vmatpush.msra.mxu0 0.0
    %9931 = vmatpush.msra.mxu0 0.0
    %9932 = vmatpush.msra.mxu0 0.0
    %9933 = vmatpush.msra.mxu0 %v9909
    %9934 = vmatmul.f32.gmra.mxu0 %v9916
    %v9935 = vpop.f32.mrf.mxu0
    %v9936 = vadd.f32 %v9913, %v9935
    %9937 = vdwg.mxu0
    %s9938 = scalar_lea.vmem %s7, 144
    %v9939 = vld [vmem:[%s9938] sm:$0xff]
    %v9940 = vld [vmem:[%s9938 + $0x8] sm:$0xff]
    %v9941 = vld [vmem:[%s9938 + $0x10] sm:$0xff]
    %v9942 = vld [vmem:[%s9938 + $0x18] sm:$0xff]
    %v9943 = vld [vmem:[%s9938 + $0x20] sm:$0xff]
    %v9944 = vld [vmem:[%s9938 + $0x28] sm:$0xff]
    %s9945 = scalar_lea.vmem %s8, 3
    %v9946 = vld [vmem:[%s9945] sm:$0x1]
    %v9948 = vperm.slane %v9946, 0
    %v9951 = vsel %vm4868, %v9936, 0
    %9953 = vmatpush.msra.mxu0 0.0
    %9954 = vmatpush.msra.mxu0 0.0
    %9955 = vmatpush.msra.mxu0 0.0
    %9956 = vmatpush.msra.mxu0 0.0
    %9957 = vmatpush.msra.mxu0 0.0
    %9958 = vmatpush.msra.mxu0 0.0
    %9959 = vmatpush.msra.mxu0 0.0
    %9960 = vmatpush.msra.mxu0 0.0
    %9961 = vmatpush.msra.mxu0 0.0
    %9962 = vmatpush.msra.mxu0 0.0
    %9963 = vmatpush.msra.mxu0 %v9944
    %9964 = vmatpush.msra.mxu0 %v9943
    %9965 = vmatpush.msra.mxu0 %v9942
    %9966 = vmatpush.msra.mxu0 %v9941
    %9967 = vmatpush.msra.mxu0 %v9940
    %9968 = vmatpush.msra.mxu0 %v9939
    %9969 = vmatmul.f32.gmra.mxu0 %v9951
    %v9970 = vpop.f32.mrf.mxu0
    %v9971 = vadd.f32 %v9948, %v9970
    %9972 = vdwg.mxu0
    %9974 = vrot.lane.b32.xlu0 %v9971, 120
    %v9975 = vpop.permute.xlu0 %9974
    %9977 = vxpose.xlu0.b32.start [1/16] %v9975, 128
    %9978 = vxpose.xlu0.b32.cont [2/16] 0.0, 128
    %9979 = vxpose.xlu0.b32.cont [3/16] 0.0, 128
    %9980 = vxpose.xlu0.b32.cont [4/16] 0.0, 128
    %9981 = vxpose.xlu0.b32.cont [5/16] 0.0, 128
    %9982 = vxpose.xlu0.b32.cont [6/16] 0.0, 128
    %9983 = vxpose.xlu0.b32.cont [7/16] 0.0, 128
    %9984 = vxpose.xlu0.b32.cont [8/16] 0.0, 128
    %9985 = vxpose.xlu0.b32.cont [9/16] 0.0, 128
    %9986 = vxpose.xlu0.b32.cont [10/16] 0.0, 128
    %9987 = vxpose.xlu0.b32.cont [11/16] 0.0, 128
    %9988 = vxpose.xlu0.b32.cont [12/16] 0.0, 128
    %9989 = vxpose.xlu0.b32.cont [13/16] 0.0, 128
    %9990 = vxpose.xlu0.b32.cont [14/16] 0.0, 128
    %9991 = vxpose.xlu0.b32.cont [15/16] 0.0, 128
    %9992 = vxpose.xlu0.b32.end [16/16] 0.0, 128
    %v9993 = vpop.trf.xlu0
    %v9994 = vpop.trf.xlu0
    %v9995 = vpop.trf.xlu0
    %v9996 = vpop.trf.xlu0
    %v9997 = vpop.trf.xlu0
    %v9998 = vpop.trf.xlu0
    %v9999 = vpop.trf.xlu0
    %v10000 = vpop.trf.xlu0
    %v10001 = vpop.trf.xlu0
    %v10002 = vpop.trf.xlu0
    %v10003 = vpop.trf.xlu0
    %v10004 = vpop.trf.xlu0
    %v10005 = vpop.trf.xlu0
    %v10006 = vpop.trf.xlu0
    %v10007 = vpop.trf.xlu0
    %v10008 = vpop.trf.xlu0
    %v10010 = vsel %vm9483, %v9993, 0
    %v10012 = vsel %vm9487, %v9971, 0
    %10014 = vmatpush.msra.mxu0 0.0
    %10015 = vmatpush.msra.mxu0 0.0
    %10016 = vmatpush.msra.mxu0 0.0
    %10017 = vmatpush.msra.mxu0 0.0
    %10018 = vmatpush.msra.mxu0 0.0
    %10019 = vmatpush.msra.mxu0 0.0
    %10020 = vmatpush.msra.mxu0 0.0
    %10021 = vmatpush.msra.mxu0 0.0
    %10022 = vmatpush.msra.mxu0 0.0
    %10023 = vmatpush.msra.mxu0 0.0
    %10024 = vmatpush.msra.mxu0 0.0
    %10025 = vmatpush.msra.mxu0 0.0
    %10026 = vmatpush.msra.mxu0 0.0
    %10027 = vmatpush.msra.mxu0 0.0
    %10028 = vmatpush.msra.mxu0 0.0
    %10029 = vmatpush.msra.mxu0 %v10012
    %10030 = vmatmul.f32.gmra.mxu0 %v10010
    %v10031 = vpop.f32.mrf.mxu0
    %v10032 = vadd.f32 0.0, %v10031
    %10033 = vdwg.mxu0
    %v10034 = vsel %vm9510, %v10032, -inf
    %10035 = vmax.xlane.f32.xlu0 %v10034
    %v10036 = vpop.xlane.xlu0 %10035
    %v10037 = vsub.f32 %v10032, %v10036
    %v10038 = vmul.f32 %v10037, 1.442695
    %v10039 = vpow.pop %v10038
    %v10040 = vsel %vm9510, %v10039, 0.0
    %10041 = vadd.xlane.f32.xlu0 %v10040
    %v10042 = vpop.xlane.xlu0 %10041
    %v10043 = vrcp.pop %v10042
    %v10044 = vmul.f32 %v10042, %v10043
    %v10045 = vsub.f32 1.0, %v10044
    %v10046 = vmul.f32 %v10043, %v10045
    %v10047 = vadd.f32 %v10043, %v10046
    %vm10048 = vweird.f32 %v10042
    %vm10049 = vweird.f32 %v10043
    %vm10050 = vmor %vm10048, %vm10049
    %v10051 = vsel %vm10050, %v10043, %v10047
    %v10052 = vand.u32 2147483647, %v10042
    %vm10053 = vcmp.eq.f32.partialorder %v10052, 8.507059e+37
    %v10054 = vand.u32 %v10042, 2147483648
    %v10055 = vor.u32 1.1754944e-38, %v10054
    %v10056 = vsel %vm10053, %v10055, %v10051
    %v10057 = vmul.f32 %v10039, %v10056
    %v10058 = vmul.f32 %v10057, 0.35355338
    %10059 = vrot.lane.b32.xlu0 %v9971, 112
    %v10060 = vpop.permute.xlu0 %10059
    %v10061 = vsel %vm9510, %v10060, 0
    %10063 = vmatpush.msra.mxu0 0.0
    %10064 = vmatpush.msra.mxu0 0.0
    %10065 = vmatpush.msra.mxu0 0.0
    %10066 = vmatpush.msra.mxu0 0.0
    %10067 = vmatpush.msra.mxu0 0.0
    %10068 = vmatpush.msra.mxu0 0.0
    %10069 = vmatpush.msra.mxu0 0.0
    %10070 = vmatpush.msra.mxu0 0.0
    %10071 = vmatpush.msra.mxu0 0.0
    %10072 = vmatpush.msra.mxu0 0.0
    %10073 = vmatpush.msra.mxu0 0.0
    %10074 = vmatpush.msra.mxu0 0.0
    %10075 = vmatpush.msra.mxu0 0.0
    %10076 = vmatpush.msra.mxu0 0.0
    %10077 = vmatpush.msra.mxu0 0.0
    %10078 = vmatpush.msra.mxu0 %v10058
    %10079 = vmatmul.f32.gmra.mxu0 %v10061
    %v10080 = vpop.f32.mrf.mxu0
    %v10081 = vadd.f32 0.0, %v10080
    %10082 = vdwg.mxu0
    %s10083 = scalar_lea.vmem %s9, 24
    %v10084 = vld [vmem:[%s10083] sm:$0xff]
    %s10085 = scalar_lea.vmem %s10, 3
    %v10086 = vld [vmem:[%s10085] sm:$0x1]
    %v10088 = vperm.slane %v10086, 0
    %v10091 = vsel %vm9510, %v10081, 0
    %10093 = vmatpush.msra.mxu0 0.0
    %10094 = vmatpush.msra.mxu0 0.0
    %10095 = vmatpush.msra.mxu0 0.0
    %10096 = vmatpush.msra.mxu0 0.0
    %10097 = vmatpush.msra.mxu0 0.0
    %10098 = vmatpush.msra.mxu0 0.0
    %10099 = vmatpush.msra.mxu0 0.0
    %10100 = vmatpush.msra.mxu0 0.0
    %10101 = vmatpush.msra.mxu0 0.0
    %10102 = vmatpush.msra.mxu0 0.0
    %10103 = vmatpush.msra.mxu0 0.0
    %10104 = vmatpush.msra.mxu0 0.0
    %10105 = vmatpush.msra.mxu0 0.0
    %10106 = vmatpush.msra.mxu0 0.0
    %10107 = vmatpush.msra.mxu0 0.0
    %10108 = vmatpush.msra.mxu0 %v10084
    %10109 = vmatmul.f32.gmra.mxu0 %v10091
    %v10110 = vpop.f32.mrf.mxu0
    %v10111 = vadd.f32 %v10088, %v10110
    %10112 = vdwg.mxu0
    %v10113 = vld [vmem:[%s11] sm:$0xff]
    %v10114 = vld [vmem:[%s11 + $0x8] sm:$0xff]
    %v10115 = vld [vmem:[%s11 + $0x10] sm:$0xff]
    %v10116 = vld [vmem:[%s11 + $0x18] sm:$0xff]
    %v10117 = vld [vmem:[%s11 + $0x20] sm:$0xff]
    %v10118 = vld [vmem:[%s11 + $0x28] sm:$0xff]
    %v10119 = vld [vmem:[%s12] sm:$0x1]
    %v10121 = vperm.slane %v10119, 0
    %v10124 = vsel %vm4868, %v10111, 0
    %10126 = vmatpush.msra.mxu0 0.0
    %10127 = vmatpush.msra.mxu0 0.0
    %10128 = vmatpush.msra.mxu0 0.0
    %10129 = vmatpush.msra.mxu0 0.0
    %10130 = vmatpush.msra.mxu0 0.0
    %10131 = vmatpush.msra.mxu0 0.0
    %10132 = vmatpush.msra.mxu0 0.0
    %10133 = vmatpush.msra.mxu0 0.0
    %10134 = vmatpush.msra.mxu0 0.0
    %10135 = vmatpush.msra.mxu0 0.0
    %10136 = vmatpush.msra.mxu0 %v10118
    %10137 = vmatpush.msra.mxu0 %v10117
    %10138 = vmatpush.msra.mxu0 %v10116
    %10139 = vmatpush.msra.mxu0 %v10115
    %10140 = vmatpush.msra.mxu0 %v10114
    %10141 = vmatpush.msra.mxu0 %v10113
    %10142 = vmatmul.f32.gmra.mxu0 %v10124
    %v10143 = vpop.f32.mrf.mxu0
    %v10144 = vadd.f32 %v10121, %v10143
    %10145 = vdwg.mxu0
    %vm10146 = vcmask 74752
    %10147 = vst.msk [vmem:[#allocation4] sm:$0x3] %vm10146, %v10144
    // Predicated region
    $region54: #{transformer_forward.1} parent=1 // pred_check
      _
    $region55: #{transformer_forward.1} parent=1 // pred_check_branch
      %10149 = sbr.rel (0) target = $region57
    $region56: #{transformer_forward.1} parent=1 // pred_region
      %10151 = vsyncadd [#allocation5], 0
      %s10153 = sshll.u32 [#allocation4], 4
      %s10154 = int_to_ptr.vmem [resolvable:$true] %s10153
      %s10155 = sshll.u32 %s13, 4
      %s10156 = int_to_ptr.hbm [resolvable:$true] %s10155
      %10158 = dma.vmem_to_hbm [thread:$0]  %s10154, 32, %s10156, [#allocation5]
    $region57: #{transformer_forward.1} parent=1 // pred_fallthru
      _
    // Predicated region
    $region58: #{transformer_forward.1} parent=1 // pred_check
      _
    $region59: #{transformer_forward.1} parent=1 // pred_check_branch
      %10160 = sbr.rel (0) target = $region61
    $region60: #{transformer_forward.1} parent=1 // pred_region
      %10162 = dma.done [#allocation5], 32
    $region61: #{transformer_forward.1} parent=1 // pred_fallthru
      _
    %10163 = vsyncpa [#allocation5], 1

</llo_original>
